<compile_context>
chip_gen: v6e
topology: v6e:2x2x1
jax: 0.10.0
libtpu: 0.0.40
codegen_flags: <defaults>
</compile_context>

<pallas_src>
import functools

import jax
import jax.numpy as jnp
import numpy as np
from jax.experimental import pallas as pl
from jax.experimental.pallas import tpu as pltpu


# -----------------------------------------------------------------------------
# Kernel: per (split, batch, point-tile) grid step, run the full 5-layer chain
# on a (TN, C) tile, reduce with max over the tile, and max-accumulate into the
# per-(split, batch) output block (resident across the point-tile axis).
# -----------------------------------------------------------------------------
def _encoder_kernel(x_ref,
                    w0, b0, w1, b1, w2, b2, w3, b3, w4, b4,
                    o_ref,
                    *, k_in):
    n_id = pl.program_id(2)          # point-tile index within the split (reduction axis)

    x = x_ref[...].astype(jnp.float32)                        # (TN, K)

    # --- layer 0: K is tiny (3) -> VPU broadcast-FMA instead of a padded MXU pass ---
    w0v = w0[...].astype(jnp.float32)                         # (K, C0), f32
    h = x[:, 0:1] * w0v[0:1, :]
    for kk in range(1, k_in):
        h = h + x[:, kk:kk + 1] * w0v[kk:kk + 1, :]
    # bias + ReLU fused with the bf16 downcast (bf16-carried activations).
    h = jnp.maximum(h + b0[...], 0.0).astype(jnp.bfloat16)    # (TN, C0), bf16

    # --- layers 1..3: bf16 MXU matmuls with f32 accumulation; bias+ReLU in f32,
    #     then downcast so the inter-layer VMEM traffic is half-width ---
    for w_ref, b_ref in ((w1, b1), (w2, b2), (w3, b3)):
        acc = jnp.dot(h, w_ref[...], preferred_element_type=jnp.float32)
        h = jnp.maximum(acc + b_ref[...], 0.0).astype(jnp.bfloat16)

    # --- layer 4: final layer output stays f32 (feeds the max accumulator) ---
    acc = jnp.dot(h, w4[...], preferred_element_type=jnp.float32)
    h32 = jnp.maximum(acc + b4[...], 0.0)                     # (TN, C_out), f32

    tile_max = jnp.max(h32, axis=0, keepdims=True)            # (1, C_out)

    @pl.when(n_id == 0)
    def _init():
        o_ref[...] = tile_max

    @pl.when(n_id > 0)
    def _acc():
        o_ref[...] = jnp.maximum(o_ref[...], tile_max)


def _default_num_splits(batch_size):
    """Chip-aware point-reduction splits.

    v5e/v6e have a single TensorCore -> the split axis is pure overhead there.
    v7x has 2 TCs -> split the point reduction only when the batch axis alone
    cannot provide >= 2 parallel work units.
    """
    try:
        kind = jax.devices()[0].device_kind.lower()
    except Exception:
        return 1
    two_tensorcores = ("v7" in kind) or ("7x" in kind)
    return 2 if (two_tensorcores and batch_size < 2) else 1


def encoder_forward(x_ncl, weights, biases, *, tile_n=1024, num_splits=None):
    """x_ncl: (B, K, N) float32 (PyTorch NCL layout). Returns (B, n_filters[-1])."""
    B, K, N = x_ncl.shape
    c_out = weights[-1].shape[1]

    if num_splits is None:
        num_splits = _default_num_splits(B)

    # layout: NCL -> (B, N, K): points on sublanes, channels on lanes.
    x = jnp.transpose(x_ncl, (0, 2, 1)).astype(jnp.float32)

    # Pad N up so the point tiles split evenly across `splits` reduction chunks.
    n_tiles = pl.cdiv(N, tile_n)
    splits = num_splits if n_tiles >= num_splits else 1
    tiles_per_split = pl.cdiv(n_tiles, splits)
    n_pad = splits * tiles_per_split * tile_n
    if n_pad != N:
        # Edge-replicate the last real point: duplicated real points can never
        # change a max reduction, so no in-kernel masking is required.
        x = jnp.pad(x, ((0, 0), (0, n_pad - N), (0, 0)), mode="edge")

    grid = (splits, B, tiles_per_split)

    in_specs = [pl.BlockSpec(
        (pl.Squeezed(), tile_n, K),
        lambda s, b, n: (b, s * tiles_per_split + n, 0))]
    flat_params = []
    for w, bvec in zip(weights, biases):
        # Weights/biases are small with constant index maps -> VMEM-resident across the grid.
        in_specs.append(pl.BlockSpec(w.shape, lambda s, b, n: (0, 0)))
        in_specs.append(pl.BlockSpec(bvec.shape, lambda s, b, n: (0, 0)))
        flat_params.extend([w, bvec])

    kernel = functools.partial(_encoder_kernel, k_in=K)

    out = pl.pallas_call(
        kernel,
        out_shape=jax.ShapeDtypeStruct((splits, B, 1, c_out), jnp.float32),
        grid_spec=pltpu.PrefetchScalarGridSpec(
            num_scalar_prefetch=0,
            grid=grid,
            in_specs=in_specs,
            out_specs=pl.BlockSpec((pl.Squeezed(), pl.Squeezed(), 1, c_out),
                                   lambda s, b, n: (s, b, 0, 0)),
        ),
        compiler_params=pltpu.CompilerParams(
            dimension_semantics=("parallel", "parallel", "arbitrary")),
    )(x, *flat_params)

    # Combine the per-split partial maxima (tiny XLA op; trivial when splits == 1).
    return jnp.max(out, axis=0).reshape(B, c_out)


# -----------------------------------------------------------------------------
# Deterministic synthetic parameters, BN (eval mode) folded into the convs.
# Layer 0 weight stays f32 (VPU path); layers >= 1 are stored bf16 (MXU path).
# -----------------------------------------------------------------------------
def make_params(key, k=3, n_filters=(64, 128, 128, 256, 128), eps=1e-5):
    weights, biases = [], []
    in_c = k
    for li, out_c in enumerate(n_filters):
        key, kw, kb, kg, kbe, krm, krv = jax.random.split(key, 7)
        # Conv1d(in_c, out_c, 1): torch weight (out_c, in_c, 1) -> matmul form (in_c, out_c)
        w = jax.random.normal(kw, (in_c, out_c), jnp.float32) * (1.0 / np.sqrt(in_c))
        b = jax.random.normal(kb, (out_c,), jnp.float32) * 0.1
        # BatchNorm1d(out_c) parameters / running stats (eval-mode semantics)
        gamma = 1.0 + 0.1 * jax.random.normal(kg, (out_c,), jnp.float32)
        beta = 0.1 * jax.random.normal(kbe, (out_c,), jnp.float32)
        running_mean = 0.1 * jax.random.normal(krm, (out_c,), jnp.float32)
        running_var = jax.random.uniform(krv, (out_c,), jnp.float32, 0.5, 1.5)
        # Fold BN:  y = (x@W + b - mu) * gamma/sqrt(var+eps) + beta
        scale = gamma / jnp.sqrt(running_var + eps)
        w_eff = w * scale[None, :]
        b_eff = (b - running_mean) * scale + beta
        if li > 0:
            w_eff = w_eff.astype(jnp.bfloat16)
        weights.append(w_eff)
        biases.append(b_eff.reshape(1, out_c))
        in_c = out_c
    return weights, biases


def encoder_reference(x_ncl, weights, biases):
    """Pure-JAX f32 reference (same bf16-stored weights, f32 activations)."""
    h = jnp.transpose(x_ncl, (0, 2, 1)).astype(jnp.float32)   # (B, N, K)
    for w, b in zip(weights, biases):
        h = jnp.maximum(jnp.einsum("bnk,ko->bno", h, w.astype(jnp.float32)) + b[None], 0.0)
    return jnp.max(h, axis=1)                                  # (B, C_out)


if __name__ == "__main__":
    key = jax.random.PRNGKey(0)
    k_param, k_x = jax.random.split(key)

    # Small point cloud: batch=2, 3 coords, 2000 points (ragged on purpose to
    # exercise the edge-replicate padding path with tile_n=1024).
    B, K, N = 2, 3, 2000
    n_filters = (64, 128, 128, 256, 128)

    weights, biases = make_params(k_param, k=K, n_filters=n_filters)
    x = jax.random.normal(k_x, (B, K, N), jnp.float32)         # PyTorch NCL layout

    out = jax.block_until_ready(encoder_forward(x, weights, biases, tile_n=1024))
    ref = jax.block_until_ready(encoder_reference(x, weights, biases))

    # bf16 activations in the kernel (f32 accumulation) -> relaxed tolerance.
    np.testing.assert_allclose(np.asarray(out), np.asarray(ref), rtol=2e-2, atol=2e-2)

    print("KERNEL_OK")
</pallas_src>

<mosaic_0001>
module attributes {stable_mosaic.version = 11 : i64} {
  func.func @_encoder_kernel(%arg0: i32, %arg1: i32, %arg2: i32, %arg3: memref<1x1024x3xf32, #tpu.memory_space<vmem>>, %arg4: memref<3x64xf32, #tpu.memory_space<vmem>>, %arg5: memref<1x64xf32, #tpu.memory_space<vmem>>, %arg6: memref<64x128xbf16, #tpu.memory_space<vmem>>, %arg7: memref<1x128xf32, #tpu.memory_space<vmem>>, %arg8: memref<128x128xbf16, #tpu.memory_space<vmem>>, %arg9: memref<1x128xf32, #tpu.memory_space<vmem>>, %arg10: memref<128x256xbf16, #tpu.memory_space<vmem>>, %arg11: memref<1x256xf32, #tpu.memory_space<vmem>>, %arg12: memref<256x128xbf16, #tpu.memory_space<vmem>>, %arg13: memref<1x128xf32, #tpu.memory_space<vmem>>, %arg14: memref<1x1x1x128xf32, #tpu.memory_space<vmem>>) attributes {dimension_semantics = [#tpu.dimension_semantics<parallel>, #tpu.dimension_semantics<parallel>, #tpu.dimension_semantics<arbitrary>], iteration_bounds = array<i64: 1, 2, 2>, scalar_prefetch = 0 : i64, scratch_operands = 0 : i64, tpu.core_type = #tpu.core_type<tc>, window_params = [{transform_indices = @transform_0, window_bounds = array<i64: 1, 1024, 3>}, {pipeline_mode = #tpu.pipeline_mode<synchronous>, transform_indices = @transform_1, window_bounds = array<i64: 3, 64>}, {pipeline_mode = #tpu.pipeline_mode<synchronous>, transform_indices = @transform_2, window_bounds = array<i64: 1, 64>}, {pipeline_mode = #tpu.pipeline_mode<synchronous>, transform_indices = @transform_3, window_bounds = array<i64: 64, 128>}, {pipeline_mode = #tpu.pipeline_mode<synchronous>, transform_indices = @transform_4, window_bounds = array<i64: 1, 128>}, {pipeline_mode = #tpu.pipeline_mode<synchronous>, transform_indices = @transform_5, window_bounds = array<i64: 128, 128>}, {pipeline_mode = #tpu.pipeline_mode<synchronous>, transform_indices = @transform_6, window_bounds = array<i64: 1, 128>}, {pipeline_mode = #tpu.pipeline_mode<synchronous>, transform_indices = @transform_7, window_bounds = array<i64: 128, 256>}, {pipeline_mode = #tpu.pipeline_mode<synchronous>, transform_indices = @transform_8, window_bounds = array<i64: 1, 256>}, {pipeline_mode = #tpu.pipeline_mode<synchronous>, transform_indices = @transform_9, window_bounds = array<i64: 256, 128>}, {pipeline_mode = #tpu.pipeline_mode<synchronous>, transform_indices = @transform_10, window_bounds = array<i64: 1, 128>}, {transform_indices = @transform_11, window_bounds = array<i64: 1, 1, 1, 128>}]} {
    %c0 = arith.constant 0 : index
    %c0_0 = arith.constant 0 : index
    %c0_1 = arith.constant 0 : index
    %0 = vector.load %arg3[%c0, %c0_0, %c0_1] : memref<1x1024x3xf32, #tpu.memory_space<vmem>>, vector<1x1024x3xf32>
    %1 = vector.shape_cast %0 : vector<1x1024x3xf32> to vector<1024x3xf32>
    %c0_2 = arith.constant 0 : index
    %c0_3 = arith.constant 0 : index
    %2 = vector.load %arg4[%c0_2, %c0_3] : memref<3x64xf32, #tpu.memory_space<vmem>>, vector<3x64xf32>
    %3 = vector.extract_strided_slice %1 {offsets = [0, 0], sizes = [1024, 1], strides = [1, 1]} : vector<1024x3xf32> to vector<1024x1xf32>
    %4 = vector.extract_strided_slice %2 {offsets = [0, 0], sizes = [1, 64], strides = [1, 1]} : vector<3x64xf32> to vector<1x64xf32>
    %5 = vector.broadcast %3 : vector<1024x1xf32> to vector<1024x64xf32>
    %6 = vector.broadcast %4 : vector<1x64xf32> to vector<1024x64xf32>
    %7 = arith.mulf %5, %6 : vector<1024x64xf32>
    %8 = vector.extract_strided_slice %1 {offsets = [0, 1], sizes = [1024, 1], strides = [1, 1]} : vector<1024x3xf32> to vector<1024x1xf32>
    %9 = vector.extract_strided_slice %2 {offsets = [1, 0], sizes = [1, 64], strides = [1, 1]} : vector<3x64xf32> to vector<1x64xf32>
    %10 = vector.broadcast %8 : vector<1024x1xf32> to vector<1024x64xf32>
    %11 = vector.broadcast %9 : vector<1x64xf32> to vector<1024x64xf32>
    %12 = arith.mulf %10, %11 : vector<1024x64xf32>
    %13 = arith.addf %7, %12 : vector<1024x64xf32>
    %14 = vector.extract_strided_slice %1 {offsets = [0, 2], sizes = [1024, 1], strides = [1, 1]} : vector<1024x3xf32> to vector<1024x1xf32>
    %15 = vector.extract_strided_slice %2 {offsets = [2, 0], sizes = [1, 64], strides = [1, 1]} : vector<3x64xf32> to vector<1x64xf32>
    %16 = vector.broadcast %14 : vector<1024x1xf32> to vector<1024x64xf32>
    %17 = vector.broadcast %15 : vector<1x64xf32> to vector<1024x64xf32>
    %18 = arith.mulf %16, %17 : vector<1024x64xf32>
    %19 = arith.addf %13, %18 : vector<1024x64xf32>
    %c0_4 = arith.constant 0 : index
    %c0_5 = arith.constant 0 : index
    %20 = vector.load %arg5[%c0_4, %c0_5] : memref<1x64xf32, #tpu.memory_space<vmem>>, vector<1x64xf32>
    %21 = vector.broadcast %20 : vector<1x64xf32> to vector<1024x64xf32>
    %22 = arith.addf %19, %21 : vector<1024x64xf32>
    %cst = arith.constant 0.000000e+00 : f32
    %23 = vector.broadcast %cst : f32 to vector<1024x64xf32>
    %24 = arith.maximumf %22, %23 : vector<1024x64xf32>
    %25 = arith.truncf %24 : vector<1024x64xf32> to vector<1024x64xbf16>
    %c0_6 = arith.constant 0 : index
    %c0_7 = arith.constant 0 : index
    %26 = vector.load %arg6[%c0_6, %c0_7] : memref<64x128xbf16, #tpu.memory_space<vmem>>, vector<64x128xbf16>
    %cst_8 = arith.constant dense<0.000000e+00> : vector<1024x128xf32>
    %27 = tpu.matmul %25, %26, %cst_8 {dimension_numbers = #tpu.dot_dimension_numbers<[1], [0], [0], [1], [0, 0, 1, 1], [], []>} : vector<1024x64xbf16>, vector<64x128xbf16>, vector<1024x128xf32> -> vector<1024x128xf32>
    %c0_9 = arith.constant 0 : index
    %c0_10 = arith.constant 0 : index
    %28 = vector.load %arg7[%c0_9, %c0_10] : memref<1x128xf32, #tpu.memory_space<vmem>>, vector<1x128xf32>
    %29 = vector.broadcast %28 : vector<1x128xf32> to vector<1024x128xf32>
    %30 = arith.addf %27, %29 : vector<1024x128xf32>
    %cst_11 = arith.constant 0.000000e+00 : f32
    %31 = vector.broadcast %cst_11 : f32 to vector<1024x128xf32>
    %32 = arith.maximumf %30, %31 : vector<1024x128xf32>
    %33 = arith.truncf %32 : vector<1024x128xf32> to vector<1024x128xbf16>
    %c0_12 = arith.constant 0 : index
    %c0_13 = arith.constant 0 : index
    %34 = vector.load %arg8[%c0_12, %c0_13] : memref<128x128xbf16, #tpu.memory_space<vmem>>, vector<128x128xbf16>
    %cst_14 = arith.constant dense<0.000000e+00> : vector<1024x128xf32>
    %35 = tpu.matmul %33, %34, %cst_14 {dimension_numbers = #tpu.dot_dimension_numbers<[1], [0], [0], [1], [0, 0, 1, 1], [], []>} : vector<1024x128xbf16>, vector<128x128xbf16>, vector<1024x128xf32> -> vector<1024x128xf32>
    %c0_15 = arith.constant 0 : index
    %c0_16 = arith.constant 0 : index
    %36 = vector.load %arg9[%c0_15, %c0_16] : memref<1x128xf32, #tpu.memory_space<vmem>>, vector<1x128xf32>
    %37 = vector.broadcast %36 : vector<1x128xf32> to vector<1024x128xf32>
    %38 = arith.addf %35, %37 : vector<1024x128xf32>
    %cst_17 = arith.constant 0.000000e+00 : f32
    %39 = vector.broadcast %cst_17 : f32 to vector<1024x128xf32>
    %40 = arith.maximumf %38, %39 : vector<1024x128xf32>
    %41 = arith.truncf %40 : vector<1024x128xf32> to vector<1024x128xbf16>
    %c0_18 = arith.constant 0 : index
    %c0_19 = arith.constant 0 : index
    %42 = vector.load %arg10[%c0_18, %c0_19] : memref<128x256xbf16, #tpu.memory_space<vmem>>, vector<128x256xbf16>
    %cst_20 = arith.constant dense<0.000000e+00> : vector<1024x256xf32>
    %43 = tpu.matmul %41, %42, %cst_20 {dimension_numbers = #tpu.dot_dimension_numbers<[1], [0], [0], [1], [0, 0, 1, 1], [], []>} : vector<1024x128xbf16>, vector<128x256xbf16>, vector<1024x256xf32> -> vector<1024x256xf32>
    %c0_21 = arith.constant 0 : index
    %c0_22 = arith.constant 0 : index
    %44 = vector.load %arg11[%c0_21, %c0_22] : memref<1x256xf32, #tpu.memory_space<vmem>>, vector<1x256xf32>
    %45 = vector.broadcast %44 : vector<1x256xf32> to vector<1024x256xf32>
    %46 = arith.addf %43, %45 : vector<1024x256xf32>
    %cst_23 = arith.constant 0.000000e+00 : f32
    %47 = vector.broadcast %cst_23 : f32 to vector<1024x256xf32>
    %48 = arith.maximumf %46, %47 : vector<1024x256xf32>
    %49 = arith.truncf %48 : vector<1024x256xf32> to vector<1024x256xbf16>
    %c0_24 = arith.constant 0 : index
    %c0_25 = arith.constant 0 : index
    %50 = vector.load %arg12[%c0_24, %c0_25] : memref<256x128xbf16, #tpu.memory_space<vmem>>, vector<256x128xbf16>
    %cst_26 = arith.constant dense<0.000000e+00> : vector<1024x128xf32>
    %51 = tpu.matmul %49, %50, %cst_26 {dimension_numbers = #tpu.dot_dimension_numbers<[1], [0], [0], [1], [0, 0, 1, 1], [], []>} : vector<1024x256xbf16>, vector<256x128xbf16>, vector<1024x128xf32> -> vector<1024x128xf32>
    %c0_27 = arith.constant 0 : index
    %c0_28 = arith.constant 0 : index
    %52 = vector.load %arg13[%c0_27, %c0_28] : memref<1x128xf32, #tpu.memory_space<vmem>>, vector<1x128xf32>
    %53 = vector.broadcast %52 : vector<1x128xf32> to vector<1024x128xf32>
    %54 = arith.addf %51, %53 : vector<1024x128xf32>
    %cst_29 = arith.constant 0.000000e+00 : f32
    %55 = vector.broadcast %cst_29 : f32 to vector<1024x128xf32>
    %56 = arith.maximumf %54, %55 : vector<1024x128xf32>
    %cst_30 = arith.constant dense<0xFF800000> : vector<128xf32>
    %57 = vector.multi_reduction <maximumf>, %56, %cst_30 [0] : vector<1024x128xf32> to vector<128xf32>
    %58 = vector.shape_cast %57 : vector<128xf32> to vector<1x128xf32>
    %c0_i32 = arith.constant 0 : i32
    %59 = arith.cmpi eq, %arg2, %c0_i32 : i32
    %60 = arith.extui %59 : i1 to i32
    %c0_i32_31 = arith.constant 0 : i32
    %61 = arith.cmpi ne, %60, %c0_i32_31 : i32
    scf.if %61 {
      %c0_34 = arith.constant 0 : index
      %c0_35 = arith.constant 0 : index
      %c0_36 = arith.constant 0 : index
      %c0_37 = arith.constant 0 : index
      %65 = vector.load %arg14[%c0_34, %c0_35, %c0_36, %c0_37] : memref<1x1x1x128xf32, #tpu.memory_space<vmem>>, vector<1x1x1x128xf32>
      %66 = vector.shape_cast %65 : vector<1x1x1x128xf32> to vector<1x128xf32>
      %67 = vector.shape_cast %58 : vector<1x128xf32> to vector<1x1x1x128xf32>
      tpu.vector_store %arg14[%c0_34, %c0_35, %c0_36, %c0_37], %67 {strides = array<i32>} : memref<1x1x1x128xf32, #tpu.memory_space<vmem>>, vector<1x1x1x128xf32>,
    } else {
    }
    %c0_i32_32 = arith.constant 0 : i32
    %62 = arith.cmpi sgt, %arg2, %c0_i32_32 : i32
    %63 = arith.extui %62 : i1 to i32
    %c0_i32_33 = arith.constant 0 : i32
    %64 = arith.cmpi ne, %63, %c0_i32_33 : i32
    scf.if %64 {
      %c0_34 = arith.constant 0 : index
      %c0_35 = arith.constant 0 : index
      %c0_36 = arith.constant 0 : index
      %c0_37 = arith.constant 0 : index
      %65 = vector.load %arg14[%c0_34, %c0_35, %c0_36, %c0_37] : memref<1x1x1x128xf32, #tpu.memory_space<vmem>>, vector<1x1x1x128xf32>
      %66 = vector.shape_cast %65 : vector<1x1x1x128xf32> to vector<1x128xf32>
      %67 = arith.maximumf %66, %58 : vector<1x128xf32>
      %c0_38 = arith.constant 0 : index
      %c0_39 = arith.constant 0 : index
      %c0_40 = arith.constant 0 : index
      %c0_41 = arith.constant 0 : index
      %68 = vector.load %arg14[%c0_38, %c0_39, %c0_40, %c0_41] : memref<1x1x1x128xf32, #tpu.memory_space<vmem>>, vector<1x1x1x128xf32>
      %69 = vector.shape_cast %68 : vector<1x1x1x128xf32> to vector<1x128xf32>
      %70 = vector.shape_cast %67 : vector<1x128xf32> to vector<1x1x1x128xf32>
      tpu.vector_store %arg14[%c0_38, %c0_39, %c0_40, %c0_41], %70 {strides = array<i32>} : memref<1x1x1x128xf32, #tpu.memory_space<vmem>>, vector<1x1x1x128xf32>,
    } else {
    }
    return
  }
  func.func @transform_0(%arg0: i32, %arg1: i32, %arg2: i32) -> (i32, i32, i32) {
    %c2_i32 = arith.constant 2 : i32
    %0 = arith.muli %arg0, %c2_i32 : i32
    %1 = arith.addi %0, %arg2 : i32
    %c0_i32 = arith.constant 0 : i32
    %c0_i32_0 = arith.constant 0 : i32
    return %arg1, %1, %c0_i32 : i32, i32, i32
  }
  func.func @transform_1(%arg0: i32, %arg1: i32, %arg2: i32) -> (i32, i32) {
    %c0_i32 = arith.constant 0 : i32
    %c0_i32_0 = arith.constant 0 : i32
    %c0_i32_1 = arith.constant 0 : i32
    return %c0_i32, %c0_i32_0 : i32, i32
  }
  func.func @transform_2(%arg0: i32, %arg1: i32, %arg2: i32) -> (i32, i32) {
    %c0_i32 = arith.constant 0 : i32
    %c0_i32_0 = arith.constant 0 : i32
    %c0_i32_1 = arith.constant 0 : i32
    return %c0_i32, %c0_i32_0 : i32, i32
  }
  func.func @transform_3(%arg0: i32, %arg1: i32, %arg2: i32) -> (i32, i32) {
    %c0_i32 = arith.constant 0 : i32
    %c0_i32_0 = arith.constant 0 : i32
    %c0_i32_1 = arith.constant 0 : i32
    return %c0_i32, %c0_i32_0 : i32, i32
  }
  func.func @transform_4(%arg0: i32, %arg1: i32, %arg2: i32) -> (i32, i32) {
    %c0_i32 = arith.constant 0 : i32
    %c0_i32_0 = arith.constant 0 : i32
    %c0_i32_1 = arith.constant 0 : i32
    return %c0_i32, %c0_i32_0 : i32, i32
  }
  func.func @transform_5(%arg0: i32, %arg1: i32, %arg2: i32) -> (i32, i32) {
    %c0_i32 = arith.constant 0 : i32
    %c0_i32_0 = arith.constant 0 : i32
    %c0_i32_1 = arith.constant 0 : i32
    return %c0_i32, %c0_i32_0 : i32, i32
  }
  func.func @transform_6(%arg0: i32, %arg1: i32, %arg2: i32) -> (i32, i32) {
    %c0_i32 = arith.constant 0 : i32
    %c0_i32_0 = arith.constant 0 : i32
    %c0_i32_1 = arith.constant 0 : i32
    return %c0_i32, %c0_i32_0 : i32, i32
  }
  func.func @transform_7(%arg0: i32, %arg1: i32, %arg2: i32) -> (i32, i32) {
    %c0_i32 = arith.constant 0 : i32
    %c0_i32_0 = arith.constant 0 : i32
    %c0_i32_1 = arith.constant 0 : i32
    return %c0_i32, %c0_i32_0 : i32, i32
  }
  func.func @transform_8(%arg0: i32, %arg1: i32, %arg2: i32) -> (i32, i32) {
    %c0_i32 = arith.constant 0 : i32
    %c0_i32_0 = arith.constant 0 : i32
    %c0_i32_1 = arith.constant 0 : i32
    return %c0_i32, %c0_i32_0 : i32, i32
  }
  func.func @transform_9(%arg0: i32, %arg1: i32, %arg2: i32) -> (i32, i32) {
    %c0_i32 = arith.constant 0 : i32
    %c0_i32_0 = arith.constant 0 : i32
    %c0_i32_1 = arith.constant 0 : i32
    return %c0_i32, %c0_i32_0 : i32, i32
  }
  func.func @transform_10(%arg0: i32, %arg1: i32, %arg2: i32) -> (i32, i32) {
    %c0_i32 = arith.constant 0 : i32
    %c0_i32_0 = arith.constant 0 : i32
    %c0_i32_1 = arith.constant 0 : i32
    return %c0_i32, %c0_i32_0 : i32, i32
  }
  func.func @transform_11(%arg0: i32, %arg1: i32, %arg2: i32) -> (i32, i32, i32, i32) {
    %c0_i32 = arith.constant 0 : i32
    %c0_i32_0 = arith.constant 0 : i32
    %c0_i32_1 = arith.constant 0 : i32
    return %arg0, %arg1, %c0_i32, %c0_i32_0 : i32, i32, i32, i32
  }
}

</mosaic_0001>

<llo_original>
// kernel: tpu_custom_call.1
$region0: #{tpu_custom_call.1}
  #allocation0 [shape = 'u32[]', space=smem, size = 0x4, offset = 0x4, fixed_abs, tag = 'smem constant byte address 0x4 - core index']
  #allocation1 [shape = 'u32[144,128]{1,0:T(1,128)}', space=vmem, size = 0x12000, scoped, tag = 'internal scratch']
  %s0 = inlined_call_operand.vmem [shape: f32[2,2048,3], index: 0, kind: input, shape index: {}]
  %s1 = inlined_call_operand.vmem [shape: f32[3,64], index: 1, kind: input, shape index: {}]
  %s2 = inlined_call_operand.vmem [shape: f32[1,64], index: 2, kind: input, shape index: {}]
  %s3 = inlined_call_operand.vmem [shape: bf16[64,128], index: 3, kind: input, shape index: {}]
  %s4 = inlined_call_operand.vmem [shape: f32[1,128], index: 4, kind: input, shape index: {}]
  %s5 = inlined_call_operand.vmem [shape: bf16[128,128], index: 5, kind: input, shape index: {}]
  %s6 = inlined_call_operand.vmem [shape: f32[1,128], index: 6, kind: input, shape index: {}]
  %s7 = inlined_call_operand.vmem [shape: bf16[128,256], index: 7, kind: input, shape index: {}]
  %s8 = inlined_call_operand.vmem [shape: f32[1,256], index: 8, kind: input, shape index: {}]
  %s9 = inlined_call_operand.vmem [shape: bf16[256,128], index: 9, kind: input, shape index: {}]
  %s10 = inlined_call_operand.vmem [shape: f32[1,128], index: 10, kind: input, shape index: {}]
  %s11 = inlined_call_operand.hbm [shape: f32[1,2,1,128], index: 11, kind: output, shape index: {}]
  %s12 = sld [smem:[#allocation0]]
  $region85: #{tpu_custom_call.1} parent=0
    _
  %s14 = ssub.s32 1, %s12
  %s15 = scalar_select 0, %s14, %s12
  $region1: #{tpu_custom_call.1} parent=0
    #allocation2 [shape = 'u8[1024]{0}', space=vmem, size = 0x400, scoped, tag = 'output window, operand 0']
    #allocation3 [shape = 's32[2]{0}', space=sflag, size = 0x8, scoped, tag = 'scoped memory for tpu_custom_call.1']
    %16 = vsyncpa [#allocation3], 0
    %s17 = scalar_lea.sflag [#allocation3], 1
    %18 = vsyncpa %s17, 0
    loop: start=0, step=1, limit=6
    $region2: #{tpu_custom_call.1} parent=1 // loop_pre_header
      _
    $region3: #{tpu_custom_call.1} parent=1 // loop_header
      %s20 = sphi 0, %s24
      %p21 = scmp.ge.s32.totalorder %s20, 6
      %s27 = sphi 0, %s46
      %s28 = sphi 0, %s42
      %s29 = sphi 0, %s38
      %s30 = sphi 0, %s27
      %s31 = sphi 0, %s28
      %s32 = sphi 0, %s29
      %s33 = sphi 0, %s30
      %s34 = sphi 0, %s31
      %s35 = sphi 0, %s32
      %s55 = sphi 0, %s57
      %s58 = sphi 0, %s55
      %s59 = sphi 0, %s58
      %s75 = sphi 0, %s59
      %s79 = sphi 0, %s79
      %s81 = sphi 0, %s79
      %s82 = sphi 0, %s81
      %s96 = sphi 0, %s82
      %s100 = sphi 0, %s100
      %s102 = sphi 0, %s100
      %s103 = sphi 0, %s102
      %s117 = sphi 0, %s103
      %s121 = sphi 0, %s121
      %s123 = sphi 0, %s121
      %s124 = sphi 0, %s123
      %s138 = sphi 0, %s124
      %s142 = sphi 0, %s142
      %s144 = sphi 0, %s142
      %s145 = sphi 0, %s144
      %s159 = sphi 0, %s145
      %s163 = sphi 0, %s163
      %s165 = sphi 0, %s163
      %s166 = sphi 0, %s165
      %s180 = sphi 0, %s166
      %s184 = sphi 0, %s184
      %s186 = sphi 0, %s184
      %s187 = sphi 0, %s186
      %s201 = sphi 0, %s187
      %s205 = sphi 0, %s205
      %s207 = sphi 0, %s205
      %s208 = sphi 0, %s207
      %s222 = sphi 0, %s208
      %s226 = sphi 0, %s226
      %s228 = sphi 0, %s226
      %s229 = sphi 0, %s228
      %s243 = sphi 0, %s229
      %s247 = sphi 0, %s247
      %s249 = sphi 0, %s247
      %s250 = sphi 0, %s249
      %s264 = sphi 0, %s250
      %s268 = sphi 0, %s268
      %s270 = sphi 0, %s268
      %s271 = sphi 0, %s270
      %s285 = sphi 0, %s271
      %s293 = sphi 0, %s295
      %s296 = sphi 0, %s293
      %s297 = sphi 0, %s296
      %s313 = sphi 0, %s297
    $region4: #{tpu_custom_call.1} parent=1 // loop_header_branch
      %23 = sbr.rel (%p21) target = $region8
    $region5: #{tpu_custom_call.1} parent=1 // loop_body
      %s25 = ssub.s32 %s20, 1
      %s26 = ssub.s32 %s20, 2
      %s36 = sadd.s32 1, %s29
      %p37 = scmp.ge.s32.totalorder %s36, 2
      %s38 = scalar_select %p37, 0, %s36
      %s39 = sadd.s32 1, %s28
      %s40 = scalar_select %p37, %s39, %s28
      %p41 = scmp.ge.s32.totalorder %s40, 2
      %s42 = scalar_select %p41, 0, %s40
      %s43 = sadd.s32 1, %s27
      %s44 = scalar_select %p41, %s43, %s27
      %p45 = scmp.ge.s32.totalorder %s44, 1
      %s46 = scalar_select %p45, 0, %s44
      %s47 = smul.u32 %s27, 2
      %s48 = sadd.s32 %s47, %s29
      %s49 = smul.u32 %s46, 2
      %s50 = sadd.s32 %s49, %s38
      %s51 = ssub.s32 %s28, %s42
      %s52 = ssub.s32 %s48, %s50
      %s53 = sor.u32 %s51, %s52
      %p54 = scmp.eq.s32.totalorder %s53, 0
      %s56 = sadd.s32 %s55, 1
      %s57 = scalar_select %p54, %s55, %s56
      %p60 = pneg %p54
      %p61 = scmp.eq.s32.totalorder %s20, 3
      %p62 = por %p60, %p61
      %p63 = scmp.ne.s32.totalorder %s55, %s58
      %p64 = scmp.eq.s32.totalorder %s20, 0
      %p65 = por %p63, %p64
      %p66 = scmp.ne.s32.totalorder %s55, %s58
      %p67 = scmp.eq.s32.totalorder %s25, 3
      %p68 = por %p66, %p67
      %p69 = scmp.ne.s32.totalorder %s58, %s59
      %p70 = scmp.eq.s32.totalorder %s25, 0
      %p71 = por %p69, %p70
      %p72 = scmp.ne.s32.totalorder %s58, %s59
      %p73 = scmp.eq.s32.totalorder %s26, 3
      %p74 = por %p72, %p73
      %p76 = scmp.ne.s32.totalorder %s59, %s75
      %p77 = scmp.eq.s32.totalorder %s26, 0
      %p78 = por %p76, %p77
      %s80 = sadd.s32 %s79, 1
      %p83 = scmp.eq.s32.totalorder %s20, 3
      %p84 = scmp.ne.s32.totalorder %s79, %s81
      %p85 = scmp.eq.s32.totalorder %s20, 0
      %p86 = por %p84, %p85
      %p87 = scmp.ne.s32.totalorder %s79, %s81
      %p88 = scmp.eq.s32.totalorder %s25, 3
      %p89 = por %p87, %p88
      %p90 = scmp.ne.s32.totalorder %s81, %s82
      %p91 = scmp.eq.s32.totalorder %s25, 0
      %p92 = por %p90, %p91
      %p93 = scmp.ne.s32.totalorder %s81, %s82
      %p94 = scmp.eq.s32.totalorder %s26, 3
      %p95 = por %p93, %p94
      %p97 = scmp.ne.s32.totalorder %s82, %s96
      %p98 = scmp.eq.s32.totalorder %s26, 0
      %p99 = por %p97, %p98
      %s101 = sadd.s32 %s100, 1
      %p104 = scmp.eq.s32.totalorder %s20, 3
      %p105 = scmp.ne.s32.totalorder %s100, %s102
      %p106 = scmp.eq.s32.totalorder %s20, 0
      %p107 = por %p105, %p106
      %p108 = scmp.ne.s32.totalorder %s100, %s102
      %p109 = scmp.eq.s32.totalorder %s25, 3
      %p110 = por %p108, %p109
      %p111 = scmp.ne.s32.totalorder %s102, %s103
      %p112 = scmp.eq.s32.totalorder %s25, 0
      %p113 = por %p111, %p112
      %p114 = scmp.ne.s32.totalorder %s102, %s103
      %p115 = scmp.eq.s32.totalorder %s26, 3
      %p116 = por %p114, %p115
      %p118 = scmp.ne.s32.totalorder %s103, %s117
      %p119 = scmp.eq.s32.totalorder %s26, 0
      %p120 = por %p118, %p119
      %s122 = sadd.s32 %s121, 1
      %p125 = scmp.eq.s32.totalorder %s20, 3
      %p126 = scmp.ne.s32.totalorder %s121, %s123
      %p127 = scmp.eq.s32.totalorder %s20, 0
      %p128 = por %p126, %p127
      %p129 = scmp.ne.s32.totalorder %s121, %s123
      %p130 = scmp.eq.s32.totalorder %s25, 3
      %p131 = por %p129, %p130
      %p132 = scmp.ne.s32.totalorder %s123, %s124
      %p133 = scmp.eq.s32.totalorder %s25, 0
      %p134 = por %p132, %p133
      %p135 = scmp.ne.s32.totalorder %s123, %s124
      %p136 = scmp.eq.s32.totalorder %s26, 3
      %p137 = por %p135, %p136
      %p139 = scmp.ne.s32.totalorder %s124, %s138
      %p140 = scmp.eq.s32.totalorder %s26, 0
      %p141 = por %p139, %p140
      %s143 = sadd.s32 %s142, 1
      %p146 = scmp.eq.s32.totalorder %s20, 3
      %p147 = scmp.ne.s32.totalorder %s142, %s144
      %p148 = scmp.eq.s32.totalorder %s20, 0
      %p149 = por %p147, %p148
      %p150 = scmp.ne.s32.totalorder %s142, %s144
      %p151 = scmp.eq.s32.totalorder %s25, 3
      %p152 = por %p150, %p151
      %p153 = scmp.ne.s32.totalorder %s144, %s145
      %p154 = scmp.eq.s32.totalorder %s25, 0
      %p155 = por %p153, %p154
      %p156 = scmp.ne.s32.totalorder %s144, %s145
      %p157 = scmp.eq.s32.totalorder %s26, 3
      %p158 = por %p156, %p157
      %p160 = scmp.ne.s32.totalorder %s145, %s159
      %p161 = scmp.eq.s32.totalorder %s26, 0
      %p162 = por %p160, %p161
      %s164 = sadd.s32 %s163, 1
      %p167 = scmp.eq.s32.totalorder %s20, 3
      %p168 = scmp.ne.s32.totalorder %s163, %s165
      %p169 = scmp.eq.s32.totalorder %s20, 0
      %p170 = por %p168, %p169
      %p171 = scmp.ne.s32.totalorder %s163, %s165
      %p172 = scmp.eq.s32.totalorder %s25, 3
      %p173 = por %p171, %p172
      %p174 = scmp.ne.s32.totalorder %s165, %s166
      %p175 = scmp.eq.s32.totalorder %s25, 0
      %p176 = por %p174, %p175
      %p177 = scmp.ne.s32.totalorder %s165, %s166
      %p178 = scmp.eq.s32.totalorder %s26, 3
      %p179 = por %p177, %p178
      %p181 = scmp.ne.s32.totalorder %s166, %s180
      %p182 = scmp.eq.s32.totalorder %s26, 0
      %p183 = por %p181, %p182
      %s185 = sadd.s32 %s184, 1
      %p188 = scmp.eq.s32.totalorder %s20, 3
      %p189 = scmp.ne.s32.totalorder %s184, %s186
      %p190 = scmp.eq.s32.totalorder %s20, 0
      %p191 = por %p189, %p190
      %p192 = scmp.ne.s32.totalorder %s184, %s186
      %p193 = scmp.eq.s32.totalorder %s25, 3
      %p194 = por %p192, %p193
      %p195 = scmp.ne.s32.totalorder %s186, %s187
      %p196 = scmp.eq.s32.totalorder %s25, 0
      %p197 = por %p195, %p196
      %p198 = scmp.ne.s32.totalorder %s186, %s187
      %p199 = scmp.eq.s32.totalorder %s26, 3
      %p200 = por %p198, %p199
      %p202 = scmp.ne.s32.totalorder %s187, %s201
      %p203 = scmp.eq.s32.totalorder %s26, 0
      %p204 = por %p202, %p203
      %s206 = sadd.s32 %s205, 1
      %p209 = scmp.eq.s32.totalorder %s20, 3
      %p210 = scmp.ne.s32.totalorder %s205, %s207
      %p211 = scmp.eq.s32.totalorder %s20, 0
      %p212 = por %p210, %p211
      %p213 = scmp.ne.s32.totalorder %s205, %s207
      %p214 = scmp.eq.s32.totalorder %s25, 3
      %p215 = por %p213, %p214
      %p216 = scmp.ne.s32.totalorder %s207, %s208
      %p217 = scmp.eq.s32.totalorder %s25, 0
      %p218 = por %p216, %p217
      %p219 = scmp.ne.s32.totalorder %s207, %s208
      %p220 = scmp.eq.s32.totalorder %s26, 3
      %p221 = por %p219, %p220
      %p223 = scmp.ne.s32.totalorder %s208, %s222
      %p224 = scmp.eq.s32.totalorder %s26, 0
      %p225 = por %p223, %p224
      %s227 = sadd.s32 %s226, 1
      %p230 = scmp.eq.s32.totalorder %s20, 3
      %p231 = scmp.ne.s32.totalorder %s226, %s228
      %p232 = scmp.eq.s32.totalorder %s20, 0
      %p233 = por %p231, %p232
      %p234 = scmp.ne.s32.totalorder %s226, %s228
      %p235 = scmp.eq.s32.totalorder %s25, 3
      %p236 = por %p234, %p235
      %p237 = scmp.ne.s32.totalorder %s228, %s229
      %p238 = scmp.eq.s32.totalorder %s25, 0
      %p239 = por %p237, %p238
      %p240 = scmp.ne.s32.totalorder %s228, %s229
      %p241 = scmp.eq.s32.totalorder %s26, 3
      %p242 = por %p240, %p241
      %p244 = scmp.ne.s32.totalorder %s229, %s243
      %p245 = scmp.eq.s32.totalorder %s26, 0
      %p246 = por %p244, %p245
      %s248 = sadd.s32 %s247, 1
      %p251 = scmp.eq.s32.totalorder %s20, 3
      %p252 = scmp.ne.s32.totalorder %s247, %s249
      %p253 = scmp.eq.s32.totalorder %s20, 0
      %p254 = por %p252, %p253
      %p255 = scmp.ne.s32.totalorder %s247, %s249
      %p256 = scmp.eq.s32.totalorder %s25, 3
      %p257 = por %p255, %p256
      %p258 = scmp.ne.s32.totalorder %s249, %s250
      %p259 = scmp.eq.s32.totalorder %s25, 0
      %p260 = por %p258, %p259
      %p261 = scmp.ne.s32.totalorder %s249, %s250
      %p262 = scmp.eq.s32.totalorder %s26, 3
      %p263 = por %p261, %p262
      %p265 = scmp.ne.s32.totalorder %s250, %s264
      %p266 = scmp.eq.s32.totalorder %s26, 0
      %p267 = por %p265, %p266
      %s269 = sadd.s32 %s268, 1
      %p272 = scmp.eq.s32.totalorder %s20, 3
      %p273 = scmp.ne.s32.totalorder %s268, %s270
      %p274 = scmp.eq.s32.totalorder %s20, 0
      %p275 = por %p273, %p274
      %p276 = scmp.ne.s32.totalorder %s268, %s270
      %p277 = scmp.eq.s32.totalorder %s25, 3
      %p278 = por %p276, %p277
      %p279 = scmp.ne.s32.totalorder %s270, %s271
      %p280 = scmp.eq.s32.totalorder %s25, 0
      %p281 = por %p279, %p280
      %p282 = scmp.ne.s32.totalorder %s270, %s271
      %p283 = scmp.eq.s32.totalorder %s26, 3
      %p284 = por %p282, %p283
      %p286 = scmp.ne.s32.totalorder %s271, %s285
      %p287 = scmp.eq.s32.totalorder %s26, 0
      %p288 = por %p286, %p287
      %s289 = ssub.s32 %s27, %s46
      %s290 = ssub.s32 %s28, %s42
      %s291 = sor.u32 %s289, %s290
      %p292 = scmp.eq.s32.totalorder %s291, 0
      %s294 = sadd.s32 %s293, 1
      %s295 = scalar_select %p292, %s293, %s294
      %p298 = pneg %p292
      %p299 = scmp.eq.s32.totalorder %s20, 3
      %p300 = por %p298, %p299
      %p301 = scmp.ne.s32.totalorder %s293, %s296
      %p302 = scmp.eq.s32.totalorder %s20, 0
      %p303 = por %p301, %p302
      %p304 = scmp.ne.s32.totalorder %s293, %s296
      %p305 = scmp.eq.s32.totalorder %s25, 3
      %p306 = por %p304, %p305
      %p307 = scmp.ne.s32.totalorder %s296, %s297
      %p308 = scmp.eq.s32.totalorder %s25, 0
      %p309 = por %p307, %p308
      %p310 = scmp.ne.s32.totalorder %s296, %s297
      %p311 = scmp.eq.s32.totalorder %s26, 3
      %p312 = por %p310, %p311
      %p314 = scmp.ne.s32.totalorder %s297, %s313
      %p315 = scmp.eq.s32.totalorder %s26, 0
      %p316 = por %p314, %p315
      %p317 = scmp.le.s32.totalorder 1, %s20
      %p318 = scmp.lt.s32.totalorder %s20, 5
      %p319 = pnand %p317, %p318
      %p320 = pneg %p319
      // Predicated region
      $region9: #{tpu_custom_call.1} parent=5 // pred_check
        _
      $region10: #{tpu_custom_call.1} parent=5 // pred_check_branch
        %322 = sbr.rel (%p319) target = $region12
      $region11: #{tpu_custom_call.1} parent=5 // pred_region
        %s323 = ssub.s32 %s20, 1
        // Predicated region
        $region13: #{tpu_custom_call.1} parent=11 // pred_check
          %p324 = pneg %p92
        $region14: #{tpu_custom_call.1} parent=11 // pred_check_branch
          %326 = sbr.rel (%p324) target = $region16
        $region15: #{tpu_custom_call.1} parent=11 // pred_region
          _
        $region16: #{tpu_custom_call.1} parent=11 // pred_fallthru
          _
        // Predicated region
        $region17: #{tpu_custom_call.1} parent=11 // pred_check
          %p327 = pneg %p113
        $region18: #{tpu_custom_call.1} parent=11 // pred_check_branch
          %329 = sbr.rel (%p327) target = $region20
        $region19: #{tpu_custom_call.1} parent=11 // pred_region
          _
        $region20: #{tpu_custom_call.1} parent=11 // pred_fallthru
          _
        // Predicated region
        $region21: #{tpu_custom_call.1} parent=11 // pred_check
          %p330 = pneg %p134
        $region22: #{tpu_custom_call.1} parent=11 // pred_check_branch
          %332 = sbr.rel (%p330) target = $region24
        $region23: #{tpu_custom_call.1} parent=11 // pred_region
          _
        $region24: #{tpu_custom_call.1} parent=11 // pred_fallthru
          _
        // Predicated region
        $region25: #{tpu_custom_call.1} parent=11 // pred_check
          %p333 = pneg %p155
        $region26: #{tpu_custom_call.1} parent=11 // pred_check_branch
          %335 = sbr.rel (%p333) target = $region28
        $region27: #{tpu_custom_call.1} parent=11 // pred_region
          _
        $region28: #{tpu_custom_call.1} parent=11 // pred_fallthru
          _
        // Predicated region
        $region29: #{tpu_custom_call.1} parent=11 // pred_check
          %p336 = pneg %p176
        $region30: #{tpu_custom_call.1} parent=11 // pred_check_branch
          %338 = sbr.rel (%p336) target = $region32
        $region31: #{tpu_custom_call.1} parent=11 // pred_region
          _
        $region32: #{tpu_custom_call.1} parent=11 // pred_fallthru
          _
        // Predicated region
        $region33: #{tpu_custom_call.1} parent=11 // pred_check
          %p339 = pneg %p197
        $region34: #{tpu_custom_call.1} parent=11 // pred_check_branch
          %341 = sbr.rel (%p339) target = $region36
        $region35: #{tpu_custom_call.1} parent=11 // pred_region
          _
        $region36: #{tpu_custom_call.1} parent=11 // pred_fallthru
          _
        // Predicated region
        $region37: #{tpu_custom_call.1} parent=11 // pred_check
          %p342 = pneg %p218
        $region38: #{tpu_custom_call.1} parent=11 // pred_check_branch
          %344 = sbr.rel (%p342) target = $region40
        $region39: #{tpu_custom_call.1} parent=11 // pred_region
          _
        $region40: #{tpu_custom_call.1} parent=11 // pred_fallthru
          _
        // Predicated region
        $region41: #{tpu_custom_call.1} parent=11 // pred_check
          %p345 = pneg %p239
        $region42: #{tpu_custom_call.1} parent=11 // pred_check_branch
          %347 = sbr.rel (%p345) target = $region44
        $region43: #{tpu_custom_call.1} parent=11 // pred_region
          _
        $region44: #{tpu_custom_call.1} parent=11 // pred_fallthru
          _
        // Predicated region
        $region45: #{tpu_custom_call.1} parent=11 // pred_check
          %p348 = pneg %p260
        $region46: #{tpu_custom_call.1} parent=11 // pred_check_branch
          %350 = sbr.rel (%p348) target = $region48
        $region47: #{tpu_custom_call.1} parent=11 // pred_region
          _
        $region48: #{tpu_custom_call.1} parent=11 // pred_fallthru
          _
        // Predicated region
        $region49: #{tpu_custom_call.1} parent=11 // pred_check
          %p351 = pneg %p281
        $region50: #{tpu_custom_call.1} parent=11 // pred_check_branch
          %353 = sbr.rel (%p351) target = $region52
        $region51: #{tpu_custom_call.1} parent=11 // pred_region
          _
        $region52: #{tpu_custom_call.1} parent=11 // pred_fallthru
          _
      $region12: #{tpu_custom_call.1} parent=5 // pred_fallthru
        _
      %p354 = scmp.lt.s32.totalorder %s20, 4
      // Predicated region
      $region53: #{tpu_custom_call.1} parent=5 // pred_check
        %p355 = pneg %p354
      $region54: #{tpu_custom_call.1} parent=5 // pred_check_branch
        %357 = sbr.rel (%p355) target = $region56
      $region55: #{tpu_custom_call.1} parent=5 // pred_region
        // Predicated region
        $region57: #{tpu_custom_call.1} parent=55 // pred_check
          %p358 = pneg %p65
        $region58: #{tpu_custom_call.1} parent=55 // pred_check_branch
          %360 = sbr.rel (%p358) target = $region60
        $region59: #{tpu_custom_call.1} parent=55 // pred_region
          %s361 = smul.u32 %s27, 2
          %s362 = sadd.s32 %s361, %s29
          %s363 = smul.u32 128, %s362
          %p364 = scmp.lt.s32.totalorder %s28, 1
          %s365 = scalar_select %p364, %s28, 1
          %p366 = scmp.lt.s32.totalorder %s363, 255
          %s367 = scalar_select %p366, %s363, 255
          %s368 = smul.addr %s365, 256
          %s369 = sadd.s32 %s367, %s368
          %s370 = smul.addr %s369, 8
          %s371 = scalar_lea.vmem %s0, %s370
          %s372 = smul.u32 %s27, 2
          %s373 = sadd.s32 %s372, %s29
          %s374 = smul.u32 128, %s373
        $region60: #{tpu_custom_call.1} parent=55 // pred_fallthru
          _
      $region56: #{tpu_custom_call.1} parent=5 // pred_fallthru
        _
      %p375 = scmp.le.s32.totalorder 1, %s20
      %p376 = scmp.lt.s32.totalorder %s20, 5
      %p377 = pnand %p375, %p376
      %p378 = pneg %p377
      // Predicated region
      $region61: #{tpu_custom_call.1} parent=5 // pred_check
        _
      $region62: #{tpu_custom_call.1} parent=5 // pred_check_branch
        %380 = sbr.rel (%p377) target = $region64
      $region63: #{tpu_custom_call.1} parent=5 // pred_region
        %s381 = ssub.s32 %s20, 1
        %s382 = smul.u32 %s30, 2
        %s383 = sadd.s32 %s382, %s32
        %s384 = smul.u32 128, %s383
        %p385 = scmp.lt.s32.totalorder %s31, 1
        %s386 = scalar_select %p385, %s31, 1
        %p387 = scmp.lt.s32.totalorder %s384, 255
        %s388 = scalar_select %p387, %s384, 255
        %s389 = smul.addr %s386, 256
        %s390 = sadd.s32 %s388, %s389
        %s391 = smul.addr %s390, 8
        %s392 = scalar_lea.vmem %s0, %s391
        %p393 = pneg %p71
        %p394 = pneg %p68
        %p395 = pneg %p92
        %p396 = pneg %p89
        %p397 = pneg %p113
        %p398 = pneg %p110
        %p399 = pneg %p134
        %p400 = pneg %p131
        %p401 = pneg %p155
        %p402 = pneg %p152
        %p403 = pneg %p176
        %p404 = pneg %p173
        %p405 = pneg %p197
        %p406 = pneg %p194
        %p407 = pneg %p218
        %p408 = pneg %p215
        %p409 = pneg %p239
        %p410 = pneg %p236
        %p411 = pneg %p260
        %p412 = pneg %p257
        %p413 = pneg %p281
        %p414 = pneg %p278
        %p415 = pneg %p309
        %p416 = pneg %p306
        %s417 = sand.u32 %s296, 1
        %s418 = scalar_lea.sflag [#allocation3], %s417
        %s419 = sand.u32 %s296, 1
        %s420 = scalar_lea.vmem [#allocation2], %s419
        %s421 = smul.u32 %s30, 2
        %s422 = sadd.s32 %s421, %s32
        %s423 = smul.u32 128, %s422
        %p424 = scmp.lt.s32.totalorder %s31, 1
        %s425 = scalar_select %p424, %s31, 1
        %p426 = scmp.lt.s32.totalorder %s423, 255
        %s427 = scalar_select %p426, %s423, 255
        %s428 = smul.addr %s425, 256
        %s429 = sadd.s32 %s427, %s428
        %s430 = smul.addr %s429, 8
        %s431 = scalar_lea.vmem %s0, %s430
        %s432 = smul.u32 %s30, 2
        %s433 = sadd.s32 %s432, %s32
        %s434 = smul.u32 128, %s433
        %v436 = vld [vmem:[%s431] sm:$0xff]
        %v437 = vld [vmem:[%s431 + $0x8] sm:$0xff]
        %v438 = vld [vmem:[%s431 + $0x10] sm:$0xff]
        %v439 = vld [vmem:[%s431 + $0x18] sm:$0xff]
        %v440 = vld [vmem:[%s431 + $0x20] sm:$0xff]
        %v441 = vld [vmem:[%s431 + $0x28] sm:$0xff]
        %v442 = vld [vmem:[%s431 + $0x30] sm:$0xff]
        %v443 = vld [vmem:[%s431 + $0x38] sm:$0xff]
        %v444 = vld [vmem:[%s431 + $0x40] sm:$0xff]
        %v445 = vld [vmem:[%s431 + $0x48] sm:$0xff]
        %v446 = vld [vmem:[%s431 + $0x50] sm:$0xff]
        %v447 = vld [vmem:[%s431 + $0x58] sm:$0xff]
        %v448 = vld [vmem:[%s431 + $0x60] sm:$0xff]
        %v449 = vld [vmem:[%s431 + $0x68] sm:$0xff]
        %v450 = vld [vmem:[%s431 + $0x70] sm:$0xff]
        %v451 = vld [vmem:[%s431 + $0x78] sm:$0xff]
        %v452 = vld [vmem:[%s431 + $0x80] sm:$0xff]
        %v453 = vld [vmem:[%s431 + $0x88] sm:$0xff]
        %v454 = vld [vmem:[%s431 + $0x90] sm:$0xff]
        %v455 = vld [vmem:[%s431 + $0x98] sm:$0xff]
        %v456 = vld [vmem:[%s431 + $0xa0] sm:$0xff]
        %v457 = vld [vmem:[%s431 + $0xa8] sm:$0xff]
        %v458 = vld [vmem:[%s431 + $0xb0] sm:$0xff]
        %v459 = vld [vmem:[%s431 + $0xb8] sm:$0xff]
        %v460 = vld [vmem:[%s431 + $0xc0] sm:$0xff]
        %v461 = vld [vmem:[%s431 + $0xc8] sm:$0xff]
        %v462 = vld [vmem:[%s431 + $0xd0] sm:$0xff]
        %v463 = vld [vmem:[%s431 + $0xd8] sm:$0xff]
        %v464 = vld [vmem:[%s431 + $0xe0] sm:$0xff]
        %v465 = vld [vmem:[%s431 + $0xe8] sm:$0xff]
        %v466 = vld [vmem:[%s431 + $0xf0] sm:$0xff]
        %v467 = vld [vmem:[%s431 + $0xf8] sm:$0xff]
        %v468 = vld [vmem:[%s431 + $0x100] sm:$0xff]
        %v469 = vld [vmem:[%s431 + $0x108] sm:$0xff]
        %v470 = vld [vmem:[%s431 + $0x110] sm:$0xff]
        %v471 = vld [vmem:[%s431 + $0x118] sm:$0xff]
        %v472 = vld [vmem:[%s431 + $0x120] sm:$0xff]
        %v473 = vld [vmem:[%s431 + $0x128] sm:$0xff]
        %v474 = vld [vmem:[%s431 + $0x130] sm:$0xff]
        %v475 = vld [vmem:[%s431 + $0x138] sm:$0xff]
        %v476 = vld [vmem:[%s431 + $0x140] sm:$0xff]
        %v477 = vld [vmem:[%s431 + $0x148] sm:$0xff]
        %v478 = vld [vmem:[%s431 + $0x150] sm:$0xff]
        %v479 = vld [vmem:[%s431 + $0x158] sm:$0xff]
        %v480 = vld [vmem:[%s431 + $0x160] sm:$0xff]
        %v481 = vld [vmem:[%s431 + $0x168] sm:$0xff]
        %v482 = vld [vmem:[%s431 + $0x170] sm:$0xff]
        %v483 = vld [vmem:[%s431 + $0x178] sm:$0xff]
        %v484 = vld [vmem:[%s431 + $0x180] sm:$0xff]
        %v485 = vld [vmem:[%s431 + $0x188] sm:$0xff]
        %v486 = vld [vmem:[%s431 + $0x190] sm:$0xff]
        %v487 = vld [vmem:[%s431 + $0x198] sm:$0xff]
        %v488 = vld [vmem:[%s431 + $0x1a0] sm:$0xff]
        %v489 = vld [vmem:[%s431 + $0x1a8] sm:$0xff]
        %v490 = vld [vmem:[%s431 + $0x1b0] sm:$0xff]
        %v491 = vld [vmem:[%s431 + $0x1b8] sm:$0xff]
        %v492 = vld [vmem:[%s431 + $0x1c0] sm:$0xff]
        %v493 = vld [vmem:[%s431 + $0x1c8] sm:$0xff]
        %v494 = vld [vmem:[%s431 + $0x1d0] sm:$0xff]
        %v495 = vld [vmem:[%s431 + $0x1d8] sm:$0xff]
        %v496 = vld [vmem:[%s431 + $0x1e0] sm:$0xff]
        %v497 = vld [vmem:[%s431 + $0x1e8] sm:$0xff]
        %v498 = vld [vmem:[%s431 + $0x1f0] sm:$0xff]
        %v499 = vld [vmem:[%s431 + $0x1f8] sm:$0xff]
        %v500 = vld [vmem:[%s431 + $0x200] sm:$0xff]
        %v501 = vld [vmem:[%s431 + $0x208] sm:$0xff]
        %v502 = vld [vmem:[%s431 + $0x210] sm:$0xff]
        %v503 = vld [vmem:[%s431 + $0x218] sm:$0xff]
        %v504 = vld [vmem:[%s431 + $0x220] sm:$0xff]
        %v505 = vld [vmem:[%s431 + $0x228] sm:$0xff]
        %v506 = vld [vmem:[%s431 + $0x230] sm:$0xff]
        %v507 = vld [vmem:[%s431 + $0x238] sm:$0xff]
        %v508 = vld [vmem:[%s431 + $0x240] sm:$0xff]
        %v509 = vld [vmem:[%s431 + $0x248] sm:$0xff]
        %v510 = vld [vmem:[%s431 + $0x250] sm:$0xff]
        %v511 = vld [vmem:[%s431 + $0x258] sm:$0xff]
        %v512 = vld [vmem:[%s431 + $0x260] sm:$0xff]
        %v513 = vld [vmem:[%s431 + $0x268] sm:$0xff]
        %v514 = vld [vmem:[%s431 + $0x270] sm:$0xff]
        %v515 = vld [vmem:[%s431 + $0x278] sm:$0xff]
        %v516 = vld [vmem:[%s431 + $0x280] sm:$0xff]
        %v517 = vld [vmem:[%s431 + $0x288] sm:$0xff]
        %v518 = vld [vmem:[%s431 + $0x290] sm:$0xff]
        %v519 = vld [vmem:[%s431 + $0x298] sm:$0xff]
        %v520 = vld [vmem:[%s431 + $0x2a0] sm:$0xff]
        %v521 = vld [vmem:[%s431 + $0x2a8] sm:$0xff]
        %v522 = vld [vmem:[%s431 + $0x2b0] sm:$0xff]
        %v523 = vld [vmem:[%s431 + $0x2b8] sm:$0xff]
        %v524 = vld [vmem:[%s431 + $0x2c0] sm:$0xff]
        %v525 = vld [vmem:[%s431 + $0x2c8] sm:$0xff]
        %v526 = vld [vmem:[%s431 + $0x2d0] sm:$0xff]
        %v527 = vld [vmem:[%s431 + $0x2d8] sm:$0xff]
        %v528 = vld [vmem:[%s431 + $0x2e0] sm:$0xff]
        %v529 = vld [vmem:[%s431 + $0x2e8] sm:$0xff]
        %v530 = vld [vmem:[%s431 + $0x2f0] sm:$0xff]
        %v531 = vld [vmem:[%s431 + $0x2f8] sm:$0xff]
        %v532 = vld [vmem:[%s431 + $0x300] sm:$0xff]
        %v533 = vld [vmem:[%s431 + $0x308] sm:$0xff]
        %v534 = vld [vmem:[%s431 + $0x310] sm:$0xff]
        %v535 = vld [vmem:[%s431 + $0x318] sm:$0xff]
        %v536 = vld [vmem:[%s431 + $0x320] sm:$0xff]
        %v537 = vld [vmem:[%s431 + $0x328] sm:$0xff]
        %v538 = vld [vmem:[%s431 + $0x330] sm:$0xff]
        %v539 = vld [vmem:[%s431 + $0x338] sm:$0xff]
        %v540 = vld [vmem:[%s431 + $0x340] sm:$0xff]
        %v541 = vld [vmem:[%s431 + $0x348] sm:$0xff]
        %v542 = vld [vmem:[%s431 + $0x350] sm:$0xff]
        %v543 = vld [vmem:[%s431 + $0x358] sm:$0xff]
        %v544 = vld [vmem:[%s431 + $0x360] sm:$0xff]
        %v545 = vld [vmem:[%s431 + $0x368] sm:$0xff]
        %v546 = vld [vmem:[%s431 + $0x370] sm:$0xff]
        %v547 = vld [vmem:[%s431 + $0x378] sm:$0xff]
        %v548 = vld [vmem:[%s431 + $0x380] sm:$0xff]
        %v549 = vld [vmem:[%s431 + $0x388] sm:$0xff]
        %v550 = vld [vmem:[%s431 + $0x390] sm:$0xff]
        %v551 = vld [vmem:[%s431 + $0x398] sm:$0xff]
        %v552 = vld [vmem:[%s431 + $0x3a0] sm:$0xff]
        %v553 = vld [vmem:[%s431 + $0x3a8] sm:$0xff]
        %v554 = vld [vmem:[%s431 + $0x3b0] sm:$0xff]
        %v555 = vld [vmem:[%s431 + $0x3b8] sm:$0xff]
        %v556 = vld [vmem:[%s431 + $0x3c0] sm:$0xff]
        %v557 = vld [vmem:[%s431 + $0x3c8] sm:$0xff]
        %v558 = vld [vmem:[%s431 + $0x3d0] sm:$0xff]
        %v559 = vld [vmem:[%s431 + $0x3d8] sm:$0xff]
        %v560 = vld [vmem:[%s431 + $0x3e0] sm:$0xff]
        %v561 = vld [vmem:[%s431 + $0x3e8] sm:$0xff]
        %v562 = vld [vmem:[%s431 + $0x3f0] sm:$0xff]
        %v563 = vld [vmem:[%s431 + $0x3f8] sm:$0xff]
        %v564 = vld [vmem:[%s1] sm:$0x7]
        %566 = vset.pattern.permute.xlu0 0
        %567 = vperm.xlu0 %566, %v436
        %v568 = vpop.permute.xlu0 %567
        %571 = vset.pattern.permute.xlu0 0
        %572 = vperm.xlu0 %571, %v437
        %v573 = vpop.permute.xlu0 %572
        %576 = vset.pattern.permute.xlu0 0
        %577 = vperm.xlu0 %576, %v438
        %v578 = vpop.permute.xlu0 %577
        %581 = vset.pattern.permute.xlu0 0
        %582 = vperm.xlu0 %581, %v439
        %v583 = vpop.permute.xlu0 %582
        %586 = vset.pattern.permute.xlu0 0
        %587 = vperm.xlu0 %586, %v440
        %v588 = vpop.permute.xlu0 %587
        %591 = vset.pattern.permute.xlu0 0
        %592 = vperm.xlu0 %591, %v441
        %v593 = vpop.permute.xlu0 %592
        %596 = vset.pattern.permute.xlu0 0
        %597 = vperm.xlu0 %596, %v442
        %v598 = vpop.permute.xlu0 %597
        %601 = vset.pattern.permute.xlu0 0
        %602 = vperm.xlu0 %601, %v443
        %v603 = vpop.permute.xlu0 %602
        %606 = vset.pattern.permute.xlu0 0
        %607 = vperm.xlu0 %606, %v444
        %v608 = vpop.permute.xlu0 %607
        %611 = vset.pattern.permute.xlu0 0
        %612 = vperm.xlu0 %611, %v445
        %v613 = vpop.permute.xlu0 %612
        %616 = vset.pattern.permute.xlu0 0
        %617 = vperm.xlu0 %616, %v446
        %v618 = vpop.permute.xlu0 %617
        %621 = vset.pattern.permute.xlu0 0
        %622 = vperm.xlu0 %621, %v447
        %v623 = vpop.permute.xlu0 %622
        %626 = vset.pattern.permute.xlu0 0
        %627 = vperm.xlu0 %626, %v448
        %v628 = vpop.permute.xlu0 %627
        %631 = vset.pattern.permute.xlu0 0
        %632 = vperm.xlu0 %631, %v449
        %v633 = vpop.permute.xlu0 %632
        %636 = vset.pattern.permute.xlu0 0
        %637 = vperm.xlu0 %636, %v450
        %v638 = vpop.permute.xlu0 %637
        %641 = vset.pattern.permute.xlu0 0
        %642 = vperm.xlu0 %641, %v451
        %v643 = vpop.permute.xlu0 %642
        %646 = vset.pattern.permute.xlu0 0
        %647 = vperm.xlu0 %646, %v452
        %v648 = vpop.permute.xlu0 %647
        %651 = vset.pattern.permute.xlu0 0
        %652 = vperm.xlu0 %651, %v453
        %v653 = vpop.permute.xlu0 %652
        %656 = vset.pattern.permute.xlu0 0
        %657 = vperm.xlu0 %656, %v454
        %v658 = vpop.permute.xlu0 %657
        %661 = vset.pattern.permute.xlu0 0
        %662 = vperm.xlu0 %661, %v455
        %v663 = vpop.permute.xlu0 %662
        %666 = vset.pattern.permute.xlu0 0
        %667 = vperm.xlu0 %666, %v456
        %v668 = vpop.permute.xlu0 %667
        %671 = vset.pattern.permute.xlu0 0
        %672 = vperm.xlu0 %671, %v457
        %v673 = vpop.permute.xlu0 %672
        %676 = vset.pattern.permute.xlu0 0
        %677 = vperm.xlu0 %676, %v458
        %v678 = vpop.permute.xlu0 %677
        %681 = vset.pattern.permute.xlu0 0
        %682 = vperm.xlu0 %681, %v459
        %v683 = vpop.permute.xlu0 %682
        %686 = vset.pattern.permute.xlu0 0
        %687 = vperm.xlu0 %686, %v460
        %v688 = vpop.permute.xlu0 %687
        %691 = vset.pattern.permute.xlu0 0
        %692 = vperm.xlu0 %691, %v461
        %v693 = vpop.permute.xlu0 %692
        %696 = vset.pattern.permute.xlu0 0
        %697 = vperm.xlu0 %696, %v462
        %v698 = vpop.permute.xlu0 %697
        %701 = vset.pattern.permute.xlu0 0
        %702 = vperm.xlu0 %701, %v463
        %v703 = vpop.permute.xlu0 %702
        %706 = vset.pattern.permute.xlu0 0
        %707 = vperm.xlu0 %706, %v464
        %v708 = vpop.permute.xlu0 %707
        %711 = vset.pattern.permute.xlu0 0
        %712 = vperm.xlu0 %711, %v465
        %v713 = vpop.permute.xlu0 %712
        %716 = vset.pattern.permute.xlu0 0
        %717 = vperm.xlu0 %716, %v466
        %v718 = vpop.permute.xlu0 %717
        %721 = vset.pattern.permute.xlu0 0
        %722 = vperm.xlu0 %721, %v467
        %v723 = vpop.permute.xlu0 %722
        %726 = vset.pattern.permute.xlu0 0
        %727 = vperm.xlu0 %726, %v468
        %v728 = vpop.permute.xlu0 %727
        %731 = vset.pattern.permute.xlu0 0
        %732 = vperm.xlu0 %731, %v469
        %v733 = vpop.permute.xlu0 %732
        %736 = vset.pattern.permute.xlu0 0
        %737 = vperm.xlu0 %736, %v470
        %v738 = vpop.permute.xlu0 %737
        %741 = vset.pattern.permute.xlu0 0
        %742 = vperm.xlu0 %741, %v471
        %v743 = vpop.permute.xlu0 %742
        %746 = vset.pattern.permute.xlu0 0
        %747 = vperm.xlu0 %746, %v472
        %v748 = vpop.permute.xlu0 %747
        %751 = vset.pattern.permute.xlu0 0
        %752 = vperm.xlu0 %751, %v473
        %v753 = vpop.permute.xlu0 %752
        %756 = vset.pattern.permute.xlu0 0
        %757 = vperm.xlu0 %756, %v474
        %v758 = vpop.permute.xlu0 %757
        %761 = vset.pattern.permute.xlu0 0
        %762 = vperm.xlu0 %761, %v475
        %v763 = vpop.permute.xlu0 %762
        %766 = vset.pattern.permute.xlu0 0
        %767 = vperm.xlu0 %766, %v476
        %v768 = vpop.permute.xlu0 %767
        %771 = vset.pattern.permute.xlu0 0
        %772 = vperm.xlu0 %771, %v477
        %v773 = vpop.permute.xlu0 %772
        %776 = vset.pattern.permute.xlu0 0
        %777 = vperm.xlu0 %776, %v478
        %v778 = vpop.permute.xlu0 %777
        %781 = vset.pattern.permute.xlu0 0
        %782 = vperm.xlu0 %781, %v479
        %v783 = vpop.permute.xlu0 %782
        %786 = vset.pattern.permute.xlu0 0
        %787 = vperm.xlu0 %786, %v480
        %v788 = vpop.permute.xlu0 %787
        %791 = vset.pattern.permute.xlu0 0
        %792 = vperm.xlu0 %791, %v481
        %v793 = vpop.permute.xlu0 %792
        %796 = vset.pattern.permute.xlu0 0
        %797 = vperm.xlu0 %796, %v482
        %v798 = vpop.permute.xlu0 %797
        %801 = vset.pattern.permute.xlu0 0
        %802 = vperm.xlu0 %801, %v483
        %v803 = vpop.permute.xlu0 %802
        %806 = vset.pattern.permute.xlu0 0
        %807 = vperm.xlu0 %806, %v484
        %v808 = vpop.permute.xlu0 %807
        %811 = vset.pattern.permute.xlu0 0
        %812 = vperm.xlu0 %811, %v485
        %v813 = vpop.permute.xlu0 %812
        %816 = vset.pattern.permute.xlu0 0
        %817 = vperm.xlu0 %816, %v486
        %v818 = vpop.permute.xlu0 %817
        %821 = vset.pattern.permute.xlu0 0
        %822 = vperm.xlu0 %821, %v487
        %v823 = vpop.permute.xlu0 %822
        %826 = vset.pattern.permute.xlu0 0
        %827 = vperm.xlu0 %826, %v488
        %v828 = vpop.permute.xlu0 %827
        %831 = vset.pattern.permute.xlu0 0
        %832 = vperm.xlu0 %831, %v489
        %v833 = vpop.permute.xlu0 %832
        %836 = vset.pattern.permute.xlu0 0
        %837 = vperm.xlu0 %836, %v490
        %v838 = vpop.permute.xlu0 %837
        %841 = vset.pattern.permute.xlu0 0
        %842 = vperm.xlu0 %841, %v491
        %v843 = vpop.permute.xlu0 %842
        %846 = vset.pattern.permute.xlu0 0
        %847 = vperm.xlu0 %846, %v492
        %v848 = vpop.permute.xlu0 %847
        %851 = vset.pattern.permute.xlu0 0
        %852 = vperm.xlu0 %851, %v493
        %v853 = vpop.permute.xlu0 %852
        %856 = vset.pattern.permute.xlu0 0
        %857 = vperm.xlu0 %856, %v494
        %v858 = vpop.permute.xlu0 %857
        %861 = vset.pattern.permute.xlu0 0
        %862 = vperm.xlu0 %861, %v495
        %v863 = vpop.permute.xlu0 %862
        %866 = vset.pattern.permute.xlu0 0
        %867 = vperm.xlu0 %866, %v496
        %v868 = vpop.permute.xlu0 %867
        %871 = vset.pattern.permute.xlu0 0
        %872 = vperm.xlu0 %871, %v497
        %v873 = vpop.permute.xlu0 %872
        %876 = vset.pattern.permute.xlu0 0
        %877 = vperm.xlu0 %876, %v498
        %v878 = vpop.permute.xlu0 %877
        %881 = vset.pattern.permute.xlu0 0
        %882 = vperm.xlu0 %881, %v499
        %v883 = vpop.permute.xlu0 %882
        %886 = vset.pattern.permute.xlu0 0
        %887 = vperm.xlu0 %886, %v500
        %v888 = vpop.permute.xlu0 %887
        %891 = vset.pattern.permute.xlu0 0
        %892 = vperm.xlu0 %891, %v501
        %v893 = vpop.permute.xlu0 %892
        %896 = vset.pattern.permute.xlu0 0
        %897 = vperm.xlu0 %896, %v502
        %v898 = vpop.permute.xlu0 %897
        %901 = vset.pattern.permute.xlu0 0
        %902 = vperm.xlu0 %901, %v503
        %v903 = vpop.permute.xlu0 %902
        %906 = vset.pattern.permute.xlu0 0
        %907 = vperm.xlu0 %906, %v504
        %v908 = vpop.permute.xlu0 %907
        %911 = vset.pattern.permute.xlu0 0
        %912 = vperm.xlu0 %911, %v505
        %v913 = vpop.permute.xlu0 %912
        %916 = vset.pattern.permute.xlu0 0
        %917 = vperm.xlu0 %916, %v506
        %v918 = vpop.permute.xlu0 %917
        %921 = vset.pattern.permute.xlu0 0
        %922 = vperm.xlu0 %921, %v507
        %v923 = vpop.permute.xlu0 %922
        %926 = vset.pattern.permute.xlu0 0
        %927 = vperm.xlu0 %926, %v508
        %v928 = vpop.permute.xlu0 %927
        %931 = vset.pattern.permute.xlu0 0
        %932 = vperm.xlu0 %931, %v509
        %v933 = vpop.permute.xlu0 %932
        %936 = vset.pattern.permute.xlu0 0
        %937 = vperm.xlu0 %936, %v510
        %v938 = vpop.permute.xlu0 %937
        %941 = vset.pattern.permute.xlu0 0
        %942 = vperm.xlu0 %941, %v511
        %v943 = vpop.permute.xlu0 %942
        %946 = vset.pattern.permute.xlu0 0
        %947 = vperm.xlu0 %946, %v512
        %v948 = vpop.permute.xlu0 %947
        %951 = vset.pattern.permute.xlu0 0
        %952 = vperm.xlu0 %951, %v513
        %v953 = vpop.permute.xlu0 %952
        %956 = vset.pattern.permute.xlu0 0
        %957 = vperm.xlu0 %956, %v514
        %v958 = vpop.permute.xlu0 %957
        %961 = vset.pattern.permute.xlu0 0
        %962 = vperm.xlu0 %961, %v515
        %v963 = vpop.permute.xlu0 %962
        %966 = vset.pattern.permute.xlu0 0
        %967 = vperm.xlu0 %966, %v516
        %v968 = vpop.permute.xlu0 %967
        %971 = vset.pattern.permute.xlu0 0
        %972 = vperm.xlu0 %971, %v517
        %v973 = vpop.permute.xlu0 %972
        %976 = vset.pattern.permute.xlu0 0
        %977 = vperm.xlu0 %976, %v518
        %v978 = vpop.permute.xlu0 %977
        %981 = vset.pattern.permute.xlu0 0
        %982 = vperm.xlu0 %981, %v519
        %v983 = vpop.permute.xlu0 %982
        %986 = vset.pattern.permute.xlu0 0
        %987 = vperm.xlu0 %986, %v520
        %v988 = vpop.permute.xlu0 %987
        %991 = vset.pattern.permute.xlu0 0
        %992 = vperm.xlu0 %991, %v521
        %v993 = vpop.permute.xlu0 %992
        %996 = vset.pattern.permute.xlu0 0
        %997 = vperm.xlu0 %996, %v522
        %v998 = vpop.permute.xlu0 %997
        %1001 = vset.pattern.permute.xlu0 0
        %1002 = vperm.xlu0 %1001, %v523
        %v1003 = vpop.permute.xlu0 %1002
        %1006 = vset.pattern.permute.xlu0 0
        %1007 = vperm.xlu0 %1006, %v524
        %v1008 = vpop.permute.xlu0 %1007
        %1011 = vset.pattern.permute.xlu0 0
        %1012 = vperm.xlu0 %1011, %v525
        %v1013 = vpop.permute.xlu0 %1012
        %1016 = vset.pattern.permute.xlu0 0
        %1017 = vperm.xlu0 %1016, %v526
        %v1018 = vpop.permute.xlu0 %1017
        %1021 = vset.pattern.permute.xlu0 0
        %1022 = vperm.xlu0 %1021, %v527
        %v1023 = vpop.permute.xlu0 %1022
        %1026 = vset.pattern.permute.xlu0 0
        %1027 = vperm.xlu0 %1026, %v528
        %v1028 = vpop.permute.xlu0 %1027
        %1031 = vset.pattern.permute.xlu0 0
        %1032 = vperm.xlu0 %1031, %v529
        %v1033 = vpop.permute.xlu0 %1032
        %1036 = vset.pattern.permute.xlu0 0
        %1037 = vperm.xlu0 %1036, %v530
        %v1038 = vpop.permute.xlu0 %1037
        %1041 = vset.pattern.permute.xlu0 0
        %1042 = vperm.xlu0 %1041, %v531
        %v1043 = vpop.permute.xlu0 %1042
        %1046 = vset.pattern.permute.xlu0 0
        %1047 = vperm.xlu0 %1046, %v532
        %v1048 = vpop.permute.xlu0 %1047
        %1051 = vset.pattern.permute.xlu0 0
        %1052 = vperm.xlu0 %1051, %v533
        %v1053 = vpop.permute.xlu0 %1052
        %1056 = vset.pattern.permute.xlu0 0
        %1057 = vperm.xlu0 %1056, %v534
        %v1058 = vpop.permute.xlu0 %1057
        %1061 = vset.pattern.permute.xlu0 0
        %1062 = vperm.xlu0 %1061, %v535
        %v1063 = vpop.permute.xlu0 %1062
        %1066 = vset.pattern.permute.xlu0 0
        %1067 = vperm.xlu0 %1066, %v536
        %v1068 = vpop.permute.xlu0 %1067
        %1071 = vset.pattern.permute.xlu0 0
        %1072 = vperm.xlu0 %1071, %v537
        %v1073 = vpop.permute.xlu0 %1072
        %1076 = vset.pattern.permute.xlu0 0
        %1077 = vperm.xlu0 %1076, %v538
        %v1078 = vpop.permute.xlu0 %1077
        %1081 = vset.pattern.permute.xlu0 0
        %1082 = vperm.xlu0 %1081, %v539
        %v1083 = vpop.permute.xlu0 %1082
        %1086 = vset.pattern.permute.xlu0 0
        %1087 = vperm.xlu0 %1086, %v540
        %v1088 = vpop.permute.xlu0 %1087
        %1091 = vset.pattern.permute.xlu0 0
        %1092 = vperm.xlu0 %1091, %v541
        %v1093 = vpop.permute.xlu0 %1092
        %1096 = vset.pattern.permute.xlu0 0
        %1097 = vperm.xlu0 %1096, %v542
        %v1098 = vpop.permute.xlu0 %1097
        %1101 = vset.pattern.permute.xlu0 0
        %1102 = vperm.xlu0 %1101, %v543
        %v1103 = vpop.permute.xlu0 %1102
        %1106 = vset.pattern.permute.xlu0 0
        %1107 = vperm.xlu0 %1106, %v544
        %v1108 = vpop.permute.xlu0 %1107
        %1111 = vset.pattern.permute.xlu0 0
        %1112 = vperm.xlu0 %1111, %v545
        %v1113 = vpop.permute.xlu0 %1112
        %1116 = vset.pattern.permute.xlu0 0
        %1117 = vperm.xlu0 %1116, %v546
        %v1118 = vpop.permute.xlu0 %1117
        %1121 = vset.pattern.permute.xlu0 0
        %1122 = vperm.xlu0 %1121, %v547
        %v1123 = vpop.permute.xlu0 %1122
        %1126 = vset.pattern.permute.xlu0 0
        %1127 = vperm.xlu0 %1126, %v548
        %v1128 = vpop.permute.xlu0 %1127
        %1131 = vset.pattern.permute.xlu0 0
        %1132 = vperm.xlu0 %1131, %v549
        %v1133 = vpop.permute.xlu0 %1132
        %1136 = vset.pattern.permute.xlu0 0
        %1137 = vperm.xlu0 %1136, %v550
        %v1138 = vpop.permute.xlu0 %1137
        %1141 = vset.pattern.permute.xlu0 0
        %1142 = vperm.xlu0 %1141, %v551
        %v1143 = vpop.permute.xlu0 %1142
        %1146 = vset.pattern.permute.xlu0 0
        %1147 = vperm.xlu0 %1146, %v552
        %v1148 = vpop.permute.xlu0 %1147
        %1151 = vset.pattern.permute.xlu0 0
        %1152 = vperm.xlu0 %1151, %v553
        %v1153 = vpop.permute.xlu0 %1152
        %1156 = vset.pattern.permute.xlu0 0
        %1157 = vperm.xlu0 %1156, %v554
        %v1158 = vpop.permute.xlu0 %1157
        %1161 = vset.pattern.permute.xlu0 0
        %1162 = vperm.xlu0 %1161, %v555
        %v1163 = vpop.permute.xlu0 %1162
        %1166 = vset.pattern.permute.xlu0 0
        %1167 = vperm.xlu0 %1166, %v556
        %v1168 = vpop.permute.xlu0 %1167
        %1171 = vset.pattern.permute.xlu0 0
        %1172 = vperm.xlu0 %1171, %v557
        %v1173 = vpop.permute.xlu0 %1172
        %1176 = vset.pattern.permute.xlu0 0
        %1177 = vperm.xlu0 %1176, %v558
        %v1178 = vpop.permute.xlu0 %1177
        %1181 = vset.pattern.permute.xlu0 0
        %1182 = vperm.xlu0 %1181, %v559
        %v1183 = vpop.permute.xlu0 %1182
        %1186 = vset.pattern.permute.xlu0 0
        %1187 = vperm.xlu0 %1186, %v560
        %v1188 = vpop.permute.xlu0 %1187
        %1191 = vset.pattern.permute.xlu0 0
        %1192 = vperm.xlu0 %1191, %v561
        %v1193 = vpop.permute.xlu0 %1192
        %1196 = vset.pattern.permute.xlu0 0
        %1197 = vperm.xlu0 %1196, %v562
        %v1198 = vpop.permute.xlu0 %1197
        %1201 = vset.pattern.permute.xlu0 0
        %1202 = vperm.xlu0 %1201, %v563
        %v1203 = vpop.permute.xlu0 %1202
        %v1205 = vlaneseq
        %v1206 = vshrl.u32 %v1205, 7
        %v1207 = vsub.s32 0, %v1206
        %v1208 = vrot.slane %v564, %v1207
        %v1209 = vmul.f32 %v568, %v1208
        %v1210 = vmul.f32 %v573, %v1208
        %v1211 = vmul.f32 %v578, %v1208
        %v1212 = vmul.f32 %v583, %v1208
        %v1213 = vmul.f32 %v588, %v1208
        %v1214 = vmul.f32 %v593, %v1208
        %v1215 = vmul.f32 %v598, %v1208
        %v1216 = vmul.f32 %v603, %v1208
        %v1217 = vmul.f32 %v608, %v1208
        %v1218 = vmul.f32 %v613, %v1208
        %v1219 = vmul.f32 %v618, %v1208
        %v1220 = vmul.f32 %v623, %v1208
        %v1221 = vmul.f32 %v628, %v1208
        %v1222 = vmul.f32 %v633, %v1208
        %v1223 = vmul.f32 %v638, %v1208
        %v1224 = vmul.f32 %v643, %v1208
        %v1225 = vmul.f32 %v648, %v1208
        %v1226 = vmul.f32 %v653, %v1208
        %v1227 = vmul.f32 %v658, %v1208
        %v1228 = vmul.f32 %v663, %v1208
        %v1229 = vmul.f32 %v668, %v1208
        %v1230 = vmul.f32 %v673, %v1208
        %v1231 = vmul.f32 %v678, %v1208
        %v1232 = vmul.f32 %v683, %v1208
        %v1233 = vmul.f32 %v688, %v1208
        %v1234 = vmul.f32 %v693, %v1208
        %v1235 = vmul.f32 %v698, %v1208
        %v1236 = vmul.f32 %v703, %v1208
        %v1237 = vmul.f32 %v708, %v1208
        %v1238 = vmul.f32 %v713, %v1208
        %v1239 = vmul.f32 %v718, %v1208
        %v1240 = vmul.f32 %v723, %v1208
        %v1241 = vmul.f32 %v728, %v1208
        %v1242 = vmul.f32 %v733, %v1208
        %v1243 = vmul.f32 %v738, %v1208
        %v1244 = vmul.f32 %v743, %v1208
        %v1245 = vmul.f32 %v748, %v1208
        %v1246 = vmul.f32 %v753, %v1208
        %v1247 = vmul.f32 %v758, %v1208
        %v1248 = vmul.f32 %v763, %v1208
        %v1249 = vmul.f32 %v768, %v1208
        %v1250 = vmul.f32 %v773, %v1208
        %v1251 = vmul.f32 %v778, %v1208
        %v1252 = vmul.f32 %v783, %v1208
        %v1253 = vmul.f32 %v788, %v1208
        %v1254 = vmul.f32 %v793, %v1208
        %v1255 = vmul.f32 %v798, %v1208
        %v1256 = vmul.f32 %v803, %v1208
        %v1257 = vmul.f32 %v808, %v1208
        %v1258 = vmul.f32 %v813, %v1208
        %v1259 = vmul.f32 %v818, %v1208
        %v1260 = vmul.f32 %v823, %v1208
        %v1261 = vmul.f32 %v828, %v1208
        %v1262 = vmul.f32 %v833, %v1208
        %v1263 = vmul.f32 %v838, %v1208
        %v1264 = vmul.f32 %v843, %v1208
        %v1265 = vmul.f32 %v848, %v1208
        %v1266 = vmul.f32 %v853, %v1208
        %v1267 = vmul.f32 %v858, %v1208
        %v1268 = vmul.f32 %v863, %v1208
        %v1269 = vmul.f32 %v868, %v1208
        %v1270 = vmul.f32 %v873, %v1208
        %v1271 = vmul.f32 %v878, %v1208
        %v1272 = vmul.f32 %v883, %v1208
        %v1273 = vmul.f32 %v888, %v1208
        %v1274 = vmul.f32 %v893, %v1208
        %v1275 = vmul.f32 %v898, %v1208
        %v1276 = vmul.f32 %v903, %v1208
        %v1277 = vmul.f32 %v908, %v1208
        %v1278 = vmul.f32 %v913, %v1208
        %v1279 = vmul.f32 %v918, %v1208
        %v1280 = vmul.f32 %v923, %v1208
        %v1281 = vmul.f32 %v928, %v1208
        %v1282 = vmul.f32 %v933, %v1208
        %v1283 = vmul.f32 %v938, %v1208
        %v1284 = vmul.f32 %v943, %v1208
        %v1285 = vmul.f32 %v948, %v1208
        %v1286 = vmul.f32 %v953, %v1208
        %v1287 = vmul.f32 %v958, %v1208
        %v1288 = vmul.f32 %v963, %v1208
        %v1289 = vmul.f32 %v968, %v1208
        %v1290 = vmul.f32 %v973, %v1208
        %v1291 = vmul.f32 %v978, %v1208
        %v1292 = vmul.f32 %v983, %v1208
        %v1293 = vmul.f32 %v988, %v1208
        %v1294 = vmul.f32 %v993, %v1208
        %v1295 = vmul.f32 %v998, %v1208
        %v1296 = vmul.f32 %v1003, %v1208
        %v1297 = vmul.f32 %v1008, %v1208
        %v1298 = vmul.f32 %v1013, %v1208
        %v1299 = vmul.f32 %v1018, %v1208
        %v1300 = vmul.f32 %v1023, %v1208
        %v1301 = vmul.f32 %v1028, %v1208
        %v1302 = vmul.f32 %v1033, %v1208
        %v1303 = vmul.f32 %v1038, %v1208
        %v1304 = vmul.f32 %v1043, %v1208
        %v1305 = vmul.f32 %v1048, %v1208
        %v1306 = vmul.f32 %v1053, %v1208
        %v1307 = vmul.f32 %v1058, %v1208
        %v1308 = vmul.f32 %v1063, %v1208
        %v1309 = vmul.f32 %v1068, %v1208
        %v1310 = vmul.f32 %v1073, %v1208
        %v1311 = vmul.f32 %v1078, %v1208
        %v1312 = vmul.f32 %v1083, %v1208
        %v1313 = vmul.f32 %v1088, %v1208
        %v1314 = vmul.f32 %v1093, %v1208
        %v1315 = vmul.f32 %v1098, %v1208
        %v1316 = vmul.f32 %v1103, %v1208
        %v1317 = vmul.f32 %v1108, %v1208
        %v1318 = vmul.f32 %v1113, %v1208
        %v1319 = vmul.f32 %v1118, %v1208
        %v1320 = vmul.f32 %v1123, %v1208
        %v1321 = vmul.f32 %v1128, %v1208
        %v1322 = vmul.f32 %v1133, %v1208
        %v1323 = vmul.f32 %v1138, %v1208
        %v1324 = vmul.f32 %v1143, %v1208
        %v1325 = vmul.f32 %v1148, %v1208
        %v1326 = vmul.f32 %v1153, %v1208
        %v1327 = vmul.f32 %v1158, %v1208
        %v1328 = vmul.f32 %v1163, %v1208
        %v1329 = vmul.f32 %v1168, %v1208
        %v1330 = vmul.f32 %v1173, %v1208
        %v1331 = vmul.f32 %v1178, %v1208
        %v1332 = vmul.f32 %v1183, %v1208
        %v1333 = vmul.f32 %v1188, %v1208
        %v1334 = vmul.f32 %v1193, %v1208
        %v1335 = vmul.f32 %v1198, %v1208
        %v1336 = vmul.f32 %v1203, %v1208
        %1337 = vset.pattern.permute.xlu0 1
        %1338 = vperm.xlu0 %1337, %v436
        %v1339 = vpop.permute.xlu0 %1338
        %1341 = vset.pattern.permute.xlu0 1
        %1342 = vperm.xlu0 %1341, %v437
        %v1343 = vpop.permute.xlu0 %1342
        %1345 = vset.pattern.permute.xlu0 1
        %1346 = vperm.xlu0 %1345, %v438
        %v1347 = vpop.permute.xlu0 %1346
        %1349 = vset.pattern.permute.xlu0 1
        %1350 = vperm.xlu0 %1349, %v439
        %v1351 = vpop.permute.xlu0 %1350
        %1353 = vset.pattern.permute.xlu0 1
        %1354 = vperm.xlu0 %1353, %v440
        %v1355 = vpop.permute.xlu0 %1354
        %1357 = vset.pattern.permute.xlu0 1
        %1358 = vperm.xlu0 %1357, %v441
        %v1359 = vpop.permute.xlu0 %1358
        %1361 = vset.pattern.permute.xlu0 1
        %1362 = vperm.xlu0 %1361, %v442
        %v1363 = vpop.permute.xlu0 %1362
        %1365 = vset.pattern.permute.xlu0 1
        %1366 = vperm.xlu0 %1365, %v443
        %v1367 = vpop.permute.xlu0 %1366
        %1369 = vset.pattern.permute.xlu0 1
        %1370 = vperm.xlu0 %1369, %v444
        %v1371 = vpop.permute.xlu0 %1370
        %1373 = vset.pattern.permute.xlu0 1
        %1374 = vperm.xlu0 %1373, %v445
        %v1375 = vpop.permute.xlu0 %1374
        %1377 = vset.pattern.permute.xlu0 1
        %1378 = vperm.xlu0 %1377, %v446
        %v1379 = vpop.permute.xlu0 %1378
        %1381 = vset.pattern.permute.xlu0 1
        %1382 = vperm.xlu0 %1381, %v447
        %v1383 = vpop.permute.xlu0 %1382
        %1385 = vset.pattern.permute.xlu0 1
        %1386 = vperm.xlu0 %1385, %v448
        %v1387 = vpop.permute.xlu0 %1386
        %1389 = vset.pattern.permute.xlu0 1
        %1390 = vperm.xlu0 %1389, %v449
        %v1391 = vpop.permute.xlu0 %1390
        %1393 = vset.pattern.permute.xlu0 1
        %1394 = vperm.xlu0 %1393, %v450
        %v1395 = vpop.permute.xlu0 %1394
        %1397 = vset.pattern.permute.xlu0 1
        %1398 = vperm.xlu0 %1397, %v451
        %v1399 = vpop.permute.xlu0 %1398
        %1401 = vset.pattern.permute.xlu0 1
        %1402 = vperm.xlu0 %1401, %v452
        %v1403 = vpop.permute.xlu0 %1402
        %1405 = vset.pattern.permute.xlu0 1
        %1406 = vperm.xlu0 %1405, %v453
        %v1407 = vpop.permute.xlu0 %1406
        %1409 = vset.pattern.permute.xlu0 1
        %1410 = vperm.xlu0 %1409, %v454
        %v1411 = vpop.permute.xlu0 %1410
        %1413 = vset.pattern.permute.xlu0 1
        %1414 = vperm.xlu0 %1413, %v455
        %v1415 = vpop.permute.xlu0 %1414
        %1417 = vset.pattern.permute.xlu0 1
        %1418 = vperm.xlu0 %1417, %v456
        %v1419 = vpop.permute.xlu0 %1418
        %1421 = vset.pattern.permute.xlu0 1
        %1422 = vperm.xlu0 %1421, %v457
        %v1423 = vpop.permute.xlu0 %1422
        %1425 = vset.pattern.permute.xlu0 1
        %1426 = vperm.xlu0 %1425, %v458
        %v1427 = vpop.permute.xlu0 %1426
        %1429 = vset.pattern.permute.xlu0 1
        %1430 = vperm.xlu0 %1429, %v459
        %v1431 = vpop.permute.xlu0 %1430
        %1433 = vset.pattern.permute.xlu0 1
        %1434 = vperm.xlu0 %1433, %v460
        %v1435 = vpop.permute.xlu0 %1434
        %1437 = vset.pattern.permute.xlu0 1
        %1438 = vperm.xlu0 %1437, %v461
        %v1439 = vpop.permute.xlu0 %1438
        %1441 = vset.pattern.permute.xlu0 1
        %1442 = vperm.xlu0 %1441, %v462
        %v1443 = vpop.permute.xlu0 %1442
        %1445 = vset.pattern.permute.xlu0 1
        %1446 = vperm.xlu0 %1445, %v463
        %v1447 = vpop.permute.xlu0 %1446
        %1449 = vset.pattern.permute.xlu0 1
        %1450 = vperm.xlu0 %1449, %v464
        %v1451 = vpop.permute.xlu0 %1450
        %1453 = vset.pattern.permute.xlu0 1
        %1454 = vperm.xlu0 %1453, %v465
        %v1455 = vpop.permute.xlu0 %1454
        %1457 = vset.pattern.permute.xlu0 1
        %1458 = vperm.xlu0 %1457, %v466
        %v1459 = vpop.permute.xlu0 %1458
        %1461 = vset.pattern.permute.xlu0 1
        %1462 = vperm.xlu0 %1461, %v467
        %v1463 = vpop.permute.xlu0 %1462
        %1465 = vset.pattern.permute.xlu0 1
        %1466 = vperm.xlu0 %1465, %v468
        %v1467 = vpop.permute.xlu0 %1466
        %1469 = vset.pattern.permute.xlu0 1
        %1470 = vperm.xlu0 %1469, %v469
        %v1471 = vpop.permute.xlu0 %1470
        %1473 = vset.pattern.permute.xlu0 1
        %1474 = vperm.xlu0 %1473, %v470
        %v1475 = vpop.permute.xlu0 %1474
        %1477 = vset.pattern.permute.xlu0 1
        %1478 = vperm.xlu0 %1477, %v471
        %v1479 = vpop.permute.xlu0 %1478
        %1481 = vset.pattern.permute.xlu0 1
        %1482 = vperm.xlu0 %1481, %v472
        %v1483 = vpop.permute.xlu0 %1482
        %1485 = vset.pattern.permute.xlu0 1
        %1486 = vperm.xlu0 %1485, %v473
        %v1487 = vpop.permute.xlu0 %1486
        %1489 = vset.pattern.permute.xlu0 1
        %1490 = vperm.xlu0 %1489, %v474
        %v1491 = vpop.permute.xlu0 %1490
        %1493 = vset.pattern.permute.xlu0 1
        %1494 = vperm.xlu0 %1493, %v475
        %v1495 = vpop.permute.xlu0 %1494
        %1497 = vset.pattern.permute.xlu0 1
        %1498 = vperm.xlu0 %1497, %v476
        %v1499 = vpop.permute.xlu0 %1498
        %1501 = vset.pattern.permute.xlu0 1
        %1502 = vperm.xlu0 %1501, %v477
        %v1503 = vpop.permute.xlu0 %1502
        %1505 = vset.pattern.permute.xlu0 1
        %1506 = vperm.xlu0 %1505, %v478
        %v1507 = vpop.permute.xlu0 %1506
        %1509 = vset.pattern.permute.xlu0 1
        %1510 = vperm.xlu0 %1509, %v479
        %v1511 = vpop.permute.xlu0 %1510
        %1513 = vset.pattern.permute.xlu0 1
        %1514 = vperm.xlu0 %1513, %v480
        %v1515 = vpop.permute.xlu0 %1514
        %1517 = vset.pattern.permute.xlu0 1
        %1518 = vperm.xlu0 %1517, %v481
        %v1519 = vpop.permute.xlu0 %1518
        %1521 = vset.pattern.permute.xlu0 1
        %1522 = vperm.xlu0 %1521, %v482
        %v1523 = vpop.permute.xlu0 %1522
        %1525 = vset.pattern.permute.xlu0 1
        %1526 = vperm.xlu0 %1525, %v483
        %v1527 = vpop.permute.xlu0 %1526
        %1529 = vset.pattern.permute.xlu0 1
        %1530 = vperm.xlu0 %1529, %v484
        %v1531 = vpop.permute.xlu0 %1530
        %1533 = vset.pattern.permute.xlu0 1
        %1534 = vperm.xlu0 %1533, %v485
        %v1535 = vpop.permute.xlu0 %1534
        %1537 = vset.pattern.permute.xlu0 1
        %1538 = vperm.xlu0 %1537, %v486
        %v1539 = vpop.permute.xlu0 %1538
        %1541 = vset.pattern.permute.xlu0 1
        %1542 = vperm.xlu0 %1541, %v487
        %v1543 = vpop.permute.xlu0 %1542
        %1545 = vset.pattern.permute.xlu0 1
        %1546 = vperm.xlu0 %1545, %v488
        %v1547 = vpop.permute.xlu0 %1546
        %1549 = vset.pattern.permute.xlu0 1
        %1550 = vperm.xlu0 %1549, %v489
        %v1551 = vpop.permute.xlu0 %1550
        %1553 = vset.pattern.permute.xlu0 1
        %1554 = vperm.xlu0 %1553, %v490
        %v1555 = vpop.permute.xlu0 %1554
        %1557 = vset.pattern.permute.xlu0 1
        %1558 = vperm.xlu0 %1557, %v491
        %v1559 = vpop.permute.xlu0 %1558
        %1561 = vset.pattern.permute.xlu0 1
        %1562 = vperm.xlu0 %1561, %v492
        %v1563 = vpop.permute.xlu0 %1562
        %1565 = vset.pattern.permute.xlu0 1
        %1566 = vperm.xlu0 %1565, %v493
        %v1567 = vpop.permute.xlu0 %1566
        %1569 = vset.pattern.permute.xlu0 1
        %1570 = vperm.xlu0 %1569, %v494
        %v1571 = vpop.permute.xlu0 %1570
        %1573 = vset.pattern.permute.xlu0 1
        %1574 = vperm.xlu0 %1573, %v495
        %v1575 = vpop.permute.xlu0 %1574
        %1577 = vset.pattern.permute.xlu0 1
        %1578 = vperm.xlu0 %1577, %v496
        %v1579 = vpop.permute.xlu0 %1578
        %1581 = vset.pattern.permute.xlu0 1
        %1582 = vperm.xlu0 %1581, %v497
        %v1583 = vpop.permute.xlu0 %1582
        %1585 = vset.pattern.permute.xlu0 1
        %1586 = vperm.xlu0 %1585, %v498
        %v1587 = vpop.permute.xlu0 %1586
        %1589 = vset.pattern.permute.xlu0 1
        %1590 = vperm.xlu0 %1589, %v499
        %v1591 = vpop.permute.xlu0 %1590
        %1593 = vset.pattern.permute.xlu0 1
        %1594 = vperm.xlu0 %1593, %v500
        %v1595 = vpop.permute.xlu0 %1594
        %1597 = vset.pattern.permute.xlu0 1
        %1598 = vperm.xlu0 %1597, %v501
        %v1599 = vpop.permute.xlu0 %1598
        %1601 = vset.pattern.permute.xlu0 1
        %1602 = vperm.xlu0 %1601, %v502
        %v1603 = vpop.permute.xlu0 %1602
        %1605 = vset.pattern.permute.xlu0 1
        %1606 = vperm.xlu0 %1605, %v503
        %v1607 = vpop.permute.xlu0 %1606
        %1609 = vset.pattern.permute.xlu0 1
        %1610 = vperm.xlu0 %1609, %v504
        %v1611 = vpop.permute.xlu0 %1610
        %1613 = vset.pattern.permute.xlu0 1
        %1614 = vperm.xlu0 %1613, %v505
        %v1615 = vpop.permute.xlu0 %1614
        %1617 = vset.pattern.permute.xlu0 1
        %1618 = vperm.xlu0 %1617, %v506
        %v1619 = vpop.permute.xlu0 %1618
        %1621 = vset.pattern.permute.xlu0 1
        %1622 = vperm.xlu0 %1621, %v507
        %v1623 = vpop.permute.xlu0 %1622
        %1625 = vset.pattern.permute.xlu0 1
        %1626 = vperm.xlu0 %1625, %v508
        %v1627 = vpop.permute.xlu0 %1626
        %1629 = vset.pattern.permute.xlu0 1
        %1630 = vperm.xlu0 %1629, %v509
        %v1631 = vpop.permute.xlu0 %1630
        %1633 = vset.pattern.permute.xlu0 1
        %1634 = vperm.xlu0 %1633, %v510
        %v1635 = vpop.permute.xlu0 %1634
        %1637 = vset.pattern.permute.xlu0 1
        %1638 = vperm.xlu0 %1637, %v511
        %v1639 = vpop.permute.xlu0 %1638
        %1641 = vset.pattern.permute.xlu0 1
        %1642 = vperm.xlu0 %1641, %v512
        %v1643 = vpop.permute.xlu0 %1642
        %1645 = vset.pattern.permute.xlu0 1
        %1646 = vperm.xlu0 %1645, %v513
        %v1647 = vpop.permute.xlu0 %1646
        %1649 = vset.pattern.permute.xlu0 1
        %1650 = vperm.xlu0 %1649, %v514
        %v1651 = vpop.permute.xlu0 %1650
        %1653 = vset.pattern.permute.xlu0 1
        %1654 = vperm.xlu0 %1653, %v515
        %v1655 = vpop.permute.xlu0 %1654
        %1657 = vset.pattern.permute.xlu0 1
        %1658 = vperm.xlu0 %1657, %v516
        %v1659 = vpop.permute.xlu0 %1658
        %1661 = vset.pattern.permute.xlu0 1
        %1662 = vperm.xlu0 %1661, %v517
        %v1663 = vpop.permute.xlu0 %1662
        %1665 = vset.pattern.permute.xlu0 1
        %1666 = vperm.xlu0 %1665, %v518
        %v1667 = vpop.permute.xlu0 %1666
        %1669 = vset.pattern.permute.xlu0 1
        %1670 = vperm.xlu0 %1669, %v519
        %v1671 = vpop.permute.xlu0 %1670
        %1673 = vset.pattern.permute.xlu0 1
        %1674 = vperm.xlu0 %1673, %v520
        %v1675 = vpop.permute.xlu0 %1674
        %1677 = vset.pattern.permute.xlu0 1
        %1678 = vperm.xlu0 %1677, %v521
        %v1679 = vpop.permute.xlu0 %1678
        %1681 = vset.pattern.permute.xlu0 1
        %1682 = vperm.xlu0 %1681, %v522
        %v1683 = vpop.permute.xlu0 %1682
        %1685 = vset.pattern.permute.xlu0 1
        %1686 = vperm.xlu0 %1685, %v523
        %v1687 = vpop.permute.xlu0 %1686
        %1689 = vset.pattern.permute.xlu0 1
        %1690 = vperm.xlu0 %1689, %v524
        %v1691 = vpop.permute.xlu0 %1690
        %1693 = vset.pattern.permute.xlu0 1
        %1694 = vperm.xlu0 %1693, %v525
        %v1695 = vpop.permute.xlu0 %1694
        %1697 = vset.pattern.permute.xlu0 1
        %1698 = vperm.xlu0 %1697, %v526
        %v1699 = vpop.permute.xlu0 %1698
        %1701 = vset.pattern.permute.xlu0 1
        %1702 = vperm.xlu0 %1701, %v527
        %v1703 = vpop.permute.xlu0 %1702
        %1705 = vset.pattern.permute.xlu0 1
        %1706 = vperm.xlu0 %1705, %v528
        %v1707 = vpop.permute.xlu0 %1706
        %1709 = vset.pattern.permute.xlu0 1
        %1710 = vperm.xlu0 %1709, %v529
        %v1711 = vpop.permute.xlu0 %1710
        %1713 = vset.pattern.permute.xlu0 1
        %1714 = vperm.xlu0 %1713, %v530
        %v1715 = vpop.permute.xlu0 %1714
        %1717 = vset.pattern.permute.xlu0 1
        %1718 = vperm.xlu0 %1717, %v531
        %v1719 = vpop.permute.xlu0 %1718
        %1721 = vset.pattern.permute.xlu0 1
        %1722 = vperm.xlu0 %1721, %v532
        %v1723 = vpop.permute.xlu0 %1722
        %1725 = vset.pattern.permute.xlu0 1
        %1726 = vperm.xlu0 %1725, %v533
        %v1727 = vpop.permute.xlu0 %1726
        %1729 = vset.pattern.permute.xlu0 1
        %1730 = vperm.xlu0 %1729, %v534
        %v1731 = vpop.permute.xlu0 %1730
        %1733 = vset.pattern.permute.xlu0 1
        %1734 = vperm.xlu0 %1733, %v535
        %v1735 = vpop.permute.xlu0 %1734
        %1737 = vset.pattern.permute.xlu0 1
        %1738 = vperm.xlu0 %1737, %v536
        %v1739 = vpop.permute.xlu0 %1738
        %1741 = vset.pattern.permute.xlu0 1
        %1742 = vperm.xlu0 %1741, %v537
        %v1743 = vpop.permute.xlu0 %1742
        %1745 = vset.pattern.permute.xlu0 1
        %1746 = vperm.xlu0 %1745, %v538
        %v1747 = vpop.permute.xlu0 %1746
        %1749 = vset.pattern.permute.xlu0 1
        %1750 = vperm.xlu0 %1749, %v539
        %v1751 = vpop.permute.xlu0 %1750
        %1753 = vset.pattern.permute.xlu0 1
        %1754 = vperm.xlu0 %1753, %v540
        %v1755 = vpop.permute.xlu0 %1754
        %1757 = vset.pattern.permute.xlu0 1
        %1758 = vperm.xlu0 %1757, %v541
        %v1759 = vpop.permute.xlu0 %1758
        %1761 = vset.pattern.permute.xlu0 1
        %1762 = vperm.xlu0 %1761, %v542
        %v1763 = vpop.permute.xlu0 %1762
        %1765 = vset.pattern.permute.xlu0 1
        %1766 = vperm.xlu0 %1765, %v543
        %v1767 = vpop.permute.xlu0 %1766
        %1769 = vset.pattern.permute.xlu0 1
        %1770 = vperm.xlu0 %1769, %v544
        %v1771 = vpop.permute.xlu0 %1770
        %1773 = vset.pattern.permute.xlu0 1
        %1774 = vperm.xlu0 %1773, %v545
        %v1775 = vpop.permute.xlu0 %1774
        %1777 = vset.pattern.permute.xlu0 1
        %1778 = vperm.xlu0 %1777, %v546
        %v1779 = vpop.permute.xlu0 %1778
        %1781 = vset.pattern.permute.xlu0 1
        %1782 = vperm.xlu0 %1781, %v547
        %v1783 = vpop.permute.xlu0 %1782
        %1785 = vset.pattern.permute.xlu0 1
        %1786 = vperm.xlu0 %1785, %v548
        %v1787 = vpop.permute.xlu0 %1786
        %1789 = vset.pattern.permute.xlu0 1
        %1790 = vperm.xlu0 %1789, %v549
        %v1791 = vpop.permute.xlu0 %1790
        %1793 = vset.pattern.permute.xlu0 1
        %1794 = vperm.xlu0 %1793, %v550
        %v1795 = vpop.permute.xlu0 %1794
        %1797 = vset.pattern.permute.xlu0 1
        %1798 = vperm.xlu0 %1797, %v551
        %v1799 = vpop.permute.xlu0 %1798
        %1801 = vset.pattern.permute.xlu0 1
        %1802 = vperm.xlu0 %1801, %v552
        %v1803 = vpop.permute.xlu0 %1802
        %1805 = vset.pattern.permute.xlu0 1
        %1806 = vperm.xlu0 %1805, %v553
        %v1807 = vpop.permute.xlu0 %1806
        %1809 = vset.pattern.permute.xlu0 1
        %1810 = vperm.xlu0 %1809, %v554
        %v1811 = vpop.permute.xlu0 %1810
        %1813 = vset.pattern.permute.xlu0 1
        %1814 = vperm.xlu0 %1813, %v555
        %v1815 = vpop.permute.xlu0 %1814
        %1817 = vset.pattern.permute.xlu0 1
        %1818 = vperm.xlu0 %1817, %v556
        %v1819 = vpop.permute.xlu0 %1818
        %1821 = vset.pattern.permute.xlu0 1
        %1822 = vperm.xlu0 %1821, %v557
        %v1823 = vpop.permute.xlu0 %1822
        %1825 = vset.pattern.permute.xlu0 1
        %1826 = vperm.xlu0 %1825, %v558
        %v1827 = vpop.permute.xlu0 %1826
        %1829 = vset.pattern.permute.xlu0 1
        %1830 = vperm.xlu0 %1829, %v559
        %v1831 = vpop.permute.xlu0 %1830
        %1833 = vset.pattern.permute.xlu0 1
        %1834 = vperm.xlu0 %1833, %v560
        %v1835 = vpop.permute.xlu0 %1834
        %1837 = vset.pattern.permute.xlu0 1
        %1838 = vperm.xlu0 %1837, %v561
        %v1839 = vpop.permute.xlu0 %1838
        %1841 = vset.pattern.permute.xlu0 1
        %1842 = vperm.xlu0 %1841, %v562
        %v1843 = vpop.permute.xlu0 %1842
        %1845 = vset.pattern.permute.xlu0 1
        %1846 = vperm.xlu0 %1845, %v563
        %v1847 = vpop.permute.xlu0 %1846
        %v1849 = vlaneseq
        %v1850 = vshrl.u32 %v1849, 7
        %v1851 = vsub.s32 1, %v1850
        %v1852 = vrot.slane %v564, %v1851
        %v1853 = vmul.f32 %v1339, %v1852
        %v1854 = vmul.f32 %v1343, %v1852
        %v1855 = vmul.f32 %v1347, %v1852
        %v1856 = vmul.f32 %v1351, %v1852
        %v1857 = vmul.f32 %v1355, %v1852
        %v1858 = vmul.f32 %v1359, %v1852
        %v1859 = vmul.f32 %v1363, %v1852
        %v1860 = vmul.f32 %v1367, %v1852
        %v1861 = vmul.f32 %v1371, %v1852
        %v1862 = vmul.f32 %v1375, %v1852
        %v1863 = vmul.f32 %v1379, %v1852
        %v1864 = vmul.f32 %v1383, %v1852
        %v1865 = vmul.f32 %v1387, %v1852
        %v1866 = vmul.f32 %v1391, %v1852
        %v1867 = vmul.f32 %v1395, %v1852
        %v1868 = vmul.f32 %v1399, %v1852
        %v1869 = vmul.f32 %v1403, %v1852
        %v1870 = vmul.f32 %v1407, %v1852
        %v1871 = vmul.f32 %v1411, %v1852
        %v1872 = vmul.f32 %v1415, %v1852
        %v1873 = vmul.f32 %v1419, %v1852
        %v1874 = vmul.f32 %v1423, %v1852
        %v1875 = vmul.f32 %v1427, %v1852
        %v1876 = vmul.f32 %v1431, %v1852
        %v1877 = vmul.f32 %v1435, %v1852
        %v1878 = vmul.f32 %v1439, %v1852
        %v1879 = vmul.f32 %v1443, %v1852
        %v1880 = vmul.f32 %v1447, %v1852
        %v1881 = vmul.f32 %v1451, %v1852
        %v1882 = vmul.f32 %v1455, %v1852
        %v1883 = vmul.f32 %v1459, %v1852
        %v1884 = vmul.f32 %v1463, %v1852
        %v1885 = vmul.f32 %v1467, %v1852
        %v1886 = vmul.f32 %v1471, %v1852
        %v1887 = vmul.f32 %v1475, %v1852
        %v1888 = vmul.f32 %v1479, %v1852
        %v1889 = vmul.f32 %v1483, %v1852
        %v1890 = vmul.f32 %v1487, %v1852
        %v1891 = vmul.f32 %v1491, %v1852
        %v1892 = vmul.f32 %v1495, %v1852
        %v1893 = vmul.f32 %v1499, %v1852
        %v1894 = vmul.f32 %v1503, %v1852
        %v1895 = vmul.f32 %v1507, %v1852
        %v1896 = vmul.f32 %v1511, %v1852
        %v1897 = vmul.f32 %v1515, %v1852
        %v1898 = vmul.f32 %v1519, %v1852
        %v1899 = vmul.f32 %v1523, %v1852
        %v1900 = vmul.f32 %v1527, %v1852
        %v1901 = vmul.f32 %v1531, %v1852
        %v1902 = vmul.f32 %v1535, %v1852
        %v1903 = vmul.f32 %v1539, %v1852
        %v1904 = vmul.f32 %v1543, %v1852
        %v1905 = vmul.f32 %v1547, %v1852
        %v1906 = vmul.f32 %v1551, %v1852
        %v1907 = vmul.f32 %v1555, %v1852
        %v1908 = vmul.f32 %v1559, %v1852
        %v1909 = vmul.f32 %v1563, %v1852
        %v1910 = vmul.f32 %v1567, %v1852
        %v1911 = vmul.f32 %v1571, %v1852
        %v1912 = vmul.f32 %v1575, %v1852
        %v1913 = vmul.f32 %v1579, %v1852
        %v1914 = vmul.f32 %v1583, %v1852
        %v1915 = vmul.f32 %v1587, %v1852
        %v1916 = vmul.f32 %v1591, %v1852
        %v1917 = vmul.f32 %v1595, %v1852
        %v1918 = vmul.f32 %v1599, %v1852
        %v1919 = vmul.f32 %v1603, %v1852
        %v1920 = vmul.f32 %v1607, %v1852
        %v1921 = vmul.f32 %v1611, %v1852
        %v1922 = vmul.f32 %v1615, %v1852
        %v1923 = vmul.f32 %v1619, %v1852
        %v1924 = vmul.f32 %v1623, %v1852
        %v1925 = vmul.f32 %v1627, %v1852
        %v1926 = vmul.f32 %v1631, %v1852
        %v1927 = vmul.f32 %v1635, %v1852
        %v1928 = vmul.f32 %v1639, %v1852
        %v1929 = vmul.f32 %v1643, %v1852
        %v1930 = vmul.f32 %v1647, %v1852
        %v1931 = vmul.f32 %v1651, %v1852
        %v1932 = vmul.f32 %v1655, %v1852
        %v1933 = vmul.f32 %v1659, %v1852
        %v1934 = vmul.f32 %v1663, %v1852
        %v1935 = vmul.f32 %v1667, %v1852
        %v1936 = vmul.f32 %v1671, %v1852
        %v1937 = vmul.f32 %v1675, %v1852
        %v1938 = vmul.f32 %v1679, %v1852
        %v1939 = vmul.f32 %v1683, %v1852
        %v1940 = vmul.f32 %v1687, %v1852
        %v1941 = vmul.f32 %v1691, %v1852
        %v1942 = vmul.f32 %v1695, %v1852
        %v1943 = vmul.f32 %v1699, %v1852
        %v1944 = vmul.f32 %v1703, %v1852
        %v1945 = vmul.f32 %v1707, %v1852
        %v1946 = vmul.f32 %v1711, %v1852
        %v1947 = vmul.f32 %v1715, %v1852
        %v1948 = vmul.f32 %v1719, %v1852
        %v1949 = vmul.f32 %v1723, %v1852
        %v1950 = vmul.f32 %v1727, %v1852
        %v1951 = vmul.f32 %v1731, %v1852
        %v1952 = vmul.f32 %v1735, %v1852
        %v1953 = vmul.f32 %v1739, %v1852
        %v1954 = vmul.f32 %v1743, %v1852
        %v1955 = vmul.f32 %v1747, %v1852
        %v1956 = vmul.f32 %v1751, %v1852
        %v1957 = vmul.f32 %v1755, %v1852
        %v1958 = vmul.f32 %v1759, %v1852
        %v1959 = vmul.f32 %v1763, %v1852
        %v1960 = vmul.f32 %v1767, %v1852
        %v1961 = vmul.f32 %v1771, %v1852
        %v1962 = vmul.f32 %v1775, %v1852
        %v1963 = vmul.f32 %v1779, %v1852
        %v1964 = vmul.f32 %v1783, %v1852
        %v1965 = vmul.f32 %v1787, %v1852
        %v1966 = vmul.f32 %v1791, %v1852
        %v1967 = vmul.f32 %v1795, %v1852
        %v1968 = vmul.f32 %v1799, %v1852
        %v1969 = vmul.f32 %v1803, %v1852
        %v1970 = vmul.f32 %v1807, %v1852
        %v1971 = vmul.f32 %v1811, %v1852
        %v1972 = vmul.f32 %v1815, %v1852
        %v1973 = vmul.f32 %v1819, %v1852
        %v1974 = vmul.f32 %v1823, %v1852
        %v1975 = vmul.f32 %v1827, %v1852
        %v1976 = vmul.f32 %v1831, %v1852
        %v1977 = vmul.f32 %v1835, %v1852
        %v1978 = vmul.f32 %v1839, %v1852
        %v1979 = vmul.f32 %v1843, %v1852
        %v1980 = vmul.f32 %v1847, %v1852
        %v1981 = vadd.f32 %v1209, %v1853
        %v1982 = vadd.f32 %v1210, %v1854
        %v1983 = vadd.f32 %v1211, %v1855
        %v1984 = vadd.f32 %v1212, %v1856
        %v1985 = vadd.f32 %v1213, %v1857
        %v1986 = vadd.f32 %v1214, %v1858
        %v1987 = vadd.f32 %v1215, %v1859
        %v1988 = vadd.f32 %v1216, %v1860
        %v1989 = vadd.f32 %v1217, %v1861
        %v1990 = vadd.f32 %v1218, %v1862
        %v1991 = vadd.f32 %v1219, %v1863
        %v1992 = vadd.f32 %v1220, %v1864
        %v1993 = vadd.f32 %v1221, %v1865
        %v1994 = vadd.f32 %v1222, %v1866
        %v1995 = vadd.f32 %v1223, %v1867
        %v1996 = vadd.f32 %v1224, %v1868
        %v1997 = vadd.f32 %v1225, %v1869
        %v1998 = vadd.f32 %v1226, %v1870
        %v1999 = vadd.f32 %v1227, %v1871
        %v2000 = vadd.f32 %v1228, %v1872
        %v2001 = vadd.f32 %v1229, %v1873
        %v2002 = vadd.f32 %v1230, %v1874
        %v2003 = vadd.f32 %v1231, %v1875
        %v2004 = vadd.f32 %v1232, %v1876
        %v2005 = vadd.f32 %v1233, %v1877
        %v2006 = vadd.f32 %v1234, %v1878
        %v2007 = vadd.f32 %v1235, %v1879
        %v2008 = vadd.f32 %v1236, %v1880
        %v2009 = vadd.f32 %v1237, %v1881
        %v2010 = vadd.f32 %v1238, %v1882
        %v2011 = vadd.f32 %v1239, %v1883
        %v2012 = vadd.f32 %v1240, %v1884
        %v2013 = vadd.f32 %v1241, %v1885
        %v2014 = vadd.f32 %v1242, %v1886
        %v2015 = vadd.f32 %v1243, %v1887
        %v2016 = vadd.f32 %v1244, %v1888
        %v2017 = vadd.f32 %v1245, %v1889
        %v2018 = vadd.f32 %v1246, %v1890
        %v2019 = vadd.f32 %v1247, %v1891
        %v2020 = vadd.f32 %v1248, %v1892
        %v2021 = vadd.f32 %v1249, %v1893
        %v2022 = vadd.f32 %v1250, %v1894
        %v2023 = vadd.f32 %v1251, %v1895
        %v2024 = vadd.f32 %v1252, %v1896
        %v2025 = vadd.f32 %v1253, %v1897
        %v2026 = vadd.f32 %v1254, %v1898
        %v2027 = vadd.f32 %v1255, %v1899
        %v2028 = vadd.f32 %v1256, %v1900
        %v2029 = vadd.f32 %v1257, %v1901
        %v2030 = vadd.f32 %v1258, %v1902
        %v2031 = vadd.f32 %v1259, %v1903
        %v2032 = vadd.f32 %v1260, %v1904
        %v2033 = vadd.f32 %v1261, %v1905
        %v2034 = vadd.f32 %v1262, %v1906
        %v2035 = vadd.f32 %v1263, %v1907
        %v2036 = vadd.f32 %v1264, %v1908
        %v2037 = vadd.f32 %v1265, %v1909
        %v2038 = vadd.f32 %v1266, %v1910
        %v2039 = vadd.f32 %v1267, %v1911
        %v2040 = vadd.f32 %v1268, %v1912
        %v2041 = vadd.f32 %v1269, %v1913
        %v2042 = vadd.f32 %v1270, %v1914
        %v2043 = vadd.f32 %v1271, %v1915
        %v2044 = vadd.f32 %v1272, %v1916
        %v2045 = vadd.f32 %v1273, %v1917
        %v2046 = vadd.f32 %v1274, %v1918
        %v2047 = vadd.f32 %v1275, %v1919
        %v2048 = vadd.f32 %v1276, %v1920
        %v2049 = vadd.f32 %v1277, %v1921
        %v2050 = vadd.f32 %v1278, %v1922
        %v2051 = vadd.f32 %v1279, %v1923
        %v2052 = vadd.f32 %v1280, %v1924
        %v2053 = vadd.f32 %v1281, %v1925
        %v2054 = vadd.f32 %v1282, %v1926
        %v2055 = vadd.f32 %v1283, %v1927
        %v2056 = vadd.f32 %v1284, %v1928
        %v2057 = vadd.f32 %v1285, %v1929
        %v2058 = vadd.f32 %v1286, %v1930
        %v2059 = vadd.f32 %v1287, %v1931
        %v2060 = vadd.f32 %v1288, %v1932
        %v2061 = vadd.f32 %v1289, %v1933
        %v2062 = vadd.f32 %v1290, %v1934
        %v2063 = vadd.f32 %v1291, %v1935
        %v2064 = vadd.f32 %v1292, %v1936
        %v2065 = vadd.f32 %v1293, %v1937
        %v2066 = vadd.f32 %v1294, %v1938
        %v2067 = vadd.f32 %v1295, %v1939
        %v2068 = vadd.f32 %v1296, %v1940
        %v2069 = vadd.f32 %v1297, %v1941
        %v2070 = vadd.f32 %v1298, %v1942
        %v2071 = vadd.f32 %v1299, %v1943
        %v2072 = vadd.f32 %v1300, %v1944
        %v2073 = vadd.f32 %v1301, %v1945
        %v2074 = vadd.f32 %v1302, %v1946
        %v2075 = vadd.f32 %v1303, %v1947
        %v2076 = vadd.f32 %v1304, %v1948
        %v2077 = vadd.f32 %v1305, %v1949
        %v2078 = vadd.f32 %v1306, %v1950
        %v2079 = vadd.f32 %v1307, %v1951
        %v2080 = vadd.f32 %v1308, %v1952
        %v2081 = vadd.f32 %v1309, %v1953
        %v2082 = vadd.f32 %v1310, %v1954
        %v2083 = vadd.f32 %v1311, %v1955
        %v2084 = vadd.f32 %v1312, %v1956
        %v2085 = vadd.f32 %v1313, %v1957
        %v2086 = vadd.f32 %v1314, %v1958
        %v2087 = vadd.f32 %v1315, %v1959
        %v2088 = vadd.f32 %v1316, %v1960
        %v2089 = vadd.f32 %v1317, %v1961
        %v2090 = vadd.f32 %v1318, %v1962
        %v2091 = vadd.f32 %v1319, %v1963
        %v2092 = vadd.f32 %v1320, %v1964
        %v2093 = vadd.f32 %v1321, %v1965
        %v2094 = vadd.f32 %v1322, %v1966
        %v2095 = vadd.f32 %v1323, %v1967
        %v2096 = vadd.f32 %v1324, %v1968
        %v2097 = vadd.f32 %v1325, %v1969
        %v2098 = vadd.f32 %v1326, %v1970
        %v2099 = vadd.f32 %v1327, %v1971
        %v2100 = vadd.f32 %v1328, %v1972
        %v2101 = vadd.f32 %v1329, %v1973
        %v2102 = vadd.f32 %v1330, %v1974
        %v2103 = vadd.f32 %v1331, %v1975
        %v2104 = vadd.f32 %v1332, %v1976
        %v2105 = vadd.f32 %v1333, %v1977
        %v2106 = vadd.f32 %v1334, %v1978
        %v2107 = vadd.f32 %v1335, %v1979
        %v2108 = vadd.f32 %v1336, %v1980
        %2109 = vset.pattern.permute.xlu0 2
        %2110 = vperm.xlu0 %2109, %v436
        %v2111 = vpop.permute.xlu0 %2110
        %2113 = vset.pattern.permute.xlu0 2
        %2114 = vperm.xlu0 %2113, %v437
        %v2115 = vpop.permute.xlu0 %2114
        %2117 = vset.pattern.permute.xlu0 2
        %2118 = vperm.xlu0 %2117, %v438
        %v2119 = vpop.permute.xlu0 %2118
        %2121 = vset.pattern.permute.xlu0 2
        %2122 = vperm.xlu0 %2121, %v439
        %v2123 = vpop.permute.xlu0 %2122
        %2125 = vset.pattern.permute.xlu0 2
        %2126 = vperm.xlu0 %2125, %v440
        %v2127 = vpop.permute.xlu0 %2126
        %2129 = vset.pattern.permute.xlu0 2
        %2130 = vperm.xlu0 %2129, %v441
        %v2131 = vpop.permute.xlu0 %2130
        %2133 = vset.pattern.permute.xlu0 2
        %2134 = vperm.xlu0 %2133, %v442
        %v2135 = vpop.permute.xlu0 %2134
        %2137 = vset.pattern.permute.xlu0 2
        %2138 = vperm.xlu0 %2137, %v443
        %v2139 = vpop.permute.xlu0 %2138
        %2141 = vset.pattern.permute.xlu0 2
        %2142 = vperm.xlu0 %2141, %v444
        %v2143 = vpop.permute.xlu0 %2142
        %2145 = vset.pattern.permute.xlu0 2
        %2146 = vperm.xlu0 %2145, %v445
        %v2147 = vpop.permute.xlu0 %2146
        %2149 = vset.pattern.permute.xlu0 2
        %2150 = vperm.xlu0 %2149, %v446
        %v2151 = vpop.permute.xlu0 %2150
        %2153 = vset.pattern.permute.xlu0 2
        %2154 = vperm.xlu0 %2153, %v447
        %v2155 = vpop.permute.xlu0 %2154
        %2157 = vset.pattern.permute.xlu0 2
        %2158 = vperm.xlu0 %2157, %v448
        %v2159 = vpop.permute.xlu0 %2158
        %2161 = vset.pattern.permute.xlu0 2
        %2162 = vperm.xlu0 %2161, %v449
        %v2163 = vpop.permute.xlu0 %2162
        %2165 = vset.pattern.permute.xlu0 2
        %2166 = vperm.xlu0 %2165, %v450
        %v2167 = vpop.permute.xlu0 %2166
        %2169 = vset.pattern.permute.xlu0 2
        %2170 = vperm.xlu0 %2169, %v451
        %v2171 = vpop.permute.xlu0 %2170
        %2173 = vset.pattern.permute.xlu0 2
        %2174 = vperm.xlu0 %2173, %v452
        %v2175 = vpop.permute.xlu0 %2174
        %2177 = vset.pattern.permute.xlu0 2
        %2178 = vperm.xlu0 %2177, %v453
        %v2179 = vpop.permute.xlu0 %2178
        %2181 = vset.pattern.permute.xlu0 2
        %2182 = vperm.xlu0 %2181, %v454
        %v2183 = vpop.permute.xlu0 %2182
        %2185 = vset.pattern.permute.xlu0 2
        %2186 = vperm.xlu0 %2185, %v455
        %v2187 = vpop.permute.xlu0 %2186
        %2189 = vset.pattern.permute.xlu0 2
        %2190 = vperm.xlu0 %2189, %v456
        %v2191 = vpop.permute.xlu0 %2190
        %2193 = vset.pattern.permute.xlu0 2
        %2194 = vperm.xlu0 %2193, %v457
        %v2195 = vpop.permute.xlu0 %2194
        %2197 = vset.pattern.permute.xlu0 2
        %2198 = vperm.xlu0 %2197, %v458
        %v2199 = vpop.permute.xlu0 %2198
        %2201 = vset.pattern.permute.xlu0 2
        %2202 = vperm.xlu0 %2201, %v459
        %v2203 = vpop.permute.xlu0 %2202
        %2205 = vset.pattern.permute.xlu0 2
        %2206 = vperm.xlu0 %2205, %v460
        %v2207 = vpop.permute.xlu0 %2206
        %2209 = vset.pattern.permute.xlu0 2
        %2210 = vperm.xlu0 %2209, %v461
        %v2211 = vpop.permute.xlu0 %2210
        %2213 = vset.pattern.permute.xlu0 2
        %2214 = vperm.xlu0 %2213, %v462
        %v2215 = vpop.permute.xlu0 %2214
        %2217 = vset.pattern.permute.xlu0 2
        %2218 = vperm.xlu0 %2217, %v463
        %v2219 = vpop.permute.xlu0 %2218
        %2221 = vset.pattern.permute.xlu0 2
        %2222 = vperm.xlu0 %2221, %v464
        %v2223 = vpop.permute.xlu0 %2222
        %2225 = vset.pattern.permute.xlu0 2
        %2226 = vperm.xlu0 %2225, %v465
        %v2227 = vpop.permute.xlu0 %2226
        %2229 = vset.pattern.permute.xlu0 2
        %2230 = vperm.xlu0 %2229, %v466
        %v2231 = vpop.permute.xlu0 %2230
        %2233 = vset.pattern.permute.xlu0 2
        %2234 = vperm.xlu0 %2233, %v467
        %v2235 = vpop.permute.xlu0 %2234
        %2237 = vset.pattern.permute.xlu0 2
        %2238 = vperm.xlu0 %2237, %v468
        %v2239 = vpop.permute.xlu0 %2238
        %2241 = vset.pattern.permute.xlu0 2
        %2242 = vperm.xlu0 %2241, %v469
        %v2243 = vpop.permute.xlu0 %2242
        %2245 = vset.pattern.permute.xlu0 2
        %2246 = vperm.xlu0 %2245, %v470
        %v2247 = vpop.permute.xlu0 %2246
        %2249 = vset.pattern.permute.xlu0 2
        %2250 = vperm.xlu0 %2249, %v471
        %v2251 = vpop.permute.xlu0 %2250
        %2253 = vset.pattern.permute.xlu0 2
        %2254 = vperm.xlu0 %2253, %v472
        %v2255 = vpop.permute.xlu0 %2254
        %2257 = vset.pattern.permute.xlu0 2
        %2258 = vperm.xlu0 %2257, %v473
        %v2259 = vpop.permute.xlu0 %2258
        %2261 = vset.pattern.permute.xlu0 2
        %2262 = vperm.xlu0 %2261, %v474
        %v2263 = vpop.permute.xlu0 %2262
        %2265 = vset.pattern.permute.xlu0 2
        %2266 = vperm.xlu0 %2265, %v475
        %v2267 = vpop.permute.xlu0 %2266
        %2269 = vset.pattern.permute.xlu0 2
        %2270 = vperm.xlu0 %2269, %v476
        %v2271 = vpop.permute.xlu0 %2270
        %2273 = vset.pattern.permute.xlu0 2
        %2274 = vperm.xlu0 %2273, %v477
        %v2275 = vpop.permute.xlu0 %2274
        %2277 = vset.pattern.permute.xlu0 2
        %2278 = vperm.xlu0 %2277, %v478
        %v2279 = vpop.permute.xlu0 %2278
        %2281 = vset.pattern.permute.xlu0 2
        %2282 = vperm.xlu0 %2281, %v479
        %v2283 = vpop.permute.xlu0 %2282
        %2285 = vset.pattern.permute.xlu0 2
        %2286 = vperm.xlu0 %2285, %v480
        %v2287 = vpop.permute.xlu0 %2286
        %2289 = vset.pattern.permute.xlu0 2
        %2290 = vperm.xlu0 %2289, %v481
        %v2291 = vpop.permute.xlu0 %2290
        %2293 = vset.pattern.permute.xlu0 2
        %2294 = vperm.xlu0 %2293, %v482
        %v2295 = vpop.permute.xlu0 %2294
        %2297 = vset.pattern.permute.xlu0 2
        %2298 = vperm.xlu0 %2297, %v483
        %v2299 = vpop.permute.xlu0 %2298
        %2301 = vset.pattern.permute.xlu0 2
        %2302 = vperm.xlu0 %2301, %v484
        %v2303 = vpop.permute.xlu0 %2302
        %2305 = vset.pattern.permute.xlu0 2
        %2306 = vperm.xlu0 %2305, %v485
        %v2307 = vpop.permute.xlu0 %2306
        %2309 = vset.pattern.permute.xlu0 2
        %2310 = vperm.xlu0 %2309, %v486
        %v2311 = vpop.permute.xlu0 %2310
        %2313 = vset.pattern.permute.xlu0 2
        %2314 = vperm.xlu0 %2313, %v487
        %v2315 = vpop.permute.xlu0 %2314
        %2317 = vset.pattern.permute.xlu0 2
        %2318 = vperm.xlu0 %2317, %v488
        %v2319 = vpop.permute.xlu0 %2318
        %2321 = vset.pattern.permute.xlu0 2
        %2322 = vperm.xlu0 %2321, %v489
        %v2323 = vpop.permute.xlu0 %2322
        %2325 = vset.pattern.permute.xlu0 2
        %2326 = vperm.xlu0 %2325, %v490
        %v2327 = vpop.permute.xlu0 %2326
        %2329 = vset.pattern.permute.xlu0 2
        %2330 = vperm.xlu0 %2329, %v491
        %v2331 = vpop.permute.xlu0 %2330
        %2333 = vset.pattern.permute.xlu0 2
        %2334 = vperm.xlu0 %2333, %v492
        %v2335 = vpop.permute.xlu0 %2334
        %2337 = vset.pattern.permute.xlu0 2
        %2338 = vperm.xlu0 %2337, %v493
        %v2339 = vpop.permute.xlu0 %2338
        %2341 = vset.pattern.permute.xlu0 2
        %2342 = vperm.xlu0 %2341, %v494
        %v2343 = vpop.permute.xlu0 %2342
        %2345 = vset.pattern.permute.xlu0 2
        %2346 = vperm.xlu0 %2345, %v495
        %v2347 = vpop.permute.xlu0 %2346
        %2349 = vset.pattern.permute.xlu0 2
        %2350 = vperm.xlu0 %2349, %v496
        %v2351 = vpop.permute.xlu0 %2350
        %2353 = vset.pattern.permute.xlu0 2
        %2354 = vperm.xlu0 %2353, %v497
        %v2355 = vpop.permute.xlu0 %2354
        %2357 = vset.pattern.permute.xlu0 2
        %2358 = vperm.xlu0 %2357, %v498
        %v2359 = vpop.permute.xlu0 %2358
        %2361 = vset.pattern.permute.xlu0 2
        %2362 = vperm.xlu0 %2361, %v499
        %v2363 = vpop.permute.xlu0 %2362
        %2365 = vset.pattern.permute.xlu0 2
        %2366 = vperm.xlu0 %2365, %v500
        %v2367 = vpop.permute.xlu0 %2366
        %2369 = vset.pattern.permute.xlu0 2
        %2370 = vperm.xlu0 %2369, %v501
        %v2371 = vpop.permute.xlu0 %2370
        %2373 = vset.pattern.permute.xlu0 2
        %2374 = vperm.xlu0 %2373, %v502
        %v2375 = vpop.permute.xlu0 %2374
        %2377 = vset.pattern.permute.xlu0 2
        %2378 = vperm.xlu0 %2377, %v503
        %v2379 = vpop.permute.xlu0 %2378
        %2381 = vset.pattern.permute.xlu0 2
        %2382 = vperm.xlu0 %2381, %v504
        %v2383 = vpop.permute.xlu0 %2382
        %2385 = vset.pattern.permute.xlu0 2
        %2386 = vperm.xlu0 %2385, %v505
        %v2387 = vpop.permute.xlu0 %2386
        %2389 = vset.pattern.permute.xlu0 2
        %2390 = vperm.xlu0 %2389, %v506
        %v2391 = vpop.permute.xlu0 %2390
        %2393 = vset.pattern.permute.xlu0 2
        %2394 = vperm.xlu0 %2393, %v507
        %v2395 = vpop.permute.xlu0 %2394
        %2397 = vset.pattern.permute.xlu0 2
        %2398 = vperm.xlu0 %2397, %v508
        %v2399 = vpop.permute.xlu0 %2398
        %2401 = vset.pattern.permute.xlu0 2
        %2402 = vperm.xlu0 %2401, %v509
        %v2403 = vpop.permute.xlu0 %2402
        %2405 = vset.pattern.permute.xlu0 2
        %2406 = vperm.xlu0 %2405, %v510
        %v2407 = vpop.permute.xlu0 %2406
        %2409 = vset.pattern.permute.xlu0 2
        %2410 = vperm.xlu0 %2409, %v511
        %v2411 = vpop.permute.xlu0 %2410
        %2413 = vset.pattern.permute.xlu0 2
        %2414 = vperm.xlu0 %2413, %v512
        %v2415 = vpop.permute.xlu0 %2414
        %2417 = vset.pattern.permute.xlu0 2
        %2418 = vperm.xlu0 %2417, %v513
        %v2419 = vpop.permute.xlu0 %2418
        %2421 = vset.pattern.permute.xlu0 2
        %2422 = vperm.xlu0 %2421, %v514
        %v2423 = vpop.permute.xlu0 %2422
        %2425 = vset.pattern.permute.xlu0 2
        %2426 = vperm.xlu0 %2425, %v515
        %v2427 = vpop.permute.xlu0 %2426
        %2429 = vset.pattern.permute.xlu0 2
        %2430 = vperm.xlu0 %2429, %v516
        %v2431 = vpop.permute.xlu0 %2430
        %2433 = vset.pattern.permute.xlu0 2
        %2434 = vperm.xlu0 %2433, %v517
        %v2435 = vpop.permute.xlu0 %2434
        %2437 = vset.pattern.permute.xlu0 2
        %2438 = vperm.xlu0 %2437, %v518
        %v2439 = vpop.permute.xlu0 %2438
        %2441 = vset.pattern.permute.xlu0 2
        %2442 = vperm.xlu0 %2441, %v519
        %v2443 = vpop.permute.xlu0 %2442
        %2445 = vset.pattern.permute.xlu0 2
        %2446 = vperm.xlu0 %2445, %v520
        %v2447 = vpop.permute.xlu0 %2446
        %2449 = vset.pattern.permute.xlu0 2
        %2450 = vperm.xlu0 %2449, %v521
        %v2451 = vpop.permute.xlu0 %2450
        %2453 = vset.pattern.permute.xlu0 2
        %2454 = vperm.xlu0 %2453, %v522
        %v2455 = vpop.permute.xlu0 %2454
        %2457 = vset.pattern.permute.xlu0 2
        %2458 = vperm.xlu0 %2457, %v523
        %v2459 = vpop.permute.xlu0 %2458
        %2461 = vset.pattern.permute.xlu0 2
        %2462 = vperm.xlu0 %2461, %v524
        %v2463 = vpop.permute.xlu0 %2462
        %2465 = vset.pattern.permute.xlu0 2
        %2466 = vperm.xlu0 %2465, %v525
        %v2467 = vpop.permute.xlu0 %2466
        %2469 = vset.pattern.permute.xlu0 2
        %2470 = vperm.xlu0 %2469, %v526
        %v2471 = vpop.permute.xlu0 %2470
        %2473 = vset.pattern.permute.xlu0 2
        %2474 = vperm.xlu0 %2473, %v527
        %v2475 = vpop.permute.xlu0 %2474
        %2477 = vset.pattern.permute.xlu0 2
        %2478 = vperm.xlu0 %2477, %v528
        %v2479 = vpop.permute.xlu0 %2478
        %2481 = vset.pattern.permute.xlu0 2
        %2482 = vperm.xlu0 %2481, %v529
        %v2483 = vpop.permute.xlu0 %2482
        %2485 = vset.pattern.permute.xlu0 2
        %2486 = vperm.xlu0 %2485, %v530
        %v2487 = vpop.permute.xlu0 %2486
        %2489 = vset.pattern.permute.xlu0 2
        %2490 = vperm.xlu0 %2489, %v531
        %v2491 = vpop.permute.xlu0 %2490
        %2493 = vset.pattern.permute.xlu0 2
        %2494 = vperm.xlu0 %2493, %v532
        %v2495 = vpop.permute.xlu0 %2494
        %2497 = vset.pattern.permute.xlu0 2
        %2498 = vperm.xlu0 %2497, %v533
        %v2499 = vpop.permute.xlu0 %2498
        %2501 = vset.pattern.permute.xlu0 2
        %2502 = vperm.xlu0 %2501, %v534
        %v2503 = vpop.permute.xlu0 %2502
        %2505 = vset.pattern.permute.xlu0 2
        %2506 = vperm.xlu0 %2505, %v535
        %v2507 = vpop.permute.xlu0 %2506
        %2509 = vset.pattern.permute.xlu0 2
        %2510 = vperm.xlu0 %2509, %v536
        %v2511 = vpop.permute.xlu0 %2510
        %2513 = vset.pattern.permute.xlu0 2
        %2514 = vperm.xlu0 %2513, %v537
        %v2515 = vpop.permute.xlu0 %2514
        %2517 = vset.pattern.permute.xlu0 2
        %2518 = vperm.xlu0 %2517, %v538
        %v2519 = vpop.permute.xlu0 %2518
        %2521 = vset.pattern.permute.xlu0 2
        %2522 = vperm.xlu0 %2521, %v539
        %v2523 = vpop.permute.xlu0 %2522
        %2525 = vset.pattern.permute.xlu0 2
        %2526 = vperm.xlu0 %2525, %v540
        %v2527 = vpop.permute.xlu0 %2526
        %2529 = vset.pattern.permute.xlu0 2
        %2530 = vperm.xlu0 %2529, %v541
        %v2531 = vpop.permute.xlu0 %2530
        %2533 = vset.pattern.permute.xlu0 2
        %2534 = vperm.xlu0 %2533, %v542
        %v2535 = vpop.permute.xlu0 %2534
        %2537 = vset.pattern.permute.xlu0 2
        %2538 = vperm.xlu0 %2537, %v543
        %v2539 = vpop.permute.xlu0 %2538
        %2541 = vset.pattern.permute.xlu0 2
        %2542 = vperm.xlu0 %2541, %v544
        %v2543 = vpop.permute.xlu0 %2542
        %2545 = vset.pattern.permute.xlu0 2
        %2546 = vperm.xlu0 %2545, %v545
        %v2547 = vpop.permute.xlu0 %2546
        %2549 = vset.pattern.permute.xlu0 2
        %2550 = vperm.xlu0 %2549, %v546
        %v2551 = vpop.permute.xlu0 %2550
        %2553 = vset.pattern.permute.xlu0 2
        %2554 = vperm.xlu0 %2553, %v547
        %v2555 = vpop.permute.xlu0 %2554
        %2557 = vset.pattern.permute.xlu0 2
        %2558 = vperm.xlu0 %2557, %v548
        %v2559 = vpop.permute.xlu0 %2558
        %2561 = vset.pattern.permute.xlu0 2
        %2562 = vperm.xlu0 %2561, %v549
        %v2563 = vpop.permute.xlu0 %2562
        %2565 = vset.pattern.permute.xlu0 2
        %2566 = vperm.xlu0 %2565, %v550
        %v2567 = vpop.permute.xlu0 %2566
        %2569 = vset.pattern.permute.xlu0 2
        %2570 = vperm.xlu0 %2569, %v551
        %v2571 = vpop.permute.xlu0 %2570
        %2573 = vset.pattern.permute.xlu0 2
        %2574 = vperm.xlu0 %2573, %v552
        %v2575 = vpop.permute.xlu0 %2574
        %2577 = vset.pattern.permute.xlu0 2
        %2578 = vperm.xlu0 %2577, %v553
        %v2579 = vpop.permute.xlu0 %2578
        %2581 = vset.pattern.permute.xlu0 2
        %2582 = vperm.xlu0 %2581, %v554
        %v2583 = vpop.permute.xlu0 %2582
        %2585 = vset.pattern.permute.xlu0 2
        %2586 = vperm.xlu0 %2585, %v555
        %v2587 = vpop.permute.xlu0 %2586
        %2589 = vset.pattern.permute.xlu0 2
        %2590 = vperm.xlu0 %2589, %v556
        %v2591 = vpop.permute.xlu0 %2590
        %2593 = vset.pattern.permute.xlu0 2
        %2594 = vperm.xlu0 %2593, %v557
        %v2595 = vpop.permute.xlu0 %2594
        %2597 = vset.pattern.permute.xlu0 2
        %2598 = vperm.xlu0 %2597, %v558
        %v2599 = vpop.permute.xlu0 %2598
        %2601 = vset.pattern.permute.xlu0 2
        %2602 = vperm.xlu0 %2601, %v559
        %v2603 = vpop.permute.xlu0 %2602
        %2605 = vset.pattern.permute.xlu0 2
        %2606 = vperm.xlu0 %2605, %v560
        %v2607 = vpop.permute.xlu0 %2606
        %2609 = vset.pattern.permute.xlu0 2
        %2610 = vperm.xlu0 %2609, %v561
        %v2611 = vpop.permute.xlu0 %2610
        %2613 = vset.pattern.permute.xlu0 2
        %2614 = vperm.xlu0 %2613, %v562
        %v2615 = vpop.permute.xlu0 %2614
        %2617 = vset.pattern.permute.xlu0 2
        %2618 = vperm.xlu0 %2617, %v563
        %v2619 = vpop.permute.xlu0 %2618
        %v2621 = vlaneseq
        %v2622 = vshrl.u32 %v2621, 7
        %v2623 = vsub.s32 2, %v2622
        %v2624 = vrot.slane %v564, %v2623
        %v2625 = vmul.f32 %v2111, %v2624
        %v2626 = vmul.f32 %v2115, %v2624
        %v2627 = vmul.f32 %v2119, %v2624
        %v2628 = vmul.f32 %v2123, %v2624
        %v2629 = vmul.f32 %v2127, %v2624
        %v2630 = vmul.f32 %v2131, %v2624
        %v2631 = vmul.f32 %v2135, %v2624
        %v2632 = vmul.f32 %v2139, %v2624
        %v2633 = vmul.f32 %v2143, %v2624
        %v2634 = vmul.f32 %v2147, %v2624
        %v2635 = vmul.f32 %v2151, %v2624
        %v2636 = vmul.f32 %v2155, %v2624
        %v2637 = vmul.f32 %v2159, %v2624
        %v2638 = vmul.f32 %v2163, %v2624
        %v2639 = vmul.f32 %v2167, %v2624
        %v2640 = vmul.f32 %v2171, %v2624
        %v2641 = vmul.f32 %v2175, %v2624
        %v2642 = vmul.f32 %v2179, %v2624
        %v2643 = vmul.f32 %v2183, %v2624
        %v2644 = vmul.f32 %v2187, %v2624
        %v2645 = vmul.f32 %v2191, %v2624
        %v2646 = vmul.f32 %v2195, %v2624
        %v2647 = vmul.f32 %v2199, %v2624
        %v2648 = vmul.f32 %v2203, %v2624
        %v2649 = vmul.f32 %v2207, %v2624
        %v2650 = vmul.f32 %v2211, %v2624
        %v2651 = vmul.f32 %v2215, %v2624
        %v2652 = vmul.f32 %v2219, %v2624
        %v2653 = vmul.f32 %v2223, %v2624
        %v2654 = vmul.f32 %v2227, %v2624
        %v2655 = vmul.f32 %v2231, %v2624
        %v2656 = vmul.f32 %v2235, %v2624
        %v2657 = vmul.f32 %v2239, %v2624
        %v2658 = vmul.f32 %v2243, %v2624
        %v2659 = vmul.f32 %v2247, %v2624
        %v2660 = vmul.f32 %v2251, %v2624
        %v2661 = vmul.f32 %v2255, %v2624
        %v2662 = vmul.f32 %v2259, %v2624
        %v2663 = vmul.f32 %v2263, %v2624
        %v2664 = vmul.f32 %v2267, %v2624
        %v2665 = vmul.f32 %v2271, %v2624
        %v2666 = vmul.f32 %v2275, %v2624
        %v2667 = vmul.f32 %v2279, %v2624
        %v2668 = vmul.f32 %v2283, %v2624
        %v2669 = vmul.f32 %v2287, %v2624
        %v2670 = vmul.f32 %v2291, %v2624
        %v2671 = vmul.f32 %v2295, %v2624
        %v2672 = vmul.f32 %v2299, %v2624
        %v2673 = vmul.f32 %v2303, %v2624
        %v2674 = vmul.f32 %v2307, %v2624
        %v2675 = vmul.f32 %v2311, %v2624
        %v2676 = vmul.f32 %v2315, %v2624
        %v2677 = vmul.f32 %v2319, %v2624
        %v2678 = vmul.f32 %v2323, %v2624
        %v2679 = vmul.f32 %v2327, %v2624
        %v2680 = vmul.f32 %v2331, %v2624
        %v2681 = vmul.f32 %v2335, %v2624
        %v2682 = vmul.f32 %v2339, %v2624
        %v2683 = vmul.f32 %v2343, %v2624
        %v2684 = vmul.f32 %v2347, %v2624
        %v2685 = vmul.f32 %v2351, %v2624
        %v2686 = vmul.f32 %v2355, %v2624
        %v2687 = vmul.f32 %v2359, %v2624
        %v2688 = vmul.f32 %v2363, %v2624
        %v2689 = vmul.f32 %v2367, %v2624
        %v2690 = vmul.f32 %v2371, %v2624
        %v2691 = vmul.f32 %v2375, %v2624
        %v2692 = vmul.f32 %v2379, %v2624
        %v2693 = vmul.f32 %v2383, %v2624
        %v2694 = vmul.f32 %v2387, %v2624
        %v2695 = vmul.f32 %v2391, %v2624
        %v2696 = vmul.f32 %v2395, %v2624
        %v2697 = vmul.f32 %v2399, %v2624
        %v2698 = vmul.f32 %v2403, %v2624
        %v2699 = vmul.f32 %v2407, %v2624
        %v2700 = vmul.f32 %v2411, %v2624
        %v2701 = vmul.f32 %v2415, %v2624
        %v2702 = vmul.f32 %v2419, %v2624
        %v2703 = vmul.f32 %v2423, %v2624
        %v2704 = vmul.f32 %v2427, %v2624
        %v2705 = vmul.f32 %v2431, %v2624
        %v2706 = vmul.f32 %v2435, %v2624
        %v2707 = vmul.f32 %v2439, %v2624
        %v2708 = vmul.f32 %v2443, %v2624
        %v2709 = vmul.f32 %v2447, %v2624
        %v2710 = vmul.f32 %v2451, %v2624
        %v2711 = vmul.f32 %v2455, %v2624
        %v2712 = vmul.f32 %v2459, %v2624
        %v2713 = vmul.f32 %v2463, %v2624
        %v2714 = vmul.f32 %v2467, %v2624
        %v2715 = vmul.f32 %v2471, %v2624
        %v2716 = vmul.f32 %v2475, %v2624
        %v2717 = vmul.f32 %v2479, %v2624
        %v2718 = vmul.f32 %v2483, %v2624
        %v2719 = vmul.f32 %v2487, %v2624
        %v2720 = vmul.f32 %v2491, %v2624
        %v2721 = vmul.f32 %v2495, %v2624
        %v2722 = vmul.f32 %v2499, %v2624
        %v2723 = vmul.f32 %v2503, %v2624
        %v2724 = vmul.f32 %v2507, %v2624
        %v2725 = vmul.f32 %v2511, %v2624
        %v2726 = vmul.f32 %v2515, %v2624
        %v2727 = vmul.f32 %v2519, %v2624
        %v2728 = vmul.f32 %v2523, %v2624
        %v2729 = vmul.f32 %v2527, %v2624
        %v2730 = vmul.f32 %v2531, %v2624
        %v2731 = vmul.f32 %v2535, %v2624
        %v2732 = vmul.f32 %v2539, %v2624
        %v2733 = vmul.f32 %v2543, %v2624
        %v2734 = vmul.f32 %v2547, %v2624
        %v2735 = vmul.f32 %v2551, %v2624
        %v2736 = vmul.f32 %v2555, %v2624
        %v2737 = vmul.f32 %v2559, %v2624
        %v2738 = vmul.f32 %v2563, %v2624
        %v2739 = vmul.f32 %v2567, %v2624
        %v2740 = vmul.f32 %v2571, %v2624
        %v2741 = vmul.f32 %v2575, %v2624
        %v2742 = vmul.f32 %v2579, %v2624
        %v2743 = vmul.f32 %v2583, %v2624
        %v2744 = vmul.f32 %v2587, %v2624
        %v2745 = vmul.f32 %v2591, %v2624
        %v2746 = vmul.f32 %v2595, %v2624
        %v2747 = vmul.f32 %v2599, %v2624
        %v2748 = vmul.f32 %v2603, %v2624
        %v2749 = vmul.f32 %v2607, %v2624
        %v2750 = vmul.f32 %v2611, %v2624
        %v2751 = vmul.f32 %v2615, %v2624
        %v2752 = vmul.f32 %v2619, %v2624
        %v2753 = vadd.f32 %v1981, %v2625
        %v2754 = vadd.f32 %v1982, %v2626
        %v2755 = vadd.f32 %v1983, %v2627
        %v2756 = vadd.f32 %v1984, %v2628
        %v2757 = vadd.f32 %v1985, %v2629
        %v2758 = vadd.f32 %v1986, %v2630
        %v2759 = vadd.f32 %v1987, %v2631
        %v2760 = vadd.f32 %v1988, %v2632
        %v2761 = vadd.f32 %v1989, %v2633
        %v2762 = vadd.f32 %v1990, %v2634
        %v2763 = vadd.f32 %v1991, %v2635
        %v2764 = vadd.f32 %v1992, %v2636
        %v2765 = vadd.f32 %v1993, %v2637
        %v2766 = vadd.f32 %v1994, %v2638
        %v2767 = vadd.f32 %v1995, %v2639
        %v2768 = vadd.f32 %v1996, %v2640
        %v2769 = vadd.f32 %v1997, %v2641
        %v2770 = vadd.f32 %v1998, %v2642
        %v2771 = vadd.f32 %v1999, %v2643
        %v2772 = vadd.f32 %v2000, %v2644
        %v2773 = vadd.f32 %v2001, %v2645
        %v2774 = vadd.f32 %v2002, %v2646
        %v2775 = vadd.f32 %v2003, %v2647
        %v2776 = vadd.f32 %v2004, %v2648
        %v2777 = vadd.f32 %v2005, %v2649
        %v2778 = vadd.f32 %v2006, %v2650
        %v2779 = vadd.f32 %v2007, %v2651
        %v2780 = vadd.f32 %v2008, %v2652
        %v2781 = vadd.f32 %v2009, %v2653
        %v2782 = vadd.f32 %v2010, %v2654
        %v2783 = vadd.f32 %v2011, %v2655
        %v2784 = vadd.f32 %v2012, %v2656
        %v2785 = vadd.f32 %v2013, %v2657
        %v2786 = vadd.f32 %v2014, %v2658
        %v2787 = vadd.f32 %v2015, %v2659
        %v2788 = vadd.f32 %v2016, %v2660
        %v2789 = vadd.f32 %v2017, %v2661
        %v2790 = vadd.f32 %v2018, %v2662
        %v2791 = vadd.f32 %v2019, %v2663
        %v2792 = vadd.f32 %v2020, %v2664
        %v2793 = vadd.f32 %v2021, %v2665
        %v2794 = vadd.f32 %v2022, %v2666
        %v2795 = vadd.f32 %v2023, %v2667
        %v2796 = vadd.f32 %v2024, %v2668
        %v2797 = vadd.f32 %v2025, %v2669
        %v2798 = vadd.f32 %v2026, %v2670
        %v2799 = vadd.f32 %v2027, %v2671
        %v2800 = vadd.f32 %v2028, %v2672
        %v2801 = vadd.f32 %v2029, %v2673
        %v2802 = vadd.f32 %v2030, %v2674
        %v2803 = vadd.f32 %v2031, %v2675
        %v2804 = vadd.f32 %v2032, %v2676
        %v2805 = vadd.f32 %v2033, %v2677
        %v2806 = vadd.f32 %v2034, %v2678
        %v2807 = vadd.f32 %v2035, %v2679
        %v2808 = vadd.f32 %v2036, %v2680
        %v2809 = vadd.f32 %v2037, %v2681
        %v2810 = vadd.f32 %v2038, %v2682
        %v2811 = vadd.f32 %v2039, %v2683
        %v2812 = vadd.f32 %v2040, %v2684
        %v2813 = vadd.f32 %v2041, %v2685
        %v2814 = vadd.f32 %v2042, %v2686
        %v2815 = vadd.f32 %v2043, %v2687
        %v2816 = vadd.f32 %v2044, %v2688
        %v2817 = vadd.f32 %v2045, %v2689
        %v2818 = vadd.f32 %v2046, %v2690
        %v2819 = vadd.f32 %v2047, %v2691
        %v2820 = vadd.f32 %v2048, %v2692
        %v2821 = vadd.f32 %v2049, %v2693
        %v2822 = vadd.f32 %v2050, %v2694
        %v2823 = vadd.f32 %v2051, %v2695
        %v2824 = vadd.f32 %v2052, %v2696
        %v2825 = vadd.f32 %v2053, %v2697
        %v2826 = vadd.f32 %v2054, %v2698
        %v2827 = vadd.f32 %v2055, %v2699
        %v2828 = vadd.f32 %v2056, %v2700
        %v2829 = vadd.f32 %v2057, %v2701
        %v2830 = vadd.f32 %v2058, %v2702
        %v2831 = vadd.f32 %v2059, %v2703
        %v2832 = vadd.f32 %v2060, %v2704
        %v2833 = vadd.f32 %v2061, %v2705
        %v2834 = vadd.f32 %v2062, %v2706
        %v2835 = vadd.f32 %v2063, %v2707
        %v2836 = vadd.f32 %v2064, %v2708
        %v2837 = vadd.f32 %v2065, %v2709
        %v2838 = vadd.f32 %v2066, %v2710
        %v2839 = vadd.f32 %v2067, %v2711
        %v2840 = vadd.f32 %v2068, %v2712
        %v2841 = vadd.f32 %v2069, %v2713
        %v2842 = vadd.f32 %v2070, %v2714
        %v2843 = vadd.f32 %v2071, %v2715
        %v2844 = vadd.f32 %v2072, %v2716
        %v2845 = vadd.f32 %v2073, %v2717
        %v2846 = vadd.f32 %v2074, %v2718
        %v2847 = vadd.f32 %v2075, %v2719
        %v2848 = vadd.f32 %v2076, %v2720
        %v2849 = vadd.f32 %v2077, %v2721
        %v2850 = vadd.f32 %v2078, %v2722
        %v2851 = vadd.f32 %v2079, %v2723
        %v2852 = vadd.f32 %v2080, %v2724
        %v2853 = vadd.f32 %v2081, %v2725
        %v2854 = vadd.f32 %v2082, %v2726
        %v2855 = vadd.f32 %v2083, %v2727
        %v2856 = vadd.f32 %v2084, %v2728
        %v2857 = vadd.f32 %v2085, %v2729
        %v2858 = vadd.f32 %v2086, %v2730
        %v2859 = vadd.f32 %v2087, %v2731
        %v2860 = vadd.f32 %v2088, %v2732
        %v2861 = vadd.f32 %v2089, %v2733
        %v2862 = vadd.f32 %v2090, %v2734
        %v2863 = vadd.f32 %v2091, %v2735
        %v2864 = vadd.f32 %v2092, %v2736
        %v2865 = vadd.f32 %v2093, %v2737
        %v2866 = vadd.f32 %v2094, %v2738
        %v2867 = vadd.f32 %v2095, %v2739
        %v2868 = vadd.f32 %v2096, %v2740
        %v2869 = vadd.f32 %v2097, %v2741
        %v2870 = vadd.f32 %v2098, %v2742
        %v2871 = vadd.f32 %v2099, %v2743
        %v2872 = vadd.f32 %v2100, %v2744
        %v2873 = vadd.f32 %v2101, %v2745
        %v2874 = vadd.f32 %v2102, %v2746
        %v2875 = vadd.f32 %v2103, %v2747
        %v2876 = vadd.f32 %v2104, %v2748
        %v2877 = vadd.f32 %v2105, %v2749
        %v2878 = vadd.f32 %v2106, %v2750
        %v2879 = vadd.f32 %v2107, %v2751
        %v2880 = vadd.f32 %v2108, %v2752
        %v2881 = vld [vmem:[%s2] sm:$0x1]
        %v2883 = vlaneseq
        %v2884 = vshrl.u32 %v2883, 7
        %v2885 = vsub.s32 0, %v2884
        %v2886 = vrot.slane %v2881, %v2885
        %v2888 = vadd.f32 %v2753, %v2886
        %v2889 = vadd.f32 %v2754, %v2886
        %v2890 = vadd.f32 %v2755, %v2886
        %v2891 = vadd.f32 %v2756, %v2886
        %v2892 = vadd.f32 %v2757, %v2886
        %v2893 = vadd.f32 %v2758, %v2886
        %v2894 = vadd.f32 %v2759, %v2886
        %v2895 = vadd.f32 %v2760, %v2886
        %v2896 = vadd.f32 %v2761, %v2886
        %v2897 = vadd.f32 %v2762, %v2886
        %v2898 = vadd.f32 %v2763, %v2886
        %v2899 = vadd.f32 %v2764, %v2886
        %v2900 = vadd.f32 %v2765, %v2886
        %v2901 = vadd.f32 %v2766, %v2886
        %v2902 = vadd.f32 %v2767, %v2886
        %v2903 = vadd.f32 %v2768, %v2886
        %v2904 = vadd.f32 %v2769, %v2886
        %v2905 = vadd.f32 %v2770, %v2886
        %v2906 = vadd.f32 %v2771, %v2886
        %v2907 = vadd.f32 %v2772, %v2886
        %v2908 = vadd.f32 %v2773, %v2886
        %v2909 = vadd.f32 %v2774, %v2886
        %v2910 = vadd.f32 %v2775, %v2886
        %v2911 = vadd.f32 %v2776, %v2886
        %v2912 = vadd.f32 %v2777, %v2886
        %v2913 = vadd.f32 %v2778, %v2886
        %v2914 = vadd.f32 %v2779, %v2886
        %v2915 = vadd.f32 %v2780, %v2886
        %v2916 = vadd.f32 %v2781, %v2886
        %v2917 = vadd.f32 %v2782, %v2886
        %v2918 = vadd.f32 %v2783, %v2886
        %v2919 = vadd.f32 %v2784, %v2886
        %v2920 = vadd.f32 %v2785, %v2886
        %v2921 = vadd.f32 %v2786, %v2886
        %v2922 = vadd.f32 %v2787, %v2886
        %v2923 = vadd.f32 %v2788, %v2886
        %v2924 = vadd.f32 %v2789, %v2886
        %v2925 = vadd.f32 %v2790, %v2886
        %v2926 = vadd.f32 %v2791, %v2886
        %v2927 = vadd.f32 %v2792, %v2886
        %v2928 = vadd.f32 %v2793, %v2886
        %v2929 = vadd.f32 %v2794, %v2886
        %v2930 = vadd.f32 %v2795, %v2886
        %v2931 = vadd.f32 %v2796, %v2886
        %v2932 = vadd.f32 %v2797, %v2886
        %v2933 = vadd.f32 %v2798, %v2886
        %v2934 = vadd.f32 %v2799, %v2886
        %v2935 = vadd.f32 %v2800, %v2886
        %v2936 = vadd.f32 %v2801, %v2886
        %v2937 = vadd.f32 %v2802, %v2886
        %v2938 = vadd.f32 %v2803, %v2886
        %v2939 = vadd.f32 %v2804, %v2886
        %v2940 = vadd.f32 %v2805, %v2886
        %v2941 = vadd.f32 %v2806, %v2886
        %v2942 = vadd.f32 %v2807, %v2886
        %v2943 = vadd.f32 %v2808, %v2886
        %v2944 = vadd.f32 %v2809, %v2886
        %v2945 = vadd.f32 %v2810, %v2886
        %v2946 = vadd.f32 %v2811, %v2886
        %v2947 = vadd.f32 %v2812, %v2886
        %v2948 = vadd.f32 %v2813, %v2886
        %v2949 = vadd.f32 %v2814, %v2886
        %v2950 = vadd.f32 %v2815, %v2886
        %v2951 = vadd.f32 %v2816, %v2886
        %v2952 = vadd.f32 %v2817, %v2886
        %v2953 = vadd.f32 %v2818, %v2886
        %v2954 = vadd.f32 %v2819, %v2886
        %v2955 = vadd.f32 %v2820, %v2886
        %v2956 = vadd.f32 %v2821, %v2886
        %v2957 = vadd.f32 %v2822, %v2886
        %v2958 = vadd.f32 %v2823, %v2886
        %v2959 = vadd.f32 %v2824, %v2886
        %v2960 = vadd.f32 %v2825, %v2886
        %v2961 = vadd.f32 %v2826, %v2886
        %v2962 = vadd.f32 %v2827, %v2886
        %v2963 = vadd.f32 %v2828, %v2886
        %v2964 = vadd.f32 %v2829, %v2886
        %v2965 = vadd.f32 %v2830, %v2886
        %v2966 = vadd.f32 %v2831, %v2886
        %v2967 = vadd.f32 %v2832, %v2886
        %v2968 = vadd.f32 %v2833, %v2886
        %v2969 = vadd.f32 %v2834, %v2886
        %v2970 = vadd.f32 %v2835, %v2886
        %v2971 = vadd.f32 %v2836, %v2886
        %v2972 = vadd.f32 %v2837, %v2886
        %v2973 = vadd.f32 %v2838, %v2886
        %v2974 = vadd.f32 %v2839, %v2886
        %v2975 = vadd.f32 %v2840, %v2886
        %v2976 = vadd.f32 %v2841, %v2886
        %v2977 = vadd.f32 %v2842, %v2886
        %v2978 = vadd.f32 %v2843, %v2886
        %v2979 = vadd.f32 %v2844, %v2886
        %v2980 = vadd.f32 %v2845, %v2886
        %v2981 = vadd.f32 %v2846, %v2886
        %v2982 = vadd.f32 %v2847, %v2886
        %v2983 = vadd.f32 %v2848, %v2886
        %v2984 = vadd.f32 %v2849, %v2886
        %v2985 = vadd.f32 %v2850, %v2886
        %v2986 = vadd.f32 %v2851, %v2886
        %v2987 = vadd.f32 %v2852, %v2886
        %v2988 = vadd.f32 %v2853, %v2886
        %v2989 = vadd.f32 %v2854, %v2886
        %v2990 = vadd.f32 %v2855, %v2886
        %v2991 = vadd.f32 %v2856, %v2886
        %v2992 = vadd.f32 %v2857, %v2886
        %v2993 = vadd.f32 %v2858, %v2886
        %v2994 = vadd.f32 %v2859, %v2886
        %v2995 = vadd.f32 %v2860, %v2886
        %v2996 = vadd.f32 %v2861, %v2886
        %v2997 = vadd.f32 %v2862, %v2886
        %v2998 = vadd.f32 %v2863, %v2886
        %v2999 = vadd.f32 %v2864, %v2886
        %v3000 = vadd.f32 %v2865, %v2886
        %v3001 = vadd.f32 %v2866, %v2886
        %v3002 = vadd.f32 %v2867, %v2886
        %v3003 = vadd.f32 %v2868, %v2886
        %v3004 = vadd.f32 %v2869, %v2886
        %v3005 = vadd.f32 %v2870, %v2886
        %v3006 = vadd.f32 %v2871, %v2886
        %v3007 = vadd.f32 %v2872, %v2886
        %v3008 = vadd.f32 %v2873, %v2886
        %v3009 = vadd.f32 %v2874, %v2886
        %v3010 = vadd.f32 %v2875, %v2886
        %v3011 = vadd.f32 %v2876, %v2886
        %v3012 = vadd.f32 %v2877, %v2886
        %v3013 = vadd.f32 %v2878, %v2886
        %v3014 = vadd.f32 %v2879, %v2886
        %v3015 = vadd.f32 %v2880, %v2886
        %v3016 = vmax.f32 %v2888, 0.0
        %v3017 = vmax.f32 %v2889, 0.0
        %v3018 = vmax.f32 %v2890, 0.0
        %v3019 = vmax.f32 %v2891, 0.0
        %v3020 = vmax.f32 %v2892, 0.0
        %v3021 = vmax.f32 %v2893, 0.0
        %v3022 = vmax.f32 %v2894, 0.0
        %v3023 = vmax.f32 %v2895, 0.0
        %v3024 = vmax.f32 %v2896, 0.0
        %v3025 = vmax.f32 %v2897, 0.0
        %v3026 = vmax.f32 %v2898, 0.0
        %v3027 = vmax.f32 %v2899, 0.0
        %v3028 = vmax.f32 %v2900, 0.0
        %v3029 = vmax.f32 %v2901, 0.0
        %v3030 = vmax.f32 %v2902, 0.0
        %v3031 = vmax.f32 %v2903, 0.0
        %v3032 = vmax.f32 %v2904, 0.0
        %v3033 = vmax.f32 %v2905, 0.0
        %v3034 = vmax.f32 %v2906, 0.0
        %v3035 = vmax.f32 %v2907, 0.0
        %v3036 = vmax.f32 %v2908, 0.0
        %v3037 = vmax.f32 %v2909, 0.0
        %v3038 = vmax.f32 %v2910, 0.0
        %v3039 = vmax.f32 %v2911, 0.0
        %v3040 = vmax.f32 %v2912, 0.0
        %v3041 = vmax.f32 %v2913, 0.0
        %v3042 = vmax.f32 %v2914, 0.0
        %v3043 = vmax.f32 %v2915, 0.0
        %v3044 = vmax.f32 %v2916, 0.0
        %v3045 = vmax.f32 %v2917, 0.0
        %v3046 = vmax.f32 %v2918, 0.0
        %v3047 = vmax.f32 %v2919, 0.0
        %v3048 = vmax.f32 %v2920, 0.0
        %v3049 = vmax.f32 %v2921, 0.0
        %v3050 = vmax.f32 %v2922, 0.0
        %v3051 = vmax.f32 %v2923, 0.0
        %v3052 = vmax.f32 %v2924, 0.0
        %v3053 = vmax.f32 %v2925, 0.0
        %v3054 = vmax.f32 %v2926, 0.0
        %v3055 = vmax.f32 %v2927, 0.0
        %v3056 = vmax.f32 %v2928, 0.0
        %v3057 = vmax.f32 %v2929, 0.0
        %v3058 = vmax.f32 %v2930, 0.0
        %v3059 = vmax.f32 %v2931, 0.0
        %v3060 = vmax.f32 %v2932, 0.0
        %v3061 = vmax.f32 %v2933, 0.0
        %v3062 = vmax.f32 %v2934, 0.0
        %v3063 = vmax.f32 %v2935, 0.0
        %v3064 = vmax.f32 %v2936, 0.0
        %v3065 = vmax.f32 %v2937, 0.0
        %v3066 = vmax.f32 %v2938, 0.0
        %v3067 = vmax.f32 %v2939, 0.0
        %v3068 = vmax.f32 %v2940, 0.0
        %v3069 = vmax.f32 %v2941, 0.0
        %v3070 = vmax.f32 %v2942, 0.0
        %v3071 = vmax.f32 %v2943, 0.0
        %v3072 = vmax.f32 %v2944, 0.0
        %v3073 = vmax.f32 %v2945, 0.0
        %v3074 = vmax.f32 %v2946, 0.0
        %v3075 = vmax.f32 %v2947, 0.0
        %v3076 = vmax.f32 %v2948, 0.0
        %v3077 = vmax.f32 %v2949, 0.0
        %v3078 = vmax.f32 %v2950, 0.0
        %v3079 = vmax.f32 %v2951, 0.0
        %v3080 = vmax.f32 %v2952, 0.0
        %v3081 = vmax.f32 %v2953, 0.0
        %v3082 = vmax.f32 %v2954, 0.0
        %v3083 = vmax.f32 %v2955, 0.0
        %v3084 = vmax.f32 %v2956, 0.0
        %v3085 = vmax.f32 %v2957, 0.0
        %v3086 = vmax.f32 %v2958, 0.0
        %v3087 = vmax.f32 %v2959, 0.0
        %v3088 = vmax.f32 %v2960, 0.0
        %v3089 = vmax.f32 %v2961, 0.0
        %v3090 = vmax.f32 %v2962, 0.0
        %v3091 = vmax.f32 %v2963, 0.0
        %v3092 = vmax.f32 %v2964, 0.0
        %v3093 = vmax.f32 %v2965, 0.0
        %v3094 = vmax.f32 %v2966, 0.0
        %v3095 = vmax.f32 %v2967, 0.0
        %v3096 = vmax.f32 %v2968, 0.0
        %v3097 = vmax.f32 %v2969, 0.0
        %v3098 = vmax.f32 %v2970, 0.0
        %v3099 = vmax.f32 %v2971, 0.0
        %v3100 = vmax.f32 %v2972, 0.0
        %v3101 = vmax.f32 %v2973, 0.0
        %v3102 = vmax.f32 %v2974, 0.0
        %v3103 = vmax.f32 %v2975, 0.0
        %v3104 = vmax.f32 %v2976, 0.0
        %v3105 = vmax.f32 %v2977, 0.0
        %v3106 = vmax.f32 %v2978, 0.0
        %v3107 = vmax.f32 %v2979, 0.0
        %v3108 = vmax.f32 %v2980, 0.0
        %v3109 = vmax.f32 %v2981, 0.0
        %v3110 = vmax.f32 %v2982, 0.0
        %v3111 = vmax.f32 %v2983, 0.0
        %v3112 = vmax.f32 %v2984, 0.0
        %v3113 = vmax.f32 %v2985, 0.0
        %v3114 = vmax.f32 %v2986, 0.0
        %v3115 = vmax.f32 %v2987, 0.0
        %v3116 = vmax.f32 %v2988, 0.0
        %v3117 = vmax.f32 %v2989, 0.0
        %v3118 = vmax.f32 %v2990, 0.0
        %v3119 = vmax.f32 %v2991, 0.0
        %v3120 = vmax.f32 %v2992, 0.0
        %v3121 = vmax.f32 %v2993, 0.0
        %v3122 = vmax.f32 %v2994, 0.0
        %v3123 = vmax.f32 %v2995, 0.0
        %v3124 = vmax.f32 %v2996, 0.0
        %v3125 = vmax.f32 %v2997, 0.0
        %v3126 = vmax.f32 %v2998, 0.0
        %v3127 = vmax.f32 %v2999, 0.0
        %v3128 = vmax.f32 %v3000, 0.0
        %v3129 = vmax.f32 %v3001, 0.0
        %v3130 = vmax.f32 %v3002, 0.0
        %v3131 = vmax.f32 %v3003, 0.0
        %v3132 = vmax.f32 %v3004, 0.0
        %v3133 = vmax.f32 %v3005, 0.0
        %v3134 = vmax.f32 %v3006, 0.0
        %v3135 = vmax.f32 %v3007, 0.0
        %v3136 = vmax.f32 %v3008, 0.0
        %v3137 = vmax.f32 %v3009, 0.0
        %v3138 = vmax.f32 %v3010, 0.0
        %v3139 = vmax.f32 %v3011, 0.0
        %v3140 = vmax.f32 %v3012, 0.0
        %v3141 = vmax.f32 %v3013, 0.0
        %v3142 = vmax.f32 %v3014, 0.0
        %v3143 = vmax.f32 %v3015, 0.0
        %v3144 = vpack.c.bf16 %v3017, %v3016
        %v3145 = vpack.c.bf16 %v3019, %v3018
        %v3146 = vpack.c.bf16 %v3021, %v3020
        %v3147 = vpack.c.bf16 %v3023, %v3022
        %v3148 = vpack.c.bf16 %v3025, %v3024
        %v3149 = vpack.c.bf16 %v3027, %v3026
        %v3150 = vpack.c.bf16 %v3029, %v3028
        %v3151 = vpack.c.bf16 %v3031, %v3030
        %v3152 = vpack.c.bf16 %v3033, %v3032
        %v3153 = vpack.c.bf16 %v3035, %v3034
        %v3154 = vpack.c.bf16 %v3037, %v3036
        %v3155 = vpack.c.bf16 %v3039, %v3038
        %v3156 = vpack.c.bf16 %v3041, %v3040
        %v3157 = vpack.c.bf16 %v3043, %v3042
        %v3158 = vpack.c.bf16 %v3045, %v3044
        %v3159 = vpack.c.bf16 %v3047, %v3046
        %v3160 = vpack.c.bf16 %v3049, %v3048
        %v3161 = vpack.c.bf16 %v3051, %v3050
        %v3162 = vpack.c.bf16 %v3053, %v3052
        %v3163 = vpack.c.bf16 %v3055, %v3054
        %v3164 = vpack.c.bf16 %v3057, %v3056
        %v3165 = vpack.c.bf16 %v3059, %v3058
        %v3166 = vpack.c.bf16 %v3061, %v3060
        %v3167 = vpack.c.bf16 %v3063, %v3062
        %v3168 = vpack.c.bf16 %v3065, %v3064
        %v3169 = vpack.c.bf16 %v3067, %v3066
        %v3170 = vpack.c.bf16 %v3069, %v3068
        %v3171 = vpack.c.bf16 %v3071, %v3070
        %v3172 = vpack.c.bf16 %v3073, %v3072
        %v3173 = vpack.c.bf16 %v3075, %v3074
        %v3174 = vpack.c.bf16 %v3077, %v3076
        %v3175 = vpack.c.bf16 %v3079, %v3078
        %v3176 = vpack.c.bf16 %v3081, %v3080
        %v3177 = vpack.c.bf16 %v3083, %v3082
        %v3178 = vpack.c.bf16 %v3085, %v3084
        %v3179 = vpack.c.bf16 %v3087, %v3086
        %v3180 = vpack.c.bf16 %v3089, %v3088
        %v3181 = vpack.c.bf16 %v3091, %v3090
        %v3182 = vpack.c.bf16 %v3093, %v3092
        %v3183 = vpack.c.bf16 %v3095, %v3094
        %v3184 = vpack.c.bf16 %v3097, %v3096
        %v3185 = vpack.c.bf16 %v3099, %v3098
        %v3186 = vpack.c.bf16 %v3101, %v3100
        %v3187 = vpack.c.bf16 %v3103, %v3102
        %v3188 = vpack.c.bf16 %v3105, %v3104
        %v3189 = vpack.c.bf16 %v3107, %v3106
        %v3190 = vpack.c.bf16 %v3109, %v3108
        %v3191 = vpack.c.bf16 %v3111, %v3110
        %v3192 = vpack.c.bf16 %v3113, %v3112
        %v3193 = vpack.c.bf16 %v3115, %v3114
        %v3194 = vpack.c.bf16 %v3117, %v3116
        %v3195 = vpack.c.bf16 %v3119, %v3118
        %v3196 = vpack.c.bf16 %v3121, %v3120
        %v3197 = vpack.c.bf16 %v3123, %v3122
        %v3198 = vpack.c.bf16 %v3125, %v3124
        %v3199 = vpack.c.bf16 %v3127, %v3126
        %v3200 = vpack.c.bf16 %v3129, %v3128
        %v3201 = vpack.c.bf16 %v3131, %v3130
        %v3202 = vpack.c.bf16 %v3133, %v3132
        %v3203 = vpack.c.bf16 %v3135, %v3134
        %v3204 = vpack.c.bf16 %v3137, %v3136
        %v3205 = vpack.c.bf16 %v3139, %v3138
        %v3206 = vpack.c.bf16 %v3141, %v3140
        %v3207 = vpack.c.bf16 %v3143, %v3142
        %v3208 = vld [vmem:[%s3] sm:$0xf]
        %v3209 = vld [vmem:[%s3 + $0x4] sm:$0xf]
        %v3210 = vld [vmem:[%s3 + $0x8] sm:$0xf]
        %v3211 = vld [vmem:[%s3 + $0xc] sm:$0xf]
        %v3212 = vld [vmem:[%s3 + $0x10] sm:$0xf]
        %v3213 = vld [vmem:[%s3 + $0x14] sm:$0xf]
        %v3214 = vld [vmem:[%s3 + $0x18] sm:$0xf]
        %v3215 = vld [vmem:[%s3 + $0x1c] sm:$0xf]
        %v3216 = vld [vmem:[%s4] sm:$0x1]
        %v3218 = vlaneseq
        %v3219 = vshrl.u32 %v3218, 7
        %v3220 = vsub.s32 0, %v3219
        %v3221 = vrot.slane %v3216, %v3220
        %v3231 = vunpack.c.l.b16 %v3208
        %v3232 = vunpack.c.l.b16 %v3209
        %v3233 = vunpack.c.l.b16 %v3210
        %v3234 = vunpack.c.l.b16 %v3211
        %v3235 = vunpack.c.l.b16 %v3212
        %v3236 = vunpack.c.l.b16 %v3213
        %v3237 = vunpack.c.l.b16 %v3214
        %v3238 = vunpack.c.l.b16 %v3215
        %v3239 = vpack.c.b16 %v3232, %v3231
        %v3240 = vpack.c.b16 %v3234, %v3233
        %v3241 = vpack.c.b16 %v3236, %v3235
        %v3242 = vpack.c.b16 %v3238, %v3237
        %vm3247 = vcmask 523264
        %v3249 = vsel %vm3247, %v3144, 0
        %v3252 = vsel %vm3247, %v3145, 0
        %v3255 = vsel %vm3247, %v3146, 0
        %v3258 = vsel %vm3247, %v3147, 0
        %v3261 = vsel %vm3247, %v3148, 0
        %v3264 = vsel %vm3247, %v3149, 0
        %v3267 = vsel %vm3247, %v3150, 0
        %v3270 = vsel %vm3247, %v3151, 0
        %v3273 = vsel %vm3247, %v3152, 0
        %v3276 = vsel %vm3247, %v3153, 0
        %v3279 = vsel %vm3247, %v3154, 0
        %v3282 = vsel %vm3247, %v3155, 0
        %v3285 = vsel %vm3247, %v3156, 0
        %v3288 = vsel %vm3247, %v3157, 0
        %v3291 = vsel %vm3247, %v3158, 0
        %v3294 = vsel %vm3247, %v3159, 0
        %v3297 = vsel %vm3247, %v3160, 0
        %v3300 = vsel %vm3247, %v3161, 0
        %v3303 = vsel %vm3247, %v3162, 0
        %v3306 = vsel %vm3247, %v3163, 0
        %v3309 = vsel %vm3247, %v3164, 0
        %v3312 = vsel %vm3247, %v3165, 0
        %v3315 = vsel %vm3247, %v3166, 0
        %v3318 = vsel %vm3247, %v3167, 0
        %v3321 = vsel %vm3247, %v3168, 0
        %v3324 = vsel %vm3247, %v3169, 0
        %v3327 = vsel %vm3247, %v3170, 0
        %v3330 = vsel %vm3247, %v3171, 0
        %v3333 = vsel %vm3247, %v3172, 0
        %v3336 = vsel %vm3247, %v3173, 0
        %v3339 = vsel %vm3247, %v3174, 0
        %v3342 = vsel %vm3247, %v3175, 0
        %v3345 = vsel %vm3247, %v3176, 0
        %v3348 = vsel %vm3247, %v3177, 0
        %v3351 = vsel %vm3247, %v3178, 0
        %v3354 = vsel %vm3247, %v3179, 0
        %v3357 = vsel %vm3247, %v3180, 0
        %v3360 = vsel %vm3247, %v3181, 0
        %v3363 = vsel %vm3247, %v3182, 0
        %v3366 = vsel %vm3247, %v3183, 0
        %v3369 = vsel %vm3247, %v3184, 0
        %v3372 = vsel %vm3247, %v3185, 0
        %v3375 = vsel %vm3247, %v3186, 0
        %v3378 = vsel %vm3247, %v3187, 0
        %v3381 = vsel %vm3247, %v3188, 0
        %v3384 = vsel %vm3247, %v3189, 0
        %v3387 = vsel %vm3247, %v3190, 0
        %v3390 = vsel %vm3247, %v3191, 0
        %v3393 = vsel %vm3247, %v3192, 0
        %v3396 = vsel %vm3247, %v3193, 0
        %v3399 = vsel %vm3247, %v3194, 0
        %v3402 = vsel %vm3247, %v3195, 0
        %v3405 = vsel %vm3247, %v3196, 0
        %v3408 = vsel %vm3247, %v3197, 0
        %v3411 = vsel %vm3247, %v3198, 0
        %v3414 = vsel %vm3247, %v3199, 0
        %v3417 = vsel %vm3247, %v3200, 0
        %v3420 = vsel %vm3247, %v3201, 0
        %v3423 = vsel %vm3247, %v3202, 0
        %v3426 = vsel %vm3247, %v3203, 0
        %v3429 = vsel %vm3247, %v3204, 0
        %v3432 = vsel %vm3247, %v3205, 0
        %v3435 = vsel %vm3247, %v3206, 0
        %v3438 = vsel %vm3247, %v3207, 0
        %3440 = vmatprep.subr.bf16.mxu0 0
        %3441 = vmatpush1.bf16.msra.mxu0 0
        %3442 = vmatprep.subr.bf16.mxu0 0
        %3443 = vmatpush1.bf16.msra.mxu0 0
        %3444 = vmatprep.subr.bf16.mxu0 0
        %3445 = vmatpush1.bf16.msra.mxu0 0
        %3446 = vmatprep.subr.bf16.mxu0 0
        %3447 = vmatpush1.bf16.msra.mxu0 0
        %3448 = vmatprep.subr.bf16.mxu0 0
        %3449 = vmatpush1.bf16.msra.mxu0 %v3242
        %3450 = vmatprep.subr.bf16.mxu0 0
        %3451 = vmatpush1.bf16.msra.mxu0 %v3241
        %3452 = vmatprep.subr.bf16.mxu0 0
        %3453 = vmatpush1.bf16.msra.mxu0 %v3240
        %3454 = vmatprep.subr.bf16.mxu0 0
        %3455 = vmatpush1.bf16.msra.mxu0 %v3239
        %3456 = vmatprep.subr.bf16.mxu0 0
        %3457 = vmatpush2.bf16.msra.mxu0 0
        %3458 = vmatprep.subr.bf16.mxu0 0
        %3459 = vmatpush2.bf16.msra.mxu0 0
        %3460 = vmatprep.subr.bf16.mxu0 0
        %3461 = vmatpush2.bf16.msra.mxu0 0
        %3462 = vmatprep.subr.bf16.mxu0 0
        %3463 = vmatpush2.bf16.msra.mxu0 0
        %3464 = vmatprep.subr.bf16.mxu0 0
        %3465 = vmatpush2.bf16.msra.mxu0 0
        %3466 = vmatprep.subr.bf16.mxu0 0
        %3467 = vmatpush2.bf16.msra.mxu0 0
        %3468 = vmatprep.subr.bf16.mxu0 0
        %3469 = vmatpush2.bf16.msra.mxu0 0
        %3470 = vmatprep.subr.bf16.mxu0 0
        %3471 = vmatpush2.bf16.msra.mxu0 0
        %3472 = vmatprep.mubr.bf16.mxu0 0
        %3473 = vmatmul.mubr.bf16.gmra.mxu0 %v3249
        %v3474 = vpop.f32.mrf.mxu0
        %v3475 = vadd.f32 %v3221, %v3474
        %v3476 = vpop.f32.mrf.mxu0
        %v3477 = vpop.f32.mrf.mxu0
        %v3478 = vadd.f32 %v3221, %v3477
        %v3479 = vpop.f32.mrf.mxu0
        %3480 = vmatprep.mubr.bf16.mxu0 0
        %3481 = vmatmul.mubr.bf16.gmra.mxu0 %v3252
        %v3482 = vpop.f32.mrf.mxu0
        %v3483 = vadd.f32 %v3221, %v3482
        %v3484 = vpop.f32.mrf.mxu0
        %v3485 = vpop.f32.mrf.mxu0
        %v3486 = vadd.f32 %v3221, %v3485
        %v3487 = vpop.f32.mrf.mxu0
        %3488 = vmatprep.mubr.bf16.mxu0 0
        %3489 = vmatmul.mubr.bf16.gmra.mxu0 %v3255
        %v3490 = vpop.f32.mrf.mxu0
        %v3491 = vadd.f32 %v3221, %v3490
        %v3492 = vpop.f32.mrf.mxu0
        %v3493 = vpop.f32.mrf.mxu0
        %v3494 = vadd.f32 %v3221, %v3493
        %v3495 = vpop.f32.mrf.mxu0
        %3496 = vmatprep.mubr.bf16.mxu0 0
        %3497 = vmatmul.mubr.bf16.gmra.mxu0 %v3258
        %v3498 = vpop.f32.mrf.mxu0
        %v3499 = vadd.f32 %v3221, %v3498
        %v3500 = vpop.f32.mrf.mxu0
        %v3501 = vpop.f32.mrf.mxu0
        %v3502 = vadd.f32 %v3221, %v3501
        %v3503 = vpop.f32.mrf.mxu0
        %3504 = vmatprep.mubr.bf16.mxu0 0
        %3505 = vmatmul.mubr.bf16.gmra.mxu0 %v3261
        %v3506 = vpop.f32.mrf.mxu0
        %v3507 = vadd.f32 %v3221, %v3506
        %v3508 = vpop.f32.mrf.mxu0
        %v3509 = vpop.f32.mrf.mxu0
        %v3510 = vadd.f32 %v3221, %v3509
        %v3511 = vpop.f32.mrf.mxu0
        %3512 = vmatprep.mubr.bf16.mxu0 0
        %3513 = vmatmul.mubr.bf16.gmra.mxu0 %v3264
        %v3514 = vpop.f32.mrf.mxu0
        %v3515 = vadd.f32 %v3221, %v3514
        %v3516 = vpop.f32.mrf.mxu0
        %v3517 = vpop.f32.mrf.mxu0
        %v3518 = vadd.f32 %v3221, %v3517
        %v3519 = vpop.f32.mrf.mxu0
        %3520 = vmatprep.mubr.bf16.mxu0 0
        %3521 = vmatmul.mubr.bf16.gmra.mxu0 %v3267
        %v3522 = vpop.f32.mrf.mxu0
        %v3523 = vadd.f32 %v3221, %v3522
        %v3524 = vpop.f32.mrf.mxu0
        %v3525 = vpop.f32.mrf.mxu0
        %v3526 = vadd.f32 %v3221, %v3525
        %v3527 = vpop.f32.mrf.mxu0
        %3528 = vmatprep.mubr.bf16.mxu0 0
        %3529 = vmatmul.mubr.bf16.gmra.mxu0 %v3270
        %v3530 = vpop.f32.mrf.mxu0
        %v3531 = vadd.f32 %v3221, %v3530
        %v3532 = vpop.f32.mrf.mxu0
        %v3533 = vpop.f32.mrf.mxu0
        %v3534 = vadd.f32 %v3221, %v3533
        %v3535 = vpop.f32.mrf.mxu0
        %3536 = vmatprep.mubr.bf16.mxu0 0
        %3537 = vmatmul.mubr.bf16.gmra.mxu0 %v3273
        %v3538 = vpop.f32.mrf.mxu0
        %v3539 = vadd.f32 %v3221, %v3538
        %v3540 = vpop.f32.mrf.mxu0
        %v3541 = vpop.f32.mrf.mxu0
        %v3542 = vadd.f32 %v3221, %v3541
        %v3543 = vpop.f32.mrf.mxu0
        %3544 = vmatprep.mubr.bf16.mxu0 0
        %3545 = vmatmul.mubr.bf16.gmra.mxu0 %v3276
        %v3546 = vpop.f32.mrf.mxu0
        %v3547 = vadd.f32 %v3221, %v3546
        %v3548 = vpop.f32.mrf.mxu0
        %v3549 = vpop.f32.mrf.mxu0
        %v3550 = vadd.f32 %v3221, %v3549
        %v3551 = vpop.f32.mrf.mxu0
        %3552 = vmatprep.mubr.bf16.mxu0 0
        %3553 = vmatmul.mubr.bf16.gmra.mxu0 %v3279
        %v3554 = vpop.f32.mrf.mxu0
        %v3555 = vadd.f32 %v3221, %v3554
        %v3556 = vpop.f32.mrf.mxu0
        %v3557 = vpop.f32.mrf.mxu0
        %v3558 = vadd.f32 %v3221, %v3557
        %v3559 = vpop.f32.mrf.mxu0
        %3560 = vmatprep.mubr.bf16.mxu0 0
        %3561 = vmatmul.mubr.bf16.gmra.mxu0 %v3282
        %v3562 = vpop.f32.mrf.mxu0
        %v3563 = vadd.f32 %v3221, %v3562
        %v3564 = vpop.f32.mrf.mxu0
        %v3565 = vpop.f32.mrf.mxu0
        %v3566 = vadd.f32 %v3221, %v3565
        %v3567 = vpop.f32.mrf.mxu0
        %3568 = vmatprep.mubr.bf16.mxu0 0
        %3569 = vmatmul.mubr.bf16.gmra.mxu0 %v3285
        %v3570 = vpop.f32.mrf.mxu0
        %v3571 = vadd.f32 %v3221, %v3570
        %v3572 = vpop.f32.mrf.mxu0
        %v3573 = vpop.f32.mrf.mxu0
        %v3574 = vadd.f32 %v3221, %v3573
        %v3575 = vpop.f32.mrf.mxu0
        %3576 = vmatprep.mubr.bf16.mxu0 0
        %3577 = vmatmul.mubr.bf16.gmra.mxu0 %v3288
        %v3578 = vpop.f32.mrf.mxu0
        %v3579 = vadd.f32 %v3221, %v3578
        %v3580 = vpop.f32.mrf.mxu0
        %v3581 = vpop.f32.mrf.mxu0
        %v3582 = vadd.f32 %v3221, %v3581
        %v3583 = vpop.f32.mrf.mxu0
        %3584 = vmatprep.mubr.bf16.mxu0 0
        %3585 = vmatmul.mubr.bf16.gmra.mxu0 %v3291
        %v3586 = vpop.f32.mrf.mxu0
        %v3587 = vadd.f32 %v3221, %v3586
        %v3588 = vpop.f32.mrf.mxu0
        %v3589 = vpop.f32.mrf.mxu0
        %v3590 = vadd.f32 %v3221, %v3589
        %v3591 = vpop.f32.mrf.mxu0
        %3592 = vmatprep.mubr.bf16.mxu0 0
        %3593 = vmatmul.mubr.bf16.gmra.mxu0 %v3294
        %v3594 = vpop.f32.mrf.mxu0
        %v3595 = vadd.f32 %v3221, %v3594
        %v3596 = vpop.f32.mrf.mxu0
        %v3597 = vpop.f32.mrf.mxu0
        %v3598 = vadd.f32 %v3221, %v3597
        %v3599 = vpop.f32.mrf.mxu0
        %3600 = vmatprep.mubr.bf16.mxu0 0
        %3601 = vmatmul.mubr.bf16.gmra.mxu0 %v3297
        %v3602 = vpop.f32.mrf.mxu0
        %v3603 = vadd.f32 %v3221, %v3602
        %v3604 = vpop.f32.mrf.mxu0
        %v3605 = vpop.f32.mrf.mxu0
        %v3606 = vadd.f32 %v3221, %v3605
        %v3607 = vpop.f32.mrf.mxu0
        %3608 = vmatprep.mubr.bf16.mxu0 0
        %3609 = vmatmul.mubr.bf16.gmra.mxu0 %v3300
        %v3610 = vpop.f32.mrf.mxu0
        %v3611 = vadd.f32 %v3221, %v3610
        %v3612 = vpop.f32.mrf.mxu0
        %v3613 = vpop.f32.mrf.mxu0
        %v3614 = vadd.f32 %v3221, %v3613
        %v3615 = vpop.f32.mrf.mxu0
        %3616 = vmatprep.mubr.bf16.mxu0 0
        %3617 = vmatmul.mubr.bf16.gmra.mxu0 %v3303
        %v3618 = vpop.f32.mrf.mxu0
        %v3619 = vadd.f32 %v3221, %v3618
        %v3620 = vpop.f32.mrf.mxu0
        %v3621 = vpop.f32.mrf.mxu0
        %v3622 = vadd.f32 %v3221, %v3621
        %v3623 = vpop.f32.mrf.mxu0
        %3624 = vmatprep.mubr.bf16.mxu0 0
        %3625 = vmatmul.mubr.bf16.gmra.mxu0 %v3306
        %v3626 = vpop.f32.mrf.mxu0
        %v3627 = vadd.f32 %v3221, %v3626
        %v3628 = vpop.f32.mrf.mxu0
        %v3629 = vpop.f32.mrf.mxu0
        %v3630 = vadd.f32 %v3221, %v3629
        %v3631 = vpop.f32.mrf.mxu0
        %3632 = vmatprep.mubr.bf16.mxu0 0
        %3633 = vmatmul.mubr.bf16.gmra.mxu0 %v3309
        %v3634 = vpop.f32.mrf.mxu0
        %v3635 = vadd.f32 %v3221, %v3634
        %v3636 = vpop.f32.mrf.mxu0
        %v3637 = vpop.f32.mrf.mxu0
        %v3638 = vadd.f32 %v3221, %v3637
        %v3639 = vpop.f32.mrf.mxu0
        %3640 = vmatprep.mubr.bf16.mxu0 0
        %3641 = vmatmul.mubr.bf16.gmra.mxu0 %v3312
        %v3642 = vpop.f32.mrf.mxu0
        %v3643 = vadd.f32 %v3221, %v3642
        %v3644 = vpop.f32.mrf.mxu0
        %v3645 = vpop.f32.mrf.mxu0
        %v3646 = vadd.f32 %v3221, %v3645
        %v3647 = vpop.f32.mrf.mxu0
        %3648 = vmatprep.mubr.bf16.mxu0 0
        %3649 = vmatmul.mubr.bf16.gmra.mxu0 %v3315
        %v3650 = vpop.f32.mrf.mxu0
        %v3651 = vadd.f32 %v3221, %v3650
        %v3652 = vpop.f32.mrf.mxu0
        %v3653 = vpop.f32.mrf.mxu0
        %v3654 = vadd.f32 %v3221, %v3653
        %v3655 = vpop.f32.mrf.mxu0
        %3656 = vmatprep.mubr.bf16.mxu0 0
        %3657 = vmatmul.mubr.bf16.gmra.mxu0 %v3318
        %v3658 = vpop.f32.mrf.mxu0
        %v3659 = vadd.f32 %v3221, %v3658
        %v3660 = vpop.f32.mrf.mxu0
        %v3661 = vpop.f32.mrf.mxu0
        %v3662 = vadd.f32 %v3221, %v3661
        %v3663 = vpop.f32.mrf.mxu0
        %3664 = vmatprep.mubr.bf16.mxu0 0
        %3665 = vmatmul.mubr.bf16.gmra.mxu0 %v3321
        %v3666 = vpop.f32.mrf.mxu0
        %v3667 = vadd.f32 %v3221, %v3666
        %v3668 = vpop.f32.mrf.mxu0
        %v3669 = vpop.f32.mrf.mxu0
        %v3670 = vadd.f32 %v3221, %v3669
        %v3671 = vpop.f32.mrf.mxu0
        %3672 = vmatprep.mubr.bf16.mxu0 0
        %3673 = vmatmul.mubr.bf16.gmra.mxu0 %v3324
        %v3674 = vpop.f32.mrf.mxu0
        %v3675 = vadd.f32 %v3221, %v3674
        %v3676 = vpop.f32.mrf.mxu0
        %v3677 = vpop.f32.mrf.mxu0
        %v3678 = vadd.f32 %v3221, %v3677
        %v3679 = vpop.f32.mrf.mxu0
        %3680 = vmatprep.mubr.bf16.mxu0 0
        %3681 = vmatmul.mubr.bf16.gmra.mxu0 %v3327
        %v3682 = vpop.f32.mrf.mxu0
        %v3683 = vadd.f32 %v3221, %v3682
        %v3684 = vpop.f32.mrf.mxu0
        %v3685 = vpop.f32.mrf.mxu0
        %v3686 = vadd.f32 %v3221, %v3685
        %v3687 = vpop.f32.mrf.mxu0
        %3688 = vmatprep.mubr.bf16.mxu0 0
        %3689 = vmatmul.mubr.bf16.gmra.mxu0 %v3330
        %v3690 = vpop.f32.mrf.mxu0
        %v3691 = vadd.f32 %v3221, %v3690
        %v3692 = vpop.f32.mrf.mxu0
        %v3693 = vpop.f32.mrf.mxu0
        %v3694 = vadd.f32 %v3221, %v3693
        %v3695 = vpop.f32.mrf.mxu0
        %3696 = vmatprep.mubr.bf16.mxu0 0
        %3697 = vmatmul.mubr.bf16.gmra.mxu0 %v3333
        %v3698 = vpop.f32.mrf.mxu0
        %v3699 = vadd.f32 %v3221, %v3698
        %v3700 = vpop.f32.mrf.mxu0
        %v3701 = vpop.f32.mrf.mxu0
        %v3702 = vadd.f32 %v3221, %v3701
        %v3703 = vpop.f32.mrf.mxu0
        %3704 = vmatprep.mubr.bf16.mxu0 0
        %3705 = vmatmul.mubr.bf16.gmra.mxu0 %v3336
        %v3706 = vpop.f32.mrf.mxu0
        %v3707 = vadd.f32 %v3221, %v3706
        %v3708 = vpop.f32.mrf.mxu0
        %v3709 = vpop.f32.mrf.mxu0
        %v3710 = vadd.f32 %v3221, %v3709
        %v3711 = vpop.f32.mrf.mxu0
        %3712 = vmatprep.mubr.bf16.mxu0 0
        %3713 = vmatmul.mubr.bf16.gmra.mxu0 %v3339
        %v3714 = vpop.f32.mrf.mxu0
        %v3715 = vadd.f32 %v3221, %v3714
        %v3716 = vpop.f32.mrf.mxu0
        %v3717 = vpop.f32.mrf.mxu0
        %v3718 = vadd.f32 %v3221, %v3717
        %v3719 = vpop.f32.mrf.mxu0
        %3720 = vmatprep.mubr.bf16.mxu0 0
        %3721 = vmatmul.mubr.bf16.gmra.mxu0 %v3342
        %v3722 = vpop.f32.mrf.mxu0
        %v3723 = vadd.f32 %v3221, %v3722
        %v3724 = vpop.f32.mrf.mxu0
        %v3725 = vpop.f32.mrf.mxu0
        %v3726 = vadd.f32 %v3221, %v3725
        %v3727 = vpop.f32.mrf.mxu0
        %3728 = vmatprep.mubr.bf16.mxu0 0
        %3729 = vmatmul.mubr.bf16.gmra.mxu0 %v3345
        %v3730 = vpop.f32.mrf.mxu0
        %v3731 = vadd.f32 %v3221, %v3730
        %v3732 = vpop.f32.mrf.mxu0
        %v3733 = vpop.f32.mrf.mxu0
        %v3734 = vadd.f32 %v3221, %v3733
        %v3735 = vpop.f32.mrf.mxu0
        %3736 = vmatprep.mubr.bf16.mxu0 0
        %3737 = vmatmul.mubr.bf16.gmra.mxu0 %v3348
        %v3738 = vpop.f32.mrf.mxu0
        %v3739 = vadd.f32 %v3221, %v3738
        %v3740 = vpop.f32.mrf.mxu0
        %v3741 = vpop.f32.mrf.mxu0
        %v3742 = vadd.f32 %v3221, %v3741
        %v3743 = vpop.f32.mrf.mxu0
        %3744 = vmatprep.mubr.bf16.mxu0 0
        %3745 = vmatmul.mubr.bf16.gmra.mxu0 %v3351
        %v3746 = vpop.f32.mrf.mxu0
        %v3747 = vadd.f32 %v3221, %v3746
        %v3748 = vpop.f32.mrf.mxu0
        %v3749 = vpop.f32.mrf.mxu0
        %v3750 = vadd.f32 %v3221, %v3749
        %v3751 = vpop.f32.mrf.mxu0
        %3752 = vmatprep.mubr.bf16.mxu0 0
        %3753 = vmatmul.mubr.bf16.gmra.mxu0 %v3354
        %v3754 = vpop.f32.mrf.mxu0
        %v3755 = vadd.f32 %v3221, %v3754
        %v3756 = vpop.f32.mrf.mxu0
        %v3757 = vpop.f32.mrf.mxu0
        %v3758 = vadd.f32 %v3221, %v3757
        %v3759 = vpop.f32.mrf.mxu0
        %3760 = vmatprep.mubr.bf16.mxu0 0
        %3761 = vmatmul.mubr.bf16.gmra.mxu0 %v3357
        %v3762 = vpop.f32.mrf.mxu0
        %v3763 = vadd.f32 %v3221, %v3762
        %v3764 = vpop.f32.mrf.mxu0
        %v3765 = vpop.f32.mrf.mxu0
        %v3766 = vadd.f32 %v3221, %v3765
        %v3767 = vpop.f32.mrf.mxu0
        %3768 = vmatprep.mubr.bf16.mxu0 0
        %3769 = vmatmul.mubr.bf16.gmra.mxu0 %v3360
        %v3770 = vpop.f32.mrf.mxu0
        %v3771 = vadd.f32 %v3221, %v3770
        %v3772 = vpop.f32.mrf.mxu0
        %v3773 = vpop.f32.mrf.mxu0
        %v3774 = vadd.f32 %v3221, %v3773
        %v3775 = vpop.f32.mrf.mxu0
        %3776 = vmatprep.mubr.bf16.mxu0 0
        %3777 = vmatmul.mubr.bf16.gmra.mxu0 %v3363
        %v3778 = vpop.f32.mrf.mxu0
        %v3779 = vadd.f32 %v3221, %v3778
        %v3780 = vpop.f32.mrf.mxu0
        %v3781 = vpop.f32.mrf.mxu0
        %v3782 = vadd.f32 %v3221, %v3781
        %v3783 = vpop.f32.mrf.mxu0
        %3784 = vmatprep.mubr.bf16.mxu0 0
        %3785 = vmatmul.mubr.bf16.gmra.mxu0 %v3366
        %v3786 = vpop.f32.mrf.mxu0
        %v3787 = vadd.f32 %v3221, %v3786
        %v3788 = vpop.f32.mrf.mxu0
        %v3789 = vpop.f32.mrf.mxu0
        %v3790 = vadd.f32 %v3221, %v3789
        %v3791 = vpop.f32.mrf.mxu0
        %3792 = vmatprep.mubr.bf16.mxu0 0
        %3793 = vmatmul.mubr.bf16.gmra.mxu0 %v3369
        %v3794 = vpop.f32.mrf.mxu0
        %v3795 = vadd.f32 %v3221, %v3794
        %v3796 = vpop.f32.mrf.mxu0
        %v3797 = vpop.f32.mrf.mxu0
        %v3798 = vadd.f32 %v3221, %v3797
        %v3799 = vpop.f32.mrf.mxu0
        %3800 = vmatprep.mubr.bf16.mxu0 0
        %3801 = vmatmul.mubr.bf16.gmra.mxu0 %v3372
        %v3802 = vpop.f32.mrf.mxu0
        %v3803 = vadd.f32 %v3221, %v3802
        %v3804 = vpop.f32.mrf.mxu0
        %v3805 = vpop.f32.mrf.mxu0
        %v3806 = vadd.f32 %v3221, %v3805
        %v3807 = vpop.f32.mrf.mxu0
        %3808 = vmatprep.mubr.bf16.mxu0 0
        %3809 = vmatmul.mubr.bf16.gmra.mxu0 %v3375
        %v3810 = vpop.f32.mrf.mxu0
        %v3811 = vadd.f32 %v3221, %v3810
        %v3812 = vpop.f32.mrf.mxu0
        %v3813 = vpop.f32.mrf.mxu0
        %v3814 = vadd.f32 %v3221, %v3813
        %v3815 = vpop.f32.mrf.mxu0
        %3816 = vmatprep.mubr.bf16.mxu0 0
        %3817 = vmatmul.mubr.bf16.gmra.mxu0 %v3378
        %v3818 = vpop.f32.mrf.mxu0
        %v3819 = vadd.f32 %v3221, %v3818
        %v3820 = vpop.f32.mrf.mxu0
        %v3821 = vpop.f32.mrf.mxu0
        %v3822 = vadd.f32 %v3221, %v3821
        %v3823 = vpop.f32.mrf.mxu0
        %3824 = vmatprep.mubr.bf16.mxu0 0
        %3825 = vmatmul.mubr.bf16.gmra.mxu0 %v3381
        %v3826 = vpop.f32.mrf.mxu0
        %v3827 = vadd.f32 %v3221, %v3826
        %v3828 = vpop.f32.mrf.mxu0
        %v3829 = vpop.f32.mrf.mxu0
        %v3830 = vadd.f32 %v3221, %v3829
        %v3831 = vpop.f32.mrf.mxu0
        %3832 = vmatprep.mubr.bf16.mxu0 0
        %3833 = vmatmul.mubr.bf16.gmra.mxu0 %v3384
        %v3834 = vpop.f32.mrf.mxu0
        %v3835 = vadd.f32 %v3221, %v3834
        %v3836 = vpop.f32.mrf.mxu0
        %v3837 = vpop.f32.mrf.mxu0
        %v3838 = vadd.f32 %v3221, %v3837
        %v3839 = vpop.f32.mrf.mxu0
        %3840 = vmatprep.mubr.bf16.mxu0 0
        %3841 = vmatmul.mubr.bf16.gmra.mxu0 %v3387
        %v3842 = vpop.f32.mrf.mxu0
        %v3843 = vadd.f32 %v3221, %v3842
        %v3844 = vpop.f32.mrf.mxu0
        %v3845 = vpop.f32.mrf.mxu0
        %v3846 = vadd.f32 %v3221, %v3845
        %v3847 = vpop.f32.mrf.mxu0
        %3848 = vmatprep.mubr.bf16.mxu0 0
        %3849 = vmatmul.mubr.bf16.gmra.mxu0 %v3390
        %v3850 = vpop.f32.mrf.mxu0
        %v3851 = vadd.f32 %v3221, %v3850
        %v3852 = vpop.f32.mrf.mxu0
        %v3853 = vpop.f32.mrf.mxu0
        %v3854 = vadd.f32 %v3221, %v3853
        %v3855 = vpop.f32.mrf.mxu0
        %3856 = vmatprep.mubr.bf16.mxu0 0
        %3857 = vmatmul.mubr.bf16.gmra.mxu0 %v3393
        %v3858 = vpop.f32.mrf.mxu0
        %v3859 = vadd.f32 %v3221, %v3858
        %v3860 = vpop.f32.mrf.mxu0
        %v3861 = vpop.f32.mrf.mxu0
        %v3862 = vadd.f32 %v3221, %v3861
        %v3863 = vpop.f32.mrf.mxu0
        %3864 = vmatprep.mubr.bf16.mxu0 0
        %3865 = vmatmul.mubr.bf16.gmra.mxu0 %v3396
        %v3866 = vpop.f32.mrf.mxu0
        %v3867 = vadd.f32 %v3221, %v3866
        %v3868 = vpop.f32.mrf.mxu0
        %v3869 = vpop.f32.mrf.mxu0
        %v3870 = vadd.f32 %v3221, %v3869
        %v3871 = vpop.f32.mrf.mxu0
        %3872 = vmatprep.mubr.bf16.mxu0 0
        %3873 = vmatmul.mubr.bf16.gmra.mxu0 %v3399
        %v3874 = vpop.f32.mrf.mxu0
        %v3875 = vadd.f32 %v3221, %v3874
        %v3876 = vpop.f32.mrf.mxu0
        %v3877 = vpop.f32.mrf.mxu0
        %v3878 = vadd.f32 %v3221, %v3877
        %v3879 = vpop.f32.mrf.mxu0
        %3880 = vmatprep.mubr.bf16.mxu0 0
        %3881 = vmatmul.mubr.bf16.gmra.mxu0 %v3402
        %v3882 = vpop.f32.mrf.mxu0
        %v3883 = vadd.f32 %v3221, %v3882
        %v3884 = vpop.f32.mrf.mxu0
        %v3885 = vpop.f32.mrf.mxu0
        %v3886 = vadd.f32 %v3221, %v3885
        %v3887 = vpop.f32.mrf.mxu0
        %3888 = vmatprep.mubr.bf16.mxu0 0
        %3889 = vmatmul.mubr.bf16.gmra.mxu0 %v3405
        %v3890 = vpop.f32.mrf.mxu0
        %v3891 = vadd.f32 %v3221, %v3890
        %v3892 = vpop.f32.mrf.mxu0
        %v3893 = vpop.f32.mrf.mxu0
        %v3894 = vadd.f32 %v3221, %v3893
        %v3895 = vpop.f32.mrf.mxu0
        %3896 = vmatprep.mubr.bf16.mxu0 0
        %3897 = vmatmul.mubr.bf16.gmra.mxu0 %v3408
        %v3898 = vpop.f32.mrf.mxu0
        %v3899 = vadd.f32 %v3221, %v3898
        %v3900 = vpop.f32.mrf.mxu0
        %v3901 = vpop.f32.mrf.mxu0
        %v3902 = vadd.f32 %v3221, %v3901
        %v3903 = vpop.f32.mrf.mxu0
        %3904 = vmatprep.mubr.bf16.mxu0 0
        %3905 = vmatmul.mubr.bf16.gmra.mxu0 %v3411
        %v3906 = vpop.f32.mrf.mxu0
        %v3907 = vadd.f32 %v3221, %v3906
        %v3908 = vpop.f32.mrf.mxu0
        %v3909 = vpop.f32.mrf.mxu0
        %v3910 = vadd.f32 %v3221, %v3909
        %v3911 = vpop.f32.mrf.mxu0
        %3912 = vmatprep.mubr.bf16.mxu0 0
        %3913 = vmatmul.mubr.bf16.gmra.mxu0 %v3414
        %v3914 = vpop.f32.mrf.mxu0
        %v3915 = vadd.f32 %v3221, %v3914
        %v3916 = vpop.f32.mrf.mxu0
        %v3917 = vpop.f32.mrf.mxu0
        %v3918 = vadd.f32 %v3221, %v3917
        %v3919 = vpop.f32.mrf.mxu0
        %3920 = vmatprep.mubr.bf16.mxu0 0
        %3921 = vmatmul.mubr.bf16.gmra.mxu0 %v3417
        %v3922 = vpop.f32.mrf.mxu0
        %v3923 = vadd.f32 %v3221, %v3922
        %v3924 = vpop.f32.mrf.mxu0
        %v3925 = vpop.f32.mrf.mxu0
        %v3926 = vadd.f32 %v3221, %v3925
        %v3927 = vpop.f32.mrf.mxu0
        %3928 = vmatprep.mubr.bf16.mxu0 0
        %3929 = vmatmul.mubr.bf16.gmra.mxu0 %v3420
        %v3930 = vpop.f32.mrf.mxu0
        %v3931 = vadd.f32 %v3221, %v3930
        %v3932 = vpop.f32.mrf.mxu0
        %v3933 = vpop.f32.mrf.mxu0
        %v3934 = vadd.f32 %v3221, %v3933
        %v3935 = vpop.f32.mrf.mxu0
        %3936 = vmatprep.mubr.bf16.mxu0 0
        %3937 = vmatmul.mubr.bf16.gmra.mxu0 %v3423
        %v3938 = vpop.f32.mrf.mxu0
        %v3939 = vadd.f32 %v3221, %v3938
        %v3940 = vpop.f32.mrf.mxu0
        %v3941 = vpop.f32.mrf.mxu0
        %v3942 = vadd.f32 %v3221, %v3941
        %v3943 = vpop.f32.mrf.mxu0
        %3944 = vmatprep.mubr.bf16.mxu0 0
        %3945 = vmatmul.mubr.bf16.gmra.mxu0 %v3426
        %v3946 = vpop.f32.mrf.mxu0
        %v3947 = vadd.f32 %v3221, %v3946
        %v3948 = vpop.f32.mrf.mxu0
        %v3949 = vpop.f32.mrf.mxu0
        %v3950 = vadd.f32 %v3221, %v3949
        %v3951 = vpop.f32.mrf.mxu0
        %3952 = vmatprep.mubr.bf16.mxu0 0
        %3953 = vmatmul.mubr.bf16.gmra.mxu0 %v3429
        %v3954 = vpop.f32.mrf.mxu0
        %v3955 = vadd.f32 %v3221, %v3954
        %v3956 = vpop.f32.mrf.mxu0
        %v3957 = vpop.f32.mrf.mxu0
        %v3958 = vadd.f32 %v3221, %v3957
        %v3959 = vpop.f32.mrf.mxu0
        %3960 = vmatprep.mubr.bf16.mxu0 0
        %3961 = vmatmul.mubr.bf16.gmra.mxu0 %v3432
        %v3962 = vpop.f32.mrf.mxu0
        %v3963 = vadd.f32 %v3221, %v3962
        %v3964 = vpop.f32.mrf.mxu0
        %v3965 = vpop.f32.mrf.mxu0
        %v3966 = vadd.f32 %v3221, %v3965
        %v3967 = vpop.f32.mrf.mxu0
        %3968 = vmatprep.mubr.bf16.mxu0 0
        %3969 = vmatmul.mubr.bf16.gmra.mxu0 %v3435
        %v3970 = vpop.f32.mrf.mxu0
        %v3971 = vadd.f32 %v3221, %v3970
        %v3972 = vpop.f32.mrf.mxu0
        %v3973 = vpop.f32.mrf.mxu0
        %v3974 = vadd.f32 %v3221, %v3973
        %v3975 = vpop.f32.mrf.mxu0
        %3976 = vmatprep.mubr.bf16.mxu0 0
        %3977 = vmatmul.mubr.bf16.gmra.mxu0 %v3438
        %v3978 = vpop.f32.mrf.mxu0
        %v3979 = vadd.f32 %v3221, %v3978
        %v3980 = vpop.f32.mrf.mxu0
        %v3981 = vpop.f32.mrf.mxu0
        %v3982 = vadd.f32 %v3221, %v3981
        %v3983 = vpop.f32.mrf.mxu0
        %3984 = vdwg.mxu0
        %v3985 = vmax.f32 %v3475, 0.0
        %v3986 = vmax.f32 %v3478, 0.0
        %v3987 = vmax.f32 %v3483, 0.0
        %v3988 = vmax.f32 %v3486, 0.0
        %v3989 = vmax.f32 %v3491, 0.0
        %v3990 = vmax.f32 %v3494, 0.0
        %v3991 = vmax.f32 %v3499, 0.0
        %v3992 = vmax.f32 %v3502, 0.0
        %v3993 = vmax.f32 %v3507, 0.0
        %v3994 = vmax.f32 %v3510, 0.0
        %v3995 = vmax.f32 %v3515, 0.0
        %v3996 = vmax.f32 %v3518, 0.0
        %v3997 = vmax.f32 %v3523, 0.0
        %v3998 = vmax.f32 %v3526, 0.0
        %v3999 = vmax.f32 %v3531, 0.0
        %v4000 = vmax.f32 %v3534, 0.0
        %v4001 = vmax.f32 %v3539, 0.0
        %v4002 = vmax.f32 %v3542, 0.0
        %v4003 = vmax.f32 %v3547, 0.0
        %v4004 = vmax.f32 %v3550, 0.0
        %v4005 = vmax.f32 %v3555, 0.0
        %v4006 = vmax.f32 %v3558, 0.0
        %v4007 = vmax.f32 %v3563, 0.0
        %v4008 = vmax.f32 %v3566, 0.0
        %v4009 = vmax.f32 %v3571, 0.0
        %v4010 = vmax.f32 %v3574, 0.0
        %v4011 = vmax.f32 %v3579, 0.0
        %v4012 = vmax.f32 %v3582, 0.0
        %v4013 = vmax.f32 %v3587, 0.0
        %v4014 = vmax.f32 %v3590, 0.0
        %v4015 = vmax.f32 %v3595, 0.0
        %v4016 = vmax.f32 %v3598, 0.0
        %v4017 = vmax.f32 %v3603, 0.0
        %v4018 = vmax.f32 %v3606, 0.0
        %v4019 = vmax.f32 %v3611, 0.0
        %v4020 = vmax.f32 %v3614, 0.0
        %v4021 = vmax.f32 %v3619, 0.0
        %v4022 = vmax.f32 %v3622, 0.0
        %v4023 = vmax.f32 %v3627, 0.0
        %v4024 = vmax.f32 %v3630, 0.0
        %v4025 = vmax.f32 %v3635, 0.0
        %v4026 = vmax.f32 %v3638, 0.0
        %v4027 = vmax.f32 %v3643, 0.0
        %v4028 = vmax.f32 %v3646, 0.0
        %v4029 = vmax.f32 %v3651, 0.0
        %v4030 = vmax.f32 %v3654, 0.0
        %v4031 = vmax.f32 %v3659, 0.0
        %v4032 = vmax.f32 %v3662, 0.0
        %v4033 = vmax.f32 %v3667, 0.0
        %v4034 = vmax.f32 %v3670, 0.0
        %v4035 = vmax.f32 %v3675, 0.0
        %v4036 = vmax.f32 %v3678, 0.0
        %v4037 = vmax.f32 %v3683, 0.0
        %v4038 = vmax.f32 %v3686, 0.0
        %v4039 = vmax.f32 %v3691, 0.0
        %v4040 = vmax.f32 %v3694, 0.0
        %v4041 = vmax.f32 %v3699, 0.0
        %v4042 = vmax.f32 %v3702, 0.0
        %v4043 = vmax.f32 %v3707, 0.0
        %v4044 = vmax.f32 %v3710, 0.0
        %v4045 = vmax.f32 %v3715, 0.0
        %v4046 = vmax.f32 %v3718, 0.0
        %v4047 = vmax.f32 %v3723, 0.0
        %v4048 = vmax.f32 %v3726, 0.0
        %v4049 = vmax.f32 %v3731, 0.0
        %v4050 = vmax.f32 %v3734, 0.0
        %v4051 = vmax.f32 %v3739, 0.0
        %v4052 = vmax.f32 %v3742, 0.0
        %v4053 = vmax.f32 %v3747, 0.0
        %v4054 = vmax.f32 %v3750, 0.0
        %v4055 = vmax.f32 %v3755, 0.0
        %v4056 = vmax.f32 %v3758, 0.0
        %v4057 = vmax.f32 %v3763, 0.0
        %v4058 = vmax.f32 %v3766, 0.0
        %v4059 = vmax.f32 %v3771, 0.0
        %v4060 = vmax.f32 %v3774, 0.0
        %v4061 = vmax.f32 %v3779, 0.0
        %v4062 = vmax.f32 %v3782, 0.0
        %v4063 = vmax.f32 %v3787, 0.0
        %v4064 = vmax.f32 %v3790, 0.0
        %v4065 = vmax.f32 %v3795, 0.0
        %v4066 = vmax.f32 %v3798, 0.0
        %v4067 = vmax.f32 %v3803, 0.0
        %v4068 = vmax.f32 %v3806, 0.0
        %v4069 = vmax.f32 %v3811, 0.0
        %v4070 = vmax.f32 %v3814, 0.0
        %v4071 = vmax.f32 %v3819, 0.0
        %v4072 = vmax.f32 %v3822, 0.0
        %v4073 = vmax.f32 %v3827, 0.0
        %v4074 = vmax.f32 %v3830, 0.0
        %v4075 = vmax.f32 %v3835, 0.0
        %v4076 = vmax.f32 %v3838, 0.0
        %v4077 = vmax.f32 %v3843, 0.0
        %v4078 = vmax.f32 %v3846, 0.0
        %v4079 = vmax.f32 %v3851, 0.0
        %v4080 = vmax.f32 %v3854, 0.0
        %v4081 = vmax.f32 %v3859, 0.0
        %v4082 = vmax.f32 %v3862, 0.0
        %v4083 = vmax.f32 %v3867, 0.0
        %v4084 = vmax.f32 %v3870, 0.0
        %v4085 = vmax.f32 %v3875, 0.0
        %v4086 = vmax.f32 %v3878, 0.0
        %v4087 = vmax.f32 %v3883, 0.0
        %v4088 = vmax.f32 %v3886, 0.0
        %v4089 = vmax.f32 %v3891, 0.0
        %v4090 = vmax.f32 %v3894, 0.0
        %v4091 = vmax.f32 %v3899, 0.0
        %v4092 = vmax.f32 %v3902, 0.0
        %v4093 = vmax.f32 %v3907, 0.0
        %v4094 = vmax.f32 %v3910, 0.0
        %v4095 = vmax.f32 %v3915, 0.0
        %v4096 = vmax.f32 %v3918, 0.0
        %v4097 = vmax.f32 %v3923, 0.0
        %v4098 = vmax.f32 %v3926, 0.0
        %v4099 = vmax.f32 %v3931, 0.0
        %v4100 = vmax.f32 %v3934, 0.0
        %v4101 = vmax.f32 %v3939, 0.0
        %v4102 = vmax.f32 %v3942, 0.0
        %v4103 = vmax.f32 %v3947, 0.0
        %v4104 = vmax.f32 %v3950, 0.0
        %v4105 = vmax.f32 %v3955, 0.0
        %v4106 = vmax.f32 %v3958, 0.0
        %v4107 = vmax.f32 %v3963, 0.0
        %v4108 = vmax.f32 %v3966, 0.0
        %v4109 = vmax.f32 %v3971, 0.0
        %v4110 = vmax.f32 %v3974, 0.0
        %v4111 = vmax.f32 %v3979, 0.0
        %v4112 = vmax.f32 %v3982, 0.0
        %v4113 = vpack.c.bf16 %v3986, %v3985
        %v4114 = vpack.c.bf16 %v3988, %v3987
        %v4115 = vpack.c.bf16 %v3990, %v3989
        %v4116 = vpack.c.bf16 %v3992, %v3991
        %v4117 = vpack.c.bf16 %v3994, %v3993
        %v4118 = vpack.c.bf16 %v3996, %v3995
        %v4119 = vpack.c.bf16 %v3998, %v3997
        %v4120 = vpack.c.bf16 %v4000, %v3999
        %v4121 = vpack.c.bf16 %v4002, %v4001
        %v4122 = vpack.c.bf16 %v4004, %v4003
        %v4123 = vpack.c.bf16 %v4006, %v4005
        %v4124 = vpack.c.bf16 %v4008, %v4007
        %v4125 = vpack.c.bf16 %v4010, %v4009
        %v4126 = vpack.c.bf16 %v4012, %v4011
        %v4127 = vpack.c.bf16 %v4014, %v4013
        %v4128 = vpack.c.bf16 %v4016, %v4015
        %v4129 = vpack.c.bf16 %v4018, %v4017
        %v4130 = vpack.c.bf16 %v4020, %v4019
        %v4131 = vpack.c.bf16 %v4022, %v4021
        %v4132 = vpack.c.bf16 %v4024, %v4023
        %v4133 = vpack.c.bf16 %v4026, %v4025
        %v4134 = vpack.c.bf16 %v4028, %v4027
        %v4135 = vpack.c.bf16 %v4030, %v4029
        %v4136 = vpack.c.bf16 %v4032, %v4031
        %v4137 = vpack.c.bf16 %v4034, %v4033
        %v4138 = vpack.c.bf16 %v4036, %v4035
        %v4139 = vpack.c.bf16 %v4038, %v4037
        %v4140 = vpack.c.bf16 %v4040, %v4039
        %v4141 = vpack.c.bf16 %v4042, %v4041
        %v4142 = vpack.c.bf16 %v4044, %v4043
        %v4143 = vpack.c.bf16 %v4046, %v4045
        %v4144 = vpack.c.bf16 %v4048, %v4047
        %v4145 = vpack.c.bf16 %v4050, %v4049
        %v4146 = vpack.c.bf16 %v4052, %v4051
        %v4147 = vpack.c.bf16 %v4054, %v4053
        %v4148 = vpack.c.bf16 %v4056, %v4055
        %v4149 = vpack.c.bf16 %v4058, %v4057
        %v4150 = vpack.c.bf16 %v4060, %v4059
        %v4151 = vpack.c.bf16 %v4062, %v4061
        %v4152 = vpack.c.bf16 %v4064, %v4063
        %v4153 = vpack.c.bf16 %v4066, %v4065
        %v4154 = vpack.c.bf16 %v4068, %v4067
        %v4155 = vpack.c.bf16 %v4070, %v4069
        %v4156 = vpack.c.bf16 %v4072, %v4071
        %v4157 = vpack.c.bf16 %v4074, %v4073
        %v4158 = vpack.c.bf16 %v4076, %v4075
        %v4159 = vpack.c.bf16 %v4078, %v4077
        %v4160 = vpack.c.bf16 %v4080, %v4079
        %v4161 = vpack.c.bf16 %v4082, %v4081
        %v4162 = vpack.c.bf16 %v4084, %v4083
        %v4163 = vpack.c.bf16 %v4086, %v4085
        %v4164 = vpack.c.bf16 %v4088, %v4087
        %v4165 = vpack.c.bf16 %v4090, %v4089
        %v4166 = vpack.c.bf16 %v4092, %v4091
        %v4167 = vpack.c.bf16 %v4094, %v4093
        %v4168 = vpack.c.bf16 %v4096, %v4095
        %v4169 = vpack.c.bf16 %v4098, %v4097
        %v4170 = vpack.c.bf16 %v4100, %v4099
        %v4171 = vpack.c.bf16 %v4102, %v4101
        %v4172 = vpack.c.bf16 %v4104, %v4103
        %v4173 = vpack.c.bf16 %v4106, %v4105
        %v4174 = vpack.c.bf16 %v4108, %v4107
        %v4175 = vpack.c.bf16 %v4110, %v4109
        %v4176 = vpack.c.bf16 %v4112, %v4111
        %v4177 = vld [vmem:[%s5] sm:$0xf]
        %v4178 = vld [vmem:[%s5 + $0x4] sm:$0xf]
        %v4179 = vld [vmem:[%s5 + $0x8] sm:$0xf]
        %v4180 = vld [vmem:[%s5 + $0xc] sm:$0xf]
        %v4181 = vld [vmem:[%s5 + $0x10] sm:$0xf]
        %v4182 = vld [vmem:[%s5 + $0x14] sm:$0xf]
        %v4183 = vld [vmem:[%s5 + $0x18] sm:$0xf]
        %v4184 = vld [vmem:[%s5 + $0x1c] sm:$0xf]
        %v4185 = vld [vmem:[%s5 + $0x20] sm:$0xf]
        %v4186 = vld [vmem:[%s5 + $0x24] sm:$0xf]
        %v4187 = vld [vmem:[%s5 + $0x28] sm:$0xf]
        %v4188 = vld [vmem:[%s5 + $0x2c] sm:$0xf]
        %v4189 = vld [vmem:[%s5 + $0x30] sm:$0xf]
        %v4190 = vld [vmem:[%s5 + $0x34] sm:$0xf]
        %v4191 = vld [vmem:[%s5 + $0x38] sm:$0xf]
        %v4192 = vld [vmem:[%s5 + $0x3c] sm:$0xf]
        %v4193 = vld [vmem:[%s6] sm:$0x1]
        %v4195 = vlaneseq
        %v4196 = vshrl.u32 %v4195, 7
        %v4197 = vsub.s32 0, %v4196
        %v4198 = vrot.slane %v4193, %v4197
        %v4216 = vunpack.c.l.b16 %v4177
        %v4217 = vunpack.c.l.b16 %v4178
        %v4218 = vunpack.c.l.b16 %v4179
        %v4219 = vunpack.c.l.b16 %v4180
        %v4220 = vunpack.c.l.b16 %v4181
        %v4221 = vunpack.c.l.b16 %v4182
        %v4222 = vunpack.c.l.b16 %v4183
        %v4223 = vunpack.c.l.b16 %v4184
        %v4224 = vunpack.c.l.b16 %v4185
        %v4225 = vunpack.c.l.b16 %v4186
        %v4226 = vunpack.c.l.b16 %v4187
        %v4227 = vunpack.c.l.b16 %v4188
        %v4228 = vunpack.c.l.b16 %v4189
        %v4229 = vunpack.c.l.b16 %v4190
        %v4230 = vunpack.c.l.b16 %v4191
        %v4231 = vunpack.c.l.b16 %v4192
        %v4232 = vpack.c.b16 %v4217, %v4216
        %v4233 = vpack.c.b16 %v4219, %v4218
        %v4234 = vpack.c.b16 %v4221, %v4220
        %v4235 = vpack.c.b16 %v4223, %v4222
        %v4236 = vpack.c.b16 %v4225, %v4224
        %v4237 = vpack.c.b16 %v4227, %v4226
        %v4238 = vpack.c.b16 %v4229, %v4228
        %v4239 = vpack.c.b16 %v4231, %v4230
        %4248 = vmatprep.subr.bf16.mxu0 0
        %4249 = vmatpush1.bf16.msra.mxu0 %v4239
        %4250 = vmatprep.subr.bf16.mxu0 0
        %4251 = vmatpush1.bf16.msra.mxu0 %v4238
        %4252 = vmatprep.subr.bf16.mxu0 0
        %4253 = vmatpush1.bf16.msra.mxu0 %v4237
        %4254 = vmatprep.subr.bf16.mxu0 0
        %4255 = vmatpush1.bf16.msra.mxu0 %v4236
        %4256 = vmatprep.subr.bf16.mxu0 0
        %4257 = vmatpush1.bf16.msra.mxu0 %v4235
        %4258 = vmatprep.subr.bf16.mxu0 0
        %4259 = vmatpush1.bf16.msra.mxu0 %v4234
        %4260 = vmatprep.subr.bf16.mxu0 0
        %4261 = vmatpush1.bf16.msra.mxu0 %v4233
        %4262 = vmatprep.subr.bf16.mxu0 0
        %4263 = vmatpush1.bf16.msra.mxu0 %v4232
        %4264 = vmatprep.subr.bf16.mxu0 0
        %4265 = vmatpush2.bf16.msra.mxu0 0
        %4266 = vmatprep.subr.bf16.mxu0 0
        %4267 = vmatpush2.bf16.msra.mxu0 0
        %4268 = vmatprep.subr.bf16.mxu0 0
        %4269 = vmatpush2.bf16.msra.mxu0 0
        %4270 = vmatprep.subr.bf16.mxu0 0
        %4271 = vmatpush2.bf16.msra.mxu0 0
        %4272 = vmatprep.subr.bf16.mxu0 0
        %4273 = vmatpush2.bf16.msra.mxu0 0
        %4274 = vmatprep.subr.bf16.mxu0 0
        %4275 = vmatpush2.bf16.msra.mxu0 0
        %4276 = vmatprep.subr.bf16.mxu0 0
        %4277 = vmatpush2.bf16.msra.mxu0 0
        %4278 = vmatprep.subr.bf16.mxu0 0
        %4279 = vmatpush2.bf16.msra.mxu0 0
        %4280 = vmatprep.mubr.bf16.mxu0 0
        %4281 = vmatmul.mubr.bf16.gmra.mxu0 %v4113
        %v4282 = vpop.f32.mrf.mxu0
        %v4283 = vadd.f32 %v4198, %v4282
        %v4284 = vpop.f32.mrf.mxu0
        %v4285 = vpop.f32.mrf.mxu0
        %v4286 = vadd.f32 %v4198, %v4285
        %v4287 = vpop.f32.mrf.mxu0
        %4288 = vmatprep.mubr.bf16.mxu0 0
        %4289 = vmatmul.mubr.bf16.gmra.mxu0 %v4114
        %v4290 = vpop.f32.mrf.mxu0
        %v4291 = vadd.f32 %v4198, %v4290
        %v4292 = vpop.f32.mrf.mxu0
        %v4293 = vpop.f32.mrf.mxu0
        %v4294 = vadd.f32 %v4198, %v4293
        %v4295 = vpop.f32.mrf.mxu0
        %4296 = vmatprep.mubr.bf16.mxu0 0
        %4297 = vmatmul.mubr.bf16.gmra.mxu0 %v4115
        %v4298 = vpop.f32.mrf.mxu0
        %v4299 = vadd.f32 %v4198, %v4298
        %v4300 = vpop.f32.mrf.mxu0
        %v4301 = vpop.f32.mrf.mxu0
        %v4302 = vadd.f32 %v4198, %v4301
        %v4303 = vpop.f32.mrf.mxu0
        %4304 = vmatprep.mubr.bf16.mxu0 0
        %4305 = vmatmul.mubr.bf16.gmra.mxu0 %v4116
        %v4306 = vpop.f32.mrf.mxu0
        %v4307 = vadd.f32 %v4198, %v4306
        %v4308 = vpop.f32.mrf.mxu0
        %v4309 = vpop.f32.mrf.mxu0
        %v4310 = vadd.f32 %v4198, %v4309
        %v4311 = vpop.f32.mrf.mxu0
        %4312 = vmatprep.mubr.bf16.mxu0 0
        %4313 = vmatmul.mubr.bf16.gmra.mxu0 %v4117
        %v4314 = vpop.f32.mrf.mxu0
        %v4315 = vadd.f32 %v4198, %v4314
        %v4316 = vpop.f32.mrf.mxu0
        %v4317 = vpop.f32.mrf.mxu0
        %v4318 = vadd.f32 %v4198, %v4317
        %v4319 = vpop.f32.mrf.mxu0
        %4320 = vmatprep.mubr.bf16.mxu0 0
        %4321 = vmatmul.mubr.bf16.gmra.mxu0 %v4118
        %v4322 = vpop.f32.mrf.mxu0
        %v4323 = vadd.f32 %v4198, %v4322
        %v4324 = vpop.f32.mrf.mxu0
        %v4325 = vpop.f32.mrf.mxu0
        %v4326 = vadd.f32 %v4198, %v4325
        %v4327 = vpop.f32.mrf.mxu0
        %4328 = vmatprep.mubr.bf16.mxu0 0
        %4329 = vmatmul.mubr.bf16.gmra.mxu0 %v4119
        %v4330 = vpop.f32.mrf.mxu0
        %v4331 = vadd.f32 %v4198, %v4330
        %v4332 = vpop.f32.mrf.mxu0
        %v4333 = vpop.f32.mrf.mxu0
        %v4334 = vadd.f32 %v4198, %v4333
        %v4335 = vpop.f32.mrf.mxu0
        %4336 = vmatprep.mubr.bf16.mxu0 0
        %4337 = vmatmul.mubr.bf16.gmra.mxu0 %v4120
        %v4338 = vpop.f32.mrf.mxu0
        %v4339 = vadd.f32 %v4198, %v4338
        %v4340 = vpop.f32.mrf.mxu0
        %v4341 = vpop.f32.mrf.mxu0
        %v4342 = vadd.f32 %v4198, %v4341
        %v4343 = vpop.f32.mrf.mxu0
        %4344 = vmatprep.mubr.bf16.mxu0 0
        %4345 = vmatmul.mubr.bf16.gmra.mxu0 %v4121
        %v4346 = vpop.f32.mrf.mxu0
        %v4347 = vadd.f32 %v4198, %v4346
        %v4348 = vpop.f32.mrf.mxu0
        %v4349 = vpop.f32.mrf.mxu0
        %v4350 = vadd.f32 %v4198, %v4349
        %v4351 = vpop.f32.mrf.mxu0
        %4352 = vmatprep.mubr.bf16.mxu0 0
        %4353 = vmatmul.mubr.bf16.gmra.mxu0 %v4122
        %v4354 = vpop.f32.mrf.mxu0
        %v4355 = vadd.f32 %v4198, %v4354
        %v4356 = vpop.f32.mrf.mxu0
        %v4357 = vpop.f32.mrf.mxu0
        %v4358 = vadd.f32 %v4198, %v4357
        %v4359 = vpop.f32.mrf.mxu0
        %4360 = vmatprep.mubr.bf16.mxu0 0
        %4361 = vmatmul.mubr.bf16.gmra.mxu0 %v4123
        %v4362 = vpop.f32.mrf.mxu0
        %v4363 = vadd.f32 %v4198, %v4362
        %v4364 = vpop.f32.mrf.mxu0
        %v4365 = vpop.f32.mrf.mxu0
        %v4366 = vadd.f32 %v4198, %v4365
        %v4367 = vpop.f32.mrf.mxu0
        %4368 = vmatprep.mubr.bf16.mxu0 0
        %4369 = vmatmul.mubr.bf16.gmra.mxu0 %v4124
        %v4370 = vpop.f32.mrf.mxu0
        %v4371 = vadd.f32 %v4198, %v4370
        %v4372 = vpop.f32.mrf.mxu0
        %v4373 = vpop.f32.mrf.mxu0
        %v4374 = vadd.f32 %v4198, %v4373
        %v4375 = vpop.f32.mrf.mxu0
        %4376 = vmatprep.mubr.bf16.mxu0 0
        %4377 = vmatmul.mubr.bf16.gmra.mxu0 %v4125
        %v4378 = vpop.f32.mrf.mxu0
        %v4379 = vadd.f32 %v4198, %v4378
        %v4380 = vpop.f32.mrf.mxu0
        %v4381 = vpop.f32.mrf.mxu0
        %v4382 = vadd.f32 %v4198, %v4381
        %v4383 = vpop.f32.mrf.mxu0
        %4384 = vmatprep.mubr.bf16.mxu0 0
        %4385 = vmatmul.mubr.bf16.gmra.mxu0 %v4126
        %v4386 = vpop.f32.mrf.mxu0
        %v4387 = vadd.f32 %v4198, %v4386
        %v4388 = vpop.f32.mrf.mxu0
        %v4389 = vpop.f32.mrf.mxu0
        %v4390 = vadd.f32 %v4198, %v4389
        %v4391 = vpop.f32.mrf.mxu0
        %4392 = vmatprep.mubr.bf16.mxu0 0
        %4393 = vmatmul.mubr.bf16.gmra.mxu0 %v4127
        %v4394 = vpop.f32.mrf.mxu0
        %v4395 = vadd.f32 %v4198, %v4394
        %v4396 = vpop.f32.mrf.mxu0
        %v4397 = vpop.f32.mrf.mxu0
        %v4398 = vadd.f32 %v4198, %v4397
        %v4399 = vpop.f32.mrf.mxu0
        %4400 = vmatprep.mubr.bf16.mxu0 0
        %4401 = vmatmul.mubr.bf16.gmra.mxu0 %v4128
        %v4402 = vpop.f32.mrf.mxu0
        %v4403 = vadd.f32 %v4198, %v4402
        %v4404 = vpop.f32.mrf.mxu0
        %v4405 = vpop.f32.mrf.mxu0
        %v4406 = vadd.f32 %v4198, %v4405
        %v4407 = vpop.f32.mrf.mxu0
        %4408 = vmatprep.mubr.bf16.mxu0 0
        %4409 = vmatmul.mubr.bf16.gmra.mxu0 %v4129
        %v4410 = vpop.f32.mrf.mxu0
        %v4411 = vadd.f32 %v4198, %v4410
        %v4412 = vpop.f32.mrf.mxu0
        %v4413 = vpop.f32.mrf.mxu0
        %v4414 = vadd.f32 %v4198, %v4413
        %v4415 = vpop.f32.mrf.mxu0
        %4416 = vmatprep.mubr.bf16.mxu0 0
        %4417 = vmatmul.mubr.bf16.gmra.mxu0 %v4130
        %v4418 = vpop.f32.mrf.mxu0
        %v4419 = vadd.f32 %v4198, %v4418
        %v4420 = vpop.f32.mrf.mxu0
        %v4421 = vpop.f32.mrf.mxu0
        %v4422 = vadd.f32 %v4198, %v4421
        %v4423 = vpop.f32.mrf.mxu0
        %4424 = vmatprep.mubr.bf16.mxu0 0
        %4425 = vmatmul.mubr.bf16.gmra.mxu0 %v4131
        %v4426 = vpop.f32.mrf.mxu0
        %v4427 = vadd.f32 %v4198, %v4426
        %v4428 = vpop.f32.mrf.mxu0
        %v4429 = vpop.f32.mrf.mxu0
        %v4430 = vadd.f32 %v4198, %v4429
        %v4431 = vpop.f32.mrf.mxu0
        %4432 = vmatprep.mubr.bf16.mxu0 0
        %4433 = vmatmul.mubr.bf16.gmra.mxu0 %v4132
        %v4434 = vpop.f32.mrf.mxu0
        %v4435 = vadd.f32 %v4198, %v4434
        %v4436 = vpop.f32.mrf.mxu0
        %v4437 = vpop.f32.mrf.mxu0
        %v4438 = vadd.f32 %v4198, %v4437
        %v4439 = vpop.f32.mrf.mxu0
        %4440 = vmatprep.mubr.bf16.mxu0 0
        %4441 = vmatmul.mubr.bf16.gmra.mxu0 %v4133
        %v4442 = vpop.f32.mrf.mxu0
        %v4443 = vadd.f32 %v4198, %v4442
        %v4444 = vpop.f32.mrf.mxu0
        %v4445 = vpop.f32.mrf.mxu0
        %v4446 = vadd.f32 %v4198, %v4445
        %v4447 = vpop.f32.mrf.mxu0
        %4448 = vmatprep.mubr.bf16.mxu0 0
        %4449 = vmatmul.mubr.bf16.gmra.mxu0 %v4134
        %v4450 = vpop.f32.mrf.mxu0
        %v4451 = vadd.f32 %v4198, %v4450
        %v4452 = vpop.f32.mrf.mxu0
        %v4453 = vpop.f32.mrf.mxu0
        %v4454 = vadd.f32 %v4198, %v4453
        %v4455 = vpop.f32.mrf.mxu0
        %4456 = vmatprep.mubr.bf16.mxu0 0
        %4457 = vmatmul.mubr.bf16.gmra.mxu0 %v4135
        %v4458 = vpop.f32.mrf.mxu0
        %v4459 = vadd.f32 %v4198, %v4458
        %v4460 = vpop.f32.mrf.mxu0
        %v4461 = vpop.f32.mrf.mxu0
        %v4462 = vadd.f32 %v4198, %v4461
        %v4463 = vpop.f32.mrf.mxu0
        %4464 = vmatprep.mubr.bf16.mxu0 0
        %4465 = vmatmul.mubr.bf16.gmra.mxu0 %v4136
        %v4466 = vpop.f32.mrf.mxu0
        %v4467 = vadd.f32 %v4198, %v4466
        %v4468 = vpop.f32.mrf.mxu0
        %v4469 = vpop.f32.mrf.mxu0
        %v4470 = vadd.f32 %v4198, %v4469
        %v4471 = vpop.f32.mrf.mxu0
        %4472 = vmatprep.mubr.bf16.mxu0 0
        %4473 = vmatmul.mubr.bf16.gmra.mxu0 %v4137
        %v4474 = vpop.f32.mrf.mxu0
        %v4475 = vadd.f32 %v4198, %v4474
        %v4476 = vpop.f32.mrf.mxu0
        %v4477 = vpop.f32.mrf.mxu0
        %v4478 = vadd.f32 %v4198, %v4477
        %v4479 = vpop.f32.mrf.mxu0
        %4480 = vmatprep.mubr.bf16.mxu0 0
        %4481 = vmatmul.mubr.bf16.gmra.mxu0 %v4138
        %v4482 = vpop.f32.mrf.mxu0
        %v4483 = vadd.f32 %v4198, %v4482
        %v4484 = vpop.f32.mrf.mxu0
        %v4485 = vpop.f32.mrf.mxu0
        %v4486 = vadd.f32 %v4198, %v4485
        %v4487 = vpop.f32.mrf.mxu0
        %4488 = vmatprep.mubr.bf16.mxu0 0
        %4489 = vmatmul.mubr.bf16.gmra.mxu0 %v4139
        %v4490 = vpop.f32.mrf.mxu0
        %v4491 = vadd.f32 %v4198, %v4490
        %v4492 = vpop.f32.mrf.mxu0
        %v4493 = vpop.f32.mrf.mxu0
        %v4494 = vadd.f32 %v4198, %v4493
        %v4495 = vpop.f32.mrf.mxu0
        %4496 = vmatprep.mubr.bf16.mxu0 0
        %4497 = vmatmul.mubr.bf16.gmra.mxu0 %v4140
        %v4498 = vpop.f32.mrf.mxu0
        %v4499 = vadd.f32 %v4198, %v4498
        %v4500 = vpop.f32.mrf.mxu0
        %v4501 = vpop.f32.mrf.mxu0
        %v4502 = vadd.f32 %v4198, %v4501
        %v4503 = vpop.f32.mrf.mxu0
        %4504 = vmatprep.mubr.bf16.mxu0 0
        %4505 = vmatmul.mubr.bf16.gmra.mxu0 %v4141
        %v4506 = vpop.f32.mrf.mxu0
        %v4507 = vadd.f32 %v4198, %v4506
        %v4508 = vpop.f32.mrf.mxu0
        %v4509 = vpop.f32.mrf.mxu0
        %v4510 = vadd.f32 %v4198, %v4509
        %v4511 = vpop.f32.mrf.mxu0
        %4512 = vmatprep.mubr.bf16.mxu0 0
        %4513 = vmatmul.mubr.bf16.gmra.mxu0 %v4142
        %v4514 = vpop.f32.mrf.mxu0
        %v4515 = vadd.f32 %v4198, %v4514
        %v4516 = vpop.f32.mrf.mxu0
        %v4517 = vpop.f32.mrf.mxu0
        %v4518 = vadd.f32 %v4198, %v4517
        %v4519 = vpop.f32.mrf.mxu0
        %4520 = vmatprep.mubr.bf16.mxu0 0
        %4521 = vmatmul.mubr.bf16.gmra.mxu0 %v4143
        %v4522 = vpop.f32.mrf.mxu0
        %v4523 = vadd.f32 %v4198, %v4522
        %v4524 = vpop.f32.mrf.mxu0
        %v4525 = vpop.f32.mrf.mxu0
        %v4526 = vadd.f32 %v4198, %v4525
        %v4527 = vpop.f32.mrf.mxu0
        %4528 = vmatprep.mubr.bf16.mxu0 0
        %4529 = vmatmul.mubr.bf16.gmra.mxu0 %v4144
        %v4530 = vpop.f32.mrf.mxu0
        %v4531 = vadd.f32 %v4198, %v4530
        %v4532 = vpop.f32.mrf.mxu0
        %v4533 = vpop.f32.mrf.mxu0
        %v4534 = vadd.f32 %v4198, %v4533
        %v4535 = vpop.f32.mrf.mxu0
        %4536 = vmatprep.mubr.bf16.mxu0 0
        %4537 = vmatmul.mubr.bf16.gmra.mxu0 %v4145
        %v4538 = vpop.f32.mrf.mxu0
        %v4539 = vadd.f32 %v4198, %v4538
        %v4540 = vpop.f32.mrf.mxu0
        %v4541 = vpop.f32.mrf.mxu0
        %v4542 = vadd.f32 %v4198, %v4541
        %v4543 = vpop.f32.mrf.mxu0
        %4544 = vmatprep.mubr.bf16.mxu0 0
        %4545 = vmatmul.mubr.bf16.gmra.mxu0 %v4146
        %v4546 = vpop.f32.mrf.mxu0
        %v4547 = vadd.f32 %v4198, %v4546
        %v4548 = vpop.f32.mrf.mxu0
        %v4549 = vpop.f32.mrf.mxu0
        %v4550 = vadd.f32 %v4198, %v4549
        %v4551 = vpop.f32.mrf.mxu0
        %4552 = vmatprep.mubr.bf16.mxu0 0
        %4553 = vmatmul.mubr.bf16.gmra.mxu0 %v4147
        %v4554 = vpop.f32.mrf.mxu0
        %v4555 = vadd.f32 %v4198, %v4554
        %v4556 = vpop.f32.mrf.mxu0
        %v4557 = vpop.f32.mrf.mxu0
        %v4558 = vadd.f32 %v4198, %v4557
        %v4559 = vpop.f32.mrf.mxu0
        %4560 = vmatprep.mubr.bf16.mxu0 0
        %4561 = vmatmul.mubr.bf16.gmra.mxu0 %v4148
        %v4562 = vpop.f32.mrf.mxu0
        %v4563 = vadd.f32 %v4198, %v4562
        %v4564 = vpop.f32.mrf.mxu0
        %v4565 = vpop.f32.mrf.mxu0
        %v4566 = vadd.f32 %v4198, %v4565
        %v4567 = vpop.f32.mrf.mxu0
        %4568 = vmatprep.mubr.bf16.mxu0 0
        %4569 = vmatmul.mubr.bf16.gmra.mxu0 %v4149
        %v4570 = vpop.f32.mrf.mxu0
        %v4571 = vadd.f32 %v4198, %v4570
        %v4572 = vpop.f32.mrf.mxu0
        %v4573 = vpop.f32.mrf.mxu0
        %v4574 = vadd.f32 %v4198, %v4573
        %v4575 = vpop.f32.mrf.mxu0
        %4576 = vmatprep.mubr.bf16.mxu0 0
        %4577 = vmatmul.mubr.bf16.gmra.mxu0 %v4150
        %v4578 = vpop.f32.mrf.mxu0
        %v4579 = vadd.f32 %v4198, %v4578
        %v4580 = vpop.f32.mrf.mxu0
        %v4581 = vpop.f32.mrf.mxu0
        %v4582 = vadd.f32 %v4198, %v4581
        %v4583 = vpop.f32.mrf.mxu0
        %4584 = vmatprep.mubr.bf16.mxu0 0
        %4585 = vmatmul.mubr.bf16.gmra.mxu0 %v4151
        %v4586 = vpop.f32.mrf.mxu0
        %v4587 = vadd.f32 %v4198, %v4586
        %v4588 = vpop.f32.mrf.mxu0
        %v4589 = vpop.f32.mrf.mxu0
        %v4590 = vadd.f32 %v4198, %v4589
        %v4591 = vpop.f32.mrf.mxu0
        %4592 = vmatprep.mubr.bf16.mxu0 0
        %4593 = vmatmul.mubr.bf16.gmra.mxu0 %v4152
        %v4594 = vpop.f32.mrf.mxu0
        %v4595 = vadd.f32 %v4198, %v4594
        %v4596 = vpop.f32.mrf.mxu0
        %v4597 = vpop.f32.mrf.mxu0
        %v4598 = vadd.f32 %v4198, %v4597
        %v4599 = vpop.f32.mrf.mxu0
        %4600 = vmatprep.mubr.bf16.mxu0 0
        %4601 = vmatmul.mubr.bf16.gmra.mxu0 %v4153
        %v4602 = vpop.f32.mrf.mxu0
        %v4603 = vadd.f32 %v4198, %v4602
        %v4604 = vpop.f32.mrf.mxu0
        %v4605 = vpop.f32.mrf.mxu0
        %v4606 = vadd.f32 %v4198, %v4605
        %v4607 = vpop.f32.mrf.mxu0
        %4608 = vmatprep.mubr.bf16.mxu0 0
        %4609 = vmatmul.mubr.bf16.gmra.mxu0 %v4154
        %v4610 = vpop.f32.mrf.mxu0
        %v4611 = vadd.f32 %v4198, %v4610
        %v4612 = vpop.f32.mrf.mxu0
        %v4613 = vpop.f32.mrf.mxu0
        %v4614 = vadd.f32 %v4198, %v4613
        %v4615 = vpop.f32.mrf.mxu0
        %4616 = vmatprep.mubr.bf16.mxu0 0
        %4617 = vmatmul.mubr.bf16.gmra.mxu0 %v4155
        %v4618 = vpop.f32.mrf.mxu0
        %v4619 = vadd.f32 %v4198, %v4618
        %v4620 = vpop.f32.mrf.mxu0
        %v4621 = vpop.f32.mrf.mxu0
        %v4622 = vadd.f32 %v4198, %v4621
        %v4623 = vpop.f32.mrf.mxu0
        %4624 = vmatprep.mubr.bf16.mxu0 0
        %4625 = vmatmul.mubr.bf16.gmra.mxu0 %v4156
        %v4626 = vpop.f32.mrf.mxu0
        %v4627 = vadd.f32 %v4198, %v4626
        %v4628 = vpop.f32.mrf.mxu0
        %v4629 = vpop.f32.mrf.mxu0
        %v4630 = vadd.f32 %v4198, %v4629
        %v4631 = vpop.f32.mrf.mxu0
        %4632 = vmatprep.mubr.bf16.mxu0 0
        %4633 = vmatmul.mubr.bf16.gmra.mxu0 %v4157
        %v4634 = vpop.f32.mrf.mxu0
        %v4635 = vadd.f32 %v4198, %v4634
        %v4636 = vpop.f32.mrf.mxu0
        %v4637 = vpop.f32.mrf.mxu0
        %v4638 = vadd.f32 %v4198, %v4637
        %v4639 = vpop.f32.mrf.mxu0
        %4640 = vmatprep.mubr.bf16.mxu0 0
        %4641 = vmatmul.mubr.bf16.gmra.mxu0 %v4158
        %v4642 = vpop.f32.mrf.mxu0
        %v4643 = vadd.f32 %v4198, %v4642
        %v4644 = vpop.f32.mrf.mxu0
        %v4645 = vpop.f32.mrf.mxu0
        %v4646 = vadd.f32 %v4198, %v4645
        %v4647 = vpop.f32.mrf.mxu0
        %4648 = vmatprep.mubr.bf16.mxu0 0
        %4649 = vmatmul.mubr.bf16.gmra.mxu0 %v4159
        %v4650 = vpop.f32.mrf.mxu0
        %v4651 = vadd.f32 %v4198, %v4650
        %v4652 = vpop.f32.mrf.mxu0
        %v4653 = vpop.f32.mrf.mxu0
        %v4654 = vadd.f32 %v4198, %v4653
        %v4655 = vpop.f32.mrf.mxu0
        %4656 = vmatprep.mubr.bf16.mxu0 0
        %4657 = vmatmul.mubr.bf16.gmra.mxu0 %v4160
        %v4658 = vpop.f32.mrf.mxu0
        %v4659 = vadd.f32 %v4198, %v4658
        %v4660 = vpop.f32.mrf.mxu0
        %v4661 = vpop.f32.mrf.mxu0
        %v4662 = vadd.f32 %v4198, %v4661
        %v4663 = vpop.f32.mrf.mxu0
        %4664 = vmatprep.mubr.bf16.mxu0 0
        %4665 = vmatmul.mubr.bf16.gmra.mxu0 %v4161
        %v4666 = vpop.f32.mrf.mxu0
        %v4667 = vadd.f32 %v4198, %v4666
        %v4668 = vpop.f32.mrf.mxu0
        %v4669 = vpop.f32.mrf.mxu0
        %v4670 = vadd.f32 %v4198, %v4669
        %v4671 = vpop.f32.mrf.mxu0
        %4672 = vmatprep.mubr.bf16.mxu0 0
        %4673 = vmatmul.mubr.bf16.gmra.mxu0 %v4162
        %v4674 = vpop.f32.mrf.mxu0
        %v4675 = vadd.f32 %v4198, %v4674
        %v4676 = vpop.f32.mrf.mxu0
        %v4677 = vpop.f32.mrf.mxu0
        %v4678 = vadd.f32 %v4198, %v4677
        %v4679 = vpop.f32.mrf.mxu0
        %4680 = vmatprep.mubr.bf16.mxu0 0
        %4681 = vmatmul.mubr.bf16.gmra.mxu0 %v4163
        %v4682 = vpop.f32.mrf.mxu0
        %v4683 = vadd.f32 %v4198, %v4682
        %v4684 = vpop.f32.mrf.mxu0
        %v4685 = vpop.f32.mrf.mxu0
        %v4686 = vadd.f32 %v4198, %v4685
        %v4687 = vpop.f32.mrf.mxu0
        %4688 = vmatprep.mubr.bf16.mxu0 0
        %4689 = vmatmul.mubr.bf16.gmra.mxu0 %v4164
        %v4690 = vpop.f32.mrf.mxu0
        %v4691 = vadd.f32 %v4198, %v4690
        %v4692 = vpop.f32.mrf.mxu0
        %v4693 = vpop.f32.mrf.mxu0
        %v4694 = vadd.f32 %v4198, %v4693
        %v4695 = vpop.f32.mrf.mxu0
        %4696 = vmatprep.mubr.bf16.mxu0 0
        %4697 = vmatmul.mubr.bf16.gmra.mxu0 %v4165
        %v4698 = vpop.f32.mrf.mxu0
        %v4699 = vadd.f32 %v4198, %v4698
        %v4700 = vpop.f32.mrf.mxu0
        %v4701 = vpop.f32.mrf.mxu0
        %v4702 = vadd.f32 %v4198, %v4701
        %v4703 = vpop.f32.mrf.mxu0
        %4704 = vmatprep.mubr.bf16.mxu0 0
        %4705 = vmatmul.mubr.bf16.gmra.mxu0 %v4166
        %v4706 = vpop.f32.mrf.mxu0
        %v4707 = vadd.f32 %v4198, %v4706
        %v4708 = vpop.f32.mrf.mxu0
        %v4709 = vpop.f32.mrf.mxu0
        %v4710 = vadd.f32 %v4198, %v4709
        %v4711 = vpop.f32.mrf.mxu0
        %4712 = vmatprep.mubr.bf16.mxu0 0
        %4713 = vmatmul.mubr.bf16.gmra.mxu0 %v4167
        %v4714 = vpop.f32.mrf.mxu0
        %v4715 = vadd.f32 %v4198, %v4714
        %v4716 = vpop.f32.mrf.mxu0
        %v4717 = vpop.f32.mrf.mxu0
        %v4718 = vadd.f32 %v4198, %v4717
        %v4719 = vpop.f32.mrf.mxu0
        %4720 = vmatprep.mubr.bf16.mxu0 0
        %4721 = vmatmul.mubr.bf16.gmra.mxu0 %v4168
        %v4722 = vpop.f32.mrf.mxu0
        %v4723 = vadd.f32 %v4198, %v4722
        %v4724 = vpop.f32.mrf.mxu0
        %v4725 = vpop.f32.mrf.mxu0
        %v4726 = vadd.f32 %v4198, %v4725
        %v4727 = vpop.f32.mrf.mxu0
        %4728 = vmatprep.mubr.bf16.mxu0 0
        %4729 = vmatmul.mubr.bf16.gmra.mxu0 %v4169
        %v4730 = vpop.f32.mrf.mxu0
        %v4731 = vadd.f32 %v4198, %v4730
        %v4732 = vpop.f32.mrf.mxu0
        %v4733 = vpop.f32.mrf.mxu0
        %v4734 = vadd.f32 %v4198, %v4733
        %v4735 = vpop.f32.mrf.mxu0
        %4736 = vmatprep.mubr.bf16.mxu0 0
        %4737 = vmatmul.mubr.bf16.gmra.mxu0 %v4170
        %v4738 = vpop.f32.mrf.mxu0
        %v4739 = vadd.f32 %v4198, %v4738
        %v4740 = vpop.f32.mrf.mxu0
        %v4741 = vpop.f32.mrf.mxu0
        %v4742 = vadd.f32 %v4198, %v4741
        %v4743 = vpop.f32.mrf.mxu0
        %4744 = vmatprep.mubr.bf16.mxu0 0
        %4745 = vmatmul.mubr.bf16.gmra.mxu0 %v4171
        %v4746 = vpop.f32.mrf.mxu0
        %v4747 = vadd.f32 %v4198, %v4746
        %v4748 = vpop.f32.mrf.mxu0
        %v4749 = vpop.f32.mrf.mxu0
        %v4750 = vadd.f32 %v4198, %v4749
        %v4751 = vpop.f32.mrf.mxu0
        %4752 = vmatprep.mubr.bf16.mxu0 0
        %4753 = vmatmul.mubr.bf16.gmra.mxu0 %v4172
        %v4754 = vpop.f32.mrf.mxu0
        %v4755 = vadd.f32 %v4198, %v4754
        %v4756 = vpop.f32.mrf.mxu0
        %v4757 = vpop.f32.mrf.mxu0
        %v4758 = vadd.f32 %v4198, %v4757
        %v4759 = vpop.f32.mrf.mxu0
        %4760 = vmatprep.mubr.bf16.mxu0 0
        %4761 = vmatmul.mubr.bf16.gmra.mxu0 %v4173
        %v4762 = vpop.f32.mrf.mxu0
        %v4763 = vadd.f32 %v4198, %v4762
        %v4764 = vpop.f32.mrf.mxu0
        %v4765 = vpop.f32.mrf.mxu0
        %v4766 = vadd.f32 %v4198, %v4765
        %v4767 = vpop.f32.mrf.mxu0
        %4768 = vmatprep.mubr.bf16.mxu0 0
        %4769 = vmatmul.mubr.bf16.gmra.mxu0 %v4174
        %v4770 = vpop.f32.mrf.mxu0
        %v4771 = vadd.f32 %v4198, %v4770
        %v4772 = vpop.f32.mrf.mxu0
        %v4773 = vpop.f32.mrf.mxu0
        %v4774 = vadd.f32 %v4198, %v4773
        %v4775 = vpop.f32.mrf.mxu0
        %4776 = vmatprep.mubr.bf16.mxu0 0
        %4777 = vmatmul.mubr.bf16.gmra.mxu0 %v4175
        %v4778 = vpop.f32.mrf.mxu0
        %v4779 = vadd.f32 %v4198, %v4778
        %v4780 = vpop.f32.mrf.mxu0
        %v4781 = vpop.f32.mrf.mxu0
        %v4782 = vadd.f32 %v4198, %v4781
        %v4783 = vpop.f32.mrf.mxu0
        %4784 = vmatprep.mubr.bf16.mxu0 0
        %4785 = vmatmul.mubr.bf16.gmra.mxu0 %v4176
        %v4786 = vpop.f32.mrf.mxu0
        %v4787 = vadd.f32 %v4198, %v4786
        %v4788 = vpop.f32.mrf.mxu0
        %v4789 = vpop.f32.mrf.mxu0
        %v4790 = vadd.f32 %v4198, %v4789
        %v4791 = vpop.f32.mrf.mxu0
        %4792 = vdwg.mxu0
        %v4793 = vmax.f32 %v4283, 0.0
        %v4794 = vmax.f32 %v4286, 0.0
        %v4795 = vmax.f32 %v4291, 0.0
        %v4796 = vmax.f32 %v4294, 0.0
        %v4797 = vmax.f32 %v4299, 0.0
        %v4798 = vmax.f32 %v4302, 0.0
        %v4799 = vmax.f32 %v4307, 0.0
        %v4800 = vmax.f32 %v4310, 0.0
        %v4801 = vmax.f32 %v4315, 0.0
        %v4802 = vmax.f32 %v4318, 0.0
        %v4803 = vmax.f32 %v4323, 0.0
        %v4804 = vmax.f32 %v4326, 0.0
        %v4805 = vmax.f32 %v4331, 0.0
        %v4806 = vmax.f32 %v4334, 0.0
        %v4807 = vmax.f32 %v4339, 0.0
        %v4808 = vmax.f32 %v4342, 0.0
        %v4809 = vmax.f32 %v4347, 0.0
        %v4810 = vmax.f32 %v4350, 0.0
        %v4811 = vmax.f32 %v4355, 0.0
        %v4812 = vmax.f32 %v4358, 0.0
        %v4813 = vmax.f32 %v4363, 0.0
        %v4814 = vmax.f32 %v4366, 0.0
        %v4815 = vmax.f32 %v4371, 0.0
        %v4816 = vmax.f32 %v4374, 0.0
        %v4817 = vmax.f32 %v4379, 0.0
        %v4818 = vmax.f32 %v4382, 0.0
        %v4819 = vmax.f32 %v4387, 0.0
        %v4820 = vmax.f32 %v4390, 0.0
        %v4821 = vmax.f32 %v4395, 0.0
        %v4822 = vmax.f32 %v4398, 0.0
        %v4823 = vmax.f32 %v4403, 0.0
        %v4824 = vmax.f32 %v4406, 0.0
        %v4825 = vmax.f32 %v4411, 0.0
        %v4826 = vmax.f32 %v4414, 0.0
        %v4827 = vmax.f32 %v4419, 0.0
        %v4828 = vmax.f32 %v4422, 0.0
        %v4829 = vmax.f32 %v4427, 0.0
        %v4830 = vmax.f32 %v4430, 0.0
        %v4831 = vmax.f32 %v4435, 0.0
        %v4832 = vmax.f32 %v4438, 0.0
        %v4833 = vmax.f32 %v4443, 0.0
        %v4834 = vmax.f32 %v4446, 0.0
        %v4835 = vmax.f32 %v4451, 0.0
        %v4836 = vmax.f32 %v4454, 0.0
        %v4837 = vmax.f32 %v4459, 0.0
        %v4838 = vmax.f32 %v4462, 0.0
        %v4839 = vmax.f32 %v4467, 0.0
        %v4840 = vmax.f32 %v4470, 0.0
        %v4841 = vmax.f32 %v4475, 0.0
        %v4842 = vmax.f32 %v4478, 0.0
        %v4843 = vmax.f32 %v4483, 0.0
        %v4844 = vmax.f32 %v4486, 0.0
        %v4845 = vmax.f32 %v4491, 0.0
        %v4846 = vmax.f32 %v4494, 0.0
        %v4847 = vmax.f32 %v4499, 0.0
        %v4848 = vmax.f32 %v4502, 0.0
        %v4849 = vmax.f32 %v4507, 0.0
        %v4850 = vmax.f32 %v4510, 0.0
        %v4851 = vmax.f32 %v4515, 0.0
        %v4852 = vmax.f32 %v4518, 0.0
        %v4853 = vmax.f32 %v4523, 0.0
        %v4854 = vmax.f32 %v4526, 0.0
        %v4855 = vmax.f32 %v4531, 0.0
        %v4856 = vmax.f32 %v4534, 0.0
        %v4857 = vmax.f32 %v4539, 0.0
        %v4858 = vmax.f32 %v4542, 0.0
        %v4859 = vmax.f32 %v4547, 0.0
        %v4860 = vmax.f32 %v4550, 0.0
        %v4861 = vmax.f32 %v4555, 0.0
        %v4862 = vmax.f32 %v4558, 0.0
        %v4863 = vmax.f32 %v4563, 0.0
        %v4864 = vmax.f32 %v4566, 0.0
        %v4865 = vmax.f32 %v4571, 0.0
        %v4866 = vmax.f32 %v4574, 0.0
        %v4867 = vmax.f32 %v4579, 0.0
        %v4868 = vmax.f32 %v4582, 0.0
        %v4869 = vmax.f32 %v4587, 0.0
        %v4870 = vmax.f32 %v4590, 0.0
        %v4871 = vmax.f32 %v4595, 0.0
        %v4872 = vmax.f32 %v4598, 0.0
        %v4873 = vmax.f32 %v4603, 0.0
        %v4874 = vmax.f32 %v4606, 0.0
        %v4875 = vmax.f32 %v4611, 0.0
        %v4876 = vmax.f32 %v4614, 0.0
        %v4877 = vmax.f32 %v4619, 0.0
        %v4878 = vmax.f32 %v4622, 0.0
        %v4879 = vmax.f32 %v4627, 0.0
        %v4880 = vmax.f32 %v4630, 0.0
        %v4881 = vmax.f32 %v4635, 0.0
        %v4882 = vmax.f32 %v4638, 0.0
        %v4883 = vmax.f32 %v4643, 0.0
        %v4884 = vmax.f32 %v4646, 0.0
        %v4885 = vmax.f32 %v4651, 0.0
        %v4886 = vmax.f32 %v4654, 0.0
        %v4887 = vmax.f32 %v4659, 0.0
        %v4888 = vmax.f32 %v4662, 0.0
        %v4889 = vmax.f32 %v4667, 0.0
        %v4890 = vmax.f32 %v4670, 0.0
        %v4891 = vmax.f32 %v4675, 0.0
        %v4892 = vmax.f32 %v4678, 0.0
        %v4893 = vmax.f32 %v4683, 0.0
        %v4894 = vmax.f32 %v4686, 0.0
        %v4895 = vmax.f32 %v4691, 0.0
        %v4896 = vmax.f32 %v4694, 0.0
        %v4897 = vmax.f32 %v4699, 0.0
        %v4898 = vmax.f32 %v4702, 0.0
        %v4899 = vmax.f32 %v4707, 0.0
        %v4900 = vmax.f32 %v4710, 0.0
        %v4901 = vmax.f32 %v4715, 0.0
        %v4902 = vmax.f32 %v4718, 0.0
        %v4903 = vmax.f32 %v4723, 0.0
        %v4904 = vmax.f32 %v4726, 0.0
        %v4905 = vmax.f32 %v4731, 0.0
        %v4906 = vmax.f32 %v4734, 0.0
        %v4907 = vmax.f32 %v4739, 0.0
        %v4908 = vmax.f32 %v4742, 0.0
        %v4909 = vmax.f32 %v4747, 0.0
        %v4910 = vmax.f32 %v4750, 0.0
        %v4911 = vmax.f32 %v4755, 0.0
        %v4912 = vmax.f32 %v4758, 0.0
        %v4913 = vmax.f32 %v4763, 0.0
        %v4914 = vmax.f32 %v4766, 0.0
        %v4915 = vmax.f32 %v4771, 0.0
        %v4916 = vmax.f32 %v4774, 0.0
        %v4917 = vmax.f32 %v4779, 0.0
        %v4918 = vmax.f32 %v4782, 0.0
        %v4919 = vmax.f32 %v4787, 0.0
        %v4920 = vmax.f32 %v4790, 0.0
        %v4921 = vpack.c.bf16 %v4794, %v4793
        %v4922 = vpack.c.bf16 %v4796, %v4795
        %v4923 = vpack.c.bf16 %v4798, %v4797
        %v4924 = vpack.c.bf16 %v4800, %v4799
        %v4925 = vpack.c.bf16 %v4802, %v4801
        %v4926 = vpack.c.bf16 %v4804, %v4803
        %v4927 = vpack.c.bf16 %v4806, %v4805
        %v4928 = vpack.c.bf16 %v4808, %v4807
        %v4929 = vpack.c.bf16 %v4810, %v4809
        %v4930 = vpack.c.bf16 %v4812, %v4811
        %v4931 = vpack.c.bf16 %v4814, %v4813
        %v4932 = vpack.c.bf16 %v4816, %v4815
        %v4933 = vpack.c.bf16 %v4818, %v4817
        %v4934 = vpack.c.bf16 %v4820, %v4819
        %v4935 = vpack.c.bf16 %v4822, %v4821
        %v4936 = vpack.c.bf16 %v4824, %v4823
        %v4937 = vpack.c.bf16 %v4826, %v4825
        %v4938 = vpack.c.bf16 %v4828, %v4827
        %v4939 = vpack.c.bf16 %v4830, %v4829
        %v4940 = vpack.c.bf16 %v4832, %v4831
        %v4941 = vpack.c.bf16 %v4834, %v4833
        %v4942 = vpack.c.bf16 %v4836, %v4835
        %v4943 = vpack.c.bf16 %v4838, %v4837
        %v4944 = vpack.c.bf16 %v4840, %v4839
        %v4945 = vpack.c.bf16 %v4842, %v4841
        %v4946 = vpack.c.bf16 %v4844, %v4843
        %v4947 = vpack.c.bf16 %v4846, %v4845
        %v4948 = vpack.c.bf16 %v4848, %v4847
        %v4949 = vpack.c.bf16 %v4850, %v4849
        %v4950 = vpack.c.bf16 %v4852, %v4851
        %v4951 = vpack.c.bf16 %v4854, %v4853
        %v4952 = vpack.c.bf16 %v4856, %v4855
        %v4953 = vpack.c.bf16 %v4858, %v4857
        %v4954 = vpack.c.bf16 %v4860, %v4859
        %v4955 = vpack.c.bf16 %v4862, %v4861
        %v4956 = vpack.c.bf16 %v4864, %v4863
        %v4957 = vpack.c.bf16 %v4866, %v4865
        %v4958 = vpack.c.bf16 %v4868, %v4867
        %v4959 = vpack.c.bf16 %v4870, %v4869
        %v4960 = vpack.c.bf16 %v4872, %v4871
        %v4961 = vpack.c.bf16 %v4874, %v4873
        %v4962 = vpack.c.bf16 %v4876, %v4875
        %v4963 = vpack.c.bf16 %v4878, %v4877
        %v4964 = vpack.c.bf16 %v4880, %v4879
        %v4965 = vpack.c.bf16 %v4882, %v4881
        %v4966 = vpack.c.bf16 %v4884, %v4883
        %v4967 = vpack.c.bf16 %v4886, %v4885
        %v4968 = vpack.c.bf16 %v4888, %v4887
        %v4969 = vpack.c.bf16 %v4890, %v4889
        %v4970 = vpack.c.bf16 %v4892, %v4891
        %v4971 = vpack.c.bf16 %v4894, %v4893
        %v4972 = vpack.c.bf16 %v4896, %v4895
        %v4973 = vpack.c.bf16 %v4898, %v4897
        %v4974 = vpack.c.bf16 %v4900, %v4899
        %v4975 = vpack.c.bf16 %v4902, %v4901
        %v4976 = vpack.c.bf16 %v4904, %v4903
        %v4977 = vpack.c.bf16 %v4906, %v4905
        %v4978 = vpack.c.bf16 %v4908, %v4907
        %v4979 = vpack.c.bf16 %v4910, %v4909
        %v4980 = vpack.c.bf16 %v4912, %v4911
        %v4981 = vpack.c.bf16 %v4914, %v4913
        %v4982 = vpack.c.bf16 %v4916, %v4915
        %v4983 = vpack.c.bf16 %v4918, %v4917
        %v4984 = vpack.c.bf16 %v4920, %v4919
        %v4985 = vld [vmem:[%s7] sm:$0xff]
        %v4986 = vld [vmem:[%s7 + $0x8] sm:$0xff]
        %v4987 = vld [vmem:[%s7 + $0x10] sm:$0xff]
        %v4988 = vld [vmem:[%s7 + $0x18] sm:$0xff]
        %v4989 = vld [vmem:[%s7 + $0x20] sm:$0xff]
        %v4990 = vld [vmem:[%s7 + $0x28] sm:$0xff]
        %v4991 = vld [vmem:[%s7 + $0x30] sm:$0xff]
        %v4992 = vld [vmem:[%s7 + $0x38] sm:$0xff]
        %v4993 = vld [vmem:[%s7 + $0x40] sm:$0xff]
        %v4994 = vld [vmem:[%s7 + $0x48] sm:$0xff]
        %v4995 = vld [vmem:[%s7 + $0x50] sm:$0xff]
        %v4996 = vld [vmem:[%s7 + $0x58] sm:$0xff]
        %v4997 = vld [vmem:[%s7 + $0x60] sm:$0xff]
        %v4998 = vld [vmem:[%s7 + $0x68] sm:$0xff]
        %v4999 = vld [vmem:[%s7 + $0x70] sm:$0xff]
        %v5000 = vld [vmem:[%s7 + $0x78] sm:$0xff]
        %v5001 = vld [vmem:[%s8] sm:$0x3]
        %v5003 = vlaneseq
        %v5004 = vshrl.u32 %v5003, 7
        %v5005 = vsub.s32 0, %v5004
        %v5006 = vrot.slane %v5001, %v5005
        %v5007 = vlaneseq
        %v5008 = vshrl.u32 %v5007, 7
        %v5009 = vsub.s32 1, %v5008
        %v5010 = vrot.slane %v5001, %v5009
        %v5029 = vunpack.c.l.b16 %v4985
        %v5030 = vunpack.c.h.b16 %v4985
        %v5031 = vunpack.c.l.b16 %v4986
        %v5032 = vunpack.c.h.b16 %v4986
        %v5033 = vunpack.c.l.b16 %v4987
        %v5034 = vunpack.c.h.b16 %v4987
        %v5035 = vunpack.c.l.b16 %v4988
        %v5036 = vunpack.c.h.b16 %v4988
        %v5037 = vunpack.c.l.b16 %v4989
        %v5038 = vunpack.c.h.b16 %v4989
        %v5039 = vunpack.c.l.b16 %v4990
        %v5040 = vunpack.c.h.b16 %v4990
        %v5041 = vunpack.c.l.b16 %v4991
        %v5042 = vunpack.c.h.b16 %v4991
        %v5043 = vunpack.c.l.b16 %v4992
        %v5044 = vunpack.c.h.b16 %v4992
        %v5045 = vunpack.c.l.b16 %v4993
        %v5046 = vunpack.c.h.b16 %v4993
        %v5047 = vunpack.c.l.b16 %v4994
        %v5048 = vunpack.c.h.b16 %v4994
        %v5049 = vunpack.c.l.b16 %v4995
        %v5050 = vunpack.c.h.b16 %v4995
        %v5051 = vunpack.c.l.b16 %v4996
        %v5052 = vunpack.c.h.b16 %v4996
        %v5053 = vunpack.c.l.b16 %v4997
        %v5054 = vunpack.c.h.b16 %v4997
        %v5055 = vunpack.c.l.b16 %v4998
        %v5056 = vunpack.c.h.b16 %v4998
        %v5057 = vunpack.c.l.b16 %v4999
        %v5058 = vunpack.c.h.b16 %v4999
        %v5059 = vunpack.c.l.b16 %v5000
        %v5060 = vunpack.c.h.b16 %v5000
        %v5061 = vpack.c.b16 %v5031, %v5029
        %v5062 = vpack.c.b16 %v5032, %v5030
        %v5063 = vpack.c.b16 %v5035, %v5033
        %v5064 = vpack.c.b16 %v5036, %v5034
        %v5065 = vpack.c.b16 %v5039, %v5037
        %v5066 = vpack.c.b16 %v5040, %v5038
        %v5067 = vpack.c.b16 %v5043, %v5041
        %v5068 = vpack.c.b16 %v5044, %v5042
        %v5069 = vpack.c.b16 %v5047, %v5045
        %v5070 = vpack.c.b16 %v5048, %v5046
        %v5071 = vpack.c.b16 %v5051, %v5049
        %v5072 = vpack.c.b16 %v5052, %v5050
        %v5073 = vpack.c.b16 %v5055, %v5053
        %v5074 = vpack.c.b16 %v5056, %v5054
        %v5075 = vpack.c.b16 %v5059, %v5057
        %v5076 = vpack.c.b16 %v5060, %v5058
        %5093 = vmatprep.subr.bf16.mxu0 %v5076
        %5094 = vmatpush1.bf16.msra.mxu0 %v5075
        %5095 = vmatprep.subr.bf16.mxu0 %v5074
        %5096 = vmatpush1.bf16.msra.mxu0 %v5073
        %5097 = vmatprep.subr.bf16.mxu0 %v5072
        %5098 = vmatpush1.bf16.msra.mxu0 %v5071
        %5099 = vmatprep.subr.bf16.mxu0 %v5070
        %5100 = vmatpush1.bf16.msra.mxu0 %v5069
        %5101 = vmatprep.subr.bf16.mxu0 %v5068
        %5102 = vmatpush1.bf16.msra.mxu0 %v5067
        %5103 = vmatprep.subr.bf16.mxu0 %v5066
        %5104 = vmatpush1.bf16.msra.mxu0 %v5065
        %5105 = vmatprep.subr.bf16.mxu0 %v5064
        %5106 = vmatpush1.bf16.msra.mxu0 %v5063
        %5107 = vmatprep.subr.bf16.mxu0 %v5062
        %5108 = vmatpush1.bf16.msra.mxu0 %v5061
        %5109 = vmatprep.subr.bf16.mxu0 0
        %5110 = vmatpush2.bf16.msra.mxu0 0
        %5111 = vmatprep.subr.bf16.mxu0 0
        %5112 = vmatpush2.bf16.msra.mxu0 0
        %5113 = vmatprep.subr.bf16.mxu0 0
        %5114 = vmatpush2.bf16.msra.mxu0 0
        %5115 = vmatprep.subr.bf16.mxu0 0
        %5116 = vmatpush2.bf16.msra.mxu0 0
        %5117 = vmatprep.subr.bf16.mxu0 0
        %5118 = vmatpush2.bf16.msra.mxu0 0
        %5119 = vmatprep.subr.bf16.mxu0 0
        %5120 = vmatpush2.bf16.msra.mxu0 0
        %5121 = vmatprep.subr.bf16.mxu0 0
        %5122 = vmatpush2.bf16.msra.mxu0 0
        %5123 = vmatprep.subr.bf16.mxu0 0
        %5124 = vmatpush2.bf16.msra.mxu0 0
        %5125 = vmatprep.mubr.bf16.mxu0 0
        %5126 = vmatmul.mubr.bf16.gmra.mxu0 %v4921
        %v5127 = vpop.f32.mrf.mxu0
        %v5128 = vadd.f32 %v5006, %v5127
        %v5129 = vpop.f32.mrf.mxu0
        %v5130 = vadd.f32 %v5010, %v5129
        %v5131 = vpop.f32.mrf.mxu0
        %v5132 = vadd.f32 %v5006, %v5131
        %v5133 = vpop.f32.mrf.mxu0
        %v5134 = vadd.f32 %v5010, %v5133
        %5135 = vmatprep.mubr.bf16.mxu0 0
        %5136 = vmatmul.mubr.bf16.gmra.mxu0 %v4922
        %v5137 = vpop.f32.mrf.mxu0
        %v5138 = vadd.f32 %v5006, %v5137
        %v5139 = vpop.f32.mrf.mxu0
        %v5140 = vadd.f32 %v5010, %v5139
        %v5141 = vpop.f32.mrf.mxu0
        %v5142 = vadd.f32 %v5006, %v5141
        %v5143 = vpop.f32.mrf.mxu0
        %v5144 = vadd.f32 %v5010, %v5143
        %5145 = vmatprep.mubr.bf16.mxu0 0
        %5146 = vmatmul.mubr.bf16.gmra.mxu0 %v4923
        %v5147 = vpop.f32.mrf.mxu0
        %v5148 = vadd.f32 %v5006, %v5147
        %v5149 = vpop.f32.mrf.mxu0
        %v5150 = vadd.f32 %v5010, %v5149
        %v5151 = vpop.f32.mrf.mxu0
        %v5152 = vadd.f32 %v5006, %v5151
        %v5153 = vpop.f32.mrf.mxu0
        %v5154 = vadd.f32 %v5010, %v5153
        %5155 = vmatprep.mubr.bf16.mxu0 0
        %5156 = vmatmul.mubr.bf16.gmra.mxu0 %v4924
        %v5157 = vpop.f32.mrf.mxu0
        %v5158 = vadd.f32 %v5006, %v5157
        %v5159 = vpop.f32.mrf.mxu0
        %v5160 = vadd.f32 %v5010, %v5159
        %v5161 = vpop.f32.mrf.mxu0
        %v5162 = vadd.f32 %v5006, %v5161
        %v5163 = vpop.f32.mrf.mxu0
        %v5164 = vadd.f32 %v5010, %v5163
        %5165 = vmatprep.mubr.bf16.mxu0 0
        %5166 = vmatmul.mubr.bf16.gmra.mxu0 %v4925
        %v5167 = vpop.f32.mrf.mxu0
        %v5168 = vadd.f32 %v5006, %v5167
        %v5169 = vpop.f32.mrf.mxu0
        %v5170 = vadd.f32 %v5010, %v5169
        %v5171 = vpop.f32.mrf.mxu0
        %v5172 = vadd.f32 %v5006, %v5171
        %v5173 = vpop.f32.mrf.mxu0
        %v5174 = vadd.f32 %v5010, %v5173
        %5175 = vmatprep.mubr.bf16.mxu0 0
        %5176 = vmatmul.mubr.bf16.gmra.mxu0 %v4926
        %v5177 = vpop.f32.mrf.mxu0
        %v5178 = vadd.f32 %v5006, %v5177
        %v5179 = vpop.f32.mrf.mxu0
        %v5180 = vadd.f32 %v5010, %v5179
        %v5181 = vpop.f32.mrf.mxu0
        %v5182 = vadd.f32 %v5006, %v5181
        %v5183 = vpop.f32.mrf.mxu0
        %v5184 = vadd.f32 %v5010, %v5183
        %5185 = vmatprep.mubr.bf16.mxu0 0
        %5186 = vmatmul.mubr.bf16.gmra.mxu0 %v4927
        %v5187 = vpop.f32.mrf.mxu0
        %v5188 = vadd.f32 %v5006, %v5187
        %v5189 = vpop.f32.mrf.mxu0
        %v5190 = vadd.f32 %v5010, %v5189
        %v5191 = vpop.f32.mrf.mxu0
        %v5192 = vadd.f32 %v5006, %v5191
        %v5193 = vpop.f32.mrf.mxu0
        %v5194 = vadd.f32 %v5010, %v5193
        %5195 = vmatprep.mubr.bf16.mxu0 0
        %5196 = vmatmul.mubr.bf16.gmra.mxu0 %v4928
        %v5197 = vpop.f32.mrf.mxu0
        %v5198 = vadd.f32 %v5006, %v5197
        %v5199 = vpop.f32.mrf.mxu0
        %v5200 = vadd.f32 %v5010, %v5199
        %v5201 = vpop.f32.mrf.mxu0
        %v5202 = vadd.f32 %v5006, %v5201
        %v5203 = vpop.f32.mrf.mxu0
        %v5204 = vadd.f32 %v5010, %v5203
        %5205 = vmatprep.mubr.bf16.mxu0 0
        %5206 = vmatmul.mubr.bf16.gmra.mxu0 %v4929
        %v5207 = vpop.f32.mrf.mxu0
        %v5208 = vadd.f32 %v5006, %v5207
        %v5209 = vpop.f32.mrf.mxu0
        %v5210 = vadd.f32 %v5010, %v5209
        %v5211 = vpop.f32.mrf.mxu0
        %v5212 = vadd.f32 %v5006, %v5211
        %v5213 = vpop.f32.mrf.mxu0
        %v5214 = vadd.f32 %v5010, %v5213
        %5215 = vmatprep.mubr.bf16.mxu0 0
        %5216 = vmatmul.mubr.bf16.gmra.mxu0 %v4930
        %v5217 = vpop.f32.mrf.mxu0
        %v5218 = vadd.f32 %v5006, %v5217
        %v5219 = vpop.f32.mrf.mxu0
        %v5220 = vadd.f32 %v5010, %v5219
        %v5221 = vpop.f32.mrf.mxu0
        %v5222 = vadd.f32 %v5006, %v5221
        %v5223 = vpop.f32.mrf.mxu0
        %v5224 = vadd.f32 %v5010, %v5223
        %5225 = vmatprep.mubr.bf16.mxu0 0
        %5226 = vmatmul.mubr.bf16.gmra.mxu0 %v4931
        %v5227 = vpop.f32.mrf.mxu0
        %v5228 = vadd.f32 %v5006, %v5227
        %v5229 = vpop.f32.mrf.mxu0
        %v5230 = vadd.f32 %v5010, %v5229
        %v5231 = vpop.f32.mrf.mxu0
        %v5232 = vadd.f32 %v5006, %v5231
        %v5233 = vpop.f32.mrf.mxu0
        %v5234 = vadd.f32 %v5010, %v5233
        %5235 = vmatprep.mubr.bf16.mxu0 0
        %5236 = vmatmul.mubr.bf16.gmra.mxu0 %v4932
        %v5237 = vpop.f32.mrf.mxu0
        %v5238 = vadd.f32 %v5006, %v5237
        %v5239 = vpop.f32.mrf.mxu0
        %v5240 = vadd.f32 %v5010, %v5239
        %v5241 = vpop.f32.mrf.mxu0
        %v5242 = vadd.f32 %v5006, %v5241
        %v5243 = vpop.f32.mrf.mxu0
        %v5244 = vadd.f32 %v5010, %v5243
        %5245 = vmatprep.mubr.bf16.mxu0 0
        %5246 = vmatmul.mubr.bf16.gmra.mxu0 %v4933
        %v5247 = vpop.f32.mrf.mxu0
        %v5248 = vadd.f32 %v5006, %v5247
        %v5249 = vpop.f32.mrf.mxu0
        %v5250 = vadd.f32 %v5010, %v5249
        %v5251 = vpop.f32.mrf.mxu0
        %v5252 = vadd.f32 %v5006, %v5251
        %v5253 = vpop.f32.mrf.mxu0
        %v5254 = vadd.f32 %v5010, %v5253
        %5255 = vmatprep.mubr.bf16.mxu0 0
        %5256 = vmatmul.mubr.bf16.gmra.mxu0 %v4934
        %v5257 = vpop.f32.mrf.mxu0
        %v5258 = vadd.f32 %v5006, %v5257
        %v5259 = vpop.f32.mrf.mxu0
        %v5260 = vadd.f32 %v5010, %v5259
        %v5261 = vpop.f32.mrf.mxu0
        %v5262 = vadd.f32 %v5006, %v5261
        %v5263 = vpop.f32.mrf.mxu0
        %v5264 = vadd.f32 %v5010, %v5263
        %5265 = vmatprep.mubr.bf16.mxu0 0
        %5266 = vmatmul.mubr.bf16.gmra.mxu0 %v4935
        %v5267 = vpop.f32.mrf.mxu0
        %v5268 = vadd.f32 %v5006, %v5267
        %v5269 = vpop.f32.mrf.mxu0
        %v5270 = vadd.f32 %v5010, %v5269
        %v5271 = vpop.f32.mrf.mxu0
        %v5272 = vadd.f32 %v5006, %v5271
        %v5273 = vpop.f32.mrf.mxu0
        %v5274 = vadd.f32 %v5010, %v5273
        %5275 = vmatprep.mubr.bf16.mxu0 0
        %5276 = vmatmul.mubr.bf16.gmra.mxu0 %v4936
        %v5277 = vpop.f32.mrf.mxu0
        %v5278 = vadd.f32 %v5006, %v5277
        %v5279 = vpop.f32.mrf.mxu0
        %v5280 = vadd.f32 %v5010, %v5279
        %v5281 = vpop.f32.mrf.mxu0
        %v5282 = vadd.f32 %v5006, %v5281
        %v5283 = vpop.f32.mrf.mxu0
        %v5284 = vadd.f32 %v5010, %v5283
        %5285 = vmatprep.mubr.bf16.mxu0 0
        %5286 = vmatmul.mubr.bf16.gmra.mxu0 %v4937
        %v5287 = vpop.f32.mrf.mxu0
        %v5288 = vadd.f32 %v5006, %v5287
        %v5289 = vpop.f32.mrf.mxu0
        %v5290 = vadd.f32 %v5010, %v5289
        %v5291 = vpop.f32.mrf.mxu0
        %v5292 = vadd.f32 %v5006, %v5291
        %v5293 = vpop.f32.mrf.mxu0
        %v5294 = vadd.f32 %v5010, %v5293
        %5295 = vmatprep.mubr.bf16.mxu0 0
        %5296 = vmatmul.mubr.bf16.gmra.mxu0 %v4938
        %v5297 = vpop.f32.mrf.mxu0
        %v5298 = vadd.f32 %v5006, %v5297
        %v5299 = vpop.f32.mrf.mxu0
        %v5300 = vadd.f32 %v5010, %v5299
        %v5301 = vpop.f32.mrf.mxu0
        %v5302 = vadd.f32 %v5006, %v5301
        %v5303 = vpop.f32.mrf.mxu0
        %v5304 = vadd.f32 %v5010, %v5303
        %5305 = vmatprep.mubr.bf16.mxu0 0
        %5306 = vmatmul.mubr.bf16.gmra.mxu0 %v4939
        %v5307 = vpop.f32.mrf.mxu0
        %v5308 = vadd.f32 %v5006, %v5307
        %v5309 = vpop.f32.mrf.mxu0
        %v5310 = vadd.f32 %v5010, %v5309
        %v5311 = vpop.f32.mrf.mxu0
        %v5312 = vadd.f32 %v5006, %v5311
        %v5313 = vpop.f32.mrf.mxu0
        %v5314 = vadd.f32 %v5010, %v5313
        %5315 = vmatprep.mubr.bf16.mxu0 0
        %5316 = vmatmul.mubr.bf16.gmra.mxu0 %v4940
        %v5317 = vpop.f32.mrf.mxu0
        %v5318 = vadd.f32 %v5006, %v5317
        %v5319 = vpop.f32.mrf.mxu0
        %v5320 = vadd.f32 %v5010, %v5319
        %v5321 = vpop.f32.mrf.mxu0
        %v5322 = vadd.f32 %v5006, %v5321
        %v5323 = vpop.f32.mrf.mxu0
        %v5324 = vadd.f32 %v5010, %v5323
        %5325 = vmatprep.mubr.bf16.mxu0 0
        %5326 = vmatmul.mubr.bf16.gmra.mxu0 %v4941
        %v5327 = vpop.f32.mrf.mxu0
        %v5328 = vadd.f32 %v5006, %v5327
        %v5329 = vpop.f32.mrf.mxu0
        %v5330 = vadd.f32 %v5010, %v5329
        %v5331 = vpop.f32.mrf.mxu0
        %v5332 = vadd.f32 %v5006, %v5331
        %v5333 = vpop.f32.mrf.mxu0
        %v5334 = vadd.f32 %v5010, %v5333
        %5335 = vmatprep.mubr.bf16.mxu0 0
        %5336 = vmatmul.mubr.bf16.gmra.mxu0 %v4942
        %v5337 = vpop.f32.mrf.mxu0
        %v5338 = vadd.f32 %v5006, %v5337
        %v5339 = vpop.f32.mrf.mxu0
        %v5340 = vadd.f32 %v5010, %v5339
        %v5341 = vpop.f32.mrf.mxu0
        %v5342 = vadd.f32 %v5006, %v5341
        %v5343 = vpop.f32.mrf.mxu0
        %v5344 = vadd.f32 %v5010, %v5343
        %5345 = vmatprep.mubr.bf16.mxu0 0
        %5346 = vmatmul.mubr.bf16.gmra.mxu0 %v4943
        %v5347 = vpop.f32.mrf.mxu0
        %v5348 = vadd.f32 %v5006, %v5347
        %v5349 = vpop.f32.mrf.mxu0
        %v5350 = vadd.f32 %v5010, %v5349
        %v5351 = vpop.f32.mrf.mxu0
        %v5352 = vadd.f32 %v5006, %v5351
        %v5353 = vpop.f32.mrf.mxu0
        %v5354 = vadd.f32 %v5010, %v5353
        %5355 = vmatprep.mubr.bf16.mxu0 0
        %5356 = vmatmul.mubr.bf16.gmra.mxu0 %v4944
        %v5357 = vpop.f32.mrf.mxu0
        %v5358 = vadd.f32 %v5006, %v5357
        %v5359 = vpop.f32.mrf.mxu0
        %v5360 = vadd.f32 %v5010, %v5359
        %v5361 = vpop.f32.mrf.mxu0
        %v5362 = vadd.f32 %v5006, %v5361
        %v5363 = vpop.f32.mrf.mxu0
        %v5364 = vadd.f32 %v5010, %v5363
        %5365 = vmatprep.mubr.bf16.mxu0 0
        %5366 = vmatmul.mubr.bf16.gmra.mxu0 %v4945
        %v5367 = vpop.f32.mrf.mxu0
        %v5368 = vadd.f32 %v5006, %v5367
        %v5369 = vpop.f32.mrf.mxu0
        %v5370 = vadd.f32 %v5010, %v5369
        %v5371 = vpop.f32.mrf.mxu0
        %v5372 = vadd.f32 %v5006, %v5371
        %v5373 = vpop.f32.mrf.mxu0
        %v5374 = vadd.f32 %v5010, %v5373
        %5375 = vmatprep.mubr.bf16.mxu0 0
        %5376 = vmatmul.mubr.bf16.gmra.mxu0 %v4946
        %v5377 = vpop.f32.mrf.mxu0
        %v5378 = vadd.f32 %v5006, %v5377
        %v5379 = vpop.f32.mrf.mxu0
        %v5380 = vadd.f32 %v5010, %v5379
        %v5381 = vpop.f32.mrf.mxu0
        %v5382 = vadd.f32 %v5006, %v5381
        %v5383 = vpop.f32.mrf.mxu0
        %v5384 = vadd.f32 %v5010, %v5383
        %5385 = vmatprep.mubr.bf16.mxu0 0
        %5386 = vmatmul.mubr.bf16.gmra.mxu0 %v4947
        %v5387 = vpop.f32.mrf.mxu0
        %v5388 = vadd.f32 %v5006, %v5387
        %v5389 = vpop.f32.mrf.mxu0
        %v5390 = vadd.f32 %v5010, %v5389
        %v5391 = vpop.f32.mrf.mxu0
        %v5392 = vadd.f32 %v5006, %v5391
        %v5393 = vpop.f32.mrf.mxu0
        %v5394 = vadd.f32 %v5010, %v5393
        %5395 = vmatprep.mubr.bf16.mxu0 0
        %5396 = vmatmul.mubr.bf16.gmra.mxu0 %v4948
        %v5397 = vpop.f32.mrf.mxu0
        %v5398 = vadd.f32 %v5006, %v5397
        %v5399 = vpop.f32.mrf.mxu0
        %v5400 = vadd.f32 %v5010, %v5399
        %v5401 = vpop.f32.mrf.mxu0
        %v5402 = vadd.f32 %v5006, %v5401
        %v5403 = vpop.f32.mrf.mxu0
        %v5404 = vadd.f32 %v5010, %v5403
        %5405 = vmatprep.mubr.bf16.mxu0 0
        %5406 = vmatmul.mubr.bf16.gmra.mxu0 %v4949
        %v5407 = vpop.f32.mrf.mxu0
        %v5408 = vadd.f32 %v5006, %v5407
        %v5409 = vpop.f32.mrf.mxu0
        %v5410 = vadd.f32 %v5010, %v5409
        %v5411 = vpop.f32.mrf.mxu0
        %v5412 = vadd.f32 %v5006, %v5411
        %v5413 = vpop.f32.mrf.mxu0
        %v5414 = vadd.f32 %v5010, %v5413
        %5415 = vmatprep.mubr.bf16.mxu0 0
        %5416 = vmatmul.mubr.bf16.gmra.mxu0 %v4950
        %v5417 = vpop.f32.mrf.mxu0
        %v5418 = vadd.f32 %v5006, %v5417
        %v5419 = vpop.f32.mrf.mxu0
        %v5420 = vadd.f32 %v5010, %v5419
        %v5421 = vpop.f32.mrf.mxu0
        %v5422 = vadd.f32 %v5006, %v5421
        %v5423 = vpop.f32.mrf.mxu0
        %v5424 = vadd.f32 %v5010, %v5423
        %5425 = vmatprep.mubr.bf16.mxu0 0
        %5426 = vmatmul.mubr.bf16.gmra.mxu0 %v4951
        %v5427 = vpop.f32.mrf.mxu0
        %v5428 = vadd.f32 %v5006, %v5427
        %v5429 = vpop.f32.mrf.mxu0
        %v5430 = vadd.f32 %v5010, %v5429
        %v5431 = vpop.f32.mrf.mxu0
        %v5432 = vadd.f32 %v5006, %v5431
        %v5433 = vpop.f32.mrf.mxu0
        %v5434 = vadd.f32 %v5010, %v5433
        %5435 = vmatprep.mubr.bf16.mxu0 0
        %5436 = vmatmul.mubr.bf16.gmra.mxu0 %v4952
        %v5437 = vpop.f32.mrf.mxu0
        %v5438 = vadd.f32 %v5006, %v5437
        %v5439 = vpop.f32.mrf.mxu0
        %v5440 = vadd.f32 %v5010, %v5439
        %v5441 = vpop.f32.mrf.mxu0
        %v5442 = vadd.f32 %v5006, %v5441
        %v5443 = vpop.f32.mrf.mxu0
        %v5444 = vadd.f32 %v5010, %v5443
        %5445 = vmatprep.mubr.bf16.mxu0 0
        %5446 = vmatmul.mubr.bf16.gmra.mxu0 %v4953
        %v5447 = vpop.f32.mrf.mxu0
        %v5448 = vadd.f32 %v5006, %v5447
        %v5449 = vpop.f32.mrf.mxu0
        %v5450 = vadd.f32 %v5010, %v5449
        %v5451 = vpop.f32.mrf.mxu0
        %v5452 = vadd.f32 %v5006, %v5451
        %v5453 = vpop.f32.mrf.mxu0
        %v5454 = vadd.f32 %v5010, %v5453
        %5455 = vmatprep.mubr.bf16.mxu0 0
        %5456 = vmatmul.mubr.bf16.gmra.mxu0 %v4954
        %v5457 = vpop.f32.mrf.mxu0
        %v5458 = vadd.f32 %v5006, %v5457
        %v5459 = vpop.f32.mrf.mxu0
        %v5460 = vadd.f32 %v5010, %v5459
        %v5461 = vpop.f32.mrf.mxu0
        %v5462 = vadd.f32 %v5006, %v5461
        %v5463 = vpop.f32.mrf.mxu0
        %v5464 = vadd.f32 %v5010, %v5463
        %5465 = vmatprep.mubr.bf16.mxu0 0
        %5466 = vmatmul.mubr.bf16.gmra.mxu0 %v4955
        %v5467 = vpop.f32.mrf.mxu0
        %v5468 = vadd.f32 %v5006, %v5467
        %v5469 = vpop.f32.mrf.mxu0
        %v5470 = vadd.f32 %v5010, %v5469
        %v5471 = vpop.f32.mrf.mxu0
        %v5472 = vadd.f32 %v5006, %v5471
        %v5473 = vpop.f32.mrf.mxu0
        %v5474 = vadd.f32 %v5010, %v5473
        %5475 = vmatprep.mubr.bf16.mxu0 0
        %5476 = vmatmul.mubr.bf16.gmra.mxu0 %v4956
        %v5477 = vpop.f32.mrf.mxu0
        %v5478 = vadd.f32 %v5006, %v5477
        %v5479 = vpop.f32.mrf.mxu0
        %v5480 = vadd.f32 %v5010, %v5479
        %v5481 = vpop.f32.mrf.mxu0
        %v5482 = vadd.f32 %v5006, %v5481
        %v5483 = vpop.f32.mrf.mxu0
        %v5484 = vadd.f32 %v5010, %v5483
        %5485 = vmatprep.mubr.bf16.mxu0 0
        %5486 = vmatmul.mubr.bf16.gmra.mxu0 %v4957
        %v5487 = vpop.f32.mrf.mxu0
        %v5488 = vadd.f32 %v5006, %v5487
        %v5489 = vpop.f32.mrf.mxu0
        %v5490 = vadd.f32 %v5010, %v5489
        %v5491 = vpop.f32.mrf.mxu0
        %v5492 = vadd.f32 %v5006, %v5491
        %v5493 = vpop.f32.mrf.mxu0
        %v5494 = vadd.f32 %v5010, %v5493
        %5495 = vmatprep.mubr.bf16.mxu0 0
        %5496 = vmatmul.mubr.bf16.gmra.mxu0 %v4958
        %v5497 = vpop.f32.mrf.mxu0
        %v5498 = vadd.f32 %v5006, %v5497
        %v5499 = vpop.f32.mrf.mxu0
        %v5500 = vadd.f32 %v5010, %v5499
        %v5501 = vpop.f32.mrf.mxu0
        %v5502 = vadd.f32 %v5006, %v5501
        %v5503 = vpop.f32.mrf.mxu0
        %v5504 = vadd.f32 %v5010, %v5503
        %5505 = vmatprep.mubr.bf16.mxu0 0
        %5506 = vmatmul.mubr.bf16.gmra.mxu0 %v4959
        %v5507 = vpop.f32.mrf.mxu0
        %v5508 = vadd.f32 %v5006, %v5507
        %v5509 = vpop.f32.mrf.mxu0
        %v5510 = vadd.f32 %v5010, %v5509
        %v5511 = vpop.f32.mrf.mxu0
        %v5512 = vadd.f32 %v5006, %v5511
        %v5513 = vpop.f32.mrf.mxu0
        %v5514 = vadd.f32 %v5010, %v5513
        %5515 = vmatprep.mubr.bf16.mxu0 0
        %5516 = vmatmul.mubr.bf16.gmra.mxu0 %v4960
        %v5517 = vpop.f32.mrf.mxu0
        %v5518 = vadd.f32 %v5006, %v5517
        %v5519 = vpop.f32.mrf.mxu0
        %v5520 = vadd.f32 %v5010, %v5519
        %v5521 = vpop.f32.mrf.mxu0
        %v5522 = vadd.f32 %v5006, %v5521
        %v5523 = vpop.f32.mrf.mxu0
        %v5524 = vadd.f32 %v5010, %v5523
        %5525 = vmatprep.mubr.bf16.mxu0 0
        %5526 = vmatmul.mubr.bf16.gmra.mxu0 %v4961
        %v5527 = vpop.f32.mrf.mxu0
        %v5528 = vadd.f32 %v5006, %v5527
        %v5529 = vpop.f32.mrf.mxu0
        %v5530 = vadd.f32 %v5010, %v5529
        %v5531 = vpop.f32.mrf.mxu0
        %v5532 = vadd.f32 %v5006, %v5531
        %v5533 = vpop.f32.mrf.mxu0
        %v5534 = vadd.f32 %v5010, %v5533
        %5535 = vmatprep.mubr.bf16.mxu0 0
        %5536 = vmatmul.mubr.bf16.gmra.mxu0 %v4962
        %v5537 = vpop.f32.mrf.mxu0
        %v5538 = vadd.f32 %v5006, %v5537
        %v5539 = vpop.f32.mrf.mxu0
        %v5540 = vadd.f32 %v5010, %v5539
        %v5541 = vpop.f32.mrf.mxu0
        %v5542 = vadd.f32 %v5006, %v5541
        %v5543 = vpop.f32.mrf.mxu0
        %v5544 = vadd.f32 %v5010, %v5543
        %5545 = vmatprep.mubr.bf16.mxu0 0
        %5546 = vmatmul.mubr.bf16.gmra.mxu0 %v4963
        %v5547 = vpop.f32.mrf.mxu0
        %v5548 = vadd.f32 %v5006, %v5547
        %v5549 = vpop.f32.mrf.mxu0
        %v5550 = vadd.f32 %v5010, %v5549
        %v5551 = vpop.f32.mrf.mxu0
        %v5552 = vadd.f32 %v5006, %v5551
        %v5553 = vpop.f32.mrf.mxu0
        %v5554 = vadd.f32 %v5010, %v5553
        %5555 = vmatprep.mubr.bf16.mxu0 0
        %5556 = vmatmul.mubr.bf16.gmra.mxu0 %v4964
        %v5557 = vpop.f32.mrf.mxu0
        %v5558 = vadd.f32 %v5006, %v5557
        %v5559 = vpop.f32.mrf.mxu0
        %v5560 = vadd.f32 %v5010, %v5559
        %v5561 = vpop.f32.mrf.mxu0
        %v5562 = vadd.f32 %v5006, %v5561
        %v5563 = vpop.f32.mrf.mxu0
        %v5564 = vadd.f32 %v5010, %v5563
        %5565 = vmatprep.mubr.bf16.mxu0 0
        %5566 = vmatmul.mubr.bf16.gmra.mxu0 %v4965
        %v5567 = vpop.f32.mrf.mxu0
        %v5568 = vadd.f32 %v5006, %v5567
        %v5569 = vpop.f32.mrf.mxu0
        %v5570 = vadd.f32 %v5010, %v5569
        %v5571 = vpop.f32.mrf.mxu0
        %v5572 = vadd.f32 %v5006, %v5571
        %v5573 = vpop.f32.mrf.mxu0
        %v5574 = vadd.f32 %v5010, %v5573
        %5575 = vmatprep.mubr.bf16.mxu0 0
        %5576 = vmatmul.mubr.bf16.gmra.mxu0 %v4966
        %v5577 = vpop.f32.mrf.mxu0
        %v5578 = vadd.f32 %v5006, %v5577
        %v5579 = vpop.f32.mrf.mxu0
        %v5580 = vadd.f32 %v5010, %v5579
        %v5581 = vpop.f32.mrf.mxu0
        %v5582 = vadd.f32 %v5006, %v5581
        %v5583 = vpop.f32.mrf.mxu0
        %v5584 = vadd.f32 %v5010, %v5583
        %5585 = vmatprep.mubr.bf16.mxu0 0
        %5586 = vmatmul.mubr.bf16.gmra.mxu0 %v4967
        %v5587 = vpop.f32.mrf.mxu0
        %v5588 = vadd.f32 %v5006, %v5587
        %v5589 = vpop.f32.mrf.mxu0
        %v5590 = vadd.f32 %v5010, %v5589
        %v5591 = vpop.f32.mrf.mxu0
        %v5592 = vadd.f32 %v5006, %v5591
        %v5593 = vpop.f32.mrf.mxu0
        %v5594 = vadd.f32 %v5010, %v5593
        %5595 = vmatprep.mubr.bf16.mxu0 0
        %5596 = vmatmul.mubr.bf16.gmra.mxu0 %v4968
        %v5597 = vpop.f32.mrf.mxu0
        %v5598 = vadd.f32 %v5006, %v5597
        %v5599 = vpop.f32.mrf.mxu0
        %v5600 = vadd.f32 %v5010, %v5599
        %v5601 = vpop.f32.mrf.mxu0
        %v5602 = vadd.f32 %v5006, %v5601
        %v5603 = vpop.f32.mrf.mxu0
        %v5604 = vadd.f32 %v5010, %v5603
        %5605 = vmatprep.mubr.bf16.mxu0 0
        %5606 = vmatmul.mubr.bf16.gmra.mxu0 %v4969
        %v5607 = vpop.f32.mrf.mxu0
        %v5608 = vadd.f32 %v5006, %v5607
        %v5609 = vpop.f32.mrf.mxu0
        %v5610 = vadd.f32 %v5010, %v5609
        %v5611 = vpop.f32.mrf.mxu0
        %v5612 = vadd.f32 %v5006, %v5611
        %v5613 = vpop.f32.mrf.mxu0
        %v5614 = vadd.f32 %v5010, %v5613
        %5615 = vmatprep.mubr.bf16.mxu0 0
        %5616 = vmatmul.mubr.bf16.gmra.mxu0 %v4970
        %v5617 = vpop.f32.mrf.mxu0
        %v5618 = vadd.f32 %v5006, %v5617
        %v5619 = vpop.f32.mrf.mxu0
        %v5620 = vadd.f32 %v5010, %v5619
        %v5621 = vpop.f32.mrf.mxu0
        %v5622 = vadd.f32 %v5006, %v5621
        %v5623 = vpop.f32.mrf.mxu0
        %v5624 = vadd.f32 %v5010, %v5623
        %5625 = vmatprep.mubr.bf16.mxu0 0
        %5626 = vmatmul.mubr.bf16.gmra.mxu0 %v4971
        %v5627 = vpop.f32.mrf.mxu0
        %v5628 = vadd.f32 %v5006, %v5627
        %v5629 = vpop.f32.mrf.mxu0
        %v5630 = vadd.f32 %v5010, %v5629
        %v5631 = vpop.f32.mrf.mxu0
        %v5632 = vadd.f32 %v5006, %v5631
        %v5633 = vpop.f32.mrf.mxu0
        %v5634 = vadd.f32 %v5010, %v5633
        %5635 = vmatprep.mubr.bf16.mxu0 0
        %5636 = vmatmul.mubr.bf16.gmra.mxu0 %v4972
        %v5637 = vpop.f32.mrf.mxu0
        %v5638 = vadd.f32 %v5006, %v5637
        %v5639 = vpop.f32.mrf.mxu0
        %v5640 = vadd.f32 %v5010, %v5639
        %v5641 = vpop.f32.mrf.mxu0
        %v5642 = vadd.f32 %v5006, %v5641
        %v5643 = vpop.f32.mrf.mxu0
        %v5644 = vadd.f32 %v5010, %v5643
        %5645 = vmatprep.mubr.bf16.mxu0 0
        %5646 = vmatmul.mubr.bf16.gmra.mxu0 %v4973
        %v5647 = vpop.f32.mrf.mxu0
        %v5648 = vadd.f32 %v5006, %v5647
        %v5649 = vpop.f32.mrf.mxu0
        %v5650 = vadd.f32 %v5010, %v5649
        %v5651 = vpop.f32.mrf.mxu0
        %v5652 = vadd.f32 %v5006, %v5651
        %v5653 = vpop.f32.mrf.mxu0
        %v5654 = vadd.f32 %v5010, %v5653
        %5655 = vmatprep.mubr.bf16.mxu0 0
        %5656 = vmatmul.mubr.bf16.gmra.mxu0 %v4974
        %v5657 = vpop.f32.mrf.mxu0
        %v5658 = vadd.f32 %v5006, %v5657
        %v5659 = vpop.f32.mrf.mxu0
        %v5660 = vadd.f32 %v5010, %v5659
        %v5661 = vpop.f32.mrf.mxu0
        %v5662 = vadd.f32 %v5006, %v5661
        %v5663 = vpop.f32.mrf.mxu0
        %v5664 = vadd.f32 %v5010, %v5663
        %5665 = vmatprep.mubr.bf16.mxu0 0
        %5666 = vmatmul.mubr.bf16.gmra.mxu0 %v4975
        %v5667 = vpop.f32.mrf.mxu0
        %v5668 = vadd.f32 %v5006, %v5667
        %v5669 = vpop.f32.mrf.mxu0
        %v5670 = vadd.f32 %v5010, %v5669
        %v5671 = vpop.f32.mrf.mxu0
        %v5672 = vadd.f32 %v5006, %v5671
        %v5673 = vpop.f32.mrf.mxu0
        %v5674 = vadd.f32 %v5010, %v5673
        %5675 = vmatprep.mubr.bf16.mxu0 0
        %5676 = vmatmul.mubr.bf16.gmra.mxu0 %v4976
        %v5677 = vpop.f32.mrf.mxu0
        %v5678 = vadd.f32 %v5006, %v5677
        %v5679 = vpop.f32.mrf.mxu0
        %v5680 = vadd.f32 %v5010, %v5679
        %v5681 = vpop.f32.mrf.mxu0
        %v5682 = vadd.f32 %v5006, %v5681
        %v5683 = vpop.f32.mrf.mxu0
        %v5684 = vadd.f32 %v5010, %v5683
        %5685 = vmatprep.mubr.bf16.mxu0 0
        %5686 = vmatmul.mubr.bf16.gmra.mxu0 %v4977
        %v5687 = vpop.f32.mrf.mxu0
        %v5688 = vadd.f32 %v5006, %v5687
        %v5689 = vpop.f32.mrf.mxu0
        %v5690 = vadd.f32 %v5010, %v5689
        %v5691 = vpop.f32.mrf.mxu0
        %v5692 = vadd.f32 %v5006, %v5691
        %v5693 = vpop.f32.mrf.mxu0
        %v5694 = vadd.f32 %v5010, %v5693
        %5695 = vmatprep.mubr.bf16.mxu0 0
        %5696 = vmatmul.mubr.bf16.gmra.mxu0 %v4978
        %v5697 = vpop.f32.mrf.mxu0
        %v5698 = vadd.f32 %v5006, %v5697
        %v5699 = vpop.f32.mrf.mxu0
        %v5700 = vadd.f32 %v5010, %v5699
        %v5701 = vpop.f32.mrf.mxu0
        %v5702 = vadd.f32 %v5006, %v5701
        %v5703 = vpop.f32.mrf.mxu0
        %v5704 = vadd.f32 %v5010, %v5703
        %5705 = vmatprep.mubr.bf16.mxu0 0
        %5706 = vmatmul.mubr.bf16.gmra.mxu0 %v4979
        %v5707 = vpop.f32.mrf.mxu0
        %v5708 = vadd.f32 %v5006, %v5707
        %v5709 = vpop.f32.mrf.mxu0
        %v5710 = vadd.f32 %v5010, %v5709
        %v5711 = vpop.f32.mrf.mxu0
        %v5712 = vadd.f32 %v5006, %v5711
        %v5713 = vpop.f32.mrf.mxu0
        %v5714 = vadd.f32 %v5010, %v5713
        %5715 = vmatprep.mubr.bf16.mxu0 0
        %5716 = vmatmul.mubr.bf16.gmra.mxu0 %v4980
        %v5717 = vpop.f32.mrf.mxu0
        %v5718 = vadd.f32 %v5006, %v5717
        %v5719 = vpop.f32.mrf.mxu0
        %v5720 = vadd.f32 %v5010, %v5719
        %v5721 = vpop.f32.mrf.mxu0
        %v5722 = vadd.f32 %v5006, %v5721
        %v5723 = vpop.f32.mrf.mxu0
        %v5724 = vadd.f32 %v5010, %v5723
        %5725 = vmatprep.mubr.bf16.mxu0 0
        %5726 = vmatmul.mubr.bf16.gmra.mxu0 %v4981
        %v5727 = vpop.f32.mrf.mxu0
        %v5728 = vadd.f32 %v5006, %v5727
        %v5729 = vpop.f32.mrf.mxu0
        %v5730 = vadd.f32 %v5010, %v5729
        %v5731 = vpop.f32.mrf.mxu0
        %v5732 = vadd.f32 %v5006, %v5731
        %v5733 = vpop.f32.mrf.mxu0
        %v5734 = vadd.f32 %v5010, %v5733
        %5735 = vmatprep.mubr.bf16.mxu0 0
        %5736 = vmatmul.mubr.bf16.gmra.mxu0 %v4982
        %v5737 = vpop.f32.mrf.mxu0
        %v5738 = vadd.f32 %v5006, %v5737
        %v5739 = vpop.f32.mrf.mxu0
        %v5740 = vadd.f32 %v5010, %v5739
        %v5741 = vpop.f32.mrf.mxu0
        %v5742 = vadd.f32 %v5006, %v5741
        %v5743 = vpop.f32.mrf.mxu0
        %v5744 = vadd.f32 %v5010, %v5743
        %5745 = vmatprep.mubr.bf16.mxu0 0
        %5746 = vmatmul.mubr.bf16.gmra.mxu0 %v4983
        %v5747 = vpop.f32.mrf.mxu0
        %v5748 = vadd.f32 %v5006, %v5747
        %v5749 = vpop.f32.mrf.mxu0
        %v5750 = vadd.f32 %v5010, %v5749
        %v5751 = vpop.f32.mrf.mxu0
        %v5752 = vadd.f32 %v5006, %v5751
        %v5753 = vpop.f32.mrf.mxu0
        %v5754 = vadd.f32 %v5010, %v5753
        %5755 = vmatprep.mubr.bf16.mxu0 0
        %5756 = vmatmul.mubr.bf16.gmra.mxu0 %v4984
        %v5757 = vpop.f32.mrf.mxu0
        %v5758 = vadd.f32 %v5006, %v5757
        %v5759 = vpop.f32.mrf.mxu0
        %v5760 = vadd.f32 %v5010, %v5759
        %v5761 = vpop.f32.mrf.mxu0
        %v5762 = vadd.f32 %v5006, %v5761
        %v5763 = vpop.f32.mrf.mxu0
        %v5764 = vadd.f32 %v5010, %v5763
        %5765 = vdwg.mxu0
        %v5766 = vmax.f32 %v5128, 0.0
        %v5767 = vmax.f32 %v5130, 0.0
        %v5768 = vmax.f32 %v5132, 0.0
        %v5769 = vmax.f32 %v5134, 0.0
        %v5770 = vmax.f32 %v5138, 0.0
        %v5771 = vmax.f32 %v5140, 0.0
        %v5772 = vmax.f32 %v5142, 0.0
        %v5773 = vmax.f32 %v5144, 0.0
        %v5774 = vmax.f32 %v5148, 0.0
        %v5775 = vmax.f32 %v5150, 0.0
        %v5776 = vmax.f32 %v5152, 0.0
        %v5777 = vmax.f32 %v5154, 0.0
        %v5778 = vmax.f32 %v5158, 0.0
        %v5779 = vmax.f32 %v5160, 0.0
        %v5780 = vmax.f32 %v5162, 0.0
        %v5781 = vmax.f32 %v5164, 0.0
        %v5782 = vmax.f32 %v5168, 0.0
        %v5783 = vmax.f32 %v5170, 0.0
        %v5784 = vmax.f32 %v5172, 0.0
        %v5785 = vmax.f32 %v5174, 0.0
        %v5786 = vmax.f32 %v5178, 0.0
        %v5787 = vmax.f32 %v5180, 0.0
        %v5788 = vmax.f32 %v5182, 0.0
        %v5789 = vmax.f32 %v5184, 0.0
        %v5790 = vmax.f32 %v5188, 0.0
        %v5791 = vmax.f32 %v5190, 0.0
        %v5792 = vmax.f32 %v5192, 0.0
        %v5793 = vmax.f32 %v5194, 0.0
        %v5794 = vmax.f32 %v5198, 0.0
        %v5795 = vmax.f32 %v5200, 0.0
        %v5796 = vmax.f32 %v5202, 0.0
        %v5797 = vmax.f32 %v5204, 0.0
        %v5798 = vmax.f32 %v5208, 0.0
        %v5799 = vmax.f32 %v5210, 0.0
        %v5800 = vmax.f32 %v5212, 0.0
        %v5801 = vmax.f32 %v5214, 0.0
        %v5802 = vmax.f32 %v5218, 0.0
        %v5803 = vmax.f32 %v5220, 0.0
        %v5804 = vmax.f32 %v5222, 0.0
        %v5805 = vmax.f32 %v5224, 0.0
        %v5806 = vmax.f32 %v5228, 0.0
        %v5807 = vmax.f32 %v5230, 0.0
        %v5808 = vmax.f32 %v5232, 0.0
        %v5809 = vmax.f32 %v5234, 0.0
        %v5810 = vmax.f32 %v5238, 0.0
        %v5811 = vmax.f32 %v5240, 0.0
        %v5812 = vmax.f32 %v5242, 0.0
        %v5813 = vmax.f32 %v5244, 0.0
        %v5814 = vmax.f32 %v5248, 0.0
        %v5815 = vmax.f32 %v5250, 0.0
        %v5816 = vmax.f32 %v5252, 0.0
        %v5817 = vmax.f32 %v5254, 0.0
        %v5818 = vmax.f32 %v5258, 0.0
        %v5819 = vmax.f32 %v5260, 0.0
        %v5820 = vmax.f32 %v5262, 0.0
        %v5821 = vmax.f32 %v5264, 0.0
        %v5822 = vmax.f32 %v5268, 0.0
        %v5823 = vmax.f32 %v5270, 0.0
        %v5824 = vmax.f32 %v5272, 0.0
        %v5825 = vmax.f32 %v5274, 0.0
        %v5826 = vmax.f32 %v5278, 0.0
        %v5827 = vmax.f32 %v5280, 0.0
        %v5828 = vmax.f32 %v5282, 0.0
        %v5829 = vmax.f32 %v5284, 0.0
        %v5830 = vmax.f32 %v5288, 0.0
        %v5831 = vmax.f32 %v5290, 0.0
        %v5832 = vmax.f32 %v5292, 0.0
        %v5833 = vmax.f32 %v5294, 0.0
        %v5834 = vmax.f32 %v5298, 0.0
        %v5835 = vmax.f32 %v5300, 0.0
        %v5836 = vmax.f32 %v5302, 0.0
        %v5837 = vmax.f32 %v5304, 0.0
        %v5838 = vmax.f32 %v5308, 0.0
        %v5839 = vmax.f32 %v5310, 0.0
        %v5840 = vmax.f32 %v5312, 0.0
        %v5841 = vmax.f32 %v5314, 0.0
        %v5842 = vmax.f32 %v5318, 0.0
        %v5843 = vmax.f32 %v5320, 0.0
        %v5844 = vmax.f32 %v5322, 0.0
        %v5845 = vmax.f32 %v5324, 0.0
        %v5846 = vmax.f32 %v5328, 0.0
        %v5847 = vmax.f32 %v5330, 0.0
        %v5848 = vmax.f32 %v5332, 0.0
        %v5849 = vmax.f32 %v5334, 0.0
        %v5850 = vmax.f32 %v5338, 0.0
        %v5851 = vmax.f32 %v5340, 0.0
        %v5852 = vmax.f32 %v5342, 0.0
        %v5853 = vmax.f32 %v5344, 0.0
        %v5854 = vmax.f32 %v5348, 0.0
        %v5855 = vmax.f32 %v5350, 0.0
        %v5856 = vmax.f32 %v5352, 0.0
        %v5857 = vmax.f32 %v5354, 0.0
        %v5858 = vmax.f32 %v5358, 0.0
        %v5859 = vmax.f32 %v5360, 0.0
        %v5860 = vmax.f32 %v5362, 0.0
        %v5861 = vmax.f32 %v5364, 0.0
        %v5862 = vmax.f32 %v5368, 0.0
        %v5863 = vmax.f32 %v5370, 0.0
        %v5864 = vmax.f32 %v5372, 0.0
        %v5865 = vmax.f32 %v5374, 0.0
        %v5866 = vmax.f32 %v5378, 0.0
        %v5867 = vmax.f32 %v5380, 0.0
        %v5868 = vmax.f32 %v5382, 0.0
        %v5869 = vmax.f32 %v5384, 0.0
        %v5870 = vmax.f32 %v5388, 0.0
        %v5871 = vmax.f32 %v5390, 0.0
        %v5872 = vmax.f32 %v5392, 0.0
        %v5873 = vmax.f32 %v5394, 0.0
        %v5874 = vmax.f32 %v5398, 0.0
        %v5875 = vmax.f32 %v5400, 0.0
        %v5876 = vmax.f32 %v5402, 0.0
        %v5877 = vmax.f32 %v5404, 0.0
        %v5878 = vmax.f32 %v5408, 0.0
        %v5879 = vmax.f32 %v5410, 0.0
        %v5880 = vmax.f32 %v5412, 0.0
        %v5881 = vmax.f32 %v5414, 0.0
        %v5882 = vmax.f32 %v5418, 0.0
        %v5883 = vmax.f32 %v5420, 0.0
        %v5884 = vmax.f32 %v5422, 0.0
        %v5885 = vmax.f32 %v5424, 0.0
        %v5886 = vmax.f32 %v5428, 0.0
        %v5887 = vmax.f32 %v5430, 0.0
        %v5888 = vmax.f32 %v5432, 0.0
        %v5889 = vmax.f32 %v5434, 0.0
        %v5890 = vmax.f32 %v5438, 0.0
        %v5891 = vmax.f32 %v5440, 0.0
        %v5892 = vmax.f32 %v5442, 0.0
        %v5893 = vmax.f32 %v5444, 0.0
        %v5894 = vmax.f32 %v5448, 0.0
        %v5895 = vmax.f32 %v5450, 0.0
        %v5896 = vmax.f32 %v5452, 0.0
        %v5897 = vmax.f32 %v5454, 0.0
        %v5898 = vmax.f32 %v5458, 0.0
        %v5899 = vmax.f32 %v5460, 0.0
        %v5900 = vmax.f32 %v5462, 0.0
        %v5901 = vmax.f32 %v5464, 0.0
        %v5902 = vmax.f32 %v5468, 0.0
        %v5903 = vmax.f32 %v5470, 0.0
        %v5904 = vmax.f32 %v5472, 0.0
        %v5905 = vmax.f32 %v5474, 0.0
        %v5906 = vmax.f32 %v5478, 0.0
        %v5907 = vmax.f32 %v5480, 0.0
        %v5908 = vmax.f32 %v5482, 0.0
        %v5909 = vmax.f32 %v5484, 0.0
        %v5910 = vmax.f32 %v5488, 0.0
        %v5911 = vmax.f32 %v5490, 0.0
        %v5912 = vmax.f32 %v5492, 0.0
        %v5913 = vmax.f32 %v5494, 0.0
        %v5914 = vmax.f32 %v5498, 0.0
        %v5915 = vmax.f32 %v5500, 0.0
        %v5916 = vmax.f32 %v5502, 0.0
        %v5917 = vmax.f32 %v5504, 0.0
        %v5918 = vmax.f32 %v5508, 0.0
        %v5919 = vmax.f32 %v5510, 0.0
        %v5920 = vmax.f32 %v5512, 0.0
        %v5921 = vmax.f32 %v5514, 0.0
        %v5922 = vmax.f32 %v5518, 0.0
        %v5923 = vmax.f32 %v5520, 0.0
        %v5924 = vmax.f32 %v5522, 0.0
        %v5925 = vmax.f32 %v5524, 0.0
        %v5926 = vmax.f32 %v5528, 0.0
        %v5927 = vmax.f32 %v5530, 0.0
        %v5928 = vmax.f32 %v5532, 0.0
        %v5929 = vmax.f32 %v5534, 0.0
        %v5930 = vmax.f32 %v5538, 0.0
        %v5931 = vmax.f32 %v5540, 0.0
        %v5932 = vmax.f32 %v5542, 0.0
        %v5933 = vmax.f32 %v5544, 0.0
        %v5934 = vmax.f32 %v5548, 0.0
        %v5935 = vmax.f32 %v5550, 0.0
        %v5936 = vmax.f32 %v5552, 0.0
        %v5937 = vmax.f32 %v5554, 0.0
        %v5938 = vmax.f32 %v5558, 0.0
        %v5939 = vmax.f32 %v5560, 0.0
        %v5940 = vmax.f32 %v5562, 0.0
        %v5941 = vmax.f32 %v5564, 0.0
        %v5942 = vmax.f32 %v5568, 0.0
        %v5943 = vmax.f32 %v5570, 0.0
        %v5944 = vmax.f32 %v5572, 0.0
        %v5945 = vmax.f32 %v5574, 0.0
        %v5946 = vmax.f32 %v5578, 0.0
        %v5947 = vmax.f32 %v5580, 0.0
        %v5948 = vmax.f32 %v5582, 0.0
        %v5949 = vmax.f32 %v5584, 0.0
        %v5950 = vmax.f32 %v5588, 0.0
        %v5951 = vmax.f32 %v5590, 0.0
        %v5952 = vmax.f32 %v5592, 0.0
        %v5953 = vmax.f32 %v5594, 0.0
        %v5954 = vmax.f32 %v5598, 0.0
        %v5955 = vmax.f32 %v5600, 0.0
        %v5956 = vmax.f32 %v5602, 0.0
        %v5957 = vmax.f32 %v5604, 0.0
        %v5958 = vmax.f32 %v5608, 0.0
        %v5959 = vmax.f32 %v5610, 0.0
        %v5960 = vmax.f32 %v5612, 0.0
        %v5961 = vmax.f32 %v5614, 0.0
        %v5962 = vmax.f32 %v5618, 0.0
        %v5963 = vmax.f32 %v5620, 0.0
        %v5964 = vmax.f32 %v5622, 0.0
        %v5965 = vmax.f32 %v5624, 0.0
        %v5966 = vmax.f32 %v5628, 0.0
        %v5967 = vmax.f32 %v5630, 0.0
        %v5968 = vmax.f32 %v5632, 0.0
        %v5969 = vmax.f32 %v5634, 0.0
        %v5970 = vmax.f32 %v5638, 0.0
        %v5971 = vmax.f32 %v5640, 0.0
        %v5972 = vmax.f32 %v5642, 0.0
        %v5973 = vmax.f32 %v5644, 0.0
        %v5974 = vmax.f32 %v5648, 0.0
        %v5975 = vmax.f32 %v5650, 0.0
        %v5976 = vmax.f32 %v5652, 0.0
        %v5977 = vmax.f32 %v5654, 0.0
        %v5978 = vmax.f32 %v5658, 0.0
        %v5979 = vmax.f32 %v5660, 0.0
        %v5980 = vmax.f32 %v5662, 0.0
        %v5981 = vmax.f32 %v5664, 0.0
        %v5982 = vmax.f32 %v5668, 0.0
        %v5983 = vmax.f32 %v5670, 0.0
        %v5984 = vmax.f32 %v5672, 0.0
        %v5985 = vmax.f32 %v5674, 0.0
        %v5986 = vmax.f32 %v5678, 0.0
        %v5987 = vmax.f32 %v5680, 0.0
        %v5988 = vmax.f32 %v5682, 0.0
        %v5989 = vmax.f32 %v5684, 0.0
        %v5990 = vmax.f32 %v5688, 0.0
        %v5991 = vmax.f32 %v5690, 0.0
        %v5992 = vmax.f32 %v5692, 0.0
        %v5993 = vmax.f32 %v5694, 0.0
        %v5994 = vmax.f32 %v5698, 0.0
        %v5995 = vmax.f32 %v5700, 0.0
        %v5996 = vmax.f32 %v5702, 0.0
        %v5997 = vmax.f32 %v5704, 0.0
        %v5998 = vmax.f32 %v5708, 0.0
        %v5999 = vmax.f32 %v5710, 0.0
        %v6000 = vmax.f32 %v5712, 0.0
        %v6001 = vmax.f32 %v5714, 0.0
        %v6002 = vmax.f32 %v5718, 0.0
        %v6003 = vmax.f32 %v5720, 0.0
        %v6004 = vmax.f32 %v5722, 0.0
        %v6005 = vmax.f32 %v5724, 0.0
        %v6006 = vmax.f32 %v5728, 0.0
        %v6007 = vmax.f32 %v5730, 0.0
        %v6008 = vmax.f32 %v5732, 0.0
        %v6009 = vmax.f32 %v5734, 0.0
        %v6010 = vmax.f32 %v5738, 0.0
        %v6011 = vmax.f32 %v5740, 0.0
        %v6012 = vmax.f32 %v5742, 0.0
        %v6013 = vmax.f32 %v5744, 0.0
        %v6014 = vmax.f32 %v5748, 0.0
        %v6015 = vmax.f32 %v5750, 0.0
        %v6016 = vmax.f32 %v5752, 0.0
        %v6017 = vmax.f32 %v5754, 0.0
        %v6018 = vmax.f32 %v5758, 0.0
        %v6019 = vmax.f32 %v5760, 0.0
        %v6020 = vmax.f32 %v5762, 0.0
        %v6021 = vmax.f32 %v5764, 0.0
        %v6022 = vpack.c.bf16 %v5768, %v5766
        %v6023 = vpack.c.bf16 %v5769, %v5767
        %v6024 = vpack.c.bf16 %v5772, %v5770
        %v6025 = vpack.c.bf16 %v5773, %v5771
        %v6026 = vpack.c.bf16 %v5776, %v5774
        %v6027 = vpack.c.bf16 %v5777, %v5775
        %v6028 = vpack.c.bf16 %v5780, %v5778
        %v6029 = vpack.c.bf16 %v5781, %v5779
        %v6030 = vpack.c.bf16 %v5784, %v5782
        %v6031 = vpack.c.bf16 %v5785, %v5783
        %v6032 = vpack.c.bf16 %v5788, %v5786
        %v6033 = vpack.c.bf16 %v5789, %v5787
        %v6034 = vpack.c.bf16 %v5792, %v5790
        %v6035 = vpack.c.bf16 %v5793, %v5791
        %v6036 = vpack.c.bf16 %v5796, %v5794
        %v6037 = vpack.c.bf16 %v5797, %v5795
        %v6038 = vpack.c.bf16 %v5800, %v5798
        %v6039 = vpack.c.bf16 %v5801, %v5799
        %v6040 = vpack.c.bf16 %v5804, %v5802
        %v6041 = vpack.c.bf16 %v5805, %v5803
        %v6042 = vpack.c.bf16 %v5808, %v5806
        %v6043 = vpack.c.bf16 %v5809, %v5807
        %v6044 = vpack.c.bf16 %v5812, %v5810
        %v6045 = vpack.c.bf16 %v5813, %v5811
        %v6046 = vpack.c.bf16 %v5816, %v5814
        %v6047 = vpack.c.bf16 %v5817, %v5815
        %v6048 = vpack.c.bf16 %v5820, %v5818
        %v6049 = vpack.c.bf16 %v5821, %v5819
        %v6050 = vpack.c.bf16 %v5824, %v5822
        %v6051 = vpack.c.bf16 %v5825, %v5823
        %v6052 = vpack.c.bf16 %v5828, %v5826
        %v6053 = vpack.c.bf16 %v5829, %v5827
        %v6054 = vpack.c.bf16 %v5832, %v5830
        %v6055 = vpack.c.bf16 %v5833, %v5831
        %v6056 = vpack.c.bf16 %v5836, %v5834
        %v6057 = vpack.c.bf16 %v5837, %v5835
        %v6058 = vpack.c.bf16 %v5840, %v5838
        %v6059 = vpack.c.bf16 %v5841, %v5839
        %v6060 = vpack.c.bf16 %v5844, %v5842
        %v6061 = vpack.c.bf16 %v5845, %v5843
        %v6062 = vpack.c.bf16 %v5848, %v5846
        %v6063 = vpack.c.bf16 %v5849, %v5847
        %v6064 = vpack.c.bf16 %v5852, %v5850
        %v6065 = vpack.c.bf16 %v5853, %v5851
        %v6066 = vpack.c.bf16 %v5856, %v5854
        %v6067 = vpack.c.bf16 %v5857, %v5855
        %v6068 = vpack.c.bf16 %v5860, %v5858
        %v6069 = vpack.c.bf16 %v5861, %v5859
        %v6070 = vpack.c.bf16 %v5864, %v5862
        %v6071 = vpack.c.bf16 %v5865, %v5863
        %v6072 = vpack.c.bf16 %v5868, %v5866
        %v6073 = vpack.c.bf16 %v5869, %v5867
        %v6074 = vpack.c.bf16 %v5872, %v5870
        %v6075 = vpack.c.bf16 %v5873, %v5871
        %v6076 = vpack.c.bf16 %v5876, %v5874
        %v6077 = vpack.c.bf16 %v5877, %v5875
        %v6078 = vpack.c.bf16 %v5880, %v5878
        %v6079 = vpack.c.bf16 %v5881, %v5879
        %v6080 = vpack.c.bf16 %v5884, %v5882
        %v6081 = vpack.c.bf16 %v5885, %v5883
        %v6082 = vpack.c.bf16 %v5888, %v5886
        %v6083 = vpack.c.bf16 %v5889, %v5887
        %v6084 = vpack.c.bf16 %v5892, %v5890
        %v6085 = vpack.c.bf16 %v5893, %v5891
        %v6086 = vpack.c.bf16 %v5896, %v5894
        %v6087 = vpack.c.bf16 %v5897, %v5895
        %v6088 = vpack.c.bf16 %v5900, %v5898
        %v6089 = vpack.c.bf16 %v5901, %v5899
        %v6090 = vpack.c.bf16 %v5904, %v5902
        %v6091 = vpack.c.bf16 %v5905, %v5903
        %v6092 = vpack.c.bf16 %v5908, %v5906
        %v6093 = vpack.c.bf16 %v5909, %v5907
        %v6094 = vpack.c.bf16 %v5912, %v5910
        %v6095 = vpack.c.bf16 %v5913, %v5911
        %v6096 = vpack.c.bf16 %v5916, %v5914
        %v6097 = vpack.c.bf16 %v5917, %v5915
        %v6098 = vpack.c.bf16 %v5920, %v5918
        %v6099 = vpack.c.bf16 %v5921, %v5919
        %v6100 = vpack.c.bf16 %v5924, %v5922
        %v6101 = vpack.c.bf16 %v5925, %v5923
        %v6102 = vpack.c.bf16 %v5928, %v5926
        %v6103 = vpack.c.bf16 %v5929, %v5927
        %v6104 = vpack.c.bf16 %v5932, %v5930
        %v6105 = vpack.c.bf16 %v5933, %v5931
        %v6106 = vpack.c.bf16 %v5936, %v5934
        %v6107 = vpack.c.bf16 %v5937, %v5935
        %v6108 = vpack.c.bf16 %v5940, %v5938
        %v6109 = vpack.c.bf16 %v5941, %v5939
        %v6110 = vpack.c.bf16 %v5944, %v5942
        %v6111 = vpack.c.bf16 %v5945, %v5943
        %v6112 = vpack.c.bf16 %v5948, %v5946
        %v6113 = vpack.c.bf16 %v5949, %v5947
        %v6114 = vpack.c.bf16 %v5952, %v5950
        %v6115 = vpack.c.bf16 %v5953, %v5951
        %v6116 = vpack.c.bf16 %v5956, %v5954
        %v6117 = vpack.c.bf16 %v5957, %v5955
        %v6118 = vpack.c.bf16 %v5960, %v5958
        %v6119 = vpack.c.bf16 %v5961, %v5959
        %v6120 = vpack.c.bf16 %v5964, %v5962
        %v6121 = vpack.c.bf16 %v5965, %v5963
        %v6122 = vpack.c.bf16 %v5968, %v5966
        %v6123 = vpack.c.bf16 %v5969, %v5967
        %v6124 = vpack.c.bf16 %v5972, %v5970
        %v6125 = vpack.c.bf16 %v5973, %v5971
        %v6126 = vpack.c.bf16 %v5976, %v5974
        %v6127 = vpack.c.bf16 %v5977, %v5975
        %v6128 = vpack.c.bf16 %v5980, %v5978
        %v6129 = vpack.c.bf16 %v5981, %v5979
        %v6130 = vpack.c.bf16 %v5984, %v5982
        %v6131 = vpack.c.bf16 %v5985, %v5983
        %v6132 = vpack.c.bf16 %v5988, %v5986
        %v6133 = vpack.c.bf16 %v5989, %v5987
        %v6134 = vpack.c.bf16 %v5992, %v5990
        %v6135 = vpack.c.bf16 %v5993, %v5991
        %v6136 = vpack.c.bf16 %v5996, %v5994
        %v6137 = vpack.c.bf16 %v5997, %v5995
        %v6138 = vpack.c.bf16 %v6000, %v5998
        %v6139 = vpack.c.bf16 %v6001, %v5999
        %v6140 = vpack.c.bf16 %v6004, %v6002
        %v6141 = vpack.c.bf16 %v6005, %v6003
        %v6142 = vpack.c.bf16 %v6008, %v6006
        %v6143 = vpack.c.bf16 %v6009, %v6007
        %v6144 = vpack.c.bf16 %v6012, %v6010
        %v6145 = vpack.c.bf16 %v6013, %v6011
        %v6146 = vpack.c.bf16 %v6016, %v6014
        %v6147 = vpack.c.bf16 %v6017, %v6015
        %v6148 = vpack.c.bf16 %v6020, %v6018
        %v6149 = vpack.c.bf16 %v6021, %v6019
        %v6150 = vld [vmem:[%s9] sm:$0xf]
        %v6151 = vld [vmem:[%s9 + $0x4] sm:$0xf]
        %v6152 = vld [vmem:[%s9 + $0x8] sm:$0xf]
        %v6153 = vld [vmem:[%s9 + $0xc] sm:$0xf]
        %v6154 = vld [vmem:[%s9 + $0x10] sm:$0xf]
        %v6155 = vld [vmem:[%s9 + $0x14] sm:$0xf]
        %v6156 = vld [vmem:[%s9 + $0x18] sm:$0xf]
        %v6157 = vld [vmem:[%s9 + $0x1c] sm:$0xf]
        %v6158 = vld [vmem:[%s9 + $0x20] sm:$0xf]
        %v6159 = vld [vmem:[%s9 + $0x24] sm:$0xf]
        %v6160 = vld [vmem:[%s9 + $0x28] sm:$0xf]
        %v6161 = vld [vmem:[%s9 + $0x2c] sm:$0xf]
        %v6162 = vld [vmem:[%s9 + $0x30] sm:$0xf]
        %v6163 = vld [vmem:[%s9 + $0x34] sm:$0xf]
        %v6164 = vld [vmem:[%s9 + $0x38] sm:$0xf]
        %v6165 = vld [vmem:[%s9 + $0x3c] sm:$0xf]
        %v6166 = vld [vmem:[%s9 + $0x40] sm:$0xf]
        %v6167 = vld [vmem:[%s9 + $0x44] sm:$0xf]
        %v6168 = vld [vmem:[%s9 + $0x48] sm:$0xf]
        %v6169 = vld [vmem:[%s9 + $0x4c] sm:$0xf]
        %v6170 = vld [vmem:[%s9 + $0x50] sm:$0xf]
        %v6171 = vld [vmem:[%s9 + $0x54] sm:$0xf]
        %v6172 = vld [vmem:[%s9 + $0x58] sm:$0xf]
        %v6173 = vld [vmem:[%s9 + $0x5c] sm:$0xf]
        %v6174 = vld [vmem:[%s9 + $0x60] sm:$0xf]
        %v6175 = vld [vmem:[%s9 + $0x64] sm:$0xf]
        %v6176 = vld [vmem:[%s9 + $0x68] sm:$0xf]
        %v6177 = vld [vmem:[%s9 + $0x6c] sm:$0xf]
        %v6178 = vld [vmem:[%s9 + $0x70] sm:$0xf]
        %v6179 = vld [vmem:[%s9 + $0x74] sm:$0xf]
        %v6180 = vld [vmem:[%s9 + $0x78] sm:$0xf]
        %v6181 = vld [vmem:[%s9 + $0x7c] sm:$0xf]
        %v6182 = vld [vmem:[%s10] sm:$0x1]
        %v6184 = vlaneseq
        %v6185 = vshrl.u32 %v6184, 7
        %v6186 = vsub.s32 0, %v6185
        %v6187 = vrot.slane %v6182, %v6186
        %v6221 = vunpack.c.l.b16 %v6150
        %v6222 = vunpack.c.l.b16 %v6151
        %v6223 = vunpack.c.l.b16 %v6152
        %v6224 = vunpack.c.l.b16 %v6153
        %v6225 = vunpack.c.l.b16 %v6154
        %v6226 = vunpack.c.l.b16 %v6155
        %v6227 = vunpack.c.l.b16 %v6156
        %v6228 = vunpack.c.l.b16 %v6157
        %v6229 = vunpack.c.l.b16 %v6158
        %v6230 = vunpack.c.l.b16 %v6159
        %v6231 = vunpack.c.l.b16 %v6160
        %v6232 = vunpack.c.l.b16 %v6161
        %v6233 = vunpack.c.l.b16 %v6162
        %v6234 = vunpack.c.l.b16 %v6163
        %v6235 = vunpack.c.l.b16 %v6164
        %v6236 = vunpack.c.l.b16 %v6165
        %v6237 = vunpack.c.l.b16 %v6166
        %v6238 = vunpack.c.l.b16 %v6167
        %v6239 = vunpack.c.l.b16 %v6168
        %v6240 = vunpack.c.l.b16 %v6169
        %v6241 = vunpack.c.l.b16 %v6170
        %v6242 = vunpack.c.l.b16 %v6171
        %v6243 = vunpack.c.l.b16 %v6172
        %v6244 = vunpack.c.l.b16 %v6173
        %v6245 = vunpack.c.l.b16 %v6174
        %v6246 = vunpack.c.l.b16 %v6175
        %v6247 = vunpack.c.l.b16 %v6176
        %v6248 = vunpack.c.l.b16 %v6177
        %v6249 = vunpack.c.l.b16 %v6178
        %v6250 = vunpack.c.l.b16 %v6179
        %v6251 = vunpack.c.l.b16 %v6180
        %v6252 = vunpack.c.l.b16 %v6181
        %v6253 = vpack.c.b16 %v6222, %v6221
        %v6254 = vpack.c.b16 %v6224, %v6223
        %v6255 = vpack.c.b16 %v6226, %v6225
        %v6256 = vpack.c.b16 %v6228, %v6227
        %v6257 = vpack.c.b16 %v6230, %v6229
        %v6258 = vpack.c.b16 %v6232, %v6231
        %v6259 = vpack.c.b16 %v6234, %v6233
        %v6260 = vpack.c.b16 %v6236, %v6235
        %v6261 = vpack.c.b16 %v6238, %v6237
        %v6262 = vpack.c.b16 %v6240, %v6239
        %v6263 = vpack.c.b16 %v6242, %v6241
        %v6264 = vpack.c.b16 %v6244, %v6243
        %v6265 = vpack.c.b16 %v6246, %v6245
        %v6266 = vpack.c.b16 %v6248, %v6247
        %v6267 = vpack.c.b16 %v6250, %v6249
        %v6268 = vpack.c.b16 %v6252, %v6251
        %6285 = vmatprep.subr.bf16.mxu0 0
        %6286 = vmatpush1.bf16.msra.mxu0 %v6260
        %6287 = vmatprep.subr.bf16.mxu0 0
        %6288 = vmatpush1.bf16.msra.mxu0 %v6259
        %6289 = vmatprep.subr.bf16.mxu0 0
        %6290 = vmatpush1.bf16.msra.mxu0 %v6258
        %6291 = vmatprep.subr.bf16.mxu0 0
        %6292 = vmatpush1.bf16.msra.mxu0 %v6257
        %6293 = vmatprep.subr.bf16.mxu0 0
        %6294 = vmatpush1.bf16.msra.mxu0 %v6256
        %6295 = vmatprep.subr.bf16.mxu0 0
        %6296 = vmatpush1.bf16.msra.mxu0 %v6255
        %6297 = vmatprep.subr.bf16.mxu0 0
        %6298 = vmatpush1.bf16.msra.mxu0 %v6254
        %6299 = vmatprep.subr.bf16.mxu0 0
        %6300 = vmatpush1.bf16.msra.mxu0 %v6253
        %6301 = vmatprep.subr.bf16.mxu0 0
        %6302 = vmatpush2.bf16.msra.mxu0 %v6268
        %6303 = vmatprep.subr.bf16.mxu0 0
        %6304 = vmatpush2.bf16.msra.mxu0 %v6267
        %6305 = vmatprep.subr.bf16.mxu0 0
        %6306 = vmatpush2.bf16.msra.mxu0 %v6266
        %6307 = vmatprep.subr.bf16.mxu0 0
        %6308 = vmatpush2.bf16.msra.mxu0 %v6265
        %6309 = vmatprep.subr.bf16.mxu0 0
        %6310 = vmatpush2.bf16.msra.mxu0 %v6264
        %6311 = vmatprep.subr.bf16.mxu0 0
        %6312 = vmatpush2.bf16.msra.mxu0 %v6263
        %6313 = vmatprep.subr.bf16.mxu0 0
        %6314 = vmatpush2.bf16.msra.mxu0 %v6262
        %6315 = vmatprep.subr.bf16.mxu0 0
        %6316 = vmatpush2.bf16.msra.mxu0 %v6261
        %6317 = vmatprep.mubr.bf16.mxu0 %v6023
        %6318 = vmatmul.mubr.bf16.gmra.mxu0 %v6022
        %v6319 = vpop.f32.mrf.mxu0
        %v6320 = vadd.f32 %v6187, %v6319
        %v6321 = vpop.f32.mrf.mxu0
        %v6322 = vpop.f32.mrf.mxu0
        %v6323 = vadd.f32 %v6187, %v6322
        %v6324 = vpop.f32.mrf.mxu0
        %6325 = vmatprep.mubr.bf16.mxu0 %v6025
        %6326 = vmatmul.mubr.bf16.gmra.mxu0 %v6024
        %v6327 = vpop.f32.mrf.mxu0
        %v6328 = vadd.f32 %v6187, %v6327
        %v6329 = vpop.f32.mrf.mxu0
        %v6330 = vpop.f32.mrf.mxu0
        %v6331 = vadd.f32 %v6187, %v6330
        %v6332 = vpop.f32.mrf.mxu0
        %6333 = vmatprep.mubr.bf16.mxu0 %v6027
        %6334 = vmatmul.mubr.bf16.gmra.mxu0 %v6026
        %v6335 = vpop.f32.mrf.mxu0
        %v6336 = vadd.f32 %v6187, %v6335
        %v6337 = vpop.f32.mrf.mxu0
        %v6338 = vpop.f32.mrf.mxu0
        %v6339 = vadd.f32 %v6187, %v6338
        %v6340 = vpop.f32.mrf.mxu0
        %6341 = vmatprep.mubr.bf16.mxu0 %v6029
        %6342 = vmatmul.mubr.bf16.gmra.mxu0 %v6028
        %v6343 = vpop.f32.mrf.mxu0
        %v6344 = vadd.f32 %v6187, %v6343
        %v6345 = vpop.f32.mrf.mxu0
        %v6346 = vpop.f32.mrf.mxu0
        %v6347 = vadd.f32 %v6187, %v6346
        %v6348 = vpop.f32.mrf.mxu0
        %6349 = vmatprep.mubr.bf16.mxu0 %v6031
        %6350 = vmatmul.mubr.bf16.gmra.mxu0 %v6030
        %v6351 = vpop.f32.mrf.mxu0
        %v6352 = vadd.f32 %v6187, %v6351
        %v6353 = vpop.f32.mrf.mxu0
        %v6354 = vpop.f32.mrf.mxu0
        %v6355 = vadd.f32 %v6187, %v6354
        %v6356 = vpop.f32.mrf.mxu0
        %6357 = vmatprep.mubr.bf16.mxu0 %v6033
        %6358 = vmatmul.mubr.bf16.gmra.mxu0 %v6032
        %v6359 = vpop.f32.mrf.mxu0
        %v6360 = vadd.f32 %v6187, %v6359
        %v6361 = vpop.f32.mrf.mxu0
        %v6362 = vpop.f32.mrf.mxu0
        %v6363 = vadd.f32 %v6187, %v6362
        %v6364 = vpop.f32.mrf.mxu0
        %6365 = vmatprep.mubr.bf16.mxu0 %v6035
        %6366 = vmatmul.mubr.bf16.gmra.mxu0 %v6034
        %v6367 = vpop.f32.mrf.mxu0
        %v6368 = vadd.f32 %v6187, %v6367
        %v6369 = vpop.f32.mrf.mxu0
        %v6370 = vpop.f32.mrf.mxu0
        %v6371 = vadd.f32 %v6187, %v6370
        %v6372 = vpop.f32.mrf.mxu0
        %6373 = vmatprep.mubr.bf16.mxu0 %v6037
        %6374 = vmatmul.mubr.bf16.gmra.mxu0 %v6036
        %v6375 = vpop.f32.mrf.mxu0
        %v6376 = vadd.f32 %v6187, %v6375
        %v6377 = vpop.f32.mrf.mxu0
        %v6378 = vpop.f32.mrf.mxu0
        %v6379 = vadd.f32 %v6187, %v6378
        %v6380 = vpop.f32.mrf.mxu0
        %6381 = vmatprep.mubr.bf16.mxu0 %v6039
        %6382 = vmatmul.mubr.bf16.gmra.mxu0 %v6038
        %v6383 = vpop.f32.mrf.mxu0
        %v6384 = vadd.f32 %v6187, %v6383
        %v6385 = vpop.f32.mrf.mxu0
        %v6386 = vpop.f32.mrf.mxu0
        %v6387 = vadd.f32 %v6187, %v6386
        %v6388 = vpop.f32.mrf.mxu0
        %6389 = vmatprep.mubr.bf16.mxu0 %v6041
        %6390 = vmatmul.mubr.bf16.gmra.mxu0 %v6040
        %v6391 = vpop.f32.mrf.mxu0
        %v6392 = vadd.f32 %v6187, %v6391
        %v6393 = vpop.f32.mrf.mxu0
        %v6394 = vpop.f32.mrf.mxu0
        %v6395 = vadd.f32 %v6187, %v6394
        %v6396 = vpop.f32.mrf.mxu0
        %6397 = vmatprep.mubr.bf16.mxu0 %v6043
        %6398 = vmatmul.mubr.bf16.gmra.mxu0 %v6042
        %v6399 = vpop.f32.mrf.mxu0
        %v6400 = vadd.f32 %v6187, %v6399
        %v6401 = vpop.f32.mrf.mxu0
        %v6402 = vpop.f32.mrf.mxu0
        %v6403 = vadd.f32 %v6187, %v6402
        %v6404 = vpop.f32.mrf.mxu0
        %6405 = vmatprep.mubr.bf16.mxu0 %v6045
        %6406 = vmatmul.mubr.bf16.gmra.mxu0 %v6044
        %v6407 = vpop.f32.mrf.mxu0
        %v6408 = vadd.f32 %v6187, %v6407
        %v6409 = vpop.f32.mrf.mxu0
        %v6410 = vpop.f32.mrf.mxu0
        %v6411 = vadd.f32 %v6187, %v6410
        %v6412 = vpop.f32.mrf.mxu0
        %6413 = vmatprep.mubr.bf16.mxu0 %v6047
        %6414 = vmatmul.mubr.bf16.gmra.mxu0 %v6046
        %v6415 = vpop.f32.mrf.mxu0
        %v6416 = vadd.f32 %v6187, %v6415
        %v6417 = vpop.f32.mrf.mxu0
        %v6418 = vpop.f32.mrf.mxu0
        %v6419 = vadd.f32 %v6187, %v6418
        %v6420 = vpop.f32.mrf.mxu0
        %6421 = vmatprep.mubr.bf16.mxu0 %v6049
        %6422 = vmatmul.mubr.bf16.gmra.mxu0 %v6048
        %v6423 = vpop.f32.mrf.mxu0
        %v6424 = vadd.f32 %v6187, %v6423
        %v6425 = vpop.f32.mrf.mxu0
        %v6426 = vpop.f32.mrf.mxu0
        %v6427 = vadd.f32 %v6187, %v6426
        %v6428 = vpop.f32.mrf.mxu0
        %6429 = vmatprep.mubr.bf16.mxu0 %v6051
        %6430 = vmatmul.mubr.bf16.gmra.mxu0 %v6050
        %v6431 = vpop.f32.mrf.mxu0
        %v6432 = vadd.f32 %v6187, %v6431
        %v6433 = vpop.f32.mrf.mxu0
        %v6434 = vpop.f32.mrf.mxu0
        %v6435 = vadd.f32 %v6187, %v6434
        %v6436 = vpop.f32.mrf.mxu0
        %6437 = vmatprep.mubr.bf16.mxu0 %v6053
        %6438 = vmatmul.mubr.bf16.gmra.mxu0 %v6052
        %v6439 = vpop.f32.mrf.mxu0
        %v6440 = vadd.f32 %v6187, %v6439
        %v6441 = vpop.f32.mrf.mxu0
        %v6442 = vpop.f32.mrf.mxu0
        %v6443 = vadd.f32 %v6187, %v6442
        %v6444 = vpop.f32.mrf.mxu0
        %6445 = vmatprep.mubr.bf16.mxu0 %v6055
        %6446 = vmatmul.mubr.bf16.gmra.mxu0 %v6054
        %v6447 = vpop.f32.mrf.mxu0
        %v6448 = vadd.f32 %v6187, %v6447
        %v6449 = vpop.f32.mrf.mxu0
        %v6450 = vpop.f32.mrf.mxu0
        %v6451 = vadd.f32 %v6187, %v6450
        %v6452 = vpop.f32.mrf.mxu0
        %6453 = vmatprep.mubr.bf16.mxu0 %v6057
        %6454 = vmatmul.mubr.bf16.gmra.mxu0 %v6056
        %v6455 = vpop.f32.mrf.mxu0
        %v6456 = vadd.f32 %v6187, %v6455
        %v6457 = vpop.f32.mrf.mxu0
        %v6458 = vpop.f32.mrf.mxu0
        %v6459 = vadd.f32 %v6187, %v6458
        %v6460 = vpop.f32.mrf.mxu0
        %6461 = vmatprep.mubr.bf16.mxu0 %v6059
        %6462 = vmatmul.mubr.bf16.gmra.mxu0 %v6058
        %v6463 = vpop.f32.mrf.mxu0
        %v6464 = vadd.f32 %v6187, %v6463
        %v6465 = vpop.f32.mrf.mxu0
        %v6466 = vpop.f32.mrf.mxu0
        %v6467 = vadd.f32 %v6187, %v6466
        %v6468 = vpop.f32.mrf.mxu0
        %6469 = vmatprep.mubr.bf16.mxu0 %v6061
        %6470 = vmatmul.mubr.bf16.gmra.mxu0 %v6060
        %v6471 = vpop.f32.mrf.mxu0
        %v6472 = vadd.f32 %v6187, %v6471
        %v6473 = vpop.f32.mrf.mxu0
        %v6474 = vpop.f32.mrf.mxu0
        %v6475 = vadd.f32 %v6187, %v6474
        %v6476 = vpop.f32.mrf.mxu0
        %6477 = vmatprep.mubr.bf16.mxu0 %v6063
        %6478 = vmatmul.mubr.bf16.gmra.mxu0 %v6062
        %v6479 = vpop.f32.mrf.mxu0
        %v6480 = vadd.f32 %v6187, %v6479
        %v6481 = vpop.f32.mrf.mxu0
        %v6482 = vpop.f32.mrf.mxu0
        %v6483 = vadd.f32 %v6187, %v6482
        %v6484 = vpop.f32.mrf.mxu0
        %6485 = vmatprep.mubr.bf16.mxu0 %v6065
        %6486 = vmatmul.mubr.bf16.gmra.mxu0 %v6064
        %v6487 = vpop.f32.mrf.mxu0
        %v6488 = vadd.f32 %v6187, %v6487
        %v6489 = vpop.f32.mrf.mxu0
        %v6490 = vpop.f32.mrf.mxu0
        %v6491 = vadd.f32 %v6187, %v6490
        %v6492 = vpop.f32.mrf.mxu0
        %6493 = vmatprep.mubr.bf16.mxu0 %v6067
        %6494 = vmatmul.mubr.bf16.gmra.mxu0 %v6066
        %v6495 = vpop.f32.mrf.mxu0
        %v6496 = vadd.f32 %v6187, %v6495
        %v6497 = vpop.f32.mrf.mxu0
        %v6498 = vpop.f32.mrf.mxu0
        %v6499 = vadd.f32 %v6187, %v6498
        %v6500 = vpop.f32.mrf.mxu0
        %6501 = vmatprep.mubr.bf16.mxu0 %v6069
        %6502 = vmatmul.mubr.bf16.gmra.mxu0 %v6068
        %v6503 = vpop.f32.mrf.mxu0
        %v6504 = vadd.f32 %v6187, %v6503
        %v6505 = vpop.f32.mrf.mxu0
        %v6506 = vpop.f32.mrf.mxu0
        %v6507 = vadd.f32 %v6187, %v6506
        %v6508 = vpop.f32.mrf.mxu0
        %6509 = vmatprep.mubr.bf16.mxu0 %v6071
        %6510 = vmatmul.mubr.bf16.gmra.mxu0 %v6070
        %v6511 = vpop.f32.mrf.mxu0
        %v6512 = vadd.f32 %v6187, %v6511
        %v6513 = vpop.f32.mrf.mxu0
        %v6514 = vpop.f32.mrf.mxu0
        %v6515 = vadd.f32 %v6187, %v6514
        %v6516 = vpop.f32.mrf.mxu0
        %6517 = vmatprep.mubr.bf16.mxu0 %v6073
        %6518 = vmatmul.mubr.bf16.gmra.mxu0 %v6072
        %v6519 = vpop.f32.mrf.mxu0
        %v6520 = vadd.f32 %v6187, %v6519
        %v6521 = vpop.f32.mrf.mxu0
        %v6522 = vpop.f32.mrf.mxu0
        %v6523 = vadd.f32 %v6187, %v6522
        %v6524 = vpop.f32.mrf.mxu0
        %6525 = vmatprep.mubr.bf16.mxu0 %v6075
        %6526 = vmatmul.mubr.bf16.gmra.mxu0 %v6074
        %v6527 = vpop.f32.mrf.mxu0
        %v6528 = vadd.f32 %v6187, %v6527
        %v6529 = vpop.f32.mrf.mxu0
        %v6530 = vpop.f32.mrf.mxu0
        %v6531 = vadd.f32 %v6187, %v6530
        %v6532 = vpop.f32.mrf.mxu0
        %6533 = vmatprep.mubr.bf16.mxu0 %v6077
        %6534 = vmatmul.mubr.bf16.gmra.mxu0 %v6076
        %v6535 = vpop.f32.mrf.mxu0
        %v6536 = vadd.f32 %v6187, %v6535
        %v6537 = vpop.f32.mrf.mxu0
        %v6538 = vpop.f32.mrf.mxu0
        %v6539 = vadd.f32 %v6187, %v6538
        %v6540 = vpop.f32.mrf.mxu0
        %6541 = vmatprep.mubr.bf16.mxu0 %v6079
        %6542 = vmatmul.mubr.bf16.gmra.mxu0 %v6078
        %v6543 = vpop.f32.mrf.mxu0
        %v6544 = vadd.f32 %v6187, %v6543
        %v6545 = vpop.f32.mrf.mxu0
        %v6546 = vpop.f32.mrf.mxu0
        %v6547 = vadd.f32 %v6187, %v6546
        %v6548 = vpop.f32.mrf.mxu0
        %6549 = vmatprep.mubr.bf16.mxu0 %v6081
        %6550 = vmatmul.mubr.bf16.gmra.mxu0 %v6080
        %v6551 = vpop.f32.mrf.mxu0
        %v6552 = vadd.f32 %v6187, %v6551
        %v6553 = vpop.f32.mrf.mxu0
        %v6554 = vpop.f32.mrf.mxu0
        %v6555 = vadd.f32 %v6187, %v6554
        %v6556 = vpop.f32.mrf.mxu0
        %6557 = vmatprep.mubr.bf16.mxu0 %v6083
        %6558 = vmatmul.mubr.bf16.gmra.mxu0 %v6082
        %v6559 = vpop.f32.mrf.mxu0
        %v6560 = vadd.f32 %v6187, %v6559
        %v6561 = vpop.f32.mrf.mxu0
        %v6562 = vpop.f32.mrf.mxu0
        %v6563 = vadd.f32 %v6187, %v6562
        %v6564 = vpop.f32.mrf.mxu0
        %6565 = vmatprep.mubr.bf16.mxu0 %v6085
        %6566 = vmatmul.mubr.bf16.gmra.mxu0 %v6084
        %v6567 = vpop.f32.mrf.mxu0
        %v6568 = vadd.f32 %v6187, %v6567
        %v6569 = vpop.f32.mrf.mxu0
        %v6570 = vpop.f32.mrf.mxu0
        %v6571 = vadd.f32 %v6187, %v6570
        %v6572 = vpop.f32.mrf.mxu0
        %6573 = vmatprep.mubr.bf16.mxu0 %v6087
        %6574 = vmatmul.mubr.bf16.gmra.mxu0 %v6086
        %v6575 = vpop.f32.mrf.mxu0
        %v6576 = vadd.f32 %v6187, %v6575
        %v6577 = vpop.f32.mrf.mxu0
        %v6578 = vpop.f32.mrf.mxu0
        %v6579 = vadd.f32 %v6187, %v6578
        %v6580 = vpop.f32.mrf.mxu0
        %6581 = vmatprep.mubr.bf16.mxu0 %v6089
        %6582 = vmatmul.mubr.bf16.gmra.mxu0 %v6088
        %v6583 = vpop.f32.mrf.mxu0
        %v6584 = vadd.f32 %v6187, %v6583
        %v6585 = vpop.f32.mrf.mxu0
        %v6586 = vpop.f32.mrf.mxu0
        %v6587 = vadd.f32 %v6187, %v6586
        %v6588 = vpop.f32.mrf.mxu0
        %6589 = vmatprep.mubr.bf16.mxu0 %v6091
        %6590 = vmatmul.mubr.bf16.gmra.mxu0 %v6090
        %v6591 = vpop.f32.mrf.mxu0
        %v6592 = vadd.f32 %v6187, %v6591
        %v6593 = vpop.f32.mrf.mxu0
        %v6594 = vpop.f32.mrf.mxu0
        %v6595 = vadd.f32 %v6187, %v6594
        %v6596 = vpop.f32.mrf.mxu0
        %6597 = vmatprep.mubr.bf16.mxu0 %v6093
        %6598 = vmatmul.mubr.bf16.gmra.mxu0 %v6092
        %v6599 = vpop.f32.mrf.mxu0
        %v6600 = vadd.f32 %v6187, %v6599
        %v6601 = vpop.f32.mrf.mxu0
        %v6602 = vpop.f32.mrf.mxu0
        %v6603 = vadd.f32 %v6187, %v6602
        %v6604 = vpop.f32.mrf.mxu0
        %6605 = vmatprep.mubr.bf16.mxu0 %v6095
        %6606 = vmatmul.mubr.bf16.gmra.mxu0 %v6094
        %v6607 = vpop.f32.mrf.mxu0
        %v6608 = vadd.f32 %v6187, %v6607
        %v6609 = vpop.f32.mrf.mxu0
        %v6610 = vpop.f32.mrf.mxu0
        %v6611 = vadd.f32 %v6187, %v6610
        %v6612 = vpop.f32.mrf.mxu0
        %6613 = vmatprep.mubr.bf16.mxu0 %v6097
        %6614 = vmatmul.mubr.bf16.gmra.mxu0 %v6096
        %v6615 = vpop.f32.mrf.mxu0
        %v6616 = vadd.f32 %v6187, %v6615
        %v6617 = vpop.f32.mrf.mxu0
        %v6618 = vpop.f32.mrf.mxu0
        %v6619 = vadd.f32 %v6187, %v6618
        %v6620 = vpop.f32.mrf.mxu0
        %6621 = vmatprep.mubr.bf16.mxu0 %v6099
        %6622 = vmatmul.mubr.bf16.gmra.mxu0 %v6098
        %v6623 = vpop.f32.mrf.mxu0
        %v6624 = vadd.f32 %v6187, %v6623
        %v6625 = vpop.f32.mrf.mxu0
        %v6626 = vpop.f32.mrf.mxu0
        %v6627 = vadd.f32 %v6187, %v6626
        %v6628 = vpop.f32.mrf.mxu0
        %6629 = vmatprep.mubr.bf16.mxu0 %v6101
        %6630 = vmatmul.mubr.bf16.gmra.mxu0 %v6100
        %v6631 = vpop.f32.mrf.mxu0
        %v6632 = vadd.f32 %v6187, %v6631
        %v6633 = vpop.f32.mrf.mxu0
        %v6634 = vpop.f32.mrf.mxu0
        %v6635 = vadd.f32 %v6187, %v6634
        %v6636 = vpop.f32.mrf.mxu0
        %6637 = vmatprep.mubr.bf16.mxu0 %v6103
        %6638 = vmatmul.mubr.bf16.gmra.mxu0 %v6102
        %v6639 = vpop.f32.mrf.mxu0
        %v6640 = vadd.f32 %v6187, %v6639
        %v6641 = vpop.f32.mrf.mxu0
        %v6642 = vpop.f32.mrf.mxu0
        %v6643 = vadd.f32 %v6187, %v6642
        %v6644 = vpop.f32.mrf.mxu0
        %6645 = vmatprep.mubr.bf16.mxu0 %v6105
        %6646 = vmatmul.mubr.bf16.gmra.mxu0 %v6104
        %v6647 = vpop.f32.mrf.mxu0
        %v6648 = vadd.f32 %v6187, %v6647
        %v6649 = vpop.f32.mrf.mxu0
        %v6650 = vpop.f32.mrf.mxu0
        %v6651 = vadd.f32 %v6187, %v6650
        %v6652 = vpop.f32.mrf.mxu0
        %6653 = vmatprep.mubr.bf16.mxu0 %v6107
        %6654 = vmatmul.mubr.bf16.gmra.mxu0 %v6106
        %v6655 = vpop.f32.mrf.mxu0
        %v6656 = vadd.f32 %v6187, %v6655
        %v6657 = vpop.f32.mrf.mxu0
        %v6658 = vpop.f32.mrf.mxu0
        %v6659 = vadd.f32 %v6187, %v6658
        %v6660 = vpop.f32.mrf.mxu0
        %6661 = vmatprep.mubr.bf16.mxu0 %v6109
        %6662 = vmatmul.mubr.bf16.gmra.mxu0 %v6108
        %v6663 = vpop.f32.mrf.mxu0
        %v6664 = vadd.f32 %v6187, %v6663
        %v6665 = vpop.f32.mrf.mxu0
        %v6666 = vpop.f32.mrf.mxu0
        %v6667 = vadd.f32 %v6187, %v6666
        %v6668 = vpop.f32.mrf.mxu0
        %6669 = vmatprep.mubr.bf16.mxu0 %v6111
        %6670 = vmatmul.mubr.bf16.gmra.mxu0 %v6110
        %v6671 = vpop.f32.mrf.mxu0
        %v6672 = vadd.f32 %v6187, %v6671
        %v6673 = vpop.f32.mrf.mxu0
        %v6674 = vpop.f32.mrf.mxu0
        %v6675 = vadd.f32 %v6187, %v6674
        %v6676 = vpop.f32.mrf.mxu0
        %6677 = vmatprep.mubr.bf16.mxu0 %v6113
        %6678 = vmatmul.mubr.bf16.gmra.mxu0 %v6112
        %v6679 = vpop.f32.mrf.mxu0
        %v6680 = vadd.f32 %v6187, %v6679
        %v6681 = vpop.f32.mrf.mxu0
        %v6682 = vpop.f32.mrf.mxu0
        %v6683 = vadd.f32 %v6187, %v6682
        %v6684 = vpop.f32.mrf.mxu0
        %6685 = vmatprep.mubr.bf16.mxu0 %v6115
        %6686 = vmatmul.mubr.bf16.gmra.mxu0 %v6114
        %v6687 = vpop.f32.mrf.mxu0
        %v6688 = vadd.f32 %v6187, %v6687
        %v6689 = vpop.f32.mrf.mxu0
        %v6690 = vpop.f32.mrf.mxu0
        %v6691 = vadd.f32 %v6187, %v6690
        %v6692 = vpop.f32.mrf.mxu0
        %6693 = vmatprep.mubr.bf16.mxu0 %v6117
        %6694 = vmatmul.mubr.bf16.gmra.mxu0 %v6116
        %v6695 = vpop.f32.mrf.mxu0
        %v6696 = vadd.f32 %v6187, %v6695
        %v6697 = vpop.f32.mrf.mxu0
        %v6698 = vpop.f32.mrf.mxu0
        %v6699 = vadd.f32 %v6187, %v6698
        %v6700 = vpop.f32.mrf.mxu0
        %6701 = vmatprep.mubr.bf16.mxu0 %v6119
        %6702 = vmatmul.mubr.bf16.gmra.mxu0 %v6118
        %v6703 = vpop.f32.mrf.mxu0
        %v6704 = vadd.f32 %v6187, %v6703
        %v6705 = vpop.f32.mrf.mxu0
        %v6706 = vpop.f32.mrf.mxu0
        %v6707 = vadd.f32 %v6187, %v6706
        %v6708 = vpop.f32.mrf.mxu0
        %6709 = vmatprep.mubr.bf16.mxu0 %v6121
        %6710 = vmatmul.mubr.bf16.gmra.mxu0 %v6120
        %v6711 = vpop.f32.mrf.mxu0
        %v6712 = vadd.f32 %v6187, %v6711
        %v6713 = vpop.f32.mrf.mxu0
        %v6714 = vpop.f32.mrf.mxu0
        %v6715 = vadd.f32 %v6187, %v6714
        %v6716 = vpop.f32.mrf.mxu0
        %6717 = vmatprep.mubr.bf16.mxu0 %v6123
        %6718 = vmatmul.mubr.bf16.gmra.mxu0 %v6122
        %v6719 = vpop.f32.mrf.mxu0
        %v6720 = vadd.f32 %v6187, %v6719
        %v6721 = vpop.f32.mrf.mxu0
        %v6722 = vpop.f32.mrf.mxu0
        %v6723 = vadd.f32 %v6187, %v6722
        %v6724 = vpop.f32.mrf.mxu0
        %6725 = vmatprep.mubr.bf16.mxu0 %v6125
        %6726 = vmatmul.mubr.bf16.gmra.mxu0 %v6124
        %v6727 = vpop.f32.mrf.mxu0
        %v6728 = vadd.f32 %v6187, %v6727
        %v6729 = vpop.f32.mrf.mxu0
        %v6730 = vpop.f32.mrf.mxu0
        %v6731 = vadd.f32 %v6187, %v6730
        %v6732 = vpop.f32.mrf.mxu0
        %6733 = vmatprep.mubr.bf16.mxu0 %v6127
        %6734 = vmatmul.mubr.bf16.gmra.mxu0 %v6126
        %v6735 = vpop.f32.mrf.mxu0
        %v6736 = vadd.f32 %v6187, %v6735
        %v6737 = vpop.f32.mrf.mxu0
        %v6738 = vpop.f32.mrf.mxu0
        %v6739 = vadd.f32 %v6187, %v6738
        %v6740 = vpop.f32.mrf.mxu0
        %6741 = vmatprep.mubr.bf16.mxu0 %v6129
        %6742 = vmatmul.mubr.bf16.gmra.mxu0 %v6128
        %v6743 = vpop.f32.mrf.mxu0
        %v6744 = vadd.f32 %v6187, %v6743
        %v6745 = vpop.f32.mrf.mxu0
        %v6746 = vpop.f32.mrf.mxu0
        %v6747 = vadd.f32 %v6187, %v6746
        %v6748 = vpop.f32.mrf.mxu0
        %6749 = vmatprep.mubr.bf16.mxu0 %v6131
        %6750 = vmatmul.mubr.bf16.gmra.mxu0 %v6130
        %v6751 = vpop.f32.mrf.mxu0
        %v6752 = vadd.f32 %v6187, %v6751
        %v6753 = vpop.f32.mrf.mxu0
        %v6754 = vpop.f32.mrf.mxu0
        %v6755 = vadd.f32 %v6187, %v6754
        %v6756 = vpop.f32.mrf.mxu0
        %6757 = vmatprep.mubr.bf16.mxu0 %v6133
        %6758 = vmatmul.mubr.bf16.gmra.mxu0 %v6132
        %v6759 = vpop.f32.mrf.mxu0
        %v6760 = vadd.f32 %v6187, %v6759
        %v6761 = vpop.f32.mrf.mxu0
        %v6762 = vpop.f32.mrf.mxu0
        %v6763 = vadd.f32 %v6187, %v6762
        %v6764 = vpop.f32.mrf.mxu0
        %6765 = vmatprep.mubr.bf16.mxu0 %v6135
        %6766 = vmatmul.mubr.bf16.gmra.mxu0 %v6134
        %v6767 = vpop.f32.mrf.mxu0
        %v6768 = vadd.f32 %v6187, %v6767
        %v6769 = vpop.f32.mrf.mxu0
        %v6770 = vpop.f32.mrf.mxu0
        %v6771 = vadd.f32 %v6187, %v6770
        %v6772 = vpop.f32.mrf.mxu0
        %6773 = vmatprep.mubr.bf16.mxu0 %v6137
        %6774 = vmatmul.mubr.bf16.gmra.mxu0 %v6136
        %v6775 = vpop.f32.mrf.mxu0
        %v6776 = vadd.f32 %v6187, %v6775
        %v6777 = vpop.f32.mrf.mxu0
        %v6778 = vpop.f32.mrf.mxu0
        %v6779 = vadd.f32 %v6187, %v6778
        %v6780 = vpop.f32.mrf.mxu0
        %6781 = vmatprep.mubr.bf16.mxu0 %v6139
        %6782 = vmatmul.mubr.bf16.gmra.mxu0 %v6138
        %v6783 = vpop.f32.mrf.mxu0
        %v6784 = vadd.f32 %v6187, %v6783
        %v6785 = vpop.f32.mrf.mxu0
        %v6786 = vpop.f32.mrf.mxu0
        %v6787 = vadd.f32 %v6187, %v6786
        %v6788 = vpop.f32.mrf.mxu0
        %6789 = vmatprep.mubr.bf16.mxu0 %v6141
        %6790 = vmatmul.mubr.bf16.gmra.mxu0 %v6140
        %v6791 = vpop.f32.mrf.mxu0
        %v6792 = vadd.f32 %v6187, %v6791
        %v6793 = vpop.f32.mrf.mxu0
        %v6794 = vpop.f32.mrf.mxu0
        %v6795 = vadd.f32 %v6187, %v6794
        %v6796 = vpop.f32.mrf.mxu0
        %6797 = vmatprep.mubr.bf16.mxu0 %v6143
        %6798 = vmatmul.mubr.bf16.gmra.mxu0 %v6142
        %v6799 = vpop.f32.mrf.mxu0
        %v6800 = vadd.f32 %v6187, %v6799
        %v6801 = vpop.f32.mrf.mxu0
        %v6802 = vpop.f32.mrf.mxu0
        %v6803 = vadd.f32 %v6187, %v6802
        %v6804 = vpop.f32.mrf.mxu0
        %6805 = vmatprep.mubr.bf16.mxu0 %v6145
        %6806 = vmatmul.mubr.bf16.gmra.mxu0 %v6144
        %v6807 = vpop.f32.mrf.mxu0
        %v6808 = vadd.f32 %v6187, %v6807
        %v6809 = vpop.f32.mrf.mxu0
        %v6810 = vpop.f32.mrf.mxu0
        %v6811 = vadd.f32 %v6187, %v6810
        %v6812 = vpop.f32.mrf.mxu0
        %6813 = vmatprep.mubr.bf16.mxu0 %v6147
        %6814 = vmatmul.mubr.bf16.gmra.mxu0 %v6146
        %v6815 = vpop.f32.mrf.mxu0
        %v6816 = vadd.f32 %v6187, %v6815
        %v6817 = vpop.f32.mrf.mxu0
        %v6818 = vpop.f32.mrf.mxu0
        %v6819 = vadd.f32 %v6187, %v6818
        %v6820 = vpop.f32.mrf.mxu0
        %6821 = vmatprep.mubr.bf16.mxu0 %v6149
        %6822 = vmatmul.mubr.bf16.gmra.mxu0 %v6148
        %v6823 = vpop.f32.mrf.mxu0
        %v6824 = vadd.f32 %v6187, %v6823
        %v6825 = vpop.f32.mrf.mxu0
        %v6826 = vpop.f32.mrf.mxu0
        %v6827 = vadd.f32 %v6187, %v6826
        %v6828 = vpop.f32.mrf.mxu0
        %6829 = vdwg.mxu0
        %v6830 = vmax.f32 %v6320, 0.0
        %v6831 = vmax.f32 %v6323, 0.0
        %v6832 = vmax.f32 %v6328, 0.0
        %v6833 = vmax.f32 %v6331, 0.0
        %v6834 = vmax.f32 %v6336, 0.0
        %v6835 = vmax.f32 %v6339, 0.0
        %v6836 = vmax.f32 %v6344, 0.0
        %v6837 = vmax.f32 %v6347, 0.0
        %v6838 = vmax.f32 %v6352, 0.0
        %v6839 = vmax.f32 %v6355, 0.0
        %v6840 = vmax.f32 %v6360, 0.0
        %v6841 = vmax.f32 %v6363, 0.0
        %v6842 = vmax.f32 %v6368, 0.0
        %v6843 = vmax.f32 %v6371, 0.0
        %v6844 = vmax.f32 %v6376, 0.0
        %v6845 = vmax.f32 %v6379, 0.0
        %v6846 = vmax.f32 %v6384, 0.0
        %v6847 = vmax.f32 %v6387, 0.0
        %v6848 = vmax.f32 %v6392, 0.0
        %v6849 = vmax.f32 %v6395, 0.0
        %v6850 = vmax.f32 %v6400, 0.0
        %v6851 = vmax.f32 %v6403, 0.0
        %v6852 = vmax.f32 %v6408, 0.0
        %v6853 = vmax.f32 %v6411, 0.0
        %v6854 = vmax.f32 %v6416, 0.0
        %v6855 = vmax.f32 %v6419, 0.0
        %v6856 = vmax.f32 %v6424, 0.0
        %v6857 = vmax.f32 %v6427, 0.0
        %v6858 = vmax.f32 %v6432, 0.0
        %v6859 = vmax.f32 %v6435, 0.0
        %v6860 = vmax.f32 %v6440, 0.0
        %v6861 = vmax.f32 %v6443, 0.0
        %v6862 = vmax.f32 %v6448, 0.0
        %v6863 = vmax.f32 %v6451, 0.0
        %v6864 = vmax.f32 %v6456, 0.0
        %v6865 = vmax.f32 %v6459, 0.0
        %v6866 = vmax.f32 %v6464, 0.0
        %v6867 = vmax.f32 %v6467, 0.0
        %v6868 = vmax.f32 %v6472, 0.0
        %v6869 = vmax.f32 %v6475, 0.0
        %v6870 = vmax.f32 %v6480, 0.0
        %v6871 = vmax.f32 %v6483, 0.0
        %v6872 = vmax.f32 %v6488, 0.0
        %v6873 = vmax.f32 %v6491, 0.0
        %v6874 = vmax.f32 %v6496, 0.0
        %v6875 = vmax.f32 %v6499, 0.0
        %v6876 = vmax.f32 %v6504, 0.0
        %v6877 = vmax.f32 %v6507, 0.0
        %v6878 = vmax.f32 %v6512, 0.0
        %v6879 = vmax.f32 %v6515, 0.0
        %v6880 = vmax.f32 %v6520, 0.0
        %v6881 = vmax.f32 %v6523, 0.0
        %v6882 = vmax.f32 %v6528, 0.0
        %v6883 = vmax.f32 %v6531, 0.0
        %v6884 = vmax.f32 %v6536, 0.0
        %v6885 = vmax.f32 %v6539, 0.0
        %v6886 = vmax.f32 %v6544, 0.0
        %v6887 = vmax.f32 %v6547, 0.0
        %v6888 = vmax.f32 %v6552, 0.0
        %v6889 = vmax.f32 %v6555, 0.0
        %v6890 = vmax.f32 %v6560, 0.0
        %v6891 = vmax.f32 %v6563, 0.0
        %v6892 = vmax.f32 %v6568, 0.0
        %v6893 = vmax.f32 %v6571, 0.0
        %v6894 = vmax.f32 %v6576, 0.0
        %v6895 = vmax.f32 %v6579, 0.0
        %v6896 = vmax.f32 %v6584, 0.0
        %v6897 = vmax.f32 %v6587, 0.0
        %v6898 = vmax.f32 %v6592, 0.0
        %v6899 = vmax.f32 %v6595, 0.0
        %v6900 = vmax.f32 %v6600, 0.0
        %v6901 = vmax.f32 %v6603, 0.0
        %v6902 = vmax.f32 %v6608, 0.0
        %v6903 = vmax.f32 %v6611, 0.0
        %v6904 = vmax.f32 %v6616, 0.0
        %v6905 = vmax.f32 %v6619, 0.0
        %v6906 = vmax.f32 %v6624, 0.0
        %v6907 = vmax.f32 %v6627, 0.0
        %v6908 = vmax.f32 %v6632, 0.0
        %v6909 = vmax.f32 %v6635, 0.0
        %v6910 = vmax.f32 %v6640, 0.0
        %v6911 = vmax.f32 %v6643, 0.0
        %v6912 = vmax.f32 %v6648, 0.0
        %v6913 = vmax.f32 %v6651, 0.0
        %v6914 = vmax.f32 %v6656, 0.0
        %v6915 = vmax.f32 %v6659, 0.0
        %v6916 = vmax.f32 %v6664, 0.0
        %v6917 = vmax.f32 %v6667, 0.0
        %v6918 = vmax.f32 %v6672, 0.0
        %v6919 = vmax.f32 %v6675, 0.0
        %v6920 = vmax.f32 %v6680, 0.0
        %v6921 = vmax.f32 %v6683, 0.0
        %v6922 = vmax.f32 %v6688, 0.0
        %v6923 = vmax.f32 %v6691, 0.0
        %v6924 = vmax.f32 %v6696, 0.0
        %v6925 = vmax.f32 %v6699, 0.0
        %v6926 = vmax.f32 %v6704, 0.0
        %v6927 = vmax.f32 %v6707, 0.0
        %v6928 = vmax.f32 %v6712, 0.0
        %v6929 = vmax.f32 %v6715, 0.0
        %v6930 = vmax.f32 %v6720, 0.0
        %v6931 = vmax.f32 %v6723, 0.0
        %v6932 = vmax.f32 %v6728, 0.0
        %v6933 = vmax.f32 %v6731, 0.0
        %v6934 = vmax.f32 %v6736, 0.0
        %v6935 = vmax.f32 %v6739, 0.0
        %v6936 = vmax.f32 %v6744, 0.0
        %v6937 = vmax.f32 %v6747, 0.0
        %v6938 = vmax.f32 %v6752, 0.0
        %v6939 = vmax.f32 %v6755, 0.0
        %v6940 = vmax.f32 %v6760, 0.0
        %v6941 = vmax.f32 %v6763, 0.0
        %v6942 = vmax.f32 %v6768, 0.0
        %v6943 = vmax.f32 %v6771, 0.0
        %v6944 = vmax.f32 %v6776, 0.0
        %v6945 = vmax.f32 %v6779, 0.0
        %v6946 = vmax.f32 %v6784, 0.0
        %v6947 = vmax.f32 %v6787, 0.0
        %v6948 = vmax.f32 %v6792, 0.0
        %v6949 = vmax.f32 %v6795, 0.0
        %v6950 = vmax.f32 %v6800, 0.0
        %v6951 = vmax.f32 %v6803, 0.0
        %v6952 = vmax.f32 %v6808, 0.0
        %v6953 = vmax.f32 %v6811, 0.0
        %v6954 = vmax.f32 %v6816, 0.0
        %v6955 = vmax.f32 %v6819, 0.0
        %v6956 = vmax.f32 %v6824, 0.0
        %v6957 = vmax.f32 %v6827, 0.0
        %v6958 = vmax.f32 %v6830, %v6834
        %v6959 = vmax.f32 %v6831, %v6835
        %v6960 = vmax.f32 %v6832, %v6836
        %v6961 = vmax.f32 %v6833, %v6837
        %v6962 = vmax.f32 %v6958, %v6838
        %v6963 = vmax.f32 %v6959, %v6839
        %v6964 = vmax.f32 %v6960, %v6840
        %v6965 = vmax.f32 %v6961, %v6841
        %v6966 = vmax.f32 %v6962, %v6842
        %v6967 = vmax.f32 %v6963, %v6843
        %v6968 = vmax.f32 %v6964, %v6844
        %v6969 = vmax.f32 %v6965, %v6845
        %v6970 = vmax.f32 %v6966, %v6846
        %v6971 = vmax.f32 %v6967, %v6847
        %v6972 = vmax.f32 %v6968, %v6848
        %v6973 = vmax.f32 %v6969, %v6849
        %v6974 = vmax.f32 %v6970, %v6850
        %v6975 = vmax.f32 %v6971, %v6851
        %v6976 = vmax.f32 %v6972, %v6852
        %v6977 = vmax.f32 %v6973, %v6853
        %v6978 = vmax.f32 %v6974, %v6854
        %v6979 = vmax.f32 %v6975, %v6855
        %v6980 = vmax.f32 %v6976, %v6856
        %v6981 = vmax.f32 %v6977, %v6857
        %v6982 = vmax.f32 %v6978, %v6858
        %v6983 = vmax.f32 %v6979, %v6859
        %v6984 = vmax.f32 %v6980, %v6860
        %v6985 = vmax.f32 %v6981, %v6861
        %v6986 = vmax.f32 %v6982, %v6862
        %v6987 = vmax.f32 %v6983, %v6863
        %v6988 = vmax.f32 %v6984, %v6864
        %v6989 = vmax.f32 %v6985, %v6865
        %v6990 = vmax.f32 %v6986, %v6866
        %v6991 = vmax.f32 %v6987, %v6867
        %v6992 = vmax.f32 %v6988, %v6868
        %v6993 = vmax.f32 %v6989, %v6869
        %v6994 = vmax.f32 %v6990, %v6870
        %v6995 = vmax.f32 %v6991, %v6871
        %v6996 = vmax.f32 %v6992, %v6872
        %v6997 = vmax.f32 %v6993, %v6873
        %v6998 = vmax.f32 %v6994, %v6874
        %v6999 = vmax.f32 %v6995, %v6875
        %v7000 = vmax.f32 %v6996, %v6876
        %v7001 = vmax.f32 %v6997, %v6877
        %v7002 = vmax.f32 %v6998, %v6878
        %v7003 = vmax.f32 %v6999, %v6879
        %v7004 = vmax.f32 %v7000, %v6880
        %v7005 = vmax.f32 %v7001, %v6881
        %v7006 = vmax.f32 %v7002, %v6882
        %v7007 = vmax.f32 %v7003, %v6883
        %v7008 = vmax.f32 %v7004, %v6884
        %v7009 = vmax.f32 %v7005, %v6885
        %v7010 = vmax.f32 %v7006, %v6886
        %v7011 = vmax.f32 %v7007, %v6887
        %v7012 = vmax.f32 %v7008, %v6888
        %v7013 = vmax.f32 %v7009, %v6889
        %v7014 = vmax.f32 %v7010, %v6890
        %v7015 = vmax.f32 %v7011, %v6891
        %v7016 = vmax.f32 %v7012, %v6892
        %v7017 = vmax.f32 %v7013, %v6893
        %v7018 = vmax.f32 %v7014, %v6894
        %v7019 = vmax.f32 %v7015, %v6895
        %v7020 = vmax.f32 %v7016, %v6896
        %v7021 = vmax.f32 %v7017, %v6897
        %v7022 = vmax.f32 %v7018, %v6898
        %v7023 = vmax.f32 %v7019, %v6899
        %v7024 = vmax.f32 %v7020, %v6900
        %v7025 = vmax.f32 %v7021, %v6901
        %v7026 = vmax.f32 %v7022, %v6902
        %v7027 = vmax.f32 %v7023, %v6903
        %v7028 = vmax.f32 %v7024, %v6904
        %v7029 = vmax.f32 %v7025, %v6905
        %v7030 = vmax.f32 %v7026, %v6906
        %v7031 = vmax.f32 %v7027, %v6907
        %v7032 = vmax.f32 %v7028, %v6908
        %v7033 = vmax.f32 %v7029, %v6909
        %v7034 = vmax.f32 %v7030, %v6910
        %v7035 = vmax.f32 %v7031, %v6911
        %v7036 = vmax.f32 %v7032, %v6912
        %v7037 = vmax.f32 %v7033, %v6913
        %v7038 = vmax.f32 %v7034, %v6914
        %v7039 = vmax.f32 %v7035, %v6915
        %v7040 = vmax.f32 %v7036, %v6916
        %v7041 = vmax.f32 %v7037, %v6917
        %v7042 = vmax.f32 %v7038, %v6918
        %v7043 = vmax.f32 %v7039, %v6919
        %v7044 = vmax.f32 %v7040, %v6920
        %v7045 = vmax.f32 %v7041, %v6921
        %v7046 = vmax.f32 %v7042, %v6922
        %v7047 = vmax.f32 %v7043, %v6923
        %v7048 = vmax.f32 %v7044, %v6924
        %v7049 = vmax.f32 %v7045, %v6925
        %v7050 = vmax.f32 %v7046, %v6926
        %v7051 = vmax.f32 %v7047, %v6927
        %v7052 = vmax.f32 %v7048, %v6928
        %v7053 = vmax.f32 %v7049, %v6929
        %v7054 = vmax.f32 %v7050, %v6930
        %v7055 = vmax.f32 %v7051, %v6931
        %v7056 = vmax.f32 %v7052, %v6932
        %v7057 = vmax.f32 %v7053, %v6933
        %v7058 = vmax.f32 %v7054, %v6934
        %v7059 = vmax.f32 %v7055, %v6935
        %v7060 = vmax.f32 %v7056, %v6936
        %v7061 = vmax.f32 %v7057, %v6937
        %v7062 = vmax.f32 %v7058, %v6938
        %v7063 = vmax.f32 %v7059, %v6939
        %v7064 = vmax.f32 %v7060, %v6940
        %v7065 = vmax.f32 %v7061, %v6941
        %v7066 = vmax.f32 %v7062, %v6942
        %v7067 = vmax.f32 %v7063, %v6943
        %v7068 = vmax.f32 %v7064, %v6944
        %v7069 = vmax.f32 %v7065, %v6945
        %v7070 = vmax.f32 %v7066, %v6946
        %v7071 = vmax.f32 %v7067, %v6947
        %v7072 = vmax.f32 %v7068, %v6948
        %v7073 = vmax.f32 %v7069, %v6949
        %v7074 = vmax.f32 %v7070, %v6950
        %v7075 = vmax.f32 %v7071, %v6951
        %v7076 = vmax.f32 %v7072, %v6952
        %v7077 = vmax.f32 %v7073, %v6953
        %v7078 = vmax.f32 %v7074, %v6954
        %v7079 = vmax.f32 %v7075, %v6955
        %v7080 = vmax.f32 %v7076, %v6956
        %v7081 = vmax.f32 %v7077, %v6957
        %v7082 = vmax.f32 %v7078, %v7079
        %v7083 = vmax.f32 %v7080, %v7081
        %v7084 = vmax.f32 %v7082, %v7083
        %v7085 = vrot.slane %v7084, 4
        %v7086 = vmax.f32 %v7084, %v7085
        %v7087 = vrot.slane %v7086, 2
        %v7088 = vmax.f32 %v7086, %v7087
        %v7089 = vrot.slane %v7088, 1
        %v7090 = vmax.f32 %v7088, %v7089
        %p7091 = scmp.eq.s32.totalorder %s32, 0
        // Predicated region
        $region65: #{tpu_custom_call.1} parent=63 // pred_check
          %p7092 = pneg %p7091
        $region66: #{tpu_custom_call.1} parent=63 // pred_check_branch
          %7094 = sbr.rel (%p7092) target = $region68
        $region67: #{tpu_custom_call.1} parent=63 // pred_region
          %7095 = vst [vmem:[%s420] sm:$0x1] %v7090
        $region68: #{tpu_custom_call.1} parent=63 // pred_fallthru
          _
        %p7096 = scmp.gt.s32.totalorder %s32, 0
        // Predicated region
        $region69: #{tpu_custom_call.1} parent=63 // pred_check
          %p7097 = pneg %p7096
        $region70: #{tpu_custom_call.1} parent=63 // pred_check_branch
          %7099 = sbr.rel (%p7097) target = $region72
        $region71: #{tpu_custom_call.1} parent=63 // pred_region
          %v7100 = vld [vmem:[%s420] sm:$0x1]
          %v7101 = vmax.f32 %v7100, %v7090
          %7102 = vst [vmem:[%s420] sm:$0x1] %v7101
        $region72: #{tpu_custom_call.1} parent=63 // pred_fallthru
          _
        %s7103 = sand.u32 %s296, 1
        %s7104 = scalar_lea.sflag [#allocation3], %s7103
        %s7105 = sand.u32 %s296, 1
        %s7106 = scalar_lea.vmem [#allocation2], %s7105
        // Predicated region
        $region73: #{tpu_custom_call.1} parent=63 // pred_check
          %p7107 = pneg %p306
        $region74: #{tpu_custom_call.1} parent=63 // pred_check_branch
          %7109 = sbr.rel (%p7107) target = $region76
        $region75: #{tpu_custom_call.1} parent=63 // pred_region
          %s7111 = ssub.s32 16, 16
          %7112 = vsyncadd %s7104, %s7111
          %s7113 = smul.addr %s30, 2
          %s7114 = sadd.s32 %s31, %s7113
          %s7115 = smul.addr %s7114, 16
          %s7116 = scalar_lea.hbm %s11, %s7115
          %s7118 = sshll.u32 %s7106, 4
          %s7119 = int_to_ptr.vmem [resolvable:$true] %s7118
          %7121 = dma.vmem_to_hbm [thread:$0]  %s7119, 16, %s7116, %s7104
        $region76: #{tpu_custom_call.1} parent=63 // pred_fallthru
          _
      $region64: #{tpu_custom_call.1} parent=5 // pred_fallthru
        _
      %p7122 = scmp.le.s32.totalorder 2, %s20
      // Predicated region
      $region77: #{tpu_custom_call.1} parent=5 // pred_check
        %p7123 = pneg %p7122
      $region78: #{tpu_custom_call.1} parent=5 // pred_check_branch
        %7125 = sbr.rel (%p7123) target = $region80
      $region79: #{tpu_custom_call.1} parent=5 // pred_region
        %s7126 = ssub.s32 %s20, 2
        // Predicated region
        $region81: #{tpu_custom_call.1} parent=79 // pred_check
          %p7127 = pneg %p312
        $region82: #{tpu_custom_call.1} parent=79 // pred_check_branch
          %7129 = sbr.rel (%p7127) target = $region84
        $region83: #{tpu_custom_call.1} parent=79 // pred_region
          %s7130 = sand.u32 %s297, 1
          %s7131 = scalar_lea.sflag [#allocation3], %s7130
          %s7132 = sand.u32 %s297, 1
          %s7133 = scalar_lea.vmem [#allocation2], %s7132
          %7134 = dma.done %s7131, 16
        $region84: #{tpu_custom_call.1} parent=79 // pred_fallthru
          _
      $region80: #{tpu_custom_call.1} parent=5 // pred_fallthru
        _
    $region6: #{tpu_custom_call.1} parent=1 // loop_footer
      %s24 = sadd.s32 1, %s20
    $region7: #{tpu_custom_call.1} parent=1 // loop_footer_branch
      %19 = sbr.rel target = $region3
    $region8: #{tpu_custom_call.1} parent=1 // loop_exit
      _
    %7135 = vsyncpa [#allocation3], 1
    %s7136 = scalar_lea.sflag [#allocation3], 1
    %7137 = vsyncpa %s7136, 1

</llo_original>
